<compile_context>
chip_gen: v7x
topology: tpu7x:2x2x1
jax: 0.10.0
libtpu: 0.0.40
codegen_flags: <defaults>
</compile_context>

<pallas_src>
import jax
import jax.numpy as jnp
from jax.experimental import pallas as pl
from jax.experimental.pallas import tpu as pltpu


# ---------------------------------------------------------------------------
# Pure-JAX glue: im2col for Conv2d(kernel=3, padding=1), NCHW input.
# Feature order is (c, kh, kw), c-major, matching W.reshape(OC, C*9).
# TODO(synk): for large B/H/W move im2col inside the kernel (DMA the padded
# input once, build the 9 shifted views with static slices) to avoid the 9x
# HBM expansion; also add a batch-tiled grid with dimension_semantics=
# ("parallel",...) so v7x's second TensorCore is used and VMEM stays bounded.
# ---------------------------------------------------------------------------
def _im2col_3x3(x):
    B, C, H, W = x.shape
    xp = jnp.pad(x, ((0, 0), (0, 0), (1, 1), (1, 1)))
    cols = []
    for kh in range(3):
        for kw in range(3):
            cols.append(xp[:, :, kh:kh + H, kw:kw + W])
    p = jnp.stack(cols, axis=2)            # (B, C, 9, H, W)
    p = p.transpose(0, 3, 4, 1, 2)         # (B, H, W, C, 9)
    return p.reshape(B * H * W, C * 9)


def _make_kernel(B, HW, eps=1e-5):
    C1 = 576          # conv1 out channels (64*9)
    C3 = 1152         # conv3 out features (128*9)
    FPAD = 128        # lane-padded fc widths (120 -> 128, 84 -> 128, 4 -> 128)
    unbias = HW / (HW - 1.0)

    def bn_train(h, g, b):
        # training-mode BatchNorm: batch mean, *biased* variance (PyTorch semantics)
        mu = jnp.mean(h, axis=0, keepdims=True)
        var = jnp.mean((h - mu) ** 2, axis=0, keepdims=True)
        return g * (h - mu) * jax.lax.rsqrt(var + eps) + b

    def kernel(patches_ref, sel_ref, mask_ref,
               w1_ref, w2_ref, w3_ref, wf1_ref, wf2_ref, wf3_ref,
               pvec_ref, out_ref):
        f32, bf16 = jnp.float32, jnp.bfloat16

        # ---- packed small-parameter slab: static, lane-0-aligned slices ----
        b1 = pvec_ref[0:1, 0:C1]
        g1 = pvec_ref[1:2, 0:C1]
        be1 = pvec_ref[2:3, 0:C1]
        b2 = pvec_ref[3:4, 0:C1]
        g2 = pvec_ref[4:5, 0:C1]
        be2 = pvec_ref[5:6, 0:C1]
        b3 = pvec_ref[6:7, 0:C3]
        g3 = pvec_ref[7:8, 0:C3]
        be3 = pvec_ref[8:9, 0:C3]
        bf1 = pvec_ref[9:10, 0:FPAD]
        bf2 = pvec_ref[10:11, 0:FPAD]
        bf3 = pvec_ref[11:12, 0:FPAD]

        # ---- conv1 (3x3, pad=1) as im2col matmul -> (B*HW, 576) ----
        a = jnp.dot(patches_ref[...], w1_ref[...],
                    preferred_element_type=f32) + b1
        a2 = a * a
        sel = sel_ref[...]                 # (B, B*HW) block-diag 1/HW (static)

        # ---- per-sample moments of a on the MXU (no XLU sublane reductions) ----
        Sa1 = jnp.dot(sel, a, preferred_element_type=f32)    # (B, 576) mean_b[a]
        Sa2 = jnp.dot(sel, a2, preferred_element_type=f32)   # (B, 576) mean_b[a^2]

        # ---- BatchNorm2d training stats (global over B*HW), E[x^2]-E[x]^2 ----
        mu = jnp.mean(Sa1, axis=0, keepdims=True)
        ex2 = jnp.mean(Sa2, axis=0, keepdims=True)
        var = jnp.maximum(ex2 - mu * mu, 0.0)
        y = jnp.maximum(g1 * (a - mu) * jax.lax.rsqrt(var + eps) + be1, 0.0)

        # ---- per-sample spatial mean / unbiased std of y (torch.mean/std) ----
        y2 = y * y
        Sy1 = jnp.dot(sel, y, preferred_element_type=f32)    # (B, 576) spatial mean
        Sy2 = jnp.dot(sel, y2, preferred_element_type=f32)
        var_s = jnp.maximum(Sy2 - Sy1 * Sy1, 0.0) * unbias
        std_s = jnp.sqrt(var_s)                              # (B, 576) spatial std

        # ---- conv2: Linear(1152 -> 576) on concat([mean, std]) without the
        #      concat copy — split-weight form, bf16 MXU, f32 accumulate ----
        h = (jnp.dot(Sy1.astype(bf16), w2_ref[0:C1, :],
                     preferred_element_type=f32)
             + jnp.dot(std_s.astype(bf16), w2_ref[C1:2 * C1, :],
                       preferred_element_type=f32)
             + b2)
        h = jnp.maximum(bn_train(h, g2, be2), 0.0)

        # ---- conv3 (Linear 576 -> 1152) + BN1d + ReLU ----
        h = jnp.dot(h.astype(bf16), w3_ref[...],
                    preferred_element_type=f32) + b3
        h = jnp.maximum(bn_train(h, g3, be3), 0.0)

        # ---- fc1 (1152 -> 120, padded to 128) + ReLU ----
        h = jnp.maximum(jnp.dot(h.astype(bf16), wf1_ref[...],
                                preferred_element_type=f32) + bf1, 0.0)
        # ---- fc2 (120 -> 84, padded to 128) + ReLU ----
        h = jnp.maximum(jnp.dot(h, wf2_ref[...],
                                preferred_element_type=f32) + bf2, 0.0)

        # ---- dropout(p=0.5, training=True): precomputed keep mask * 2 ----
        h = h * mask_ref[...]

        # ---- fc3 (84 -> 4, lane-padded to 128; wrapper slices [:, :4]) ----
        out_ref[...] = jnp.dot(h, wf3_ref[...],
                               preferred_element_type=f32) + bf3

    return kernel


def mortality_ann_forward(x, params, dropout_seed):
    B, C, H, W = x.shape
    HW = H * W
    patches = _im2col_3x3(x.astype(jnp.float32))             # glue (plain JAX)

    # static block-diagonal selection matrix: per-sample means on the MXU
    sel = jnp.repeat(jnp.eye(B, dtype=jnp.float32), HW, axis=1) / float(HW)

    # dropout(p=0.5) keep mask, pre-scaled by 1/(1-p).
    # TODO(synk): cannot bit-match PyTorch's RNG stream; same Bernoulli(0.5)
    # keep-and-scale-by-2 semantics, seeded deterministically.
    key = jax.random.PRNGKey(dropout_seed)
    mask = jax.random.bernoulli(key, 0.5, (B, 128)).astype(jnp.float32) * 2.0

    kernel = _make_kernel(B, HW)
    args = [patches, sel, mask] + list(params)

    vmem = pl.BlockSpec(memory_space=pltpu.MemorySpace.VMEM)
    in_specs = [vmem] * len(args)

    # advisory cost estimate for XLA scheduling around the kernel
    flops = int(
        2 * B * HW * (C * 9) * 576            # conv1
        + 4 * 2 * B * (B * HW) * 576          # 4 moments matmuls
        + 2 * 2 * B * 576 * 576               # conv2 (split)
        + 2 * B * 576 * 1152                  # conv3
        + 2 * B * 1152 * 128                  # fc1
        + 2 * 2 * B * 128 * 128               # fc2 + fc3
    )
    bytes_accessed = int(sum(a.size * a.dtype.itemsize for a in args)
                         + B * 128 * 4)

    out = pl.pallas_call(
        kernel,
        out_shape=jax.ShapeDtypeStruct((B, 128), jnp.float32),
        in_specs=in_specs,
        out_specs=vmem,
        compiler_params=pltpu.CompilerParams(vmem_limit_bytes=32 << 20),
        cost_estimate=pl.CostEstimate(flops=flops, transcendentals=4096,
                                      bytes_accessed=bytes_accessed),
    )(*args)
    return out[:, :4]      # real fc3 width is 4; padded lanes are exactly zero


def init_params(key, input_size=(4, 16, 16)):
    """Deterministic synthetic parameters (PyTorch layouts -> kernel layouts)."""
    C = input_size[0]
    keys = iter(jax.random.split(key, 32))

    def w(shape, s=0.05):
        return s * jax.random.normal(next(keys), shape, jnp.float32)

    OC1 = 64 * 9          # 576
    F2_IN = 64 * 2 * 9    # 1152
    F2_OUT = 64 * 9       # 576
    F3_OUT = 128 * 9      # 1152
    FPAD = 128

    # PyTorch-layout parameters
    w1 = w((OC1, C, 3, 3)); b1 = w((OC1,), 0.02)
    g1 = 1.0 + w((OC1,), 0.02); be1 = w((OC1,), 0.02)
    w2 = w((F2_OUT, F2_IN)); b2 = w((F2_OUT,), 0.02)
    g2 = 1.0 + w((F2_OUT,), 0.02); be2 = w((F2_OUT,), 0.02)
    w3 = w((F3_OUT, F2_OUT)); b3 = w((F3_OUT,), 0.02)
    g3 = 1.0 + w((F3_OUT,), 0.02); be3 = w((F3_OUT,), 0.02)
    wf1 = w((120, F3_OUT)); bf1 = w((120,), 0.02)
    wf2 = w((84, 120)); bf2 = w((84,), 0.02)
    wf3 = w((4, 84)); bf3 = w((4,), 0.02)

    # ---- kernel-friendly layouts ----
    def pad_cols(m, n):
        return jnp.pad(m, ((0, 0), (0, n - m.shape[1])))

    def pad_rows(m, n):
        return jnp.pad(m, ((0, n - m.shape[0]), (0, 0)))

    w1_k = w1.reshape(OC1, C * 9).T                           # (C*9, 576) f32
    w2_k = w2.T.astype(jnp.bfloat16)                          # (1152, 576) bf16
    w3_k = w3.T.astype(jnp.bfloat16)                          # (576, 1152) bf16
    wf1_k = pad_cols(wf1.T, FPAD).astype(jnp.bfloat16)        # (1152, 128) bf16
    wf2_k = pad_cols(pad_rows(wf2.T, FPAD), FPAD)             # (128, 128) f32
    wf3_k = pad_cols(pad_rows(wf3.T, FPAD), FPAD)             # (128, 128) f32

    # packed (12, 1152) small-parameter slab (each row zero-padded, lane-dense)
    PACK_W = 1152

    def packrow(v):
        v = v.reshape(1, -1)
        return jnp.pad(v, ((0, 0), (0, PACK_W - v.shape[1])))

    pvec = jnp.concatenate([
        packrow(b1), packrow(g1), packrow(be1),
        packrow(b2), packrow(g2), packrow(be2),
        packrow(b3), packrow(g3), packrow(be3),
        packrow(jnp.pad(bf1, (0, FPAD - 120))),
        packrow(jnp.pad(bf2, (0, FPAD - 84))),
        packrow(jnp.pad(bf3, (0, FPAD - 4))),
    ], axis=0).astype(jnp.float32)

    return [w1_k, w2_k, w3_k, wf1_k, wf2_k, wf3_k, pvec]


if __name__ == "__main__":
    key = jax.random.PRNGKey(0)
    kx, kp = jax.random.split(key)
    input_size = (4, 16, 16)      # (C, H, W); H, W divisible by downsample_factor=8
    batch = 2
    x = jax.random.normal(kx, (batch,) + input_size, jnp.float32)
    params = init_params(kp, input_size)

    out = mortality_ann_forward(x, params, dropout_seed=1234)
    out = jax.block_until_ready(out)
    assert out.shape == (batch, 4), out.shape
    assert bool(jnp.all(jnp.isfinite(out)))
    print("KERNEL_OK")
</pallas_src>

<mosaic_0001>
module attributes {stable_mosaic.version = 11 : i64} {
  func.func @kernel(%arg0: memref<512x36xf32, #tpu.memory_space<vmem>>, %arg1: memref<2x512xf32, #tpu.memory_space<vmem>>, %arg2: memref<2x128xf32, #tpu.memory_space<vmem>>, %arg3: memref<36x576xf32, #tpu.memory_space<vmem>>, %arg4: memref<1152x576xbf16, #tpu.memory_space<vmem>>, %arg5: memref<576x1152xbf16, #tpu.memory_space<vmem>>, %arg6: memref<1152x128xbf16, #tpu.memory_space<vmem>>, %arg7: memref<128x128xf32, #tpu.memory_space<vmem>>, %arg8: memref<128x128xf32, #tpu.memory_space<vmem>>, %arg9: memref<12x1152xf32, #tpu.memory_space<vmem>>, %arg10: memref<2x128xf32, #tpu.memory_space<vmem>>) attributes {dimension_semantics = [], scalar_prefetch = 0 : i64, scratch_operands = 0 : i64, tpu.core_type = #tpu.core_type<tc>} {
    %c0 = arith.constant 0 : index
    %c0_0 = arith.constant 0 : index
    %0 = vector.load %arg9[%c0, %c0_0] : memref<12x1152xf32, #tpu.memory_space<vmem>>, vector<1x576xf32>
    %c1 = arith.constant 1 : index
    %c0_1 = arith.constant 0 : index
    %1 = vector.load %arg9[%c1, %c0_1] : memref<12x1152xf32, #tpu.memory_space<vmem>>, vector<1x576xf32>
    %c2 = arith.constant 2 : index
    %c0_2 = arith.constant 0 : index
    %2 = vector.load %arg9[%c2, %c0_2] : memref<12x1152xf32, #tpu.memory_space<vmem>>, vector<1x576xf32>
    %c3 = arith.constant 3 : index
    %c0_3 = arith.constant 0 : index
    %3 = vector.load %arg9[%c3, %c0_3] : memref<12x1152xf32, #tpu.memory_space<vmem>>, vector<1x576xf32>
    %c4 = arith.constant 4 : index
    %c0_4 = arith.constant 0 : index
    %4 = vector.load %arg9[%c4, %c0_4] : memref<12x1152xf32, #tpu.memory_space<vmem>>, vector<1x576xf32>
    %c5 = arith.constant 5 : index
    %c0_5 = arith.constant 0 : index
    %5 = vector.load %arg9[%c5, %c0_5] : memref<12x1152xf32, #tpu.memory_space<vmem>>, vector<1x576xf32>
    %c6 = arith.constant 6 : index
    %c0_6 = arith.constant 0 : index
    %6 = vector.load %arg9[%c6, %c0_6] : memref<12x1152xf32, #tpu.memory_space<vmem>>, vector<1x1152xf32>
    %c7 = arith.constant 7 : index
    %c0_7 = arith.constant 0 : index
    %7 = vector.load %arg9[%c7, %c0_7] : memref<12x1152xf32, #tpu.memory_space<vmem>>, vector<1x1152xf32>
    %c8 = arith.constant 8 : index
    %c0_8 = arith.constant 0 : index
    %8 = vector.load %arg9[%c8, %c0_8] : memref<12x1152xf32, #tpu.memory_space<vmem>>, vector<1x1152xf32>
    %c9 = arith.constant 9 : index
    %c0_9 = arith.constant 0 : index
    %9 = vector.load %arg9[%c9, %c0_9] : memref<12x1152xf32, #tpu.memory_space<vmem>>, vector<1x128xf32>
    %c10 = arith.constant 10 : index
    %c0_10 = arith.constant 0 : index
    %10 = vector.load %arg9[%c10, %c0_10] : memref<12x1152xf32, #tpu.memory_space<vmem>>, vector<1x128xf32>
    %c11 = arith.constant 11 : index
    %c0_11 = arith.constant 0 : index
    %11 = vector.load %arg9[%c11, %c0_11] : memref<12x1152xf32, #tpu.memory_space<vmem>>, vector<1x128xf32>
    %c0_12 = arith.constant 0 : index
    %c0_13 = arith.constant 0 : index
    %12 = vector.load %arg0[%c0_12, %c0_13] : memref<512x36xf32, #tpu.memory_space<vmem>>, vector<512x36xf32>
    %c0_14 = arith.constant 0 : index
    %c0_15 = arith.constant 0 : index
    %13 = vector.load %arg3[%c0_14, %c0_15] : memref<36x576xf32, #tpu.memory_space<vmem>>, vector<36x576xf32>
    %cst = arith.constant dense<0.000000e+00> : vector<512x576xf32>
    %14 = tpu.matmul %12, %13, %cst {dimension_numbers = #tpu.dot_dimension_numbers<[1], [0], [0], [1], [0, 0, 1, 1], [], []>} : vector<512x36xf32>, vector<36x576xf32>, vector<512x576xf32> -> vector<512x576xf32>
    %15 = vector.broadcast %0 : vector<1x576xf32> to vector<512x576xf32>
    %16 = arith.addf %14, %15 : vector<512x576xf32>
    %17 = arith.mulf %16, %16 : vector<512x576xf32>
    %c0_16 = arith.constant 0 : index
    %c0_17 = arith.constant 0 : index
    %18 = vector.load %arg1[%c0_16, %c0_17] : memref<2x512xf32, #tpu.memory_space<vmem>>, vector<2x512xf32>
    %cst_18 = arith.constant dense<0.000000e+00> : vector<2x576xf32>
    %19 = tpu.matmul %18, %16, %cst_18 {dimension_numbers = #tpu.dot_dimension_numbers<[1], [0], [0], [1], [0, 0, 1, 1], [], []>} : vector<2x512xf32>, vector<512x576xf32>, vector<2x576xf32> -> vector<2x576xf32>
    %cst_19 = arith.constant dense<0.000000e+00> : vector<2x576xf32>
    %20 = tpu.matmul %18, %17, %cst_19 {dimension_numbers = #tpu.dot_dimension_numbers<[1], [0], [0], [1], [0, 0, 1, 1], [], []>} : vector<2x512xf32>, vector<512x576xf32>, vector<2x576xf32> -> vector<2x576xf32>
    %cst_20 = arith.constant dense<0.000000e+00> : vector<576xf32>
    %21 = vector.multi_reduction <add>, %19, %cst_20 [0] : vector<2x576xf32> to vector<576xf32>
    %22 = vector.shape_cast %21 : vector<576xf32> to vector<1x576xf32>
    %cst_21 = arith.constant 2.000000e+00 : f32
    %23 = vector.broadcast %cst_21 : f32 to vector<1x576xf32>
    %24 = arith.divf %22, %23 : vector<1x576xf32>
    %cst_22 = arith.constant dense<0.000000e+00> : vector<576xf32>
    %25 = vector.multi_reduction <add>, %20, %cst_22 [0] : vector<2x576xf32> to vector<576xf32>
    %26 = vector.shape_cast %25 : vector<576xf32> to vector<1x576xf32>
    %cst_23 = arith.constant 2.000000e+00 : f32
    %27 = vector.broadcast %cst_23 : f32 to vector<1x576xf32>
    %28 = arith.divf %26, %27 : vector<1x576xf32>
    %29 = arith.mulf %24, %24 : vector<1x576xf32>
    %30 = arith.subf %28, %29 : vector<1x576xf32>
    %cst_24 = arith.constant 0.000000e+00 : f32
    %31 = vector.broadcast %cst_24 : f32 to vector<1x576xf32>
    %32 = arith.maximumf %30, %31 : vector<1x576xf32>
    %33 = vector.broadcast %24 : vector<1x576xf32> to vector<512x576xf32>
    %34 = arith.subf %16, %33 : vector<512x576xf32>
    %35 = vector.broadcast %1 : vector<1x576xf32> to vector<512x576xf32>
    %36 = arith.mulf %35, %34 : vector<512x576xf32>
    %cst_25 = arith.constant 9.99999974E-6 : f32
    %37 = vector.broadcast %cst_25 : f32 to vector<1x576xf32>
    %38 = arith.addf %32, %37 : vector<1x576xf32>
    %39 = math.rsqrt %38 : vector<1x576xf32>
    %40 = vector.broadcast %39 : vector<1x576xf32> to vector<512x576xf32>
    %41 = arith.mulf %36, %40 : vector<512x576xf32>
    %42 = vector.broadcast %2 : vector<1x576xf32> to vector<512x576xf32>
    %43 = arith.addf %41, %42 : vector<512x576xf32>
    %cst_26 = arith.constant 0.000000e+00 : f32
    %44 = vector.broadcast %cst_26 : f32 to vector<512x576xf32>
    %45 = arith.maximumf %43, %44 : vector<512x576xf32>
    %46 = arith.mulf %45, %45 : vector<512x576xf32>
    %cst_27 = arith.constant dense<0.000000e+00> : vector<2x576xf32>
    %47 = tpu.matmul %18, %45, %cst_27 {dimension_numbers = #tpu.dot_dimension_numbers<[1], [0], [0], [1], [0, 0, 1, 1], [], []>} : vector<2x512xf32>, vector<512x576xf32>, vector<2x576xf32> -> vector<2x576xf32>
    %cst_28 = arith.constant dense<0.000000e+00> : vector<2x576xf32>
    %48 = tpu.matmul %18, %46, %cst_28 {dimension_numbers = #tpu.dot_dimension_numbers<[1], [0], [0], [1], [0, 0, 1, 1], [], []>} : vector<2x512xf32>, vector<512x576xf32>, vector<2x576xf32> -> vector<2x576xf32>
    %49 = arith.mulf %47, %47 : vector<2x576xf32>
    %50 = arith.subf %48, %49 : vector<2x576xf32>
    %cst_29 = arith.constant 0.000000e+00 : f32
    %51 = vector.broadcast %cst_29 : f32 to vector<2x576xf32>
    %52 = arith.maximumf %50, %51 : vector<2x576xf32>
    %cst_30 = arith.constant 1.00392163 : f32
    %53 = vector.broadcast %cst_30 : f32 to vector<2x576xf32>
    %54 = arith.mulf %52, %53 : vector<2x576xf32>
    %55 = math.sqrt %54 : vector<2x576xf32>
    %56 = arith.truncf %47 : vector<2x576xf32> to vector<2x576xbf16>
    %c0_31 = arith.constant 0 : index
    %c0_32 = arith.constant 0 : index
    %57 = vector.load %arg4[%c0_31, %c0_32] : memref<1152x576xbf16, #tpu.memory_space<vmem>>, vector<576x576xbf16>
    %cst_33 = arith.constant dense<0.000000e+00> : vector<2x576xf32>
    %58 = tpu.matmul %56, %57, %cst_33 {dimension_numbers = #tpu.dot_dimension_numbers<[1], [0], [0], [1], [0, 0, 1, 1], [], []>} : vector<2x576xbf16>, vector<576x576xbf16>, vector<2x576xf32> -> vector<2x576xf32>
    %59 = arith.truncf %55 : vector<2x576xf32> to vector<2x576xbf16>
    %c576 = arith.constant 576 : index
    %c0_34 = arith.constant 0 : index
    %60 = vector.load %arg4[%c576, %c0_34] : memref<1152x576xbf16, #tpu.memory_space<vmem>>, vector<576x576xbf16>
    %cst_35 = arith.constant dense<0.000000e+00> : vector<2x576xf32>
    %61 = tpu.matmul %59, %60, %cst_35 {dimension_numbers = #tpu.dot_dimension_numbers<[1], [0], [0], [1], [0, 0, 1, 1], [], []>} : vector<2x576xbf16>, vector<576x576xbf16>, vector<2x576xf32> -> vector<2x576xf32>
    %62 = arith.addf %58, %61 : vector<2x576xf32>
    %63 = vector.broadcast %3 : vector<1x576xf32> to vector<2x576xf32>
    %64 = arith.addf %62, %63 : vector<2x576xf32>
    %cst_36 = arith.constant dense<0.000000e+00> : vector<576xf32>
    %65 = vector.multi_reduction <add>, %64, %cst_36 [0] : vector<2x576xf32> to vector<576xf32>
    %66 = vector.shape_cast %65 : vector<576xf32> to vector<1x576xf32>
    %cst_37 = arith.constant 2.000000e+00 : f32
    %67 = vector.broadcast %cst_37 : f32 to vector<1x576xf32>
    %68 = arith.divf %66, %67 : vector<1x576xf32>
    %69 = vector.broadcast %68 : vector<1x576xf32> to vector<2x576xf32>
    %70 = arith.subf %64, %69 : vector<2x576xf32>
    %71 = arith.mulf %70, %70 : vector<2x576xf32>
    %cst_38 = arith.constant dense<0.000000e+00> : vector<576xf32>
    %72 = vector.multi_reduction <add>, %71, %cst_38 [0] : vector<2x576xf32> to vector<576xf32>
    %73 = vector.shape_cast %72 : vector<576xf32> to vector<1x576xf32>
    %cst_39 = arith.constant 2.000000e+00 : f32
    %74 = vector.broadcast %cst_39 : f32 to vector<1x576xf32>
    %75 = arith.divf %73, %74 : vector<1x576xf32>
    %76 = vector.broadcast %68 : vector<1x576xf32> to vector<2x576xf32>
    %77 = arith.subf %64, %76 : vector<2x576xf32>
    %78 = vector.broadcast %4 : vector<1x576xf32> to vector<2x576xf32>
    %79 = arith.mulf %78, %77 : vector<2x576xf32>
    %cst_40 = arith.constant 9.99999974E-6 : f32
    %80 = vector.broadcast %cst_40 : f32 to vector<1x576xf32>
    %81 = arith.addf %75, %80 : vector<1x576xf32>
    %82 = math.rsqrt %81 : vector<1x576xf32>
    %83 = vector.broadcast %82 : vector<1x576xf32> to vector<2x576xf32>
    %84 = arith.mulf %79, %83 : vector<2x576xf32>
    %85 = vector.broadcast %5 : vector<1x576xf32> to vector<2x576xf32>
    %86 = arith.addf %84, %85 : vector<2x576xf32>
    %cst_41 = arith.constant 0.000000e+00 : f32
    %87 = vector.broadcast %cst_41 : f32 to vector<2x576xf32>
    %88 = arith.maximumf %86, %87 : vector<2x576xf32>
    %89 = arith.truncf %88 : vector<2x576xf32> to vector<2x576xbf16>
    %c0_42 = arith.constant 0 : index
    %c0_43 = arith.constant 0 : index
    %90 = vector.load %arg5[%c0_42, %c0_43] : memref<576x1152xbf16, #tpu.memory_space<vmem>>, vector<576x1152xbf16>
    %cst_44 = arith.constant dense<0.000000e+00> : vector<2x1152xf32>
    %91 = tpu.matmul %89, %90, %cst_44 {dimension_numbers = #tpu.dot_dimension_numbers<[1], [0], [0], [1], [0, 0, 1, 1], [], []>} : vector<2x576xbf16>, vector<576x1152xbf16>, vector<2x1152xf32> -> vector<2x1152xf32>
    %92 = vector.broadcast %6 : vector<1x1152xf32> to vector<2x1152xf32>
    %93 = arith.addf %91, %92 : vector<2x1152xf32>
    %cst_45 = arith.constant dense<0.000000e+00> : vector<1152xf32>
    %94 = vector.multi_reduction <add>, %93, %cst_45 [0] : vector<2x1152xf32> to vector<1152xf32>
    %95 = vector.shape_cast %94 : vector<1152xf32> to vector<1x1152xf32>
    %cst_46 = arith.constant 2.000000e+00 : f32
    %96 = vector.broadcast %cst_46 : f32 to vector<1x1152xf32>
    %97 = arith.divf %95, %96 : vector<1x1152xf32>
    %98 = vector.broadcast %97 : vector<1x1152xf32> to vector<2x1152xf32>
    %99 = arith.subf %93, %98 : vector<2x1152xf32>
    %100 = arith.mulf %99, %99 : vector<2x1152xf32>
    %cst_47 = arith.constant dense<0.000000e+00> : vector<1152xf32>
    %101 = vector.multi_reduction <add>, %100, %cst_47 [0] : vector<2x1152xf32> to vector<1152xf32>
    %102 = vector.shape_cast %101 : vector<1152xf32> to vector<1x1152xf32>
    %cst_48 = arith.constant 2.000000e+00 : f32
    %103 = vector.broadcast %cst_48 : f32 to vector<1x1152xf32>
    %104 = arith.divf %102, %103 : vector<1x1152xf32>
    %105 = vector.broadcast %97 : vector<1x1152xf32> to vector<2x1152xf32>
    %106 = arith.subf %93, %105 : vector<2x1152xf32>
    %107 = vector.broadcast %7 : vector<1x1152xf32> to vector<2x1152xf32>
    %108 = arith.mulf %107, %106 : vector<2x1152xf32>
    %cst_49 = arith.constant 9.99999974E-6 : f32
    %109 = vector.broadcast %cst_49 : f32 to vector<1x1152xf32>
    %110 = arith.addf %104, %109 : vector<1x1152xf32>
    %111 = math.rsqrt %110 : vector<1x1152xf32>
    %112 = vector.broadcast %111 : vector<1x1152xf32> to vector<2x1152xf32>
    %113 = arith.mulf %108, %112 : vector<2x1152xf32>
    %114 = vector.broadcast %8 : vector<1x1152xf32> to vector<2x1152xf32>
    %115 = arith.addf %113, %114 : vector<2x1152xf32>
    %cst_50 = arith.constant 0.000000e+00 : f32
    %116 = vector.broadcast %cst_50 : f32 to vector<2x1152xf32>
    %117 = arith.maximumf %115, %116 : vector<2x1152xf32>
    %118 = arith.truncf %117 : vector<2x1152xf32> to vector<2x1152xbf16>
    %c0_51 = arith.constant 0 : index
    %c0_52 = arith.constant 0 : index
    %119 = vector.load %arg6[%c0_51, %c0_52] : memref<1152x128xbf16, #tpu.memory_space<vmem>>, vector<1152x128xbf16>
    %cst_53 = arith.constant dense<0.000000e+00> : vector<2x128xf32>
    %120 = tpu.matmul %118, %119, %cst_53 {dimension_numbers = #tpu.dot_dimension_numbers<[1], [0], [0], [1], [0, 0, 1, 1], [], []>} : vector<2x1152xbf16>, vector<1152x128xbf16>, vector<2x128xf32> -> vector<2x128xf32>
    %121 = vector.broadcast %9 : vector<1x128xf32> to vector<2x128xf32>
    %122 = arith.addf %120, %121 : vector<2x128xf32>
    %cst_54 = arith.constant 0.000000e+00 : f32
    %123 = vector.broadcast %cst_54 : f32 to vector<2x128xf32>
    %124 = arith.maximumf %122, %123 : vector<2x128xf32>
    %c0_55 = arith.constant 0 : index
    %c0_56 = arith.constant 0 : index
    %125 = vector.load %arg7[%c0_55, %c0_56] : memref<128x128xf32, #tpu.memory_space<vmem>>, vector<128x128xf32>
    %cst_57 = arith.constant dense<0.000000e+00> : vector<2x128xf32>
    %126 = tpu.matmul %124, %125, %cst_57 {dimension_numbers = #tpu.dot_dimension_numbers<[1], [0], [0], [1], [0, 0, 1, 1], [], []>} : vector<2x128xf32>, vector<128x128xf32>, vector<2x128xf32> -> vector<2x128xf32>
    %127 = vector.broadcast %10 : vector<1x128xf32> to vector<2x128xf32>
    %128 = arith.addf %126, %127 : vector<2x128xf32>
    %cst_58 = arith.constant 0.000000e+00 : f32
    %129 = vector.broadcast %cst_58 : f32 to vector<2x128xf32>
    %130 = arith.maximumf %128, %129 : vector<2x128xf32>
    %c0_59 = arith.constant 0 : index
    %c0_60 = arith.constant 0 : index
    %131 = vector.load %arg2[%c0_59, %c0_60] : memref<2x128xf32, #tpu.memory_space<vmem>>, vector<2x128xf32>
    %132 = arith.mulf %130, %131 : vector<2x128xf32>
    %c0_61 = arith.constant 0 : index
    %c0_62 = arith.constant 0 : index
    %133 = vector.load %arg8[%c0_61, %c0_62] : memref<128x128xf32, #tpu.memory_space<vmem>>, vector<128x128xf32>
    %cst_63 = arith.constant dense<0.000000e+00> : vector<2x128xf32>
    %134 = tpu.matmul %132, %133, %cst_63 {dimension_numbers = #tpu.dot_dimension_numbers<[1], [0], [0], [1], [0, 0, 1, 1], [], []>} : vector<2x128xf32>, vector<128x128xf32>, vector<2x128xf32> -> vector<2x128xf32>
    %135 = vector.broadcast %11 : vector<1x128xf32> to vector<2x128xf32>
    %136 = arith.addf %134, %135 : vector<2x128xf32>
    %c0_64 = arith.constant 0 : index
    %c0_65 = arith.constant 0 : index
    %137 = vector.load %arg10[%c0_64, %c0_65] : memref<2x128xf32, #tpu.memory_space<vmem>>, vector<2x128xf32>
    tpu.vector_store %arg10[%c0_64, %c0_65], %136 {strides = array<i32>} : memref<2x128xf32, #tpu.memory_space<vmem>>, vector<2x128xf32>,
    return
  }
}

</mosaic_0001>

<llo_original>
// kernel: tpu_custom_call.1
$region0: #{tpu_custom_call.1}
  #allocation0 [shape = 'u32[]', space=smem, size = 0x4, offset = 0x4, fixed_abs, tag = 'smem constant byte address 0x4 - core index']
  #allocation1 [shape = 'u32[144,128]{1,0:T(1,128)}', space=vmem, size = 0x12000, scoped, tag = 'internal scratch']
  %s0 = inlined_call_operand.vmem [shape: f32[512,36], index: 0, kind: input, shape index: {}]
  %s1 = inlined_call_operand.vmem [shape: f32[2,512], index: 1, kind: input, shape index: {}]
  %s2 = inlined_call_operand.vmem [shape: f32[2,128], index: 2, kind: input, shape index: {}]
  %s3 = inlined_call_operand.vmem [shape: f32[36,576], index: 3, kind: input, shape index: {}]
  %s4 = inlined_call_operand.vmem [shape: bf16[1152,576], index: 4, kind: input, shape index: {}]
  %s5 = inlined_call_operand.vmem [shape: bf16[576,1152], index: 5, kind: input, shape index: {}]
  %s6 = inlined_call_operand.vmem [shape: bf16[1152,128], index: 6, kind: input, shape index: {}]
  %s7 = inlined_call_operand.vmem [shape: f32[128,128], index: 7, kind: input, shape index: {}]
  %s8 = inlined_call_operand.vmem [shape: f32[128,128], index: 8, kind: input, shape index: {}]
  %s9 = inlined_call_operand.vmem [shape: f32[12,1152], index: 9, kind: input, shape index: {}]
  %s10 = inlined_call_operand.hbm [shape: f32[2,128], index: 10, kind: output, shape index: {}]
  %s11 = sld [smem:[#allocation0]]
  $region50: #{tpu_custom_call.1} parent=0
    _
  %s13 = ssub.s32 1, %s11
  %s14 = scalar_select 0, %s13, %s11
  $region1: #{tpu_custom_call.1} parent=0
    #allocation2 [shape = 'u8[1024]{0}', space=vmem, size = 0x400, scoped, tag = 'output window, operand 0, single buffered']
    #allocation3 [shape = 's32[1]{0}', space=sflag, size = 0x4, scoped, tag = 'scoped memory for tpu_custom_call.1']
    %15 = vsyncpa [#allocation3], 0
    // Predicated region
    $region2: #{tpu_custom_call.1} parent=1 // pred_check
      _
    $region3: #{tpu_custom_call.1} parent=1 // pred_check_branch
      %17 = sbr.rel (0) target = $region5
    $region4: #{tpu_custom_call.1} parent=1 // pred_region
      _
    $region5: #{tpu_custom_call.1} parent=1 // pred_fallthru
      _
    // Predicated region
    $region6: #{tpu_custom_call.1} parent=1 // pred_check
      _
    $region7: #{tpu_custom_call.1} parent=1 // pred_check_branch
      %19 = sbr.rel (0) target = $region9
    $region8: #{tpu_custom_call.1} parent=1 // pred_region
      _
    $region9: #{tpu_custom_call.1} parent=1 // pred_fallthru
      _
    // Predicated region
    $region10: #{tpu_custom_call.1} parent=1 // pred_check
      _
    $region11: #{tpu_custom_call.1} parent=1 // pred_check_branch
      %21 = sbr.rel (0) target = $region13
    $region12: #{tpu_custom_call.1} parent=1 // pred_region
      _
    $region13: #{tpu_custom_call.1} parent=1 // pred_fallthru
      _
    // Predicated region
    $region14: #{tpu_custom_call.1} parent=1 // pred_check
      _
    $region15: #{tpu_custom_call.1} parent=1 // pred_check_branch
      %23 = sbr.rel (0) target = $region17
    $region16: #{tpu_custom_call.1} parent=1 // pred_region
      _
    $region17: #{tpu_custom_call.1} parent=1 // pred_fallthru
      _
    // Predicated region
    $region18: #{tpu_custom_call.1} parent=1 // pred_check
      _
    $region19: #{tpu_custom_call.1} parent=1 // pred_check_branch
      %25 = sbr.rel (0) target = $region21
    $region20: #{tpu_custom_call.1} parent=1 // pred_region
      _
    $region21: #{tpu_custom_call.1} parent=1 // pred_fallthru
      _
    // Predicated region
    $region22: #{tpu_custom_call.1} parent=1 // pred_check
      _
    $region23: #{tpu_custom_call.1} parent=1 // pred_check_branch
      %27 = sbr.rel (0) target = $region25
    $region24: #{tpu_custom_call.1} parent=1 // pred_region
      _
    $region25: #{tpu_custom_call.1} parent=1 // pred_fallthru
      _
    // Predicated region
    $region26: #{tpu_custom_call.1} parent=1 // pred_check
      _
    $region27: #{tpu_custom_call.1} parent=1 // pred_check_branch
      %29 = sbr.rel (0) target = $region29
    $region28: #{tpu_custom_call.1} parent=1 // pred_region
      _
    $region29: #{tpu_custom_call.1} parent=1 // pred_fallthru
      _
    // Predicated region
    $region30: #{tpu_custom_call.1} parent=1 // pred_check
      _
    $region31: #{tpu_custom_call.1} parent=1 // pred_check_branch
      %31 = sbr.rel (0) target = $region33
    $region32: #{tpu_custom_call.1} parent=1 // pred_region
      _
    $region33: #{tpu_custom_call.1} parent=1 // pred_fallthru
      _
    // Predicated region
    $region34: #{tpu_custom_call.1} parent=1 // pred_check
      _
    $region35: #{tpu_custom_call.1} parent=1 // pred_check_branch
      %33 = sbr.rel (0) target = $region37
    $region36: #{tpu_custom_call.1} parent=1 // pred_region
      _
    $region37: #{tpu_custom_call.1} parent=1 // pred_fallthru
      _
    // Predicated region
    $region38: #{tpu_custom_call.1} parent=1 // pred_check
      _
    $region39: #{tpu_custom_call.1} parent=1 // pred_check_branch
      %35 = sbr.rel (0) target = $region41
    $region40: #{tpu_custom_call.1} parent=1 // pred_region
      _
    $region41: #{tpu_custom_call.1} parent=1 // pred_fallthru
      _
    %v37 = vld [vmem:[%s9] ss:$8 sm:$0xf]
    %v38 = vld [vmem:[%s9] ss:$8 sm:$0x10]
    %v39 = vor.u32 %v37, %v38
    %s40 = scalar_lea.vmem %s9, 1
    %v41 = vld [vmem:[%s40] ss:$8 sm:$0xf]
    %v42 = vld [vmem:[%s40] ss:$8 sm:$0x10]
    %v43 = vor.u32 %v41, %v42
    %s44 = scalar_lea.vmem %s9, 2
    %v45 = vld [vmem:[%s44] ss:$8 sm:$0xf]
    %v46 = vld [vmem:[%s44] ss:$8 sm:$0x10]
    %v47 = vor.u32 %v45, %v46
    %s48 = scalar_lea.vmem %s9, 3
    %v49 = vld [vmem:[%s48] ss:$8 sm:$0xf]
    %v50 = vld [vmem:[%s48] ss:$8 sm:$0x10]
    %v51 = vor.u32 %v49, %v50
    %s52 = scalar_lea.vmem %s9, 4
    %v53 = vld [vmem:[%s52] ss:$8 sm:$0xf]
    %v54 = vld [vmem:[%s52] ss:$8 sm:$0x10]
    %v55 = vor.u32 %v53, %v54
    %s56 = scalar_lea.vmem %s9, 5
    %v57 = vld [vmem:[%s56] ss:$8 sm:$0xf]
    %v58 = vld [vmem:[%s56] ss:$8 sm:$0x10]
    %v59 = vor.u32 %v57, %v58
    %s60 = scalar_lea.vmem %s9, 6
    %v61 = vld [vmem:[%s60] ss:$8 sm:$0xf]
    %v62 = vld [vmem:[%s60] ss:$8 sm:$0xf0]
    %v63 = vor.u32 %v61, %v62
    %s64 = scalar_lea.vmem %s9, 70
    %v65 = vld [vmem:[%s64] ss:$8 sm:$0x1]
    %s66 = scalar_lea.vmem %s9, 7
    %v67 = vld [vmem:[%s66] ss:$8 sm:$0xf]
    %v68 = vld [vmem:[%s66] ss:$8 sm:$0xf0]
    %v69 = vor.u32 %v67, %v68
    %s70 = scalar_lea.vmem %s9, 71
    %v71 = vld [vmem:[%s70] ss:$8 sm:$0x1]
    %s72 = scalar_lea.vmem %s9, 72
    %v73 = vld [vmem:[%s72] ss:$8 sm:$0xf]
    %v74 = vld [vmem:[%s72] ss:$8 sm:$0xf0]
    %v75 = vor.u32 %v73, %v74
    %s76 = scalar_lea.vmem %s9, 136
    %v77 = vld [vmem:[%s76] ss:$8 sm:$0x1]
    %v78 = vld [vmem:[%s9 + $0x49] ss:$0 sm:$0xff]
    %v79 = vld [vmem:[%s9 + $0x4a] ss:$0 sm:$0xff]
    %v80 = vld [vmem:[%s9 + $0x4b] ss:$0 sm:$0xff]
    %v81 = vld [vmem:[%s0] sm:$0xff]
    %v82 = vld [vmem:[%s0 + $0x8] sm:$0xff]
    %v83 = vld [vmem:[%s0 + $0x10] sm:$0xff]
    %v84 = vld [vmem:[%s0 + $0x18] sm:$0xff]
    %v85 = vld [vmem:[%s0 + $0x20] sm:$0xff]
    %v86 = vld [vmem:[%s0 + $0x28] sm:$0xff]
    %v87 = vld [vmem:[%s0 + $0x30] sm:$0xff]
    %v88 = vld [vmem:[%s0 + $0x38] sm:$0xff]
    %v89 = vld [vmem:[%s0 + $0x40] sm:$0xff]
    %v90 = vld [vmem:[%s0 + $0x48] sm:$0xff]
    %v91 = vld [vmem:[%s0 + $0x50] sm:$0xff]
    %v92 = vld [vmem:[%s0 + $0x58] sm:$0xff]
    %v93 = vld [vmem:[%s0 + $0x60] sm:$0xff]
    %v94 = vld [vmem:[%s0 + $0x68] sm:$0xff]
    %v95 = vld [vmem:[%s0 + $0x70] sm:$0xff]
    %v96 = vld [vmem:[%s0 + $0x78] sm:$0xff]
    %v97 = vld [vmem:[%s0 + $0x80] sm:$0xff]
    %v98 = vld [vmem:[%s0 + $0x88] sm:$0xff]
    %v99 = vld [vmem:[%s0 + $0x90] sm:$0xff]
    %v100 = vld [vmem:[%s0 + $0x98] sm:$0xff]
    %v101 = vld [vmem:[%s0 + $0xa0] sm:$0xff]
    %v102 = vld [vmem:[%s0 + $0xa8] sm:$0xff]
    %v103 = vld [vmem:[%s0 + $0xb0] sm:$0xff]
    %v104 = vld [vmem:[%s0 + $0xb8] sm:$0xff]
    %v105 = vld [vmem:[%s0 + $0xc0] sm:$0xff]
    %v106 = vld [vmem:[%s0 + $0xc8] sm:$0xff]
    %v107 = vld [vmem:[%s0 + $0xd0] sm:$0xff]
    %v108 = vld [vmem:[%s0 + $0xd8] sm:$0xff]
    %v109 = vld [vmem:[%s0 + $0xe0] sm:$0xff]
    %v110 = vld [vmem:[%s0 + $0xe8] sm:$0xff]
    %v111 = vld [vmem:[%s0 + $0xf0] sm:$0xff]
    %v112 = vld [vmem:[%s0 + $0xf8] sm:$0xff]
    %v113 = vld [vmem:[%s0 + $0x100] sm:$0xff]
    %v114 = vld [vmem:[%s0 + $0x108] sm:$0xff]
    %v115 = vld [vmem:[%s0 + $0x110] sm:$0xff]
    %v116 = vld [vmem:[%s0 + $0x118] sm:$0xff]
    %v117 = vld [vmem:[%s0 + $0x120] sm:$0xff]
    %v118 = vld [vmem:[%s0 + $0x128] sm:$0xff]
    %v119 = vld [vmem:[%s0 + $0x130] sm:$0xff]
    %v120 = vld [vmem:[%s0 + $0x138] sm:$0xff]
    %v121 = vld [vmem:[%s0 + $0x140] sm:$0xff]
    %v122 = vld [vmem:[%s0 + $0x148] sm:$0xff]
    %v123 = vld [vmem:[%s0 + $0x150] sm:$0xff]
    %v124 = vld [vmem:[%s0 + $0x158] sm:$0xff]
    %v125 = vld [vmem:[%s0 + $0x160] sm:$0xff]
    %v126 = vld [vmem:[%s0 + $0x168] sm:$0xff]
    %v127 = vld [vmem:[%s0 + $0x170] sm:$0xff]
    %v128 = vld [vmem:[%s0 + $0x178] sm:$0xff]
    %v129 = vld [vmem:[%s0 + $0x180] sm:$0xff]
    %v130 = vld [vmem:[%s0 + $0x188] sm:$0xff]
    %v131 = vld [vmem:[%s0 + $0x190] sm:$0xff]
    %v132 = vld [vmem:[%s0 + $0x198] sm:$0xff]
    %v133 = vld [vmem:[%s0 + $0x1a0] sm:$0xff]
    %v134 = vld [vmem:[%s0 + $0x1a8] sm:$0xff]
    %v135 = vld [vmem:[%s0 + $0x1b0] sm:$0xff]
    %v136 = vld [vmem:[%s0 + $0x1b8] sm:$0xff]
    %v137 = vld [vmem:[%s0 + $0x1c0] sm:$0xff]
    %v138 = vld [vmem:[%s0 + $0x1c8] sm:$0xff]
    %v139 = vld [vmem:[%s0 + $0x1d0] sm:$0xff]
    %v140 = vld [vmem:[%s0 + $0x1d8] sm:$0xff]
    %v141 = vld [vmem:[%s0 + $0x1e0] sm:$0xff]
    %v142 = vld [vmem:[%s0 + $0x1e8] sm:$0xff]
    %v143 = vld [vmem:[%s0 + $0x1f0] sm:$0xff]
    %v144 = vld [vmem:[%s0 + $0x1f8] sm:$0xff]
    %v145 = vld [vmem:[%s3] sm:$0xff]
    %v146 = vld [vmem:[%s3 + $0x8] sm:$0xff]
    %v147 = vld [vmem:[%s3 + $0x10] sm:$0xff]
    %v148 = vld [vmem:[%s3 + $0x18] sm:$0xff]
    %v149 = vld [vmem:[%s3 + $0x20] sm:$0xff]
    %v150 = vld [vmem:[%s3 + $0x28] sm:$0xff]
    %v151 = vld [vmem:[%s3 + $0x30] sm:$0xff]
    %v152 = vld [vmem:[%s3 + $0x38] sm:$0xff]
    %v153 = vld [vmem:[%s3 + $0x40] sm:$0xff]
    %v154 = vld [vmem:[%s3 + $0x48] sm:$0xff]
    %v155 = vld [vmem:[%s3 + $0x50] sm:$0xff]
    %v156 = vld [vmem:[%s3 + $0x58] sm:$0xff]
    %v157 = vld [vmem:[%s3 + $0x60] sm:$0xff]
    %v158 = vld [vmem:[%s3 + $0x68] sm:$0xff]
    %v159 = vld [vmem:[%s3 + $0x70] sm:$0xff]
    %v160 = vld [vmem:[%s3 + $0x78] sm:$0xff]
    %v161 = vld [vmem:[%s3 + $0x80] sm:$0xff]
    %v162 = vld [vmem:[%s3 + $0x88] sm:$0xff]
    %v163 = vld [vmem:[%s3 + $0x90] sm:$0xff]
    %v164 = vld [vmem:[%s3 + $0x98] sm:$0xff]
    %v165 = vld [vmem:[%s3 + $0xa0] sm:$0xf]
    %v166 = vld [vmem:[%s3 + $0xa8] sm:$0xf]
    %v167 = vld [vmem:[%s3 + $0xb0] sm:$0xf]
    %v168 = vld [vmem:[%s3 + $0xb8] sm:$0xf]
    %v169 = vld [vmem:[%s3 + $0xc0] sm:$0xf]
    %v171 = vlaneseq
    %v172 = vshrl.u32 %v171, 7
    %v173 = vsub.s32 0, %v172
    %v174 = vrot.slane %v39, %v173
    %v175 = vlaneseq
    %v176 = vshrl.u32 %v175, 7
    %v177 = vsub.s32 1, %v176
    %v178 = vrot.slane %v39, %v177
    %v179 = vlaneseq
    %v180 = vshrl.u32 %v179, 7
    %v181 = vsub.s32 2, %v180
    %v182 = vrot.slane %v39, %v181
    %v183 = vlaneseq
    %v184 = vshrl.u32 %v183, 7
    %v185 = vsub.s32 3, %v184
    %v186 = vrot.slane %v39, %v185
    %v187 = vlaneseq
    %v188 = vshrl.u32 %v187, 7
    %v189 = vsub.s32 4, %v188
    %v190 = vrot.slane %v39, %v189
    %vm196 = vcmask 293888
    %v198 = vsel %vm196, %v81, 0
    %v201 = vsel %vm196, %v82, 0
    %v204 = vsel %vm196, %v83, 0
    %v207 = vsel %vm196, %v84, 0
    %v210 = vsel %vm196, %v85, 0
    %v213 = vsel %vm196, %v86, 0
    %v216 = vsel %vm196, %v87, 0
    %v219 = vsel %vm196, %v88, 0
    %v222 = vsel %vm196, %v89, 0
    %v225 = vsel %vm196, %v90, 0
    %v228 = vsel %vm196, %v91, 0
    %v231 = vsel %vm196, %v92, 0
    %v234 = vsel %vm196, %v93, 0
    %v237 = vsel %vm196, %v94, 0
    %v240 = vsel %vm196, %v95, 0
    %v243 = vsel %vm196, %v96, 0
    %v246 = vsel %vm196, %v97, 0
    %v249 = vsel %vm196, %v98, 0
    %v252 = vsel %vm196, %v99, 0
    %v255 = vsel %vm196, %v100, 0
    %v258 = vsel %vm196, %v101, 0
    %v261 = vsel %vm196, %v102, 0
    %v264 = vsel %vm196, %v103, 0
    %v267 = vsel %vm196, %v104, 0
    %v270 = vsel %vm196, %v105, 0
    %v273 = vsel %vm196, %v106, 0
    %v276 = vsel %vm196, %v107, 0
    %v279 = vsel %vm196, %v108, 0
    %v282 = vsel %vm196, %v109, 0
    %v285 = vsel %vm196, %v110, 0
    %v288 = vsel %vm196, %v111, 0
    %v291 = vsel %vm196, %v112, 0
    %v294 = vsel %vm196, %v113, 0
    %v297 = vsel %vm196, %v114, 0
    %v300 = vsel %vm196, %v115, 0
    %v303 = vsel %vm196, %v116, 0
    %v306 = vsel %vm196, %v117, 0
    %v309 = vsel %vm196, %v118, 0
    %v312 = vsel %vm196, %v119, 0
    %v315 = vsel %vm196, %v120, 0
    %v318 = vsel %vm196, %v121, 0
    %v321 = vsel %vm196, %v122, 0
    %v324 = vsel %vm196, %v123, 0
    %v327 = vsel %vm196, %v124, 0
    %v330 = vsel %vm196, %v125, 0
    %v333 = vsel %vm196, %v126, 0
    %v336 = vsel %vm196, %v127, 0
    %v339 = vsel %vm196, %v128, 0
    %v342 = vsel %vm196, %v129, 0
    %v345 = vsel %vm196, %v130, 0
    %v348 = vsel %vm196, %v131, 0
    %v351 = vsel %vm196, %v132, 0
    %v354 = vsel %vm196, %v133, 0
    %v357 = vsel %vm196, %v134, 0
    %v360 = vsel %vm196, %v135, 0
    %v363 = vsel %vm196, %v136, 0
    %v366 = vsel %vm196, %v137, 0
    %v369 = vsel %vm196, %v138, 0
    %v372 = vsel %vm196, %v139, 0
    %v375 = vsel %vm196, %v140, 0
    %v378 = vsel %vm196, %v141, 0
    %v381 = vsel %vm196, %v142, 0
    %v384 = vsel %vm196, %v143, 0
    %v387 = vsel %vm196, %v144, 0
    %vm389 = vcmask 1043456
    %v391 = vsel %vm389, %v165, 0
    %v394 = vsel %vm389, %v166, 0
    %v397 = vsel %vm389, %v167, 0
    %v400 = vsel %vm389, %v168, 0
    %v403 = vsel %vm389, %v169, 0
    %405 = vmatprep.subr.mxu0 %v146
    %406 = vmatpush1.msra.mxu0 %v145
    %407 = vmatprep.subr.mxu0 %v151
    %408 = vmatpush1.msra.mxu0 %v150
    %409 = vmatprep.subr.mxu0 %v156
    %410 = vmatpush1.msra.mxu0 %v155
    %411 = vmatprep.subr.mxu0 %v161
    %412 = vmatpush1.msra.mxu0 %v160
    %413 = vmatprep.subr.mxu0 %v394
    %414 = vmatpush1.msra.mxu0 %v391
    %415 = vmatprep.subr.mxu0 0.0
    %416 = vmatpush1.msra.mxu0 0.0
    %417 = vmatprep.subr.mxu0 0.0
    %418 = vmatpush1.msra.mxu0 0.0
    %419 = vmatprep.subr.mxu0 0.0
    %420 = vmatpush1.msra.mxu0 0.0
    %421 = vmatprep.subr.mxu0 0.0
    %422 = vmatpush1.msra.mxu0 0.0
    %423 = vmatprep.subr.mxu0 0.0
    %424 = vmatpush1.msra.mxu0 0.0
    %425 = vmatprep.subr.mxu0 0.0
    %426 = vmatpush1.msra.mxu0 0.0
    %427 = vmatprep.subr.mxu0 0.0
    %428 = vmatpush1.msra.mxu0 0.0
    %429 = vmatprep.subr.mxu0 0.0
    %430 = vmatpush1.msra.mxu0 0.0
    %431 = vmatprep.subr.mxu0 0.0
    %432 = vmatpush1.msra.mxu0 0.0
    %433 = vmatprep.subr.mxu0 0.0
    %434 = vmatpush1.msra.mxu0 0.0
    %435 = vmatprep.subr.mxu0 0.0
    %436 = vmatpush1.msra.mxu0 0.0
    %437 = vmatprep.subr.mxu0 0.0
    %438 = vmatpush1.msra.mxu0 0.0
    %439 = vmatprep.subr.mxu0 0.0
    %440 = vmatpush1.msra.mxu0 0.0
    %441 = vmatprep.subr.mxu0 0.0
    %442 = vmatpush1.msra.mxu0 0.0
    %443 = vmatprep.subr.mxu0 0.0
    %444 = vmatpush1.msra.mxu0 0.0
    %445 = vmatprep.subr.mxu0 0.0
    %446 = vmatpush1.msra.mxu0 0.0
    %447 = vmatprep.subr.mxu0 0.0
    %448 = vmatpush1.msra.mxu0 0.0
    %449 = vmatprep.subr.mxu0 0.0
    %450 = vmatpush1.msra.mxu0 0.0
    %451 = vmatprep.subr.mxu0 0.0
    %452 = vmatpush1.msra.mxu0 0.0
    %453 = vmatprep.subr.mxu0 0.0
    %454 = vmatpush1.msra.mxu0 0.0
    %455 = vmatprep.subr.mxu0 0.0
    %456 = vmatpush1.msra.mxu0 0.0
    %457 = vmatprep.subr.mxu0 0.0
    %458 = vmatpush1.msra.mxu0 0.0
    %459 = vmatprep.subr.mxu0 0.0
    %460 = vmatpush1.msra.mxu0 0.0
    %461 = vmatprep.subr.mxu0 0.0
    %462 = vmatpush1.msra.mxu0 0.0
    %463 = vmatprep.subr.mxu0 0.0
    %464 = vmatpush1.msra.mxu0 0.0
    %465 = vmatprep.subr.mxu0 0.0
    %466 = vmatpush1.msra.mxu0 0.0
    %467 = vmatprep.subr.mxu0 0.0
    %468 = vmatpush1.msra.mxu0 0.0
    %469 = vmatprep.mubr.f32.mxu0 0.0
    %470 = vmatmul.mubr.f32.gmra.mrb[0].mxu0 %v198
    %v471 = vpop.f32.mrb[0].mxu0
    %v472 = vadd.f32 %v174, %v471
    %v473 = vpop.f32.mrb[0].mxu0
    %v474 = vadd.f32 %v178, %v473
    %475 = vmatprep.mubr.f32.mxu0 0.0
    %476 = vmatmul.mubr.f32.gmra.mrb[0].mxu0 %v201
    %v477 = vpop.f32.mrb[0].mxu0
    %v478 = vadd.f32 %v174, %v477
    %v479 = vpop.f32.mrb[0].mxu0
    %v480 = vadd.f32 %v178, %v479
    %481 = vmatprep.mubr.f32.mxu0 0.0
    %482 = vmatmul.mubr.f32.gmra.mrb[0].mxu0 %v204
    %v483 = vpop.f32.mrb[0].mxu0
    %v484 = vadd.f32 %v174, %v483
    %v485 = vpop.f32.mrb[0].mxu0
    %v486 = vadd.f32 %v178, %v485
    %487 = vmatprep.mubr.f32.mxu0 0.0
    %488 = vmatmul.mubr.f32.gmra.mrb[0].mxu0 %v207
    %v489 = vpop.f32.mrb[0].mxu0
    %v490 = vadd.f32 %v174, %v489
    %v491 = vpop.f32.mrb[0].mxu0
    %v492 = vadd.f32 %v178, %v491
    %493 = vmatprep.mubr.f32.mxu0 0.0
    %494 = vmatmul.mubr.f32.gmra.mrb[0].mxu0 %v210
    %v495 = vpop.f32.mrb[0].mxu0
    %v496 = vadd.f32 %v174, %v495
    %v497 = vpop.f32.mrb[0].mxu0
    %v498 = vadd.f32 %v178, %v497
    %499 = vmatprep.mubr.f32.mxu0 0.0
    %500 = vmatmul.mubr.f32.gmra.mrb[0].mxu0 %v213
    %v501 = vpop.f32.mrb[0].mxu0
    %v502 = vadd.f32 %v174, %v501
    %v503 = vpop.f32.mrb[0].mxu0
    %v504 = vadd.f32 %v178, %v503
    %505 = vmatprep.mubr.f32.mxu0 0.0
    %506 = vmatmul.mubr.f32.gmra.mrb[0].mxu0 %v216
    %v507 = vpop.f32.mrb[0].mxu0
    %v508 = vadd.f32 %v174, %v507
    %v509 = vpop.f32.mrb[0].mxu0
    %v510 = vadd.f32 %v178, %v509
    %511 = vmatprep.mubr.f32.mxu0 0.0
    %512 = vmatmul.mubr.f32.gmra.mrb[0].mxu0 %v219
    %v513 = vpop.f32.mrb[0].mxu0
    %v514 = vadd.f32 %v174, %v513
    %v515 = vpop.f32.mrb[0].mxu0
    %v516 = vadd.f32 %v178, %v515
    %517 = vmatprep.mubr.f32.mxu0 0.0
    %518 = vmatmul.mubr.f32.gmra.mrb[0].mxu0 %v222
    %v519 = vpop.f32.mrb[0].mxu0
    %v520 = vadd.f32 %v174, %v519
    %v521 = vpop.f32.mrb[0].mxu0
    %v522 = vadd.f32 %v178, %v521
    %523 = vmatprep.mubr.f32.mxu0 0.0
    %524 = vmatmul.mubr.f32.gmra.mrb[0].mxu0 %v225
    %v525 = vpop.f32.mrb[0].mxu0
    %v526 = vadd.f32 %v174, %v525
    %v527 = vpop.f32.mrb[0].mxu0
    %v528 = vadd.f32 %v178, %v527
    %529 = vmatprep.mubr.f32.mxu0 0.0
    %530 = vmatmul.mubr.f32.gmra.mrb[0].mxu0 %v228
    %v531 = vpop.f32.mrb[0].mxu0
    %v532 = vadd.f32 %v174, %v531
    %v533 = vpop.f32.mrb[0].mxu0
    %v534 = vadd.f32 %v178, %v533
    %535 = vmatprep.mubr.f32.mxu0 0.0
    %536 = vmatmul.mubr.f32.gmra.mrb[0].mxu0 %v231
    %v537 = vpop.f32.mrb[0].mxu0
    %v538 = vadd.f32 %v174, %v537
    %v539 = vpop.f32.mrb[0].mxu0
    %v540 = vadd.f32 %v178, %v539
    %541 = vmatprep.mubr.f32.mxu0 0.0
    %542 = vmatmul.mubr.f32.gmra.mrb[0].mxu0 %v234
    %v543 = vpop.f32.mrb[0].mxu0
    %v544 = vadd.f32 %v174, %v543
    %v545 = vpop.f32.mrb[0].mxu0
    %v546 = vadd.f32 %v178, %v545
    %547 = vmatprep.mubr.f32.mxu0 0.0
    %548 = vmatmul.mubr.f32.gmra.mrb[0].mxu0 %v237
    %v549 = vpop.f32.mrb[0].mxu0
    %v550 = vadd.f32 %v174, %v549
    %v551 = vpop.f32.mrb[0].mxu0
    %v552 = vadd.f32 %v178, %v551
    %553 = vmatprep.mubr.f32.mxu0 0.0
    %554 = vmatmul.mubr.f32.gmra.mrb[0].mxu0 %v240
    %v555 = vpop.f32.mrb[0].mxu0
    %v556 = vadd.f32 %v174, %v555
    %v557 = vpop.f32.mrb[0].mxu0
    %v558 = vadd.f32 %v178, %v557
    %559 = vmatprep.mubr.f32.mxu0 0.0
    %560 = vmatmul.mubr.f32.gmra.mrb[0].mxu0 %v243
    %v561 = vpop.f32.mrb[0].mxu0
    %v562 = vadd.f32 %v174, %v561
    %v563 = vpop.f32.mrb[0].mxu0
    %v564 = vadd.f32 %v178, %v563
    %565 = vmatprep.mubr.f32.mxu0 0.0
    %566 = vmatmul.mubr.f32.gmra.mrb[0].mxu0 %v246
    %v567 = vpop.f32.mrb[0].mxu0
    %v568 = vadd.f32 %v174, %v567
    %v569 = vpop.f32.mrb[0].mxu0
    %v570 = vadd.f32 %v178, %v569
    %571 = vmatprep.mubr.f32.mxu0 0.0
    %572 = vmatmul.mubr.f32.gmra.mrb[0].mxu0 %v249
    %v573 = vpop.f32.mrb[0].mxu0
    %v574 = vadd.f32 %v174, %v573
    %v575 = vpop.f32.mrb[0].mxu0
    %v576 = vadd.f32 %v178, %v575
    %577 = vmatprep.mubr.f32.mxu0 0.0
    %578 = vmatmul.mubr.f32.gmra.mrb[0].mxu0 %v252
    %v579 = vpop.f32.mrb[0].mxu0
    %v580 = vadd.f32 %v174, %v579
    %v581 = vpop.f32.mrb[0].mxu0
    %v582 = vadd.f32 %v178, %v581
    %583 = vmatprep.mubr.f32.mxu0 0.0
    %584 = vmatmul.mubr.f32.gmra.mrb[0].mxu0 %v255
    %v585 = vpop.f32.mrb[0].mxu0
    %v586 = vadd.f32 %v174, %v585
    %v587 = vpop.f32.mrb[0].mxu0
    %v588 = vadd.f32 %v178, %v587
    %589 = vmatprep.mubr.f32.mxu0 0.0
    %590 = vmatmul.mubr.f32.gmra.mrb[0].mxu0 %v258
    %v591 = vpop.f32.mrb[0].mxu0
    %v592 = vadd.f32 %v174, %v591
    %v593 = vpop.f32.mrb[0].mxu0
    %v594 = vadd.f32 %v178, %v593
    %595 = vmatprep.mubr.f32.mxu0 0.0
    %596 = vmatmul.mubr.f32.gmra.mrb[0].mxu0 %v261
    %v597 = vpop.f32.mrb[0].mxu0
    %v598 = vadd.f32 %v174, %v597
    %v599 = vpop.f32.mrb[0].mxu0
    %v600 = vadd.f32 %v178, %v599
    %601 = vmatprep.mubr.f32.mxu0 0.0
    %602 = vmatmul.mubr.f32.gmra.mrb[0].mxu0 %v264
    %v603 = vpop.f32.mrb[0].mxu0
    %v604 = vadd.f32 %v174, %v603
    %v605 = vpop.f32.mrb[0].mxu0
    %v606 = vadd.f32 %v178, %v605
    %607 = vmatprep.mubr.f32.mxu0 0.0
    %608 = vmatmul.mubr.f32.gmra.mrb[0].mxu0 %v267
    %v609 = vpop.f32.mrb[0].mxu0
    %v610 = vadd.f32 %v174, %v609
    %v611 = vpop.f32.mrb[0].mxu0
    %v612 = vadd.f32 %v178, %v611
    %613 = vmatprep.mubr.f32.mxu0 0.0
    %614 = vmatmul.mubr.f32.gmra.mrb[0].mxu0 %v270
    %v615 = vpop.f32.mrb[0].mxu0
    %v616 = vadd.f32 %v174, %v615
    %v617 = vpop.f32.mrb[0].mxu0
    %v618 = vadd.f32 %v178, %v617
    %619 = vmatprep.mubr.f32.mxu0 0.0
    %620 = vmatmul.mubr.f32.gmra.mrb[0].mxu0 %v273
    %v621 = vpop.f32.mrb[0].mxu0
    %v622 = vadd.f32 %v174, %v621
    %v623 = vpop.f32.mrb[0].mxu0
    %v624 = vadd.f32 %v178, %v623
    %625 = vmatprep.mubr.f32.mxu0 0.0
    %626 = vmatmul.mubr.f32.gmra.mrb[0].mxu0 %v276
    %v627 = vpop.f32.mrb[0].mxu0
    %v628 = vadd.f32 %v174, %v627
    %v629 = vpop.f32.mrb[0].mxu0
    %v630 = vadd.f32 %v178, %v629
    %631 = vmatprep.mubr.f32.mxu0 0.0
    %632 = vmatmul.mubr.f32.gmra.mrb[0].mxu0 %v279
    %v633 = vpop.f32.mrb[0].mxu0
    %v634 = vadd.f32 %v174, %v633
    %v635 = vpop.f32.mrb[0].mxu0
    %v636 = vadd.f32 %v178, %v635
    %637 = vmatprep.mubr.f32.mxu0 0.0
    %638 = vmatmul.mubr.f32.gmra.mrb[0].mxu0 %v282
    %v639 = vpop.f32.mrb[0].mxu0
    %v640 = vadd.f32 %v174, %v639
    %v641 = vpop.f32.mrb[0].mxu0
    %v642 = vadd.f32 %v178, %v641
    %643 = vmatprep.mubr.f32.mxu0 0.0
    %644 = vmatmul.mubr.f32.gmra.mrb[0].mxu0 %v285
    %v645 = vpop.f32.mrb[0].mxu0
    %v646 = vadd.f32 %v174, %v645
    %v647 = vpop.f32.mrb[0].mxu0
    %v648 = vadd.f32 %v178, %v647
    %649 = vmatprep.mubr.f32.mxu0 0.0
    %650 = vmatmul.mubr.f32.gmra.mrb[0].mxu0 %v288
    %v651 = vpop.f32.mrb[0].mxu0
    %v652 = vadd.f32 %v174, %v651
    %v653 = vpop.f32.mrb[0].mxu0
    %v654 = vadd.f32 %v178, %v653
    %655 = vmatprep.mubr.f32.mxu0 0.0
    %656 = vmatmul.mubr.f32.gmra.mrb[0].mxu0 %v291
    %v657 = vpop.f32.mrb[0].mxu0
    %v658 = vadd.f32 %v174, %v657
    %v659 = vpop.f32.mrb[0].mxu0
    %v660 = vadd.f32 %v178, %v659
    %661 = vmatprep.mubr.f32.mxu0 0.0
    %662 = vmatmul.mubr.f32.gmra.mrb[0].mxu0 %v294
    %v663 = vpop.f32.mrb[0].mxu0
    %v664 = vadd.f32 %v174, %v663
    %v665 = vpop.f32.mrb[0].mxu0
    %v666 = vadd.f32 %v178, %v665
    %667 = vmatprep.mubr.f32.mxu0 0.0
    %668 = vmatmul.mubr.f32.gmra.mrb[0].mxu0 %v297
    %v669 = vpop.f32.mrb[0].mxu0
    %v670 = vadd.f32 %v174, %v669
    %v671 = vpop.f32.mrb[0].mxu0
    %v672 = vadd.f32 %v178, %v671
    %673 = vmatprep.mubr.f32.mxu0 0.0
    %674 = vmatmul.mubr.f32.gmra.mrb[0].mxu0 %v300
    %v675 = vpop.f32.mrb[0].mxu0
    %v676 = vadd.f32 %v174, %v675
    %v677 = vpop.f32.mrb[0].mxu0
    %v678 = vadd.f32 %v178, %v677
    %679 = vmatprep.mubr.f32.mxu0 0.0
    %680 = vmatmul.mubr.f32.gmra.mrb[0].mxu0 %v303
    %v681 = vpop.f32.mrb[0].mxu0
    %v682 = vadd.f32 %v174, %v681
    %v683 = vpop.f32.mrb[0].mxu0
    %v684 = vadd.f32 %v178, %v683
    %685 = vmatprep.mubr.f32.mxu0 0.0
    %686 = vmatmul.mubr.f32.gmra.mrb[0].mxu0 %v306
    %v687 = vpop.f32.mrb[0].mxu0
    %v688 = vadd.f32 %v174, %v687
    %v689 = vpop.f32.mrb[0].mxu0
    %v690 = vadd.f32 %v178, %v689
    %691 = vmatprep.mubr.f32.mxu0 0.0
    %692 = vmatmul.mubr.f32.gmra.mrb[0].mxu0 %v309
    %v693 = vpop.f32.mrb[0].mxu0
    %v694 = vadd.f32 %v174, %v693
    %v695 = vpop.f32.mrb[0].mxu0
    %v696 = vadd.f32 %v178, %v695
    %697 = vmatprep.mubr.f32.mxu0 0.0
    %698 = vmatmul.mubr.f32.gmra.mrb[0].mxu0 %v312
    %v699 = vpop.f32.mrb[0].mxu0
    %v700 = vadd.f32 %v174, %v699
    %v701 = vpop.f32.mrb[0].mxu0
    %v702 = vadd.f32 %v178, %v701
    %703 = vmatprep.mubr.f32.mxu0 0.0
    %704 = vmatmul.mubr.f32.gmra.mrb[0].mxu0 %v315
    %v705 = vpop.f32.mrb[0].mxu0
    %v706 = vadd.f32 %v174, %v705
    %v707 = vpop.f32.mrb[0].mxu0
    %v708 = vadd.f32 %v178, %v707
    %709 = vmatprep.mubr.f32.mxu0 0.0
    %710 = vmatmul.mubr.f32.gmra.mrb[0].mxu0 %v318
    %v711 = vpop.f32.mrb[0].mxu0
    %v712 = vadd.f32 %v174, %v711
    %v713 = vpop.f32.mrb[0].mxu0
    %v714 = vadd.f32 %v178, %v713
    %715 = vmatprep.mubr.f32.mxu0 0.0
    %716 = vmatmul.mubr.f32.gmra.mrb[0].mxu0 %v321
    %v717 = vpop.f32.mrb[0].mxu0
    %v718 = vadd.f32 %v174, %v717
    %v719 = vpop.f32.mrb[0].mxu0
    %v720 = vadd.f32 %v178, %v719
    %721 = vmatprep.mubr.f32.mxu0 0.0
    %722 = vmatmul.mubr.f32.gmra.mrb[0].mxu0 %v324
    %v723 = vpop.f32.mrb[0].mxu0
    %v724 = vadd.f32 %v174, %v723
    %v725 = vpop.f32.mrb[0].mxu0
    %v726 = vadd.f32 %v178, %v725
    %727 = vmatprep.mubr.f32.mxu0 0.0
    %728 = vmatmul.mubr.f32.gmra.mrb[0].mxu0 %v327
    %v729 = vpop.f32.mrb[0].mxu0
    %v730 = vadd.f32 %v174, %v729
    %v731 = vpop.f32.mrb[0].mxu0
    %v732 = vadd.f32 %v178, %v731
    %733 = vmatprep.mubr.f32.mxu0 0.0
    %734 = vmatmul.mubr.f32.gmra.mrb[0].mxu0 %v330
    %v735 = vpop.f32.mrb[0].mxu0
    %v736 = vadd.f32 %v174, %v735
    %v737 = vpop.f32.mrb[0].mxu0
    %v738 = vadd.f32 %v178, %v737
    %739 = vmatprep.mubr.f32.mxu0 0.0
    %740 = vmatmul.mubr.f32.gmra.mrb[0].mxu0 %v333
    %v741 = vpop.f32.mrb[0].mxu0
    %v742 = vadd.f32 %v174, %v741
    %v743 = vpop.f32.mrb[0].mxu0
    %v744 = vadd.f32 %v178, %v743
    %745 = vmatprep.mubr.f32.mxu0 0.0
    %746 = vmatmul.mubr.f32.gmra.mrb[0].mxu0 %v336
    %v747 = vpop.f32.mrb[0].mxu0
    %v748 = vadd.f32 %v174, %v747
    %v749 = vpop.f32.mrb[0].mxu0
    %v750 = vadd.f32 %v178, %v749
    %751 = vmatprep.mubr.f32.mxu0 0.0
    %752 = vmatmul.mubr.f32.gmra.mrb[0].mxu0 %v339
    %v753 = vpop.f32.mrb[0].mxu0
    %v754 = vadd.f32 %v174, %v753
    %v755 = vpop.f32.mrb[0].mxu0
    %v756 = vadd.f32 %v178, %v755
    %757 = vmatprep.mubr.f32.mxu0 0.0
    %758 = vmatmul.mubr.f32.gmra.mrb[0].mxu0 %v342
    %v759 = vpop.f32.mrb[0].mxu0
    %v760 = vadd.f32 %v174, %v759
    %v761 = vpop.f32.mrb[0].mxu0
    %v762 = vadd.f32 %v178, %v761
    %763 = vmatprep.mubr.f32.mxu0 0.0
    %764 = vmatmul.mubr.f32.gmra.mrb[0].mxu0 %v345
    %v765 = vpop.f32.mrb[0].mxu0
    %v766 = vadd.f32 %v174, %v765
    %v767 = vpop.f32.mrb[0].mxu0
    %v768 = vadd.f32 %v178, %v767
    %769 = vmatprep.mubr.f32.mxu0 0.0
    %770 = vmatmul.mubr.f32.gmra.mrb[0].mxu0 %v348
    %v771 = vpop.f32.mrb[0].mxu0
    %v772 = vadd.f32 %v174, %v771
    %v773 = vpop.f32.mrb[0].mxu0
    %v774 = vadd.f32 %v178, %v773
    %775 = vmatprep.mubr.f32.mxu0 0.0
    %776 = vmatmul.mubr.f32.gmra.mrb[0].mxu0 %v351
    %v777 = vpop.f32.mrb[0].mxu0
    %v778 = vadd.f32 %v174, %v777
    %v779 = vpop.f32.mrb[0].mxu0
    %v780 = vadd.f32 %v178, %v779
    %781 = vmatprep.mubr.f32.mxu0 0.0
    %782 = vmatmul.mubr.f32.gmra.mrb[0].mxu0 %v354
    %v783 = vpop.f32.mrb[0].mxu0
    %v784 = vadd.f32 %v174, %v783
    %v785 = vpop.f32.mrb[0].mxu0
    %v786 = vadd.f32 %v178, %v785
    %787 = vmatprep.mubr.f32.mxu0 0.0
    %788 = vmatmul.mubr.f32.gmra.mrb[0].mxu0 %v357
    %v789 = vpop.f32.mrb[0].mxu0
    %v790 = vadd.f32 %v174, %v789
    %v791 = vpop.f32.mrb[0].mxu0
    %v792 = vadd.f32 %v178, %v791
    %793 = vmatprep.mubr.f32.mxu0 0.0
    %794 = vmatmul.mubr.f32.gmra.mrb[0].mxu0 %v360
    %v795 = vpop.f32.mrb[0].mxu0
    %v796 = vadd.f32 %v174, %v795
    %v797 = vpop.f32.mrb[0].mxu0
    %v798 = vadd.f32 %v178, %v797
    %799 = vmatprep.mubr.f32.mxu0 0.0
    %800 = vmatmul.mubr.f32.gmra.mrb[0].mxu0 %v363
    %v801 = vpop.f32.mrb[0].mxu0
    %v802 = vadd.f32 %v174, %v801
    %v803 = vpop.f32.mrb[0].mxu0
    %v804 = vadd.f32 %v178, %v803
    %805 = vmatprep.mubr.f32.mxu0 0.0
    %806 = vmatmul.mubr.f32.gmra.mrb[0].mxu0 %v366
    %v807 = vpop.f32.mrb[0].mxu0
    %v808 = vadd.f32 %v174, %v807
    %v809 = vpop.f32.mrb[0].mxu0
    %v810 = vadd.f32 %v178, %v809
    %811 = vmatprep.mubr.f32.mxu0 0.0
    %812 = vmatmul.mubr.f32.gmra.mrb[0].mxu0 %v369
    %v813 = vpop.f32.mrb[0].mxu0
    %v814 = vadd.f32 %v174, %v813
    %v815 = vpop.f32.mrb[0].mxu0
    %v816 = vadd.f32 %v178, %v815
    %817 = vmatprep.mubr.f32.mxu0 0.0
    %818 = vmatmul.mubr.f32.gmra.mrb[0].mxu0 %v372
    %v819 = vpop.f32.mrb[0].mxu0
    %v820 = vadd.f32 %v174, %v819
    %v821 = vpop.f32.mrb[0].mxu0
    %v822 = vadd.f32 %v178, %v821
    %823 = vmatprep.mubr.f32.mxu0 0.0
    %824 = vmatmul.mubr.f32.gmra.mrb[0].mxu0 %v375
    %v825 = vpop.f32.mrb[0].mxu0
    %v826 = vadd.f32 %v174, %v825
    %v827 = vpop.f32.mrb[0].mxu0
    %v828 = vadd.f32 %v178, %v827
    %829 = vmatprep.mubr.f32.mxu0 0.0
    %830 = vmatmul.mubr.f32.gmra.mrb[0].mxu0 %v378
    %v831 = vpop.f32.mrb[0].mxu0
    %v832 = vadd.f32 %v174, %v831
    %v833 = vpop.f32.mrb[0].mxu0
    %v834 = vadd.f32 %v178, %v833
    %835 = vmatprep.mubr.f32.mxu0 0.0
    %836 = vmatmul.mubr.f32.gmra.mrb[0].mxu0 %v381
    %v837 = vpop.f32.mrb[0].mxu0
    %v838 = vadd.f32 %v174, %v837
    %v839 = vpop.f32.mrb[0].mxu0
    %v840 = vadd.f32 %v178, %v839
    %841 = vmatprep.mubr.f32.mxu0 0.0
    %842 = vmatmul.mubr.f32.gmra.mrb[0].mxu0 %v384
    %v843 = vpop.f32.mrb[0].mxu0
    %v844 = vadd.f32 %v174, %v843
    %v845 = vpop.f32.mrb[0].mxu0
    %v846 = vadd.f32 %v178, %v845
    %847 = vmatprep.mubr.f32.mxu0 0.0
    %848 = vmatmul.mubr.f32.gmra.mrb[0].mxu0 %v387
    %v849 = vpop.f32.mrb[0].mxu0
    %v850 = vadd.f32 %v174, %v849
    %v851 = vpop.f32.mrb[0].mxu0
    %v852 = vadd.f32 %v178, %v851
    %853 = vdwg.mxu0
    %854 = vmatprep.subr.mxu0 %v148
    %855 = vmatpush1.msra.mxu0 %v147
    %856 = vmatprep.subr.mxu0 %v153
    %857 = vmatpush1.msra.mxu0 %v152
    %858 = vmatprep.subr.mxu0 %v158
    %859 = vmatpush1.msra.mxu0 %v157
    %860 = vmatprep.subr.mxu0 %v163
    %861 = vmatpush1.msra.mxu0 %v162
    %862 = vmatprep.subr.mxu0 %v400
    %863 = vmatpush1.msra.mxu0 %v397
    %864 = vmatprep.subr.mxu0 0.0
    %865 = vmatpush1.msra.mxu0 0.0
    %866 = vmatprep.subr.mxu0 0.0
    %867 = vmatpush1.msra.mxu0 0.0
    %868 = vmatprep.subr.mxu0 0.0
    %869 = vmatpush1.msra.mxu0 0.0
    %870 = vmatprep.subr.mxu0 0.0
    %871 = vmatpush1.msra.mxu0 0.0
    %872 = vmatprep.subr.mxu0 0.0
    %873 = vmatpush1.msra.mxu0 0.0
    %874 = vmatprep.subr.mxu0 0.0
    %875 = vmatpush1.msra.mxu0 0.0
    %876 = vmatprep.subr.mxu0 0.0
    %877 = vmatpush1.msra.mxu0 0.0
    %878 = vmatprep.subr.mxu0 0.0
    %879 = vmatpush1.msra.mxu0 0.0
    %880 = vmatprep.subr.mxu0 0.0
    %881 = vmatpush1.msra.mxu0 0.0
    %882 = vmatprep.subr.mxu0 0.0
    %883 = vmatpush1.msra.mxu0 0.0
    %884 = vmatprep.subr.mxu0 0.0
    %885 = vmatpush1.msra.mxu0 0.0
    %886 = vmatprep.subr.mxu0 0.0
    %887 = vmatpush1.msra.mxu0 0.0
    %888 = vmatprep.subr.mxu0 0.0
    %889 = vmatpush1.msra.mxu0 0.0
    %890 = vmatprep.subr.mxu0 0.0
    %891 = vmatpush1.msra.mxu0 0.0
    %892 = vmatprep.subr.mxu0 0.0
    %893 = vmatpush1.msra.mxu0 0.0
    %894 = vmatprep.subr.mxu0 0.0
    %895 = vmatpush1.msra.mxu0 0.0
    %896 = vmatprep.subr.mxu0 0.0
    %897 = vmatpush1.msra.mxu0 0.0
    %898 = vmatprep.subr.mxu0 0.0
    %899 = vmatpush1.msra.mxu0 0.0
    %900 = vmatprep.subr.mxu0 0.0
    %901 = vmatpush1.msra.mxu0 0.0
    %902 = vmatprep.subr.mxu0 0.0
    %903 = vmatpush1.msra.mxu0 0.0
    %904 = vmatprep.subr.mxu0 0.0
    %905 = vmatpush1.msra.mxu0 0.0
    %906 = vmatprep.subr.mxu0 0.0
    %907 = vmatpush1.msra.mxu0 0.0
    %908 = vmatprep.subr.mxu0 0.0
    %909 = vmatpush1.msra.mxu0 0.0
    %910 = vmatprep.subr.mxu0 0.0
    %911 = vmatpush1.msra.mxu0 0.0
    %912 = vmatprep.subr.mxu0 0.0
    %913 = vmatpush1.msra.mxu0 0.0
    %914 = vmatprep.subr.mxu0 0.0
    %915 = vmatpush1.msra.mxu0 0.0
    %916 = vmatprep.subr.mxu0 0.0
    %917 = vmatpush1.msra.mxu0 0.0
    %918 = vmatprep.mubr.f32.mxu0 0.0
    %919 = vmatmul.mubr.f32.gmra.mrb[0].mxu0 %v198
    %v920 = vpop.f32.mrb[0].mxu0
    %v921 = vadd.f32 %v182, %v920
    %v922 = vpop.f32.mrb[0].mxu0
    %v923 = vadd.f32 %v186, %v922
    %924 = vmatprep.mubr.f32.mxu0 0.0
    %925 = vmatmul.mubr.f32.gmra.mrb[0].mxu0 %v201
    %v926 = vpop.f32.mrb[0].mxu0
    %v927 = vadd.f32 %v182, %v926
    %v928 = vpop.f32.mrb[0].mxu0
    %v929 = vadd.f32 %v186, %v928
    %930 = vmatprep.mubr.f32.mxu0 0.0
    %931 = vmatmul.mubr.f32.gmra.mrb[0].mxu0 %v204
    %v932 = vpop.f32.mrb[0].mxu0
    %v933 = vadd.f32 %v182, %v932
    %v934 = vpop.f32.mrb[0].mxu0
    %v935 = vadd.f32 %v186, %v934
    %936 = vmatprep.mubr.f32.mxu0 0.0
    %937 = vmatmul.mubr.f32.gmra.mrb[0].mxu0 %v207
    %v938 = vpop.f32.mrb[0].mxu0
    %v939 = vadd.f32 %v182, %v938
    %v940 = vpop.f32.mrb[0].mxu0
    %v941 = vadd.f32 %v186, %v940
    %942 = vmatprep.mubr.f32.mxu0 0.0
    %943 = vmatmul.mubr.f32.gmra.mrb[0].mxu0 %v210
    %v944 = vpop.f32.mrb[0].mxu0
    %v945 = vadd.f32 %v182, %v944
    %v946 = vpop.f32.mrb[0].mxu0
    %v947 = vadd.f32 %v186, %v946
    %948 = vmatprep.mubr.f32.mxu0 0.0
    %949 = vmatmul.mubr.f32.gmra.mrb[0].mxu0 %v213
    %v950 = vpop.f32.mrb[0].mxu0
    %v951 = vadd.f32 %v182, %v950
    %v952 = vpop.f32.mrb[0].mxu0
    %v953 = vadd.f32 %v186, %v952
    %954 = vmatprep.mubr.f32.mxu0 0.0
    %955 = vmatmul.mubr.f32.gmra.mrb[0].mxu0 %v216
    %v956 = vpop.f32.mrb[0].mxu0
    %v957 = vadd.f32 %v182, %v956
    %v958 = vpop.f32.mrb[0].mxu0
    %v959 = vadd.f32 %v186, %v958
    %960 = vmatprep.mubr.f32.mxu0 0.0
    %961 = vmatmul.mubr.f32.gmra.mrb[0].mxu0 %v219
    %v962 = vpop.f32.mrb[0].mxu0
    %v963 = vadd.f32 %v182, %v962
    %v964 = vpop.f32.mrb[0].mxu0
    %v965 = vadd.f32 %v186, %v964
    %966 = vmatprep.mubr.f32.mxu0 0.0
    %967 = vmatmul.mubr.f32.gmra.mrb[0].mxu0 %v222
    %v968 = vpop.f32.mrb[0].mxu0
    %v969 = vadd.f32 %v182, %v968
    %v970 = vpop.f32.mrb[0].mxu0
    %v971 = vadd.f32 %v186, %v970
    %972 = vmatprep.mubr.f32.mxu0 0.0
    %973 = vmatmul.mubr.f32.gmra.mrb[0].mxu0 %v225
    %v974 = vpop.f32.mrb[0].mxu0
    %v975 = vadd.f32 %v182, %v974
    %v976 = vpop.f32.mrb[0].mxu0
    %v977 = vadd.f32 %v186, %v976
    %978 = vmatprep.mubr.f32.mxu0 0.0
    %979 = vmatmul.mubr.f32.gmra.mrb[0].mxu0 %v228
    %v980 = vpop.f32.mrb[0].mxu0
    %v981 = vadd.f32 %v182, %v980
    %v982 = vpop.f32.mrb[0].mxu0
    %v983 = vadd.f32 %v186, %v982
    %984 = vmatprep.mubr.f32.mxu0 0.0
    %985 = vmatmul.mubr.f32.gmra.mrb[0].mxu0 %v231
    %v986 = vpop.f32.mrb[0].mxu0
    %v987 = vadd.f32 %v182, %v986
    %v988 = vpop.f32.mrb[0].mxu0
    %v989 = vadd.f32 %v186, %v988
    %990 = vmatprep.mubr.f32.mxu0 0.0
    %991 = vmatmul.mubr.f32.gmra.mrb[0].mxu0 %v234
    %v992 = vpop.f32.mrb[0].mxu0
    %v993 = vadd.f32 %v182, %v992
    %v994 = vpop.f32.mrb[0].mxu0
    %v995 = vadd.f32 %v186, %v994
    %996 = vmatprep.mubr.f32.mxu0 0.0
    %997 = vmatmul.mubr.f32.gmra.mrb[0].mxu0 %v237
    %v998 = vpop.f32.mrb[0].mxu0
    %v999 = vadd.f32 %v182, %v998
    %v1000 = vpop.f32.mrb[0].mxu0
    %v1001 = vadd.f32 %v186, %v1000
    %1002 = vmatprep.mubr.f32.mxu0 0.0
    %1003 = vmatmul.mubr.f32.gmra.mrb[0].mxu0 %v240
    %v1004 = vpop.f32.mrb[0].mxu0
    %v1005 = vadd.f32 %v182, %v1004
    %v1006 = vpop.f32.mrb[0].mxu0
    %v1007 = vadd.f32 %v186, %v1006
    %1008 = vmatprep.mubr.f32.mxu0 0.0
    %1009 = vmatmul.mubr.f32.gmra.mrb[0].mxu0 %v243
    %v1010 = vpop.f32.mrb[0].mxu0
    %v1011 = vadd.f32 %v182, %v1010
    %v1012 = vpop.f32.mrb[0].mxu0
    %v1013 = vadd.f32 %v186, %v1012
    %1014 = vmatprep.mubr.f32.mxu0 0.0
    %1015 = vmatmul.mubr.f32.gmra.mrb[0].mxu0 %v246
    %v1016 = vpop.f32.mrb[0].mxu0
    %v1017 = vadd.f32 %v182, %v1016
    %v1018 = vpop.f32.mrb[0].mxu0
    %v1019 = vadd.f32 %v186, %v1018
    %1020 = vmatprep.mubr.f32.mxu0 0.0
    %1021 = vmatmul.mubr.f32.gmra.mrb[0].mxu0 %v249
    %v1022 = vpop.f32.mrb[0].mxu0
    %v1023 = vadd.f32 %v182, %v1022
    %v1024 = vpop.f32.mrb[0].mxu0
    %v1025 = vadd.f32 %v186, %v1024
    %1026 = vmatprep.mubr.f32.mxu0 0.0
    %1027 = vmatmul.mubr.f32.gmra.mrb[0].mxu0 %v252
    %v1028 = vpop.f32.mrb[0].mxu0
    %v1029 = vadd.f32 %v182, %v1028
    %v1030 = vpop.f32.mrb[0].mxu0
    %v1031 = vadd.f32 %v186, %v1030
    %1032 = vmatprep.mubr.f32.mxu0 0.0
    %1033 = vmatmul.mubr.f32.gmra.mrb[0].mxu0 %v255
    %v1034 = vpop.f32.mrb[0].mxu0
    %v1035 = vadd.f32 %v182, %v1034
    %v1036 = vpop.f32.mrb[0].mxu0
    %v1037 = vadd.f32 %v186, %v1036
    %1038 = vmatprep.mubr.f32.mxu0 0.0
    %1039 = vmatmul.mubr.f32.gmra.mrb[0].mxu0 %v258
    %v1040 = vpop.f32.mrb[0].mxu0
    %v1041 = vadd.f32 %v182, %v1040
    %v1042 = vpop.f32.mrb[0].mxu0
    %v1043 = vadd.f32 %v186, %v1042
    %1044 = vmatprep.mubr.f32.mxu0 0.0
    %1045 = vmatmul.mubr.f32.gmra.mrb[0].mxu0 %v261
    %v1046 = vpop.f32.mrb[0].mxu0
    %v1047 = vadd.f32 %v182, %v1046
    %v1048 = vpop.f32.mrb[0].mxu0
    %v1049 = vadd.f32 %v186, %v1048
    %1050 = vmatprep.mubr.f32.mxu0 0.0
    %1051 = vmatmul.mubr.f32.gmra.mrb[0].mxu0 %v264
    %v1052 = vpop.f32.mrb[0].mxu0
    %v1053 = vadd.f32 %v182, %v1052
    %v1054 = vpop.f32.mrb[0].mxu0
    %v1055 = vadd.f32 %v186, %v1054
    %1056 = vmatprep.mubr.f32.mxu0 0.0
    %1057 = vmatmul.mubr.f32.gmra.mrb[0].mxu0 %v267
    %v1058 = vpop.f32.mrb[0].mxu0
    %v1059 = vadd.f32 %v182, %v1058
    %v1060 = vpop.f32.mrb[0].mxu0
    %v1061 = vadd.f32 %v186, %v1060
    %1062 = vmatprep.mubr.f32.mxu0 0.0
    %1063 = vmatmul.mubr.f32.gmra.mrb[0].mxu0 %v270
    %v1064 = vpop.f32.mrb[0].mxu0
    %v1065 = vadd.f32 %v182, %v1064
    %v1066 = vpop.f32.mrb[0].mxu0
    %v1067 = vadd.f32 %v186, %v1066
    %1068 = vmatprep.mubr.f32.mxu0 0.0
    %1069 = vmatmul.mubr.f32.gmra.mrb[0].mxu0 %v273
    %v1070 = vpop.f32.mrb[0].mxu0
    %v1071 = vadd.f32 %v182, %v1070
    %v1072 = vpop.f32.mrb[0].mxu0
    %v1073 = vadd.f32 %v186, %v1072
    %1074 = vmatprep.mubr.f32.mxu0 0.0
    %1075 = vmatmul.mubr.f32.gmra.mrb[0].mxu0 %v276
    %v1076 = vpop.f32.mrb[0].mxu0
    %v1077 = vadd.f32 %v182, %v1076
    %v1078 = vpop.f32.mrb[0].mxu0
    %v1079 = vadd.f32 %v186, %v1078
    %1080 = vmatprep.mubr.f32.mxu0 0.0
    %1081 = vmatmul.mubr.f32.gmra.mrb[0].mxu0 %v279
    %v1082 = vpop.f32.mrb[0].mxu0
    %v1083 = vadd.f32 %v182, %v1082
    %v1084 = vpop.f32.mrb[0].mxu0
    %v1085 = vadd.f32 %v186, %v1084
    %1086 = vmatprep.mubr.f32.mxu0 0.0
    %1087 = vmatmul.mubr.f32.gmra.mrb[0].mxu0 %v282
    %v1088 = vpop.f32.mrb[0].mxu0
    %v1089 = vadd.f32 %v182, %v1088
    %v1090 = vpop.f32.mrb[0].mxu0
    %v1091 = vadd.f32 %v186, %v1090
    %1092 = vmatprep.mubr.f32.mxu0 0.0
    %1093 = vmatmul.mubr.f32.gmra.mrb[0].mxu0 %v285
    %v1094 = vpop.f32.mrb[0].mxu0
    %v1095 = vadd.f32 %v182, %v1094
    %v1096 = vpop.f32.mrb[0].mxu0
    %v1097 = vadd.f32 %v186, %v1096
    %1098 = vmatprep.mubr.f32.mxu0 0.0
    %1099 = vmatmul.mubr.f32.gmra.mrb[0].mxu0 %v288
    %v1100 = vpop.f32.mrb[0].mxu0
    %v1101 = vadd.f32 %v182, %v1100
    %v1102 = vpop.f32.mrb[0].mxu0
    %v1103 = vadd.f32 %v186, %v1102
    %1104 = vmatprep.mubr.f32.mxu0 0.0
    %1105 = vmatmul.mubr.f32.gmra.mrb[0].mxu0 %v291
    %v1106 = vpop.f32.mrb[0].mxu0
    %v1107 = vadd.f32 %v182, %v1106
    %v1108 = vpop.f32.mrb[0].mxu0
    %v1109 = vadd.f32 %v186, %v1108
    %1110 = vmatprep.mubr.f32.mxu0 0.0
    %1111 = vmatmul.mubr.f32.gmra.mrb[0].mxu0 %v294
    %v1112 = vpop.f32.mrb[0].mxu0
    %v1113 = vadd.f32 %v182, %v1112
    %v1114 = vpop.f32.mrb[0].mxu0
    %v1115 = vadd.f32 %v186, %v1114
    %1116 = vmatprep.mubr.f32.mxu0 0.0
    %1117 = vmatmul.mubr.f32.gmra.mrb[0].mxu0 %v297
    %v1118 = vpop.f32.mrb[0].mxu0
    %v1119 = vadd.f32 %v182, %v1118
    %v1120 = vpop.f32.mrb[0].mxu0
    %v1121 = vadd.f32 %v186, %v1120
    %1122 = vmatprep.mubr.f32.mxu0 0.0
    %1123 = vmatmul.mubr.f32.gmra.mrb[0].mxu0 %v300
    %v1124 = vpop.f32.mrb[0].mxu0
    %v1125 = vadd.f32 %v182, %v1124
    %v1126 = vpop.f32.mrb[0].mxu0
    %v1127 = vadd.f32 %v186, %v1126
    %1128 = vmatprep.mubr.f32.mxu0 0.0
    %1129 = vmatmul.mubr.f32.gmra.mrb[0].mxu0 %v303
    %v1130 = vpop.f32.mrb[0].mxu0
    %v1131 = vadd.f32 %v182, %v1130
    %v1132 = vpop.f32.mrb[0].mxu0
    %v1133 = vadd.f32 %v186, %v1132
    %1134 = vmatprep.mubr.f32.mxu0 0.0
    %1135 = vmatmul.mubr.f32.gmra.mrb[0].mxu0 %v306
    %v1136 = vpop.f32.mrb[0].mxu0
    %v1137 = vadd.f32 %v182, %v1136
    %v1138 = vpop.f32.mrb[0].mxu0
    %v1139 = vadd.f32 %v186, %v1138
    %1140 = vmatprep.mubr.f32.mxu0 0.0
    %1141 = vmatmul.mubr.f32.gmra.mrb[0].mxu0 %v309
    %v1142 = vpop.f32.mrb[0].mxu0
    %v1143 = vadd.f32 %v182, %v1142
    %v1144 = vpop.f32.mrb[0].mxu0
    %v1145 = vadd.f32 %v186, %v1144
    %1146 = vmatprep.mubr.f32.mxu0 0.0
    %1147 = vmatmul.mubr.f32.gmra.mrb[0].mxu0 %v312
    %v1148 = vpop.f32.mrb[0].mxu0
    %v1149 = vadd.f32 %v182, %v1148
    %v1150 = vpop.f32.mrb[0].mxu0
    %v1151 = vadd.f32 %v186, %v1150
    %1152 = vmatprep.mubr.f32.mxu0 0.0
    %1153 = vmatmul.mubr.f32.gmra.mrb[0].mxu0 %v315
    %v1154 = vpop.f32.mrb[0].mxu0
    %v1155 = vadd.f32 %v182, %v1154
    %v1156 = vpop.f32.mrb[0].mxu0
    %v1157 = vadd.f32 %v186, %v1156
    %1158 = vmatprep.mubr.f32.mxu0 0.0
    %1159 = vmatmul.mubr.f32.gmra.mrb[0].mxu0 %v318
    %v1160 = vpop.f32.mrb[0].mxu0
    %v1161 = vadd.f32 %v182, %v1160
    %v1162 = vpop.f32.mrb[0].mxu0
    %v1163 = vadd.f32 %v186, %v1162
    %1164 = vmatprep.mubr.f32.mxu0 0.0
    %1165 = vmatmul.mubr.f32.gmra.mrb[0].mxu0 %v321
    %v1166 = vpop.f32.mrb[0].mxu0
    %v1167 = vadd.f32 %v182, %v1166
    %v1168 = vpop.f32.mrb[0].mxu0
    %v1169 = vadd.f32 %v186, %v1168
    %1170 = vmatprep.mubr.f32.mxu0 0.0
    %1171 = vmatmul.mubr.f32.gmra.mrb[0].mxu0 %v324
    %v1172 = vpop.f32.mrb[0].mxu0
    %v1173 = vadd.f32 %v182, %v1172
    %v1174 = vpop.f32.mrb[0].mxu0
    %v1175 = vadd.f32 %v186, %v1174
    %1176 = vmatprep.mubr.f32.mxu0 0.0
    %1177 = vmatmul.mubr.f32.gmra.mrb[0].mxu0 %v327
    %v1178 = vpop.f32.mrb[0].mxu0
    %v1179 = vadd.f32 %v182, %v1178
    %v1180 = vpop.f32.mrb[0].mxu0
    %v1181 = vadd.f32 %v186, %v1180
    %1182 = vmatprep.mubr.f32.mxu0 0.0
    %1183 = vmatmul.mubr.f32.gmra.mrb[0].mxu0 %v330
    %v1184 = vpop.f32.mrb[0].mxu0
    %v1185 = vadd.f32 %v182, %v1184
    %v1186 = vpop.f32.mrb[0].mxu0
    %v1187 = vadd.f32 %v186, %v1186
    %1188 = vmatprep.mubr.f32.mxu0 0.0
    %1189 = vmatmul.mubr.f32.gmra.mrb[0].mxu0 %v333
    %v1190 = vpop.f32.mrb[0].mxu0
    %v1191 = vadd.f32 %v182, %v1190
    %v1192 = vpop.f32.mrb[0].mxu0
    %v1193 = vadd.f32 %v186, %v1192
    %1194 = vmatprep.mubr.f32.mxu0 0.0
    %1195 = vmatmul.mubr.f32.gmra.mrb[0].mxu0 %v336
    %v1196 = vpop.f32.mrb[0].mxu0
    %v1197 = vadd.f32 %v182, %v1196
    %v1198 = vpop.f32.mrb[0].mxu0
    %v1199 = vadd.f32 %v186, %v1198
    %1200 = vmatprep.mubr.f32.mxu0 0.0
    %1201 = vmatmul.mubr.f32.gmra.mrb[0].mxu0 %v339
    %v1202 = vpop.f32.mrb[0].mxu0
    %v1203 = vadd.f32 %v182, %v1202
    %v1204 = vpop.f32.mrb[0].mxu0
    %v1205 = vadd.f32 %v186, %v1204
    %1206 = vmatprep.mubr.f32.mxu0 0.0
    %1207 = vmatmul.mubr.f32.gmra.mrb[0].mxu0 %v342
    %v1208 = vpop.f32.mrb[0].mxu0
    %v1209 = vadd.f32 %v182, %v1208
    %v1210 = vpop.f32.mrb[0].mxu0
    %v1211 = vadd.f32 %v186, %v1210
    %1212 = vmatprep.mubr.f32.mxu0 0.0
    %1213 = vmatmul.mubr.f32.gmra.mrb[0].mxu0 %v345
    %v1214 = vpop.f32.mrb[0].mxu0
    %v1215 = vadd.f32 %v182, %v1214
    %v1216 = vpop.f32.mrb[0].mxu0
    %v1217 = vadd.f32 %v186, %v1216
    %1218 = vmatprep.mubr.f32.mxu0 0.0
    %1219 = vmatmul.mubr.f32.gmra.mrb[0].mxu0 %v348
    %v1220 = vpop.f32.mrb[0].mxu0
    %v1221 = vadd.f32 %v182, %v1220
    %v1222 = vpop.f32.mrb[0].mxu0
    %v1223 = vadd.f32 %v186, %v1222
    %1224 = vmatprep.mubr.f32.mxu0 0.0
    %1225 = vmatmul.mubr.f32.gmra.mrb[0].mxu0 %v351
    %v1226 = vpop.f32.mrb[0].mxu0
    %v1227 = vadd.f32 %v182, %v1226
    %v1228 = vpop.f32.mrb[0].mxu0
    %v1229 = vadd.f32 %v186, %v1228
    %1230 = vmatprep.mubr.f32.mxu0 0.0
    %1231 = vmatmul.mubr.f32.gmra.mrb[0].mxu0 %v354
    %v1232 = vpop.f32.mrb[0].mxu0
    %v1233 = vadd.f32 %v182, %v1232
    %v1234 = vpop.f32.mrb[0].mxu0
    %v1235 = vadd.f32 %v186, %v1234
    %1236 = vmatprep.mubr.f32.mxu0 0.0
    %1237 = vmatmul.mubr.f32.gmra.mrb[0].mxu0 %v357
    %v1238 = vpop.f32.mrb[0].mxu0
    %v1239 = vadd.f32 %v182, %v1238
    %v1240 = vpop.f32.mrb[0].mxu0
    %v1241 = vadd.f32 %v186, %v1240
    %1242 = vmatprep.mubr.f32.mxu0 0.0
    %1243 = vmatmul.mubr.f32.gmra.mrb[0].mxu0 %v360
    %v1244 = vpop.f32.mrb[0].mxu0
    %v1245 = vadd.f32 %v182, %v1244
    %v1246 = vpop.f32.mrb[0].mxu0
    %v1247 = vadd.f32 %v186, %v1246
    %1248 = vmatprep.mubr.f32.mxu0 0.0
    %1249 = vmatmul.mubr.f32.gmra.mrb[0].mxu0 %v363
    %v1250 = vpop.f32.mrb[0].mxu0
    %v1251 = vadd.f32 %v182, %v1250
    %v1252 = vpop.f32.mrb[0].mxu0
    %v1253 = vadd.f32 %v186, %v1252
    %1254 = vmatprep.mubr.f32.mxu0 0.0
    %1255 = vmatmul.mubr.f32.gmra.mrb[0].mxu0 %v366
    %v1256 = vpop.f32.mrb[0].mxu0
    %v1257 = vadd.f32 %v182, %v1256
    %v1258 = vpop.f32.mrb[0].mxu0
    %v1259 = vadd.f32 %v186, %v1258
    %1260 = vmatprep.mubr.f32.mxu0 0.0
    %1261 = vmatmul.mubr.f32.gmra.mrb[0].mxu0 %v369
    %v1262 = vpop.f32.mrb[0].mxu0
    %v1263 = vadd.f32 %v182, %v1262
    %v1264 = vpop.f32.mrb[0].mxu0
    %v1265 = vadd.f32 %v186, %v1264
    %1266 = vmatprep.mubr.f32.mxu0 0.0
    %1267 = vmatmul.mubr.f32.gmra.mrb[0].mxu0 %v372
    %v1268 = vpop.f32.mrb[0].mxu0
    %v1269 = vadd.f32 %v182, %v1268
    %v1270 = vpop.f32.mrb[0].mxu0
    %v1271 = vadd.f32 %v186, %v1270
    %1272 = vmatprep.mubr.f32.mxu0 0.0
    %1273 = vmatmul.mubr.f32.gmra.mrb[0].mxu0 %v375
    %v1274 = vpop.f32.mrb[0].mxu0
    %v1275 = vadd.f32 %v182, %v1274
    %v1276 = vpop.f32.mrb[0].mxu0
    %v1277 = vadd.f32 %v186, %v1276
    %1278 = vmatprep.mubr.f32.mxu0 0.0
    %1279 = vmatmul.mubr.f32.gmra.mrb[0].mxu0 %v378
    %v1280 = vpop.f32.mrb[0].mxu0
    %v1281 = vadd.f32 %v182, %v1280
    %v1282 = vpop.f32.mrb[0].mxu0
    %v1283 = vadd.f32 %v186, %v1282
    %1284 = vmatprep.mubr.f32.mxu0 0.0
    %1285 = vmatmul.mubr.f32.gmra.mrb[0].mxu0 %v381
    %v1286 = vpop.f32.mrb[0].mxu0
    %v1287 = vadd.f32 %v182, %v1286
    %v1288 = vpop.f32.mrb[0].mxu0
    %v1289 = vadd.f32 %v186, %v1288
    %1290 = vmatprep.mubr.f32.mxu0 0.0
    %1291 = vmatmul.mubr.f32.gmra.mrb[0].mxu0 %v384
    %v1292 = vpop.f32.mrb[0].mxu0
    %v1293 = vadd.f32 %v182, %v1292
    %v1294 = vpop.f32.mrb[0].mxu0
    %v1295 = vadd.f32 %v186, %v1294
    %1296 = vmatprep.mubr.f32.mxu0 0.0
    %1297 = vmatmul.mubr.f32.gmra.mrb[0].mxu0 %v387
    %v1298 = vpop.f32.mrb[0].mxu0
    %v1299 = vadd.f32 %v182, %v1298
    %v1300 = vpop.f32.mrb[0].mxu0
    %v1301 = vadd.f32 %v186, %v1300
    %1302 = vdwg.mxu0
    %1303 = vmatprep.subr.mxu0 0.0
    %1304 = vmatpush1.msra.mxu0 %v149
    %1305 = vmatprep.subr.mxu0 0.0
    %1306 = vmatpush1.msra.mxu0 %v154
    %1307 = vmatprep.subr.mxu0 0.0
    %1308 = vmatpush1.msra.mxu0 %v159
    %1309 = vmatprep.subr.mxu0 0.0
    %1310 = vmatpush1.msra.mxu0 %v164
    %1311 = vmatprep.subr.mxu0 0.0
    %1312 = vmatpush1.msra.mxu0 %v403
    %1313 = vmatprep.subr.mxu0 0.0
    %1314 = vmatpush1.msra.mxu0 0.0
    %1315 = vmatprep.subr.mxu0 0.0
    %1316 = vmatpush1.msra.mxu0 0.0
    %1317 = vmatprep.subr.mxu0 0.0
    %1318 = vmatpush1.msra.mxu0 0.0
    %1319 = vmatprep.subr.mxu0 0.0
    %1320 = vmatpush1.msra.mxu0 0.0
    %1321 = vmatprep.subr.mxu0 0.0
    %1322 = vmatpush1.msra.mxu0 0.0
    %1323 = vmatprep.subr.mxu0 0.0
    %1324 = vmatpush1.msra.mxu0 0.0
    %1325 = vmatprep.subr.mxu0 0.0
    %1326 = vmatpush1.msra.mxu0 0.0
    %1327 = vmatprep.subr.mxu0 0.0
    %1328 = vmatpush1.msra.mxu0 0.0
    %1329 = vmatprep.subr.mxu0 0.0
    %1330 = vmatpush1.msra.mxu0 0.0
    %1331 = vmatprep.subr.mxu0 0.0
    %1332 = vmatpush1.msra.mxu0 0.0
    %1333 = vmatprep.subr.mxu0 0.0
    %1334 = vmatpush1.msra.mxu0 0.0
    %1335 = vmatprep.subr.mxu0 0.0
    %1336 = vmatpush1.msra.mxu0 0.0
    %1337 = vmatprep.subr.mxu0 0.0
    %1338 = vmatpush1.msra.mxu0 0.0
    %1339 = vmatprep.subr.mxu0 0.0
    %1340 = vmatpush1.msra.mxu0 0.0
    %1341 = vmatprep.subr.mxu0 0.0
    %1342 = vmatpush1.msra.mxu0 0.0
    %1343 = vmatprep.subr.mxu0 0.0
    %1344 = vmatpush1.msra.mxu0 0.0
    %1345 = vmatprep.subr.mxu0 0.0
    %1346 = vmatpush1.msra.mxu0 0.0
    %1347 = vmatprep.subr.mxu0 0.0
    %1348 = vmatpush1.msra.mxu0 0.0
    %1349 = vmatprep.subr.mxu0 0.0
    %1350 = vmatpush1.msra.mxu0 0.0
    %1351 = vmatprep.subr.mxu0 0.0
    %1352 = vmatpush1.msra.mxu0 0.0
    %1353 = vmatprep.subr.mxu0 0.0
    %1354 = vmatpush1.msra.mxu0 0.0
    %1355 = vmatprep.subr.mxu0 0.0
    %1356 = vmatpush1.msra.mxu0 0.0
    %1357 = vmatprep.subr.mxu0 0.0
    %1358 = vmatpush1.msra.mxu0 0.0
    %1359 = vmatprep.subr.mxu0 0.0
    %1360 = vmatpush1.msra.mxu0 0.0
    %1361 = vmatprep.subr.mxu0 0.0
    %1362 = vmatpush1.msra.mxu0 0.0
    %1363 = vmatprep.subr.mxu0 0.0
    %1364 = vmatpush1.msra.mxu0 0.0
    %1365 = vmatprep.subr.mxu0 0.0
    %1366 = vmatpush1.msra.mxu0 0.0
    %1367 = vmatprep.mubr.f32.mxu0 0.0
    %1368 = vmatmul.mubr.f32.gmra.mrb[0].mxu0 %v198
    %v1369 = vpop.f32.mrb[0].mxu0
    %v1370 = vadd.f32 %v190, %v1369
    %v1371 = vpop.f32.mrb[0].mxu0
    %1372 = vmatprep.mubr.f32.mxu0 0.0
    %1373 = vmatmul.mubr.f32.gmra.mrb[0].mxu0 %v201
    %v1374 = vpop.f32.mrb[0].mxu0
    %v1375 = vadd.f32 %v190, %v1374
    %v1376 = vpop.f32.mrb[0].mxu0
    %1377 = vmatprep.mubr.f32.mxu0 0.0
    %1378 = vmatmul.mubr.f32.gmra.mrb[0].mxu0 %v204
    %v1379 = vpop.f32.mrb[0].mxu0
    %v1380 = vadd.f32 %v190, %v1379
    %v1381 = vpop.f32.mrb[0].mxu0
    %1382 = vmatprep.mubr.f32.mxu0 0.0
    %1383 = vmatmul.mubr.f32.gmra.mrb[0].mxu0 %v207
    %v1384 = vpop.f32.mrb[0].mxu0
    %v1385 = vadd.f32 %v190, %v1384
    %v1386 = vpop.f32.mrb[0].mxu0
    %1387 = vmatprep.mubr.f32.mxu0 0.0
    %1388 = vmatmul.mubr.f32.gmra.mrb[0].mxu0 %v210
    %v1389 = vpop.f32.mrb[0].mxu0
    %v1390 = vadd.f32 %v190, %v1389
    %v1391 = vpop.f32.mrb[0].mxu0
    %1392 = vmatprep.mubr.f32.mxu0 0.0
    %1393 = vmatmul.mubr.f32.gmra.mrb[0].mxu0 %v213
    %v1394 = vpop.f32.mrb[0].mxu0
    %v1395 = vadd.f32 %v190, %v1394
    %v1396 = vpop.f32.mrb[0].mxu0
    %1397 = vmatprep.mubr.f32.mxu0 0.0
    %1398 = vmatmul.mubr.f32.gmra.mrb[0].mxu0 %v216
    %v1399 = vpop.f32.mrb[0].mxu0
    %v1400 = vadd.f32 %v190, %v1399
    %v1401 = vpop.f32.mrb[0].mxu0
    %1402 = vmatprep.mubr.f32.mxu0 0.0
    %1403 = vmatmul.mubr.f32.gmra.mrb[0].mxu0 %v219
    %v1404 = vpop.f32.mrb[0].mxu0
    %v1405 = vadd.f32 %v190, %v1404
    %v1406 = vpop.f32.mrb[0].mxu0
    %1407 = vmatprep.mubr.f32.mxu0 0.0
    %1408 = vmatmul.mubr.f32.gmra.mrb[0].mxu0 %v222
    %v1409 = vpop.f32.mrb[0].mxu0
    %v1410 = vadd.f32 %v190, %v1409
    %v1411 = vpop.f32.mrb[0].mxu0
    %1412 = vmatprep.mubr.f32.mxu0 0.0
    %1413 = vmatmul.mubr.f32.gmra.mrb[0].mxu0 %v225
    %v1414 = vpop.f32.mrb[0].mxu0
    %v1415 = vadd.f32 %v190, %v1414
    %v1416 = vpop.f32.mrb[0].mxu0
    %1417 = vmatprep.mubr.f32.mxu0 0.0
    %1418 = vmatmul.mubr.f32.gmra.mrb[0].mxu0 %v228
    %v1419 = vpop.f32.mrb[0].mxu0
    %v1420 = vadd.f32 %v190, %v1419
    %v1421 = vpop.f32.mrb[0].mxu0
    %1422 = vmatprep.mubr.f32.mxu0 0.0
    %1423 = vmatmul.mubr.f32.gmra.mrb[0].mxu0 %v231
    %v1424 = vpop.f32.mrb[0].mxu0
    %v1425 = vadd.f32 %v190, %v1424
    %v1426 = vpop.f32.mrb[0].mxu0
    %1427 = vmatprep.mubr.f32.mxu0 0.0
    %1428 = vmatmul.mubr.f32.gmra.mrb[0].mxu0 %v234
    %v1429 = vpop.f32.mrb[0].mxu0
    %v1430 = vadd.f32 %v190, %v1429
    %v1431 = vpop.f32.mrb[0].mxu0
    %1432 = vmatprep.mubr.f32.mxu0 0.0
    %1433 = vmatmul.mubr.f32.gmra.mrb[0].mxu0 %v237
    %v1434 = vpop.f32.mrb[0].mxu0
    %v1435 = vadd.f32 %v190, %v1434
    %v1436 = vpop.f32.mrb[0].mxu0
    %1437 = vmatprep.mubr.f32.mxu0 0.0
    %1438 = vmatmul.mubr.f32.gmra.mrb[0].mxu0 %v240
    %v1439 = vpop.f32.mrb[0].mxu0
    %v1440 = vadd.f32 %v190, %v1439
    %v1441 = vpop.f32.mrb[0].mxu0
    %1442 = vmatprep.mubr.f32.mxu0 0.0
    %1443 = vmatmul.mubr.f32.gmra.mrb[0].mxu0 %v243
    %v1444 = vpop.f32.mrb[0].mxu0
    %v1445 = vadd.f32 %v190, %v1444
    %v1446 = vpop.f32.mrb[0].mxu0
    %1447 = vmatprep.mubr.f32.mxu0 0.0
    %1448 = vmatmul.mubr.f32.gmra.mrb[0].mxu0 %v246
    %v1449 = vpop.f32.mrb[0].mxu0
    %v1450 = vadd.f32 %v190, %v1449
    %v1451 = vpop.f32.mrb[0].mxu0
    %1452 = vmatprep.mubr.f32.mxu0 0.0
    %1453 = vmatmul.mubr.f32.gmra.mrb[0].mxu0 %v249
    %v1454 = vpop.f32.mrb[0].mxu0
    %v1455 = vadd.f32 %v190, %v1454
    %v1456 = vpop.f32.mrb[0].mxu0
    %1457 = vmatprep.mubr.f32.mxu0 0.0
    %1458 = vmatmul.mubr.f32.gmra.mrb[0].mxu0 %v252
    %v1459 = vpop.f32.mrb[0].mxu0
    %v1460 = vadd.f32 %v190, %v1459
    %v1461 = vpop.f32.mrb[0].mxu0
    %1462 = vmatprep.mubr.f32.mxu0 0.0
    %1463 = vmatmul.mubr.f32.gmra.mrb[0].mxu0 %v255
    %v1464 = vpop.f32.mrb[0].mxu0
    %v1465 = vadd.f32 %v190, %v1464
    %v1466 = vpop.f32.mrb[0].mxu0
    %1467 = vmatprep.mubr.f32.mxu0 0.0
    %1468 = vmatmul.mubr.f32.gmra.mrb[0].mxu0 %v258
    %v1469 = vpop.f32.mrb[0].mxu0
    %v1470 = vadd.f32 %v190, %v1469
    %v1471 = vpop.f32.mrb[0].mxu0
    %1472 = vmatprep.mubr.f32.mxu0 0.0
    %1473 = vmatmul.mubr.f32.gmra.mrb[0].mxu0 %v261
    %v1474 = vpop.f32.mrb[0].mxu0
    %v1475 = vadd.f32 %v190, %v1474
    %v1476 = vpop.f32.mrb[0].mxu0
    %1477 = vmatprep.mubr.f32.mxu0 0.0
    %1478 = vmatmul.mubr.f32.gmra.mrb[0].mxu0 %v264
    %v1479 = vpop.f32.mrb[0].mxu0
    %v1480 = vadd.f32 %v190, %v1479
    %v1481 = vpop.f32.mrb[0].mxu0
    %1482 = vmatprep.mubr.f32.mxu0 0.0
    %1483 = vmatmul.mubr.f32.gmra.mrb[0].mxu0 %v267
    %v1484 = vpop.f32.mrb[0].mxu0
    %v1485 = vadd.f32 %v190, %v1484
    %v1486 = vpop.f32.mrb[0].mxu0
    %1487 = vmatprep.mubr.f32.mxu0 0.0
    %1488 = vmatmul.mubr.f32.gmra.mrb[0].mxu0 %v270
    %v1489 = vpop.f32.mrb[0].mxu0
    %v1490 = vadd.f32 %v190, %v1489
    %v1491 = vpop.f32.mrb[0].mxu0
    %1492 = vmatprep.mubr.f32.mxu0 0.0
    %1493 = vmatmul.mubr.f32.gmra.mrb[0].mxu0 %v273
    %v1494 = vpop.f32.mrb[0].mxu0
    %v1495 = vadd.f32 %v190, %v1494
    %v1496 = vpop.f32.mrb[0].mxu0
    %1497 = vmatprep.mubr.f32.mxu0 0.0
    %1498 = vmatmul.mubr.f32.gmra.mrb[0].mxu0 %v276
    %v1499 = vpop.f32.mrb[0].mxu0
    %v1500 = vadd.f32 %v190, %v1499
    %v1501 = vpop.f32.mrb[0].mxu0
    %1502 = vmatprep.mubr.f32.mxu0 0.0
    %1503 = vmatmul.mubr.f32.gmra.mrb[0].mxu0 %v279
    %v1504 = vpop.f32.mrb[0].mxu0
    %v1505 = vadd.f32 %v190, %v1504
    %v1506 = vpop.f32.mrb[0].mxu0
    %1507 = vmatprep.mubr.f32.mxu0 0.0
    %1508 = vmatmul.mubr.f32.gmra.mrb[0].mxu0 %v282
    %v1509 = vpop.f32.mrb[0].mxu0
    %v1510 = vadd.f32 %v190, %v1509
    %v1511 = vpop.f32.mrb[0].mxu0
    %1512 = vmatprep.mubr.f32.mxu0 0.0
    %1513 = vmatmul.mubr.f32.gmra.mrb[0].mxu0 %v285
    %v1514 = vpop.f32.mrb[0].mxu0
    %v1515 = vadd.f32 %v190, %v1514
    %v1516 = vpop.f32.mrb[0].mxu0
    %1517 = vmatprep.mubr.f32.mxu0 0.0
    %1518 = vmatmul.mubr.f32.gmra.mrb[0].mxu0 %v288
    %v1519 = vpop.f32.mrb[0].mxu0
    %v1520 = vadd.f32 %v190, %v1519
    %v1521 = vpop.f32.mrb[0].mxu0
    %1522 = vmatprep.mubr.f32.mxu0 0.0
    %1523 = vmatmul.mubr.f32.gmra.mrb[0].mxu0 %v291
    %v1524 = vpop.f32.mrb[0].mxu0
    %v1525 = vadd.f32 %v190, %v1524
    %v1526 = vpop.f32.mrb[0].mxu0
    %1527 = vmatprep.mubr.f32.mxu0 0.0
    %1528 = vmatmul.mubr.f32.gmra.mrb[0].mxu0 %v294
    %v1529 = vpop.f32.mrb[0].mxu0
    %v1530 = vadd.f32 %v190, %v1529
    %v1531 = vpop.f32.mrb[0].mxu0
    %1532 = vmatprep.mubr.f32.mxu0 0.0
    %1533 = vmatmul.mubr.f32.gmra.mrb[0].mxu0 %v297
    %v1534 = vpop.f32.mrb[0].mxu0
    %v1535 = vadd.f32 %v190, %v1534
    %v1536 = vpop.f32.mrb[0].mxu0
    %1537 = vmatprep.mubr.f32.mxu0 0.0
    %1538 = vmatmul.mubr.f32.gmra.mrb[0].mxu0 %v300
    %v1539 = vpop.f32.mrb[0].mxu0
    %v1540 = vadd.f32 %v190, %v1539
    %v1541 = vpop.f32.mrb[0].mxu0
    %1542 = vmatprep.mubr.f32.mxu0 0.0
    %1543 = vmatmul.mubr.f32.gmra.mrb[0].mxu0 %v303
    %v1544 = vpop.f32.mrb[0].mxu0
    %v1545 = vadd.f32 %v190, %v1544
    %v1546 = vpop.f32.mrb[0].mxu0
    %1547 = vmatprep.mubr.f32.mxu0 0.0
    %1548 = vmatmul.mubr.f32.gmra.mrb[0].mxu0 %v306
    %v1549 = vpop.f32.mrb[0].mxu0
    %v1550 = vadd.f32 %v190, %v1549
    %v1551 = vpop.f32.mrb[0].mxu0
    %1552 = vmatprep.mubr.f32.mxu0 0.0
    %1553 = vmatmul.mubr.f32.gmra.mrb[0].mxu0 %v309
    %v1554 = vpop.f32.mrb[0].mxu0
    %v1555 = vadd.f32 %v190, %v1554
    %v1556 = vpop.f32.mrb[0].mxu0
    %1557 = vmatprep.mubr.f32.mxu0 0.0
    %1558 = vmatmul.mubr.f32.gmra.mrb[0].mxu0 %v312
    %v1559 = vpop.f32.mrb[0].mxu0
    %v1560 = vadd.f32 %v190, %v1559
    %v1561 = vpop.f32.mrb[0].mxu0
    %1562 = vmatprep.mubr.f32.mxu0 0.0
    %1563 = vmatmul.mubr.f32.gmra.mrb[0].mxu0 %v315
    %v1564 = vpop.f32.mrb[0].mxu0
    %v1565 = vadd.f32 %v190, %v1564
    %v1566 = vpop.f32.mrb[0].mxu0
    %1567 = vmatprep.mubr.f32.mxu0 0.0
    %1568 = vmatmul.mubr.f32.gmra.mrb[0].mxu0 %v318
    %v1569 = vpop.f32.mrb[0].mxu0
    %v1570 = vadd.f32 %v190, %v1569
    %v1571 = vpop.f32.mrb[0].mxu0
    %1572 = vmatprep.mubr.f32.mxu0 0.0
    %1573 = vmatmul.mubr.f32.gmra.mrb[0].mxu0 %v321
    %v1574 = vpop.f32.mrb[0].mxu0
    %v1575 = vadd.f32 %v190, %v1574
    %v1576 = vpop.f32.mrb[0].mxu0
    %1577 = vmatprep.mubr.f32.mxu0 0.0
    %1578 = vmatmul.mubr.f32.gmra.mrb[0].mxu0 %v324
    %v1579 = vpop.f32.mrb[0].mxu0
    %v1580 = vadd.f32 %v190, %v1579
    %v1581 = vpop.f32.mrb[0].mxu0
    %1582 = vmatprep.mubr.f32.mxu0 0.0
    %1583 = vmatmul.mubr.f32.gmra.mrb[0].mxu0 %v327
    %v1584 = vpop.f32.mrb[0].mxu0
    %v1585 = vadd.f32 %v190, %v1584
    %v1586 = vpop.f32.mrb[0].mxu0
    %1587 = vmatprep.mubr.f32.mxu0 0.0
    %1588 = vmatmul.mubr.f32.gmra.mrb[0].mxu0 %v330
    %v1589 = vpop.f32.mrb[0].mxu0
    %v1590 = vadd.f32 %v190, %v1589
    %v1591 = vpop.f32.mrb[0].mxu0
    %1592 = vmatprep.mubr.f32.mxu0 0.0
    %1593 = vmatmul.mubr.f32.gmra.mrb[0].mxu0 %v333
    %v1594 = vpop.f32.mrb[0].mxu0
    %v1595 = vadd.f32 %v190, %v1594
    %v1596 = vpop.f32.mrb[0].mxu0
    %1597 = vmatprep.mubr.f32.mxu0 0.0
    %1598 = vmatmul.mubr.f32.gmra.mrb[0].mxu0 %v336
    %v1599 = vpop.f32.mrb[0].mxu0
    %v1600 = vadd.f32 %v190, %v1599
    %v1601 = vpop.f32.mrb[0].mxu0
    %1602 = vmatprep.mubr.f32.mxu0 0.0
    %1603 = vmatmul.mubr.f32.gmra.mrb[0].mxu0 %v339
    %v1604 = vpop.f32.mrb[0].mxu0
    %v1605 = vadd.f32 %v190, %v1604
    %v1606 = vpop.f32.mrb[0].mxu0
    %1607 = vmatprep.mubr.f32.mxu0 0.0
    %1608 = vmatmul.mubr.f32.gmra.mrb[0].mxu0 %v342
    %v1609 = vpop.f32.mrb[0].mxu0
    %v1610 = vadd.f32 %v190, %v1609
    %v1611 = vpop.f32.mrb[0].mxu0
    %1612 = vmatprep.mubr.f32.mxu0 0.0
    %1613 = vmatmul.mubr.f32.gmra.mrb[0].mxu0 %v345
    %v1614 = vpop.f32.mrb[0].mxu0
    %v1615 = vadd.f32 %v190, %v1614
    %v1616 = vpop.f32.mrb[0].mxu0
    %1617 = vmatprep.mubr.f32.mxu0 0.0
    %1618 = vmatmul.mubr.f32.gmra.mrb[0].mxu0 %v348
    %v1619 = vpop.f32.mrb[0].mxu0
    %v1620 = vadd.f32 %v190, %v1619
    %v1621 = vpop.f32.mrb[0].mxu0
    %1622 = vmatprep.mubr.f32.mxu0 0.0
    %1623 = vmatmul.mubr.f32.gmra.mrb[0].mxu0 %v351
    %v1624 = vpop.f32.mrb[0].mxu0
    %v1625 = vadd.f32 %v190, %v1624
    %v1626 = vpop.f32.mrb[0].mxu0
    %1627 = vmatprep.mubr.f32.mxu0 0.0
    %1628 = vmatmul.mubr.f32.gmra.mrb[0].mxu0 %v354
    %v1629 = vpop.f32.mrb[0].mxu0
    %v1630 = vadd.f32 %v190, %v1629
    %v1631 = vpop.f32.mrb[0].mxu0
    %1632 = vmatprep.mubr.f32.mxu0 0.0
    %1633 = vmatmul.mubr.f32.gmra.mrb[0].mxu0 %v357
    %v1634 = vpop.f32.mrb[0].mxu0
    %v1635 = vadd.f32 %v190, %v1634
    %v1636 = vpop.f32.mrb[0].mxu0
    %1637 = vmatprep.mubr.f32.mxu0 0.0
    %1638 = vmatmul.mubr.f32.gmra.mrb[0].mxu0 %v360
    %v1639 = vpop.f32.mrb[0].mxu0
    %v1640 = vadd.f32 %v190, %v1639
    %v1641 = vpop.f32.mrb[0].mxu0
    %1642 = vmatprep.mubr.f32.mxu0 0.0
    %1643 = vmatmul.mubr.f32.gmra.mrb[0].mxu0 %v363
    %v1644 = vpop.f32.mrb[0].mxu0
    %v1645 = vadd.f32 %v190, %v1644
    %v1646 = vpop.f32.mrb[0].mxu0
    %1647 = vmatprep.mubr.f32.mxu0 0.0
    %1648 = vmatmul.mubr.f32.gmra.mrb[0].mxu0 %v366
    %v1649 = vpop.f32.mrb[0].mxu0
    %v1650 = vadd.f32 %v190, %v1649
    %v1651 = vpop.f32.mrb[0].mxu0
    %1652 = vmatprep.mubr.f32.mxu0 0.0
    %1653 = vmatmul.mubr.f32.gmra.mrb[0].mxu0 %v369
    %v1654 = vpop.f32.mrb[0].mxu0
    %v1655 = vadd.f32 %v190, %v1654
    %v1656 = vpop.f32.mrb[0].mxu0
    %1657 = vmatprep.mubr.f32.mxu0 0.0
    %1658 = vmatmul.mubr.f32.gmra.mrb[0].mxu0 %v372
    %v1659 = vpop.f32.mrb[0].mxu0
    %v1660 = vadd.f32 %v190, %v1659
    %v1661 = vpop.f32.mrb[0].mxu0
    %1662 = vmatprep.mubr.f32.mxu0 0.0
    %1663 = vmatmul.mubr.f32.gmra.mrb[0].mxu0 %v375
    %v1664 = vpop.f32.mrb[0].mxu0
    %v1665 = vadd.f32 %v190, %v1664
    %v1666 = vpop.f32.mrb[0].mxu0
    %1667 = vmatprep.mubr.f32.mxu0 0.0
    %1668 = vmatmul.mubr.f32.gmra.mrb[0].mxu0 %v378
    %v1669 = vpop.f32.mrb[0].mxu0
    %v1670 = vadd.f32 %v190, %v1669
    %v1671 = vpop.f32.mrb[0].mxu0
    %1672 = vmatprep.mubr.f32.mxu0 0.0
    %1673 = vmatmul.mubr.f32.gmra.mrb[0].mxu0 %v381
    %v1674 = vpop.f32.mrb[0].mxu0
    %v1675 = vadd.f32 %v190, %v1674
    %v1676 = vpop.f32.mrb[0].mxu0
    %1677 = vmatprep.mubr.f32.mxu0 0.0
    %1678 = vmatmul.mubr.f32.gmra.mrb[0].mxu0 %v384
    %v1679 = vpop.f32.mrb[0].mxu0
    %v1680 = vadd.f32 %v190, %v1679
    %v1681 = vpop.f32.mrb[0].mxu0
    %1682 = vmatprep.mubr.f32.mxu0 0.0
    %1683 = vmatmul.mubr.f32.gmra.mrb[0].mxu0 %v387
    %v1684 = vpop.f32.mrb[0].mxu0
    %v1685 = vadd.f32 %v190, %v1684
    %v1686 = vpop.f32.mrb[0].mxu0
    %1687 = vdwg.mxu0
    %v1688 = vmul.f32 %v472, %v472
    %v1689 = vmul.f32 %v474, %v474
    %v1690 = vmul.f32 %v921, %v921
    %v1691 = vmul.f32 %v923, %v923
    %v1692 = vmul.f32 %v1370, %v1370
    %v1693 = vmul.f32 %v478, %v478
    %v1694 = vmul.f32 %v480, %v480
    %v1695 = vmul.f32 %v927, %v927
    %v1696 = vmul.f32 %v929, %v929
    %v1697 = vmul.f32 %v1375, %v1375
    %v1698 = vmul.f32 %v484, %v484
    %v1699 = vmul.f32 %v486, %v486
    %v1700 = vmul.f32 %v933, %v933
    %v1701 = vmul.f32 %v935, %v935
    %v1702 = vmul.f32 %v1380, %v1380
    %v1703 = vmul.f32 %v490, %v490
    %v1704 = vmul.f32 %v492, %v492
    %v1705 = vmul.f32 %v939, %v939
    %v1706 = vmul.f32 %v941, %v941
    %v1707 = vmul.f32 %v1385, %v1385
    %v1708 = vmul.f32 %v496, %v496
    %v1709 = vmul.f32 %v498, %v498
    %v1710 = vmul.f32 %v945, %v945
    %v1711 = vmul.f32 %v947, %v947
    %v1712 = vmul.f32 %v1390, %v1390
    %v1713 = vmul.f32 %v502, %v502
    %v1714 = vmul.f32 %v504, %v504
    %v1715 = vmul.f32 %v951, %v951
    %v1716 = vmul.f32 %v953, %v953
    %v1717 = vmul.f32 %v1395, %v1395
    %v1718 = vmul.f32 %v508, %v508
    %v1719 = vmul.f32 %v510, %v510
    %v1720 = vmul.f32 %v957, %v957
    %v1721 = vmul.f32 %v959, %v959
    %v1722 = vmul.f32 %v1400, %v1400
    %v1723 = vmul.f32 %v514, %v514
    %v1724 = vmul.f32 %v516, %v516
    %v1725 = vmul.f32 %v963, %v963
    %v1726 = vmul.f32 %v965, %v965
    %v1727 = vmul.f32 %v1405, %v1405
    %v1728 = vmul.f32 %v520, %v520
    %v1729 = vmul.f32 %v522, %v522
    %v1730 = vmul.f32 %v969, %v969
    %v1731 = vmul.f32 %v971, %v971
    %v1732 = vmul.f32 %v1410, %v1410
    %v1733 = vmul.f32 %v526, %v526
    %v1734 = vmul.f32 %v528, %v528
    %v1735 = vmul.f32 %v975, %v975
    %v1736 = vmul.f32 %v977, %v977
    %v1737 = vmul.f32 %v1415, %v1415
    %v1738 = vmul.f32 %v532, %v532
    %v1739 = vmul.f32 %v534, %v534
    %v1740 = vmul.f32 %v981, %v981
    %v1741 = vmul.f32 %v983, %v983
    %v1742 = vmul.f32 %v1420, %v1420
    %v1743 = vmul.f32 %v538, %v538
    %v1744 = vmul.f32 %v540, %v540
    %v1745 = vmul.f32 %v987, %v987
    %v1746 = vmul.f32 %v989, %v989
    %v1747 = vmul.f32 %v1425, %v1425
    %v1748 = vmul.f32 %v544, %v544
    %v1749 = vmul.f32 %v546, %v546
    %v1750 = vmul.f32 %v993, %v993
    %v1751 = vmul.f32 %v995, %v995
    %v1752 = vmul.f32 %v1430, %v1430
    %v1753 = vmul.f32 %v550, %v550
    %v1754 = vmul.f32 %v552, %v552
    %v1755 = vmul.f32 %v999, %v999
    %v1756 = vmul.f32 %v1001, %v1001
    %v1757 = vmul.f32 %v1435, %v1435
    %v1758 = vmul.f32 %v556, %v556
    %v1759 = vmul.f32 %v558, %v558
    %v1760 = vmul.f32 %v1005, %v1005
    %v1761 = vmul.f32 %v1007, %v1007
    %v1762 = vmul.f32 %v1440, %v1440
    %v1763 = vmul.f32 %v562, %v562
    %v1764 = vmul.f32 %v564, %v564
    %v1765 = vmul.f32 %v1011, %v1011
    %v1766 = vmul.f32 %v1013, %v1013
    %v1767 = vmul.f32 %v1445, %v1445
    %v1768 = vmul.f32 %v568, %v568
    %v1769 = vmul.f32 %v570, %v570
    %v1770 = vmul.f32 %v1017, %v1017
    %v1771 = vmul.f32 %v1019, %v1019
    %v1772 = vmul.f32 %v1450, %v1450
    %v1773 = vmul.f32 %v574, %v574
    %v1774 = vmul.f32 %v576, %v576
    %v1775 = vmul.f32 %v1023, %v1023
    %v1776 = vmul.f32 %v1025, %v1025
    %v1777 = vmul.f32 %v1455, %v1455
    %v1778 = vmul.f32 %v580, %v580
    %v1779 = vmul.f32 %v582, %v582
    %v1780 = vmul.f32 %v1029, %v1029
    %v1781 = vmul.f32 %v1031, %v1031
    %v1782 = vmul.f32 %v1460, %v1460
    %v1783 = vmul.f32 %v586, %v586
    %v1784 = vmul.f32 %v588, %v588
    %v1785 = vmul.f32 %v1035, %v1035
    %v1786 = vmul.f32 %v1037, %v1037
    %v1787 = vmul.f32 %v1465, %v1465
    %v1788 = vmul.f32 %v592, %v592
    %v1789 = vmul.f32 %v594, %v594
    %v1790 = vmul.f32 %v1041, %v1041
    %v1791 = vmul.f32 %v1043, %v1043
    %v1792 = vmul.f32 %v1470, %v1470
    %v1793 = vmul.f32 %v598, %v598
    %v1794 = vmul.f32 %v600, %v600
    %v1795 = vmul.f32 %v1047, %v1047
    %v1796 = vmul.f32 %v1049, %v1049
    %v1797 = vmul.f32 %v1475, %v1475
    %v1798 = vmul.f32 %v604, %v604
    %v1799 = vmul.f32 %v606, %v606
    %v1800 = vmul.f32 %v1053, %v1053
    %v1801 = vmul.f32 %v1055, %v1055
    %v1802 = vmul.f32 %v1480, %v1480
    %v1803 = vmul.f32 %v610, %v610
    %v1804 = vmul.f32 %v612, %v612
    %v1805 = vmul.f32 %v1059, %v1059
    %v1806 = vmul.f32 %v1061, %v1061
    %v1807 = vmul.f32 %v1485, %v1485
    %v1808 = vmul.f32 %v616, %v616
    %v1809 = vmul.f32 %v618, %v618
    %v1810 = vmul.f32 %v1065, %v1065
    %v1811 = vmul.f32 %v1067, %v1067
    %v1812 = vmul.f32 %v1490, %v1490
    %v1813 = vmul.f32 %v622, %v622
    %v1814 = vmul.f32 %v624, %v624
    %v1815 = vmul.f32 %v1071, %v1071
    %v1816 = vmul.f32 %v1073, %v1073
    %v1817 = vmul.f32 %v1495, %v1495
    %v1818 = vmul.f32 %v628, %v628
    %v1819 = vmul.f32 %v630, %v630
    %v1820 = vmul.f32 %v1077, %v1077
    %v1821 = vmul.f32 %v1079, %v1079
    %v1822 = vmul.f32 %v1500, %v1500
    %v1823 = vmul.f32 %v634, %v634
    %v1824 = vmul.f32 %v636, %v636
    %v1825 = vmul.f32 %v1083, %v1083
    %v1826 = vmul.f32 %v1085, %v1085
    %v1827 = vmul.f32 %v1505, %v1505
    %v1828 = vmul.f32 %v640, %v640
    %v1829 = vmul.f32 %v642, %v642
    %v1830 = vmul.f32 %v1089, %v1089
    %v1831 = vmul.f32 %v1091, %v1091
    %v1832 = vmul.f32 %v1510, %v1510
    %v1833 = vmul.f32 %v646, %v646
    %v1834 = vmul.f32 %v648, %v648
    %v1835 = vmul.f32 %v1095, %v1095
    %v1836 = vmul.f32 %v1097, %v1097
    %v1837 = vmul.f32 %v1515, %v1515
    %v1838 = vmul.f32 %v652, %v652
    %v1839 = vmul.f32 %v654, %v654
    %v1840 = vmul.f32 %v1101, %v1101
    %v1841 = vmul.f32 %v1103, %v1103
    %v1842 = vmul.f32 %v1520, %v1520
    %v1843 = vmul.f32 %v658, %v658
    %v1844 = vmul.f32 %v660, %v660
    %v1845 = vmul.f32 %v1107, %v1107
    %v1846 = vmul.f32 %v1109, %v1109
    %v1847 = vmul.f32 %v1525, %v1525
    %v1848 = vmul.f32 %v664, %v664
    %v1849 = vmul.f32 %v666, %v666
    %v1850 = vmul.f32 %v1113, %v1113
    %v1851 = vmul.f32 %v1115, %v1115
    %v1852 = vmul.f32 %v1530, %v1530
    %v1853 = vmul.f32 %v670, %v670
    %v1854 = vmul.f32 %v672, %v672
    %v1855 = vmul.f32 %v1119, %v1119
    %v1856 = vmul.f32 %v1121, %v1121
    %v1857 = vmul.f32 %v1535, %v1535
    %v1858 = vmul.f32 %v676, %v676
    %v1859 = vmul.f32 %v678, %v678
    %v1860 = vmul.f32 %v1125, %v1125
    %v1861 = vmul.f32 %v1127, %v1127
    %v1862 = vmul.f32 %v1540, %v1540
    %v1863 = vmul.f32 %v682, %v682
    %v1864 = vmul.f32 %v684, %v684
    %v1865 = vmul.f32 %v1131, %v1131
    %v1866 = vmul.f32 %v1133, %v1133
    %v1867 = vmul.f32 %v1545, %v1545
    %v1868 = vmul.f32 %v688, %v688
    %v1869 = vmul.f32 %v690, %v690
    %v1870 = vmul.f32 %v1137, %v1137
    %v1871 = vmul.f32 %v1139, %v1139
    %v1872 = vmul.f32 %v1550, %v1550
    %v1873 = vmul.f32 %v694, %v694
    %v1874 = vmul.f32 %v696, %v696
    %v1875 = vmul.f32 %v1143, %v1143
    %v1876 = vmul.f32 %v1145, %v1145
    %v1877 = vmul.f32 %v1555, %v1555
    %v1878 = vmul.f32 %v700, %v700
    %v1879 = vmul.f32 %v702, %v702
    %v1880 = vmul.f32 %v1149, %v1149
    %v1881 = vmul.f32 %v1151, %v1151
    %v1882 = vmul.f32 %v1560, %v1560
    %v1883 = vmul.f32 %v706, %v706
    %v1884 = vmul.f32 %v708, %v708
    %v1885 = vmul.f32 %v1155, %v1155
    %v1886 = vmul.f32 %v1157, %v1157
    %v1887 = vmul.f32 %v1565, %v1565
    %v1888 = vmul.f32 %v712, %v712
    %v1889 = vmul.f32 %v714, %v714
    %v1890 = vmul.f32 %v1161, %v1161
    %v1891 = vmul.f32 %v1163, %v1163
    %v1892 = vmul.f32 %v1570, %v1570
    %v1893 = vmul.f32 %v718, %v718
    %v1894 = vmul.f32 %v720, %v720
    %v1895 = vmul.f32 %v1167, %v1167
    %v1896 = vmul.f32 %v1169, %v1169
    %v1897 = vmul.f32 %v1575, %v1575
    %v1898 = vmul.f32 %v724, %v724
    %v1899 = vmul.f32 %v726, %v726
    %v1900 = vmul.f32 %v1173, %v1173
    %v1901 = vmul.f32 %v1175, %v1175
    %v1902 = vmul.f32 %v1580, %v1580
    %v1903 = vmul.f32 %v730, %v730
    %v1904 = vmul.f32 %v732, %v732
    %v1905 = vmul.f32 %v1179, %v1179
    %v1906 = vmul.f32 %v1181, %v1181
    %v1907 = vmul.f32 %v1585, %v1585
    %v1908 = vmul.f32 %v736, %v736
    %v1909 = vmul.f32 %v738, %v738
    %v1910 = vmul.f32 %v1185, %v1185
    %v1911 = vmul.f32 %v1187, %v1187
    %v1912 = vmul.f32 %v1590, %v1590
    %v1913 = vmul.f32 %v742, %v742
    %v1914 = vmul.f32 %v744, %v744
    %v1915 = vmul.f32 %v1191, %v1191
    %v1916 = vmul.f32 %v1193, %v1193
    %v1917 = vmul.f32 %v1595, %v1595
    %v1918 = vmul.f32 %v748, %v748
    %v1919 = vmul.f32 %v750, %v750
    %v1920 = vmul.f32 %v1197, %v1197
    %v1921 = vmul.f32 %v1199, %v1199
    %v1922 = vmul.f32 %v1600, %v1600
    %v1923 = vmul.f32 %v754, %v754
    %v1924 = vmul.f32 %v756, %v756
    %v1925 = vmul.f32 %v1203, %v1203
    %v1926 = vmul.f32 %v1205, %v1205
    %v1927 = vmul.f32 %v1605, %v1605
    %v1928 = vmul.f32 %v760, %v760
    %v1929 = vmul.f32 %v762, %v762
    %v1930 = vmul.f32 %v1209, %v1209
    %v1931 = vmul.f32 %v1211, %v1211
    %v1932 = vmul.f32 %v1610, %v1610
    %v1933 = vmul.f32 %v766, %v766
    %v1934 = vmul.f32 %v768, %v768
    %v1935 = vmul.f32 %v1215, %v1215
    %v1936 = vmul.f32 %v1217, %v1217
    %v1937 = vmul.f32 %v1615, %v1615
    %v1938 = vmul.f32 %v772, %v772
    %v1939 = vmul.f32 %v774, %v774
    %v1940 = vmul.f32 %v1221, %v1221
    %v1941 = vmul.f32 %v1223, %v1223
    %v1942 = vmul.f32 %v1620, %v1620
    %v1943 = vmul.f32 %v778, %v778
    %v1944 = vmul.f32 %v780, %v780
    %v1945 = vmul.f32 %v1227, %v1227
    %v1946 = vmul.f32 %v1229, %v1229
    %v1947 = vmul.f32 %v1625, %v1625
    %v1948 = vmul.f32 %v784, %v784
    %v1949 = vmul.f32 %v786, %v786
    %v1950 = vmul.f32 %v1233, %v1233
    %v1951 = vmul.f32 %v1235, %v1235
    %v1952 = vmul.f32 %v1630, %v1630
    %v1953 = vmul.f32 %v790, %v790
    %v1954 = vmul.f32 %v792, %v792
    %v1955 = vmul.f32 %v1239, %v1239
    %v1956 = vmul.f32 %v1241, %v1241
    %v1957 = vmul.f32 %v1635, %v1635
    %v1958 = vmul.f32 %v796, %v796
    %v1959 = vmul.f32 %v798, %v798
    %v1960 = vmul.f32 %v1245, %v1245
    %v1961 = vmul.f32 %v1247, %v1247
    %v1962 = vmul.f32 %v1640, %v1640
    %v1963 = vmul.f32 %v802, %v802
    %v1964 = vmul.f32 %v804, %v804
    %v1965 = vmul.f32 %v1251, %v1251
    %v1966 = vmul.f32 %v1253, %v1253
    %v1967 = vmul.f32 %v1645, %v1645
    %v1968 = vmul.f32 %v808, %v808
    %v1969 = vmul.f32 %v810, %v810
    %v1970 = vmul.f32 %v1257, %v1257
    %v1971 = vmul.f32 %v1259, %v1259
    %v1972 = vmul.f32 %v1650, %v1650
    %v1973 = vmul.f32 %v814, %v814
    %v1974 = vmul.f32 %v816, %v816
    %v1975 = vmul.f32 %v1263, %v1263
    %v1976 = vmul.f32 %v1265, %v1265
    %v1977 = vmul.f32 %v1655, %v1655
    %v1978 = vmul.f32 %v820, %v820
    %v1979 = vmul.f32 %v822, %v822
    %v1980 = vmul.f32 %v1269, %v1269
    %v1981 = vmul.f32 %v1271, %v1271
    %v1982 = vmul.f32 %v1660, %v1660
    %v1983 = vmul.f32 %v826, %v826
    %v1984 = vmul.f32 %v828, %v828
    %v1985 = vmul.f32 %v1275, %v1275
    %v1986 = vmul.f32 %v1277, %v1277
    %v1987 = vmul.f32 %v1665, %v1665
    %v1988 = vmul.f32 %v832, %v832
    %v1989 = vmul.f32 %v834, %v834
    %v1990 = vmul.f32 %v1281, %v1281
    %v1991 = vmul.f32 %v1283, %v1283
    %v1992 = vmul.f32 %v1670, %v1670
    %v1993 = vmul.f32 %v838, %v838
    %v1994 = vmul.f32 %v840, %v840
    %v1995 = vmul.f32 %v1287, %v1287
    %v1996 = vmul.f32 %v1289, %v1289
    %v1997 = vmul.f32 %v1675, %v1675
    %v1998 = vmul.f32 %v844, %v844
    %v1999 = vmul.f32 %v846, %v846
    %v2000 = vmul.f32 %v1293, %v1293
    %v2001 = vmul.f32 %v1295, %v1295
    %v2002 = vmul.f32 %v1680, %v1680
    %v2003 = vmul.f32 %v850, %v850
    %v2004 = vmul.f32 %v852, %v852
    %v2005 = vmul.f32 %v1299, %v1299
    %v2006 = vmul.f32 %v1301, %v1301
    %v2007 = vmul.f32 %v1685, %v1685
    %v2008 = vld [vmem:[%s1] sm:$0xff]
    %v2010 = vcombine.high %v2008, %v2008
    %v2012 = vunpack.c.l.s4 1983009808
    %v2013 = vunpack.c.0.s8 %v2012
    %v2014 = vlaneseq
    %v2015 = vshrl.u32 %v2014, 7
    %v2016 = vsub.s32 %v2013, %v2015
    %v2017 = vrot.slane %v2008, %v2016
    %v2019 = vunpack.c.l.s4 1983009808
    %v2020 = vunpack.c.0.s8 %v2019
    %v2021 = vlaneseq
    %v2022 = vshrl.u32 %v2021, 7
    %v2023 = vsub.s32 %v2020, %v2022
    %v2024 = vrot.slane %v2010, %v2023
    %v2025 = vcombine.high %v2017, %v2017
    %v2026 = vcombine.high %v2024, %v2024
    %2031 = vmatprep.subr.mxu0 %v474
    %2032 = vmatpush1.msra.mxu0 %v472
    %2033 = vmatprep.subr.mxu0 %v480
    %2034 = vmatpush1.msra.mxu0 %v478
    %2035 = vmatprep.subr.mxu0 %v486
    %2036 = vmatpush1.msra.mxu0 %v484
    %2037 = vmatprep.subr.mxu0 %v492
    %2038 = vmatpush1.msra.mxu0 %v490
    %2039 = vmatprep.subr.mxu0 %v498
    %2040 = vmatpush1.msra.mxu0 %v496
    %2041 = vmatprep.subr.mxu0 %v504
    %2042 = vmatpush1.msra.mxu0 %v502
    %2043 = vmatprep.subr.mxu0 %v510
    %2044 = vmatpush1.msra.mxu0 %v508
    %2045 = vmatprep.subr.mxu0 %v516
    %2046 = vmatpush1.msra.mxu0 %v514
    %2047 = vmatprep.subr.mxu0 %v522
    %2048 = vmatpush1.msra.mxu0 %v520
    %2049 = vmatprep.subr.mxu0 %v528
    %2050 = vmatpush1.msra.mxu0 %v526
    %2051 = vmatprep.subr.mxu0 %v534
    %2052 = vmatpush1.msra.mxu0 %v532
    %2053 = vmatprep.subr.mxu0 %v540
    %2054 = vmatpush1.msra.mxu0 %v538
    %2055 = vmatprep.subr.mxu0 %v546
    %2056 = vmatpush1.msra.mxu0 %v544
    %2057 = vmatprep.subr.mxu0 %v552
    %2058 = vmatpush1.msra.mxu0 %v550
    %2059 = vmatprep.subr.mxu0 %v558
    %2060 = vmatpush1.msra.mxu0 %v556
    %2061 = vmatprep.subr.mxu0 %v564
    %2062 = vmatpush1.msra.mxu0 %v562
    %2063 = vmatprep.subr.mxu0 %v570
    %2064 = vmatpush1.msra.mxu0 %v568
    %2065 = vmatprep.subr.mxu0 %v576
    %2066 = vmatpush1.msra.mxu0 %v574
    %2067 = vmatprep.subr.mxu0 %v582
    %2068 = vmatpush1.msra.mxu0 %v580
    %2069 = vmatprep.subr.mxu0 %v588
    %2070 = vmatpush1.msra.mxu0 %v586
    %2071 = vmatprep.subr.mxu0 %v594
    %2072 = vmatpush1.msra.mxu0 %v592
    %2073 = vmatprep.subr.mxu0 %v600
    %2074 = vmatpush1.msra.mxu0 %v598
    %2075 = vmatprep.subr.mxu0 %v606
    %2076 = vmatpush1.msra.mxu0 %v604
    %2077 = vmatprep.subr.mxu0 %v612
    %2078 = vmatpush1.msra.mxu0 %v610
    %2079 = vmatprep.subr.mxu0 %v618
    %2080 = vmatpush1.msra.mxu0 %v616
    %2081 = vmatprep.subr.mxu0 %v624
    %2082 = vmatpush1.msra.mxu0 %v622
    %2083 = vmatprep.subr.mxu0 %v630
    %2084 = vmatpush1.msra.mxu0 %v628
    %2085 = vmatprep.subr.mxu0 %v636
    %2086 = vmatpush1.msra.mxu0 %v634
    %2087 = vmatprep.subr.mxu0 %v642
    %2088 = vmatpush1.msra.mxu0 %v640
    %2089 = vmatprep.subr.mxu0 %v648
    %2090 = vmatpush1.msra.mxu0 %v646
    %2091 = vmatprep.subr.mxu0 %v654
    %2092 = vmatpush1.msra.mxu0 %v652
    %2093 = vmatprep.subr.mxu0 %v660
    %2094 = vmatpush1.msra.mxu0 %v658
    %2095 = vmatprep.mubr.f32.mxu0 %v2025
    %2096 = vmatmul.mubr.f32.gmra.mrb[0].mxu0 %v2017
    %v2097 = vpop.f32.mrb[0].mxu0
    %v2098 = vadd.f32 0.0, %v2097
    %v2099 = vpop.f32.mrb[0].mxu0
    %v2100 = vadd.f32 0.0, %v2099
    %2101 = vdwg.mxu0
    %2102 = vmatprep.subr.mxu0 %v666
    %2103 = vmatpush1.msra.mxu0 %v664
    %2104 = vmatprep.subr.mxu0 %v672
    %2105 = vmatpush1.msra.mxu0 %v670
    %2106 = vmatprep.subr.mxu0 %v678
    %2107 = vmatpush1.msra.mxu0 %v676
    %2108 = vmatprep.subr.mxu0 %v684
    %2109 = vmatpush1.msra.mxu0 %v682
    %2110 = vmatprep.subr.mxu0 %v690
    %2111 = vmatpush1.msra.mxu0 %v688
    %2112 = vmatprep.subr.mxu0 %v696
    %2113 = vmatpush1.msra.mxu0 %v694
    %2114 = vmatprep.subr.mxu0 %v702
    %2115 = vmatpush1.msra.mxu0 %v700
    %2116 = vmatprep.subr.mxu0 %v708
    %2117 = vmatpush1.msra.mxu0 %v706
    %2118 = vmatprep.subr.mxu0 %v714
    %2119 = vmatpush1.msra.mxu0 %v712
    %2120 = vmatprep.subr.mxu0 %v720
    %2121 = vmatpush1.msra.mxu0 %v718
    %2122 = vmatprep.subr.mxu0 %v726
    %2123 = vmatpush1.msra.mxu0 %v724
    %2124 = vmatprep.subr.mxu0 %v732
    %2125 = vmatpush1.msra.mxu0 %v730
    %2126 = vmatprep.subr.mxu0 %v738
    %2127 = vmatpush1.msra.mxu0 %v736
    %2128 = vmatprep.subr.mxu0 %v744
    %2129 = vmatpush1.msra.mxu0 %v742
    %2130 = vmatprep.subr.mxu0 %v750
    %2131 = vmatpush1.msra.mxu0 %v748
    %2132 = vmatprep.subr.mxu0 %v756
    %2133 = vmatpush1.msra.mxu0 %v754
    %2134 = vmatprep.subr.mxu0 %v762
    %2135 = vmatpush1.msra.mxu0 %v760
    %2136 = vmatprep.subr.mxu0 %v768
    %2137 = vmatpush1.msra.mxu0 %v766
    %2138 = vmatprep.subr.mxu0 %v774
    %2139 = vmatpush1.msra.mxu0 %v772
    %2140 = vmatprep.subr.mxu0 %v780
    %2141 = vmatpush1.msra.mxu0 %v778
    %2142 = vmatprep.subr.mxu0 %v786
    %2143 = vmatpush1.msra.mxu0 %v784
    %2144 = vmatprep.subr.mxu0 %v792
    %2145 = vmatpush1.msra.mxu0 %v790
    %2146 = vmatprep.subr.mxu0 %v798
    %2147 = vmatpush1.msra.mxu0 %v796
    %2148 = vmatprep.subr.mxu0 %v804
    %2149 = vmatpush1.msra.mxu0 %v802
    %2150 = vmatprep.subr.mxu0 %v810
    %2151 = vmatpush1.msra.mxu0 %v808
    %2152 = vmatprep.subr.mxu0 %v816
    %2153 = vmatpush1.msra.mxu0 %v814
    %2154 = vmatprep.subr.mxu0 %v822
    %2155 = vmatpush1.msra.mxu0 %v820
    %2156 = vmatprep.subr.mxu0 %v828
    %2157 = vmatpush1.msra.mxu0 %v826
    %2158 = vmatprep.subr.mxu0 %v834
    %2159 = vmatpush1.msra.mxu0 %v832
    %2160 = vmatprep.subr.mxu0 %v840
    %2161 = vmatpush1.msra.mxu0 %v838
    %2162 = vmatprep.subr.mxu0 %v846
    %2163 = vmatpush1.msra.mxu0 %v844
    %2164 = vmatprep.subr.mxu0 %v852
    %2165 = vmatpush1.msra.mxu0 %v850
    %2166 = vmatprep.mubr.f32.mxu0 %v2026
    %2167 = vmatmul.mubr.f32.gmra.mrb[0].mxu0 %v2024
    %v2168 = vpop.f32.mrb[0].mxu0
    %v2169 = vadd.f32 %v2098, %v2168
    %v2170 = vpop.f32.mrb[0].mxu0
    %v2171 = vadd.f32 %v2100, %v2170
    %2172 = vdwg.mxu0
    %2173 = vmatprep.subr.mxu0 %v923
    %2174 = vmatpush1.msra.mxu0 %v921
    %2175 = vmatprep.subr.mxu0 %v929
    %2176 = vmatpush1.msra.mxu0 %v927
    %2177 = vmatprep.subr.mxu0 %v935
    %2178 = vmatpush1.msra.mxu0 %v933
    %2179 = vmatprep.subr.mxu0 %v941
    %2180 = vmatpush1.msra.mxu0 %v939
    %2181 = vmatprep.subr.mxu0 %v947
    %2182 = vmatpush1.msra.mxu0 %v945
    %2183 = vmatprep.subr.mxu0 %v953
    %2184 = vmatpush1.msra.mxu0 %v951
    %2185 = vmatprep.subr.mxu0 %v959
    %2186 = vmatpush1.msra.mxu0 %v957
    %2187 = vmatprep.subr.mxu0 %v965
    %2188 = vmatpush1.msra.mxu0 %v963
    %2189 = vmatprep.subr.mxu0 %v971
    %2190 = vmatpush1.msra.mxu0 %v969
    %2191 = vmatprep.subr.mxu0 %v977
    %2192 = vmatpush1.msra.mxu0 %v975
    %2193 = vmatprep.subr.mxu0 %v983
    %2194 = vmatpush1.msra.mxu0 %v981
    %2195 = vmatprep.subr.mxu0 %v989
    %2196 = vmatpush1.msra.mxu0 %v987
    %2197 = vmatprep.subr.mxu0 %v995
    %2198 = vmatpush1.msra.mxu0 %v993
    %2199 = vmatprep.subr.mxu0 %v1001
    %2200 = vmatpush1.msra.mxu0 %v999
    %2201 = vmatprep.subr.mxu0 %v1007
    %2202 = vmatpush1.msra.mxu0 %v1005
    %2203 = vmatprep.subr.mxu0 %v1013
    %2204 = vmatpush1.msra.mxu0 %v1011
    %2205 = vmatprep.subr.mxu0 %v1019
    %2206 = vmatpush1.msra.mxu0 %v1017
    %2207 = vmatprep.subr.mxu0 %v1025
    %2208 = vmatpush1.msra.mxu0 %v1023
    %2209 = vmatprep.subr.mxu0 %v1031
    %2210 = vmatpush1.msra.mxu0 %v1029
    %2211 = vmatprep.subr.mxu0 %v1037
    %2212 = vmatpush1.msra.mxu0 %v1035
    %2213 = vmatprep.subr.mxu0 %v1043
    %2214 = vmatpush1.msra.mxu0 %v1041
    %2215 = vmatprep.subr.mxu0 %v1049
    %2216 = vmatpush1.msra.mxu0 %v1047
    %2217 = vmatprep.subr.mxu0 %v1055
    %2218 = vmatpush1.msra.mxu0 %v1053
    %2219 = vmatprep.subr.mxu0 %v1061
    %2220 = vmatpush1.msra.mxu0 %v1059
    %2221 = vmatprep.subr.mxu0 %v1067
    %2222 = vmatpush1.msra.mxu0 %v1065
    %2223 = vmatprep.subr.mxu0 %v1073
    %2224 = vmatpush1.msra.mxu0 %v1071
    %2225 = vmatprep.subr.mxu0 %v1079
    %2226 = vmatpush1.msra.mxu0 %v1077
    %2227 = vmatprep.subr.mxu0 %v1085
    %2228 = vmatpush1.msra.mxu0 %v1083
    %2229 = vmatprep.subr.mxu0 %v1091
    %2230 = vmatpush1.msra.mxu0 %v1089
    %2231 = vmatprep.subr.mxu0 %v1097
    %2232 = vmatpush1.msra.mxu0 %v1095
    %2233 = vmatprep.subr.mxu0 %v1103
    %2234 = vmatpush1.msra.mxu0 %v1101
    %2235 = vmatprep.subr.mxu0 %v1109
    %2236 = vmatpush1.msra.mxu0 %v1107
    %2237 = vmatprep.mubr.f32.mxu0 %v2025
    %2238 = vmatmul.mubr.f32.gmra.mrb[0].mxu0 %v2017
    %v2239 = vpop.f32.mrb[0].mxu0
    %v2240 = vadd.f32 0.0, %v2239
    %v2241 = vpop.f32.mrb[0].mxu0
    %v2242 = vadd.f32 0.0, %v2241
    %2243 = vdwg.mxu0
    %2244 = vmatprep.subr.mxu0 %v1115
    %2245 = vmatpush1.msra.mxu0 %v1113
    %2246 = vmatprep.subr.mxu0 %v1121
    %2247 = vmatpush1.msra.mxu0 %v1119
    %2248 = vmatprep.subr.mxu0 %v1127
    %2249 = vmatpush1.msra.mxu0 %v1125
    %2250 = vmatprep.subr.mxu0 %v1133
    %2251 = vmatpush1.msra.mxu0 %v1131
    %2252 = vmatprep.subr.mxu0 %v1139
    %2253 = vmatpush1.msra.mxu0 %v1137
    %2254 = vmatprep.subr.mxu0 %v1145
    %2255 = vmatpush1.msra.mxu0 %v1143
    %2256 = vmatprep.subr.mxu0 %v1151
    %2257 = vmatpush1.msra.mxu0 %v1149
    %2258 = vmatprep.subr.mxu0 %v1157
    %2259 = vmatpush1.msra.mxu0 %v1155
    %2260 = vmatprep.subr.mxu0 %v1163
    %2261 = vmatpush1.msra.mxu0 %v1161
    %2262 = vmatprep.subr.mxu0 %v1169
    %2263 = vmatpush1.msra.mxu0 %v1167
    %2264 = vmatprep.subr.mxu0 %v1175
    %2265 = vmatpush1.msra.mxu0 %v1173
    %2266 = vmatprep.subr.mxu0 %v1181
    %2267 = vmatpush1.msra.mxu0 %v1179
    %2268 = vmatprep.subr.mxu0 %v1187
    %2269 = vmatpush1.msra.mxu0 %v1185
    %2270 = vmatprep.subr.mxu0 %v1193
    %2271 = vmatpush1.msra.mxu0 %v1191
    %2272 = vmatprep.subr.mxu0 %v1199
    %2273 = vmatpush1.msra.mxu0 %v1197
    %2274 = vmatprep.subr.mxu0 %v1205
    %2275 = vmatpush1.msra.mxu0 %v1203
    %2276 = vmatprep.subr.mxu0 %v1211
    %2277 = vmatpush1.msra.mxu0 %v1209
    %2278 = vmatprep.subr.mxu0 %v1217
    %2279 = vmatpush1.msra.mxu0 %v1215
    %2280 = vmatprep.subr.mxu0 %v1223
    %2281 = vmatpush1.msra.mxu0 %v1221
    %2282 = vmatprep.subr.mxu0 %v1229
    %2283 = vmatpush1.msra.mxu0 %v1227
    %2284 = vmatprep.subr.mxu0 %v1235
    %2285 = vmatpush1.msra.mxu0 %v1233
    %2286 = vmatprep.subr.mxu0 %v1241
    %2287 = vmatpush1.msra.mxu0 %v1239
    %2288 = vmatprep.subr.mxu0 %v1247
    %2289 = vmatpush1.msra.mxu0 %v1245
    %2290 = vmatprep.subr.mxu0 %v1253
    %2291 = vmatpush1.msra.mxu0 %v1251
    %2292 = vmatprep.subr.mxu0 %v1259
    %2293 = vmatpush1.msra.mxu0 %v1257
    %2294 = vmatprep.subr.mxu0 %v1265
    %2295 = vmatpush1.msra.mxu0 %v1263
    %2296 = vmatprep.subr.mxu0 %v1271
    %2297 = vmatpush1.msra.mxu0 %v1269
    %2298 = vmatprep.subr.mxu0 %v1277
    %2299 = vmatpush1.msra.mxu0 %v1275
    %2300 = vmatprep.subr.mxu0 %v1283
    %2301 = vmatpush1.msra.mxu0 %v1281
    %2302 = vmatprep.subr.mxu0 %v1289
    %2303 = vmatpush1.msra.mxu0 %v1287
    %2304 = vmatprep.subr.mxu0 %v1295
    %2305 = vmatpush1.msra.mxu0 %v1293
    %2306 = vmatprep.subr.mxu0 %v1301
    %2307 = vmatpush1.msra.mxu0 %v1299
    %2308 = vmatprep.mubr.f32.mxu0 %v2026
    %2309 = vmatmul.mubr.f32.gmra.mrb[0].mxu0 %v2024
    %v2310 = vpop.f32.mrb[0].mxu0
    %v2311 = vadd.f32 %v2240, %v2310
    %v2312 = vpop.f32.mrb[0].mxu0
    %v2313 = vadd.f32 %v2242, %v2312
    %2314 = vdwg.mxu0
    %2315 = vmatprep.subr.mxu0 0.0
    %2316 = vmatpush1.msra.mxu0 %v1370
    %2317 = vmatprep.subr.mxu0 0.0
    %2318 = vmatpush1.msra.mxu0 %v1375
    %2319 = vmatprep.subr.mxu0 0.0
    %2320 = vmatpush1.msra.mxu0 %v1380
    %2321 = vmatprep.subr.mxu0 0.0
    %2322 = vmatpush1.msra.mxu0 %v1385
    %2323 = vmatprep.subr.mxu0 0.0
    %2324 = vmatpush1.msra.mxu0 %v1390
    %2325 = vmatprep.subr.mxu0 0.0
    %2326 = vmatpush1.msra.mxu0 %v1395
    %2327 = vmatprep.subr.mxu0 0.0
    %2328 = vmatpush1.msra.mxu0 %v1400
    %2329 = vmatprep.subr.mxu0 0.0
    %2330 = vmatpush1.msra.mxu0 %v1405
    %2331 = vmatprep.subr.mxu0 0.0
    %2332 = vmatpush1.msra.mxu0 %v1410
    %2333 = vmatprep.subr.mxu0 0.0
    %2334 = vmatpush1.msra.mxu0 %v1415
    %2335 = vmatprep.subr.mxu0 0.0
    %2336 = vmatpush1.msra.mxu0 %v1420
    %2337 = vmatprep.subr.mxu0 0.0
    %2338 = vmatpush1.msra.mxu0 %v1425
    %2339 = vmatprep.subr.mxu0 0.0
    %2340 = vmatpush1.msra.mxu0 %v1430
    %2341 = vmatprep.subr.mxu0 0.0
    %2342 = vmatpush1.msra.mxu0 %v1435
    %2343 = vmatprep.subr.mxu0 0.0
    %2344 = vmatpush1.msra.mxu0 %v1440
    %2345 = vmatprep.subr.mxu0 0.0
    %2346 = vmatpush1.msra.mxu0 %v1445
    %2347 = vmatprep.subr.mxu0 0.0
    %2348 = vmatpush1.msra.mxu0 %v1450
    %2349 = vmatprep.subr.mxu0 0.0
    %2350 = vmatpush1.msra.mxu0 %v1455
    %2351 = vmatprep.subr.mxu0 0.0
    %2352 = vmatpush1.msra.mxu0 %v1460
    %2353 = vmatprep.subr.mxu0 0.0
    %2354 = vmatpush1.msra.mxu0 %v1465
    %2355 = vmatprep.subr.mxu0 0.0
    %2356 = vmatpush1.msra.mxu0 %v1470
    %2357 = vmatprep.subr.mxu0 0.0
    %2358 = vmatpush1.msra.mxu0 %v1475
    %2359 = vmatprep.subr.mxu0 0.0
    %2360 = vmatpush1.msra.mxu0 %v1480
    %2361 = vmatprep.subr.mxu0 0.0
    %2362 = vmatpush1.msra.mxu0 %v1485
    %2363 = vmatprep.subr.mxu0 0.0
    %2364 = vmatpush1.msra.mxu0 %v1490
    %2365 = vmatprep.subr.mxu0 0.0
    %2366 = vmatpush1.msra.mxu0 %v1495
    %2367 = vmatprep.subr.mxu0 0.0
    %2368 = vmatpush1.msra.mxu0 %v1500
    %2369 = vmatprep.subr.mxu0 0.0
    %2370 = vmatpush1.msra.mxu0 %v1505
    %2371 = vmatprep.subr.mxu0 0.0
    %2372 = vmatpush1.msra.mxu0 %v1510
    %2373 = vmatprep.subr.mxu0 0.0
    %2374 = vmatpush1.msra.mxu0 %v1515
    %2375 = vmatprep.subr.mxu0 0.0
    %2376 = vmatpush1.msra.mxu0 %v1520
    %2377 = vmatprep.subr.mxu0 0.0
    %2378 = vmatpush1.msra.mxu0 %v1525
    %2379 = vmatprep.mubr.f32.mxu0 %v2025
    %2380 = vmatmul.mubr.f32.gmra.mrb[0].mxu0 %v2017
    %v2381 = vpop.f32.mrb[0].mxu0
    %v2382 = vadd.f32 0.0, %v2381
    %v2383 = vpop.f32.mrb[0].mxu0
    %2384 = vdwg.mxu0
    %2385 = vmatprep.subr.mxu0 0.0
    %2386 = vmatpush1.msra.mxu0 %v1530
    %2387 = vmatprep.subr.mxu0 0.0
    %2388 = vmatpush1.msra.mxu0 %v1535
    %2389 = vmatprep.subr.mxu0 0.0
    %2390 = vmatpush1.msra.mxu0 %v1540
    %2391 = vmatprep.subr.mxu0 0.0
    %2392 = vmatpush1.msra.mxu0 %v1545
    %2393 = vmatprep.subr.mxu0 0.0
    %2394 = vmatpush1.msra.mxu0 %v1550
    %2395 = vmatprep.subr.mxu0 0.0
    %2396 = vmatpush1.msra.mxu0 %v1555
    %2397 = vmatprep.subr.mxu0 0.0
    %2398 = vmatpush1.msra.mxu0 %v1560
    %2399 = vmatprep.subr.mxu0 0.0
    %2400 = vmatpush1.msra.mxu0 %v1565
    %2401 = vmatprep.subr.mxu0 0.0
    %2402 = vmatpush1.msra.mxu0 %v1570
    %2403 = vmatprep.subr.mxu0 0.0
    %2404 = vmatpush1.msra.mxu0 %v1575
    %2405 = vmatprep.subr.mxu0 0.0
    %2406 = vmatpush1.msra.mxu0 %v1580
    %2407 = vmatprep.subr.mxu0 0.0
    %2408 = vmatpush1.msra.mxu0 %v1585
    %2409 = vmatprep.subr.mxu0 0.0
    %2410 = vmatpush1.msra.mxu0 %v1590
    %2411 = vmatprep.subr.mxu0 0.0
    %2412 = vmatpush1.msra.mxu0 %v1595
    %2413 = vmatprep.subr.mxu0 0.0
    %2414 = vmatpush1.msra.mxu0 %v1600
    %2415 = vmatprep.subr.mxu0 0.0
    %2416 = vmatpush1.msra.mxu0 %v1605
    %2417 = vmatprep.subr.mxu0 0.0
    %2418 = vmatpush1.msra.mxu0 %v1610
    %2419 = vmatprep.subr.mxu0 0.0
    %2420 = vmatpush1.msra.mxu0 %v1615
    %2421 = vmatprep.subr.mxu0 0.0
    %2422 = vmatpush1.msra.mxu0 %v1620
    %2423 = vmatprep.subr.mxu0 0.0
    %2424 = vmatpush1.msra.mxu0 %v1625
    %2425 = vmatprep.subr.mxu0 0.0
    %2426 = vmatpush1.msra.mxu0 %v1630
    %2427 = vmatprep.subr.mxu0 0.0
    %2428 = vmatpush1.msra.mxu0 %v1635
    %2429 = vmatprep.subr.mxu0 0.0
    %2430 = vmatpush1.msra.mxu0 %v1640
    %2431 = vmatprep.subr.mxu0 0.0
    %2432 = vmatpush1.msra.mxu0 %v1645
    %2433 = vmatprep.subr.mxu0 0.0
    %2434 = vmatpush1.msra.mxu0 %v1650
    %2435 = vmatprep.subr.mxu0 0.0
    %2436 = vmatpush1.msra.mxu0 %v1655
    %2437 = vmatprep.subr.mxu0 0.0
    %2438 = vmatpush1.msra.mxu0 %v1660
    %2439 = vmatprep.subr.mxu0 0.0
    %2440 = vmatpush1.msra.mxu0 %v1665
    %2441 = vmatprep.subr.mxu0 0.0
    %2442 = vmatpush1.msra.mxu0 %v1670
    %2443 = vmatprep.subr.mxu0 0.0
    %2444 = vmatpush1.msra.mxu0 %v1675
    %2445 = vmatprep.subr.mxu0 0.0
    %2446 = vmatpush1.msra.mxu0 %v1680
    %2447 = vmatprep.subr.mxu0 0.0
    %2448 = vmatpush1.msra.mxu0 %v1685
    %2449 = vmatprep.mubr.f32.mxu0 %v2026
    %2450 = vmatmul.mubr.f32.gmra.mrb[0].mxu0 %v2024
    %v2451 = vpop.f32.mrb[0].mxu0
    %v2452 = vadd.f32 %v2382, %v2451
    %v2453 = vpop.f32.mrb[0].mxu0
    %2454 = vdwg.mxu0
    %2455 = vmatprep.subr.mxu0 %v1689
    %2456 = vmatpush1.msra.mxu0 %v1688
    %2457 = vmatprep.subr.mxu0 %v1694
    %2458 = vmatpush1.msra.mxu0 %v1693
    %2459 = vmatprep.subr.mxu0 %v1699
    %2460 = vmatpush1.msra.mxu0 %v1698
    %2461 = vmatprep.subr.mxu0 %v1704
    %2462 = vmatpush1.msra.mxu0 %v1703
    %2463 = vmatprep.subr.mxu0 %v1709
    %2464 = vmatpush1.msra.mxu0 %v1708
    %2465 = vmatprep.subr.mxu0 %v1714
    %2466 = vmatpush1.msra.mxu0 %v1713
    %2467 = vmatprep.subr.mxu0 %v1719
    %2468 = vmatpush1.msra.mxu0 %v1718
    %2469 = vmatprep.subr.mxu0 %v1724
    %2470 = vmatpush1.msra.mxu0 %v1723
    %2471 = vmatprep.subr.mxu0 %v1729
    %2472 = vmatpush1.msra.mxu0 %v1728
    %2473 = vmatprep.subr.mxu0 %v1734
    %2474 = vmatpush1.msra.mxu0 %v1733
    %2475 = vmatprep.subr.mxu0 %v1739
    %2476 = vmatpush1.msra.mxu0 %v1738
    %2477 = vmatprep.subr.mxu0 %v1744
    %2478 = vmatpush1.msra.mxu0 %v1743
    %2479 = vmatprep.subr.mxu0 %v1749
    %2480 = vmatpush1.msra.mxu0 %v1748
    %2481 = vmatprep.subr.mxu0 %v1754
    %2482 = vmatpush1.msra.mxu0 %v1753
    %2483 = vmatprep.subr.mxu0 %v1759
    %2484 = vmatpush1.msra.mxu0 %v1758
    %2485 = vmatprep.subr.mxu0 %v1764
    %2486 = vmatpush1.msra.mxu0 %v1763
    %2487 = vmatprep.subr.mxu0 %v1769
    %2488 = vmatpush1.msra.mxu0 %v1768
    %2489 = vmatprep.subr.mxu0 %v1774
    %2490 = vmatpush1.msra.mxu0 %v1773
    %2491 = vmatprep.subr.mxu0 %v1779
    %2492 = vmatpush1.msra.mxu0 %v1778
    %2493 = vmatprep.subr.mxu0 %v1784
    %2494 = vmatpush1.msra.mxu0 %v1783
    %2495 = vmatprep.subr.mxu0 %v1789
    %2496 = vmatpush1.msra.mxu0 %v1788
    %2497 = vmatprep.subr.mxu0 %v1794
    %2498 = vmatpush1.msra.mxu0 %v1793
    %2499 = vmatprep.subr.mxu0 %v1799
    %2500 = vmatpush1.msra.mxu0 %v1798
    %2501 = vmatprep.subr.mxu0 %v1804
    %2502 = vmatpush1.msra.mxu0 %v1803
    %2503 = vmatprep.subr.mxu0 %v1809
    %2504 = vmatpush1.msra.mxu0 %v1808
    %2505 = vmatprep.subr.mxu0 %v1814
    %2506 = vmatpush1.msra.mxu0 %v1813
    %2507 = vmatprep.subr.mxu0 %v1819
    %2508 = vmatpush1.msra.mxu0 %v1818
    %2509 = vmatprep.subr.mxu0 %v1824
    %2510 = vmatpush1.msra.mxu0 %v1823
    %2511 = vmatprep.subr.mxu0 %v1829
    %2512 = vmatpush1.msra.mxu0 %v1828
    %2513 = vmatprep.subr.mxu0 %v1834
    %2514 = vmatpush1.msra.mxu0 %v1833
    %2515 = vmatprep.subr.mxu0 %v1839
    %2516 = vmatpush1.msra.mxu0 %v1838
    %2517 = vmatprep.subr.mxu0 %v1844
    %2518 = vmatpush1.msra.mxu0 %v1843
    %2519 = vmatprep.mubr.f32.mxu0 %v2025
    %2520 = vmatmul.mubr.f32.gmra.mrb[0].mxu0 %v2017
    %v2521 = vpop.f32.mrb[0].mxu0
    %v2522 = vadd.f32 0.0, %v2521
    %v2523 = vpop.f32.mrb[0].mxu0
    %v2524 = vadd.f32 0.0, %v2523
    %2525 = vdwg.mxu0
    %2526 = vmatprep.subr.mxu0 %v1849
    %2527 = vmatpush1.msra.mxu0 %v1848
    %2528 = vmatprep.subr.mxu0 %v1854
    %2529 = vmatpush1.msra.mxu0 %v1853
    %2530 = vmatprep.subr.mxu0 %v1859
    %2531 = vmatpush1.msra.mxu0 %v1858
    %2532 = vmatprep.subr.mxu0 %v1864
    %2533 = vmatpush1.msra.mxu0 %v1863
    %2534 = vmatprep.subr.mxu0 %v1869
    %2535 = vmatpush1.msra.mxu0 %v1868
    %2536 = vmatprep.subr.mxu0 %v1874
    %2537 = vmatpush1.msra.mxu0 %v1873
    %2538 = vmatprep.subr.mxu0 %v1879
    %2539 = vmatpush1.msra.mxu0 %v1878
    %2540 = vmatprep.subr.mxu0 %v1884
    %2541 = vmatpush1.msra.mxu0 %v1883
    %2542 = vmatprep.subr.mxu0 %v1889
    %2543 = vmatpush1.msra.mxu0 %v1888
    %2544 = vmatprep.subr.mxu0 %v1894
    %2545 = vmatpush1.msra.mxu0 %v1893
    %2546 = vmatprep.subr.mxu0 %v1899
    %2547 = vmatpush1.msra.mxu0 %v1898
    %2548 = vmatprep.subr.mxu0 %v1904
    %2549 = vmatpush1.msra.mxu0 %v1903
    %2550 = vmatprep.subr.mxu0 %v1909
    %2551 = vmatpush1.msra.mxu0 %v1908
    %2552 = vmatprep.subr.mxu0 %v1914
    %2553 = vmatpush1.msra.mxu0 %v1913
    %2554 = vmatprep.subr.mxu0 %v1919
    %2555 = vmatpush1.msra.mxu0 %v1918
    %2556 = vmatprep.subr.mxu0 %v1924
    %2557 = vmatpush1.msra.mxu0 %v1923
    %2558 = vmatprep.subr.mxu0 %v1929
    %2559 = vmatpush1.msra.mxu0 %v1928
    %2560 = vmatprep.subr.mxu0 %v1934
    %2561 = vmatpush1.msra.mxu0 %v1933
    %2562 = vmatprep.subr.mxu0 %v1939
    %2563 = vmatpush1.msra.mxu0 %v1938
    %2564 = vmatprep.subr.mxu0 %v1944
    %2565 = vmatpush1.msra.mxu0 %v1943
    %2566 = vmatprep.subr.mxu0 %v1949
    %2567 = vmatpush1.msra.mxu0 %v1948
    %2568 = vmatprep.subr.mxu0 %v1954
    %2569 = vmatpush1.msra.mxu0 %v1953
    %2570 = vmatprep.subr.mxu0 %v1959
    %2571 = vmatpush1.msra.mxu0 %v1958
    %2572 = vmatprep.subr.mxu0 %v1964
    %2573 = vmatpush1.msra.mxu0 %v1963
    %2574 = vmatprep.subr.mxu0 %v1969
    %2575 = vmatpush1.msra.mxu0 %v1968
    %2576 = vmatprep.subr.mxu0 %v1974
    %2577 = vmatpush1.msra.mxu0 %v1973
    %2578 = vmatprep.subr.mxu0 %v1979
    %2579 = vmatpush1.msra.mxu0 %v1978
    %2580 = vmatprep.subr.mxu0 %v1984
    %2581 = vmatpush1.msra.mxu0 %v1983
    %2582 = vmatprep.subr.mxu0 %v1989
    %2583 = vmatpush1.msra.mxu0 %v1988
    %2584 = vmatprep.subr.mxu0 %v1994
    %2585 = vmatpush1.msra.mxu0 %v1993
    %2586 = vmatprep.subr.mxu0 %v1999
    %2587 = vmatpush1.msra.mxu0 %v1998
    %2588 = vmatprep.subr.mxu0 %v2004
    %2589 = vmatpush1.msra.mxu0 %v2003
    %2590 = vmatprep.mubr.f32.mxu0 %v2026
    %2591 = vmatmul.mubr.f32.gmra.mrb[0].mxu0 %v2024
    %v2592 = vpop.f32.mrb[0].mxu0
    %v2593 = vadd.f32 %v2522, %v2592
    %v2594 = vpop.f32.mrb[0].mxu0
    %v2595 = vadd.f32 %v2524, %v2594
    %2596 = vdwg.mxu0
    %2597 = vmatprep.subr.mxu0 %v1691
    %2598 = vmatpush1.msra.mxu0 %v1690
    %2599 = vmatprep.subr.mxu0 %v1696
    %2600 = vmatpush1.msra.mxu0 %v1695
    %2601 = vmatprep.subr.mxu0 %v1701
    %2602 = vmatpush1.msra.mxu0 %v1700
    %2603 = vmatprep.subr.mxu0 %v1706
    %2604 = vmatpush1.msra.mxu0 %v1705
    %2605 = vmatprep.subr.mxu0 %v1711
    %2606 = vmatpush1.msra.mxu0 %v1710
    %2607 = vmatprep.subr.mxu0 %v1716
    %2608 = vmatpush1.msra.mxu0 %v1715
    %2609 = vmatprep.subr.mxu0 %v1721
    %2610 = vmatpush1.msra.mxu0 %v1720
    %2611 = vmatprep.subr.mxu0 %v1726
    %2612 = vmatpush1.msra.mxu0 %v1725
    %2613 = vmatprep.subr.mxu0 %v1731
    %2614 = vmatpush1.msra.mxu0 %v1730
    %2615 = vmatprep.subr.mxu0 %v1736
    %2616 = vmatpush1.msra.mxu0 %v1735
    %2617 = vmatprep.subr.mxu0 %v1741
    %2618 = vmatpush1.msra.mxu0 %v1740
    %2619 = vmatprep.subr.mxu0 %v1746
    %2620 = vmatpush1.msra.mxu0 %v1745
    %2621 = vmatprep.subr.mxu0 %v1751
    %2622 = vmatpush1.msra.mxu0 %v1750
    %2623 = vmatprep.subr.mxu0 %v1756
    %2624 = vmatpush1.msra.mxu0 %v1755
    %2625 = vmatprep.subr.mxu0 %v1761
    %2626 = vmatpush1.msra.mxu0 %v1760
    %2627 = vmatprep.subr.mxu0 %v1766
    %2628 = vmatpush1.msra.mxu0 %v1765
    %2629 = vmatprep.subr.mxu0 %v1771
    %2630 = vmatpush1.msra.mxu0 %v1770
    %2631 = vmatprep.subr.mxu0 %v1776
    %2632 = vmatpush1.msra.mxu0 %v1775
    %2633 = vmatprep.subr.mxu0 %v1781
    %2634 = vmatpush1.msra.mxu0 %v1780
    %2635 = vmatprep.subr.mxu0 %v1786
    %2636 = vmatpush1.msra.mxu0 %v1785
    %2637 = vmatprep.subr.mxu0 %v1791
    %2638 = vmatpush1.msra.mxu0 %v1790
    %2639 = vmatprep.subr.mxu0 %v1796
    %2640 = vmatpush1.msra.mxu0 %v1795
    %2641 = vmatprep.subr.mxu0 %v1801
    %2642 = vmatpush1.msra.mxu0 %v1800
    %2643 = vmatprep.subr.mxu0 %v1806
    %2644 = vmatpush1.msra.mxu0 %v1805
    %2645 = vmatprep.subr.mxu0 %v1811
    %2646 = vmatpush1.msra.mxu0 %v1810
    %2647 = vmatprep.subr.mxu0 %v1816
    %2648 = vmatpush1.msra.mxu0 %v1815
    %2649 = vmatprep.subr.mxu0 %v1821
    %2650 = vmatpush1.msra.mxu0 %v1820
    %2651 = vmatprep.subr.mxu0 %v1826
    %2652 = vmatpush1.msra.mxu0 %v1825
    %2653 = vmatprep.subr.mxu0 %v1831
    %2654 = vmatpush1.msra.mxu0 %v1830
    %2655 = vmatprep.subr.mxu0 %v1836
    %2656 = vmatpush1.msra.mxu0 %v1835
    %2657 = vmatprep.subr.mxu0 %v1841
    %2658 = vmatpush1.msra.mxu0 %v1840
    %2659 = vmatprep.subr.mxu0 %v1846
    %2660 = vmatpush1.msra.mxu0 %v1845
    %2661 = vmatprep.mubr.f32.mxu0 %v2025
    %2662 = vmatmul.mubr.f32.gmra.mrb[0].mxu0 %v2017
    %v2663 = vpop.f32.mrb[0].mxu0
    %v2664 = vadd.f32 0.0, %v2663
    %v2665 = vpop.f32.mrb[0].mxu0
    %v2666 = vadd.f32 0.0, %v2665
    %2667 = vdwg.mxu0
    %2668 = vmatprep.subr.mxu0 %v1851
    %2669 = vmatpush1.msra.mxu0 %v1850
    %2670 = vmatprep.subr.mxu0 %v1856
    %2671 = vmatpush1.msra.mxu0 %v1855
    %2672 = vmatprep.subr.mxu0 %v1861
    %2673 = vmatpush1.msra.mxu0 %v1860
    %2674 = vmatprep.subr.mxu0 %v1866
    %2675 = vmatpush1.msra.mxu0 %v1865
    %2676 = vmatprep.subr.mxu0 %v1871
    %2677 = vmatpush1.msra.mxu0 %v1870
    %2678 = vmatprep.subr.mxu0 %v1876
    %2679 = vmatpush1.msra.mxu0 %v1875
    %2680 = vmatprep.subr.mxu0 %v1881
    %2681 = vmatpush1.msra.mxu0 %v1880
    %2682 = vmatprep.subr.mxu0 %v1886
    %2683 = vmatpush1.msra.mxu0 %v1885
    %2684 = vmatprep.subr.mxu0 %v1891
    %2685 = vmatpush1.msra.mxu0 %v1890
    %2686 = vmatprep.subr.mxu0 %v1896
    %2687 = vmatpush1.msra.mxu0 %v1895
    %2688 = vmatprep.subr.mxu0 %v1901
    %2689 = vmatpush1.msra.mxu0 %v1900
    %2690 = vmatprep.subr.mxu0 %v1906
    %2691 = vmatpush1.msra.mxu0 %v1905
    %2692 = vmatprep.subr.mxu0 %v1911
    %2693 = vmatpush1.msra.mxu0 %v1910
    %2694 = vmatprep.subr.mxu0 %v1916
    %2695 = vmatpush1.msra.mxu0 %v1915
    %2696 = vmatprep.subr.mxu0 %v1921
    %2697 = vmatpush1.msra.mxu0 %v1920
    %2698 = vmatprep.subr.mxu0 %v1926
    %2699 = vmatpush1.msra.mxu0 %v1925
    %2700 = vmatprep.subr.mxu0 %v1931
    %2701 = vmatpush1.msra.mxu0 %v1930
    %2702 = vmatprep.subr.mxu0 %v1936
    %2703 = vmatpush1.msra.mxu0 %v1935
    %2704 = vmatprep.subr.mxu0 %v1941
    %2705 = vmatpush1.msra.mxu0 %v1940
    %2706 = vmatprep.subr.mxu0 %v1946
    %2707 = vmatpush1.msra.mxu0 %v1945
    %2708 = vmatprep.subr.mxu0 %v1951
    %2709 = vmatpush1.msra.mxu0 %v1950
    %2710 = vmatprep.subr.mxu0 %v1956
    %2711 = vmatpush1.msra.mxu0 %v1955
    %2712 = vmatprep.subr.mxu0 %v1961
    %2713 = vmatpush1.msra.mxu0 %v1960
    %2714 = vmatprep.subr.mxu0 %v1966
    %2715 = vmatpush1.msra.mxu0 %v1965
    %2716 = vmatprep.subr.mxu0 %v1971
    %2717 = vmatpush1.msra.mxu0 %v1970
    %2718 = vmatprep.subr.mxu0 %v1976
    %2719 = vmatpush1.msra.mxu0 %v1975
    %2720 = vmatprep.subr.mxu0 %v1981
    %2721 = vmatpush1.msra.mxu0 %v1980
    %2722 = vmatprep.subr.mxu0 %v1986
    %2723 = vmatpush1.msra.mxu0 %v1985
    %2724 = vmatprep.subr.mxu0 %v1991
    %2725 = vmatpush1.msra.mxu0 %v1990
    %2726 = vmatprep.subr.mxu0 %v1996
    %2727 = vmatpush1.msra.mxu0 %v1995
    %2728 = vmatprep.subr.mxu0 %v2001
    %2729 = vmatpush1.msra.mxu0 %v2000
    %2730 = vmatprep.subr.mxu0 %v2006
    %2731 = vmatpush1.msra.mxu0 %v2005
    %2732 = vmatprep.mubr.f32.mxu0 %v2026
    %2733 = vmatmul.mubr.f32.gmra.mrb[0].mxu0 %v2024
    %v2734 = vpop.f32.mrb[0].mxu0
    %v2735 = vadd.f32 %v2664, %v2734
    %v2736 = vpop.f32.mrb[0].mxu0
    %v2737 = vadd.f32 %v2666, %v2736
    %2738 = vdwg.mxu0
    %2739 = vmatprep.subr.mxu0 0.0
    %2740 = vmatpush1.msra.mxu0 %v1692
    %2741 = vmatprep.subr.mxu0 0.0
    %2742 = vmatpush1.msra.mxu0 %v1697
    %2743 = vmatprep.subr.mxu0 0.0
    %2744 = vmatpush1.msra.mxu0 %v1702
    %2745 = vmatprep.subr.mxu0 0.0
    %2746 = vmatpush1.msra.mxu0 %v1707
    %2747 = vmatprep.subr.mxu0 0.0
    %2748 = vmatpush1.msra.mxu0 %v1712
    %2749 = vmatprep.subr.mxu0 0.0
    %2750 = vmatpush1.msra.mxu0 %v1717
    %2751 = vmatprep.subr.mxu0 0.0
    %2752 = vmatpush1.msra.mxu0 %v1722
    %2753 = vmatprep.subr.mxu0 0.0
    %2754 = vmatpush1.msra.mxu0 %v1727
    %2755 = vmatprep.subr.mxu0 0.0
    %2756 = vmatpush1.msra.mxu0 %v1732
    %2757 = vmatprep.subr.mxu0 0.0
    %2758 = vmatpush1.msra.mxu0 %v1737
    %2759 = vmatprep.subr.mxu0 0.0
    %2760 = vmatpush1.msra.mxu0 %v1742
    %2761 = vmatprep.subr.mxu0 0.0
    %2762 = vmatpush1.msra.mxu0 %v1747
    %2763 = vmatprep.subr.mxu0 0.0
    %2764 = vmatpush1.msra.mxu0 %v1752
    %2765 = vmatprep.subr.mxu0 0.0
    %2766 = vmatpush1.msra.mxu0 %v1757
    %2767 = vmatprep.subr.mxu0 0.0
    %2768 = vmatpush1.msra.mxu0 %v1762
    %2769 = vmatprep.subr.mxu0 0.0
    %2770 = vmatpush1.msra.mxu0 %v1767
    %2771 = vmatprep.subr.mxu0 0.0
    %2772 = vmatpush1.msra.mxu0 %v1772
    %2773 = vmatprep.subr.mxu0 0.0
    %2774 = vmatpush1.msra.mxu0 %v1777
    %2775 = vmatprep.subr.mxu0 0.0
    %2776 = vmatpush1.msra.mxu0 %v1782
    %2777 = vmatprep.subr.mxu0 0.0
    %2778 = vmatpush1.msra.mxu0 %v1787
    %2779 = vmatprep.subr.mxu0 0.0
    %2780 = vmatpush1.msra.mxu0 %v1792
    %2781 = vmatprep.subr.mxu0 0.0
    %2782 = vmatpush1.msra.mxu0 %v1797
    %2783 = vmatprep.subr.mxu0 0.0
    %2784 = vmatpush1.msra.mxu0 %v1802
    %2785 = vmatprep.subr.mxu0 0.0
    %2786 = vmatpush1.msra.mxu0 %v1807
    %2787 = vmatprep.subr.mxu0 0.0
    %2788 = vmatpush1.msra.mxu0 %v1812
    %2789 = vmatprep.subr.mxu0 0.0
    %2790 = vmatpush1.msra.mxu0 %v1817
    %2791 = vmatprep.subr.mxu0 0.0
    %2792 = vmatpush1.msra.mxu0 %v1822
    %2793 = vmatprep.subr.mxu0 0.0
    %2794 = vmatpush1.msra.mxu0 %v1827
    %2795 = vmatprep.subr.mxu0 0.0
    %2796 = vmatpush1.msra.mxu0 %v1832
    %2797 = vmatprep.subr.mxu0 0.0
    %2798 = vmatpush1.msra.mxu0 %v1837
    %2799 = vmatprep.subr.mxu0 0.0
    %2800 = vmatpush1.msra.mxu0 %v1842
    %2801 = vmatprep.subr.mxu0 0.0
    %2802 = vmatpush1.msra.mxu0 %v1847
    %2803 = vmatprep.mubr.f32.mxu0 %v2025
    %2804 = vmatmul.mubr.f32.gmra.mrb[0].mxu0 %v2017
    %v2805 = vpop.f32.mrb[0].mxu0
    %v2806 = vadd.f32 0.0, %v2805
    %v2807 = vpop.f32.mrb[0].mxu0
    %2808 = vdwg.mxu0
    %2809 = vmatprep.subr.mxu0 0.0
    %2810 = vmatpush1.msra.mxu0 %v1852
    %2811 = vmatprep.subr.mxu0 0.0
    %2812 = vmatpush1.msra.mxu0 %v1857
    %2813 = vmatprep.subr.mxu0 0.0
    %2814 = vmatpush1.msra.mxu0 %v1862
    %2815 = vmatprep.subr.mxu0 0.0
    %2816 = vmatpush1.msra.mxu0 %v1867
    %2817 = vmatprep.subr.mxu0 0.0
    %2818 = vmatpush1.msra.mxu0 %v1872
    %2819 = vmatprep.subr.mxu0 0.0
    %2820 = vmatpush1.msra.mxu0 %v1877
    %2821 = vmatprep.subr.mxu0 0.0
    %2822 = vmatpush1.msra.mxu0 %v1882
    %2823 = vmatprep.subr.mxu0 0.0
    %2824 = vmatpush1.msra.mxu0 %v1887
    %2825 = vmatprep.subr.mxu0 0.0
    %2826 = vmatpush1.msra.mxu0 %v1892
    %2827 = vmatprep.subr.mxu0 0.0
    %2828 = vmatpush1.msra.mxu0 %v1897
    %2829 = vmatprep.subr.mxu0 0.0
    %2830 = vmatpush1.msra.mxu0 %v1902
    %2831 = vmatprep.subr.mxu0 0.0
    %2832 = vmatpush1.msra.mxu0 %v1907
    %2833 = vmatprep.subr.mxu0 0.0
    %2834 = vmatpush1.msra.mxu0 %v1912
    %2835 = vmatprep.subr.mxu0 0.0
    %2836 = vmatpush1.msra.mxu0 %v1917
    %2837 = vmatprep.subr.mxu0 0.0
    %2838 = vmatpush1.msra.mxu0 %v1922
    %2839 = vmatprep.subr.mxu0 0.0
    %2840 = vmatpush1.msra.mxu0 %v1927
    %2841 = vmatprep.subr.mxu0 0.0
    %2842 = vmatpush1.msra.mxu0 %v1932
    %2843 = vmatprep.subr.mxu0 0.0
    %2844 = vmatpush1.msra.mxu0 %v1937
    %2845 = vmatprep.subr.mxu0 0.0
    %2846 = vmatpush1.msra.mxu0 %v1942
    %2847 = vmatprep.subr.mxu0 0.0
    %2848 = vmatpush1.msra.mxu0 %v1947
    %2849 = vmatprep.subr.mxu0 0.0
    %2850 = vmatpush1.msra.mxu0 %v1952
    %2851 = vmatprep.subr.mxu0 0.0
    %2852 = vmatpush1.msra.mxu0 %v1957
    %2853 = vmatprep.subr.mxu0 0.0
    %2854 = vmatpush1.msra.mxu0 %v1962
    %2855 = vmatprep.subr.mxu0 0.0
    %2856 = vmatpush1.msra.mxu0 %v1967
    %2857 = vmatprep.subr.mxu0 0.0
    %2858 = vmatpush1.msra.mxu0 %v1972
    %2859 = vmatprep.subr.mxu0 0.0
    %2860 = vmatpush1.msra.mxu0 %v1977
    %2861 = vmatprep.subr.mxu0 0.0
    %2862 = vmatpush1.msra.mxu0 %v1982
    %2863 = vmatprep.subr.mxu0 0.0
    %2864 = vmatpush1.msra.mxu0 %v1987
    %2865 = vmatprep.subr.mxu0 0.0
    %2866 = vmatpush1.msra.mxu0 %v1992
    %2867 = vmatprep.subr.mxu0 0.0
    %2868 = vmatpush1.msra.mxu0 %v1997
    %2869 = vmatprep.subr.mxu0 0.0
    %2870 = vmatpush1.msra.mxu0 %v2002
    %2871 = vmatprep.subr.mxu0 0.0
    %2872 = vmatpush1.msra.mxu0 %v2007
    %2873 = vmatprep.mubr.f32.mxu0 %v2026
    %2874 = vmatmul.mubr.f32.gmra.mrb[0].mxu0 %v2024
    %v2875 = vpop.f32.mrb[0].mxu0
    %v2876 = vadd.f32 %v2806, %v2875
    %v2877 = vpop.f32.mrb[0].mxu0
    %2878 = vdwg.mxu0
    %vm2879 = vcmask 1041408
    %v2880 = vsel %vm2879, %v2169, 0.0
    %v2881 = vrot.slane %v2880, 4
    %v2882 = vadd.f32 %v2880, %v2881
    %v2883 = vrot.slane %v2882, 2
    %v2884 = vadd.f32 %v2882, %v2883
    %v2885 = vrot.slane %v2884, 1
    %v2886 = vadd.f32 %v2884, %v2885
    %v2887 = vsel %vm2879, %v2171, 0.0
    %v2888 = vrot.slane %v2887, 4
    %v2889 = vadd.f32 %v2887, %v2888
    %v2890 = vrot.slane %v2889, 2
    %v2891 = vadd.f32 %v2889, %v2890
    %v2892 = vrot.slane %v2891, 1
    %v2893 = vadd.f32 %v2891, %v2892
    %v2894 = vsel %vm2879, %v2311, 0.0
    %v2895 = vrot.slane %v2894, 4
    %v2896 = vadd.f32 %v2894, %v2895
    %v2897 = vrot.slane %v2896, 2
    %v2898 = vadd.f32 %v2896, %v2897
    %v2899 = vrot.slane %v2898, 1
    %v2900 = vadd.f32 %v2898, %v2899
    %v2901 = vsel %vm2879, %v2313, 0.0
    %v2902 = vrot.slane %v2901, 4
    %v2903 = vadd.f32 %v2901, %v2902
    %v2904 = vrot.slane %v2903, 2
    %v2905 = vadd.f32 %v2903, %v2904
    %v2906 = vrot.slane %v2905, 1
    %v2907 = vadd.f32 %v2905, %v2906
    %vm2908 = vcmask 517120
    %v2909 = vsel %vm2908, %v2452, 0.0
    %v2910 = vrot.slane %v2909, 4
    %v2911 = vadd.f32 %v2909, %v2910
    %v2912 = vrot.slane %v2911, 2
    %v2913 = vadd.f32 %v2911, %v2912
    %v2914 = vrot.slane %v2913, 1
    %v2915 = vadd.f32 %v2913, %v2914
    %v2916 = vrcp.pop 2.0
    %v2917 = vmul.f32 %v2886, %v2916
    %v2918 = vmul.f32 %v2893, %v2916
    %v2919 = vmul.f32 %v2900, %v2916
    %v2920 = vmul.f32 %v2907, %v2916
    %v2921 = vmul.f32 %v2915, %v2916
    %v2922 = vsel %vm2879, %v2593, 0.0
    %v2923 = vrot.slane %v2922, 4
    %v2924 = vadd.f32 %v2922, %v2923
    %v2925 = vrot.slane %v2924, 2
    %v2926 = vadd.f32 %v2924, %v2925
    %v2927 = vrot.slane %v2926, 1
    %v2928 = vadd.f32 %v2926, %v2927
    %v2929 = vsel %vm2879, %v2595, 0.0
    %v2930 = vrot.slane %v2929, 4
    %v2931 = vadd.f32 %v2929, %v2930
    %v2932 = vrot.slane %v2931, 2
    %v2933 = vadd.f32 %v2931, %v2932
    %v2934 = vrot.slane %v2933, 1
    %v2935 = vadd.f32 %v2933, %v2934
    %v2936 = vsel %vm2879, %v2735, 0.0
    %v2937 = vrot.slane %v2936, 4
    %v2938 = vadd.f32 %v2936, %v2937
    %v2939 = vrot.slane %v2938, 2
    %v2940 = vadd.f32 %v2938, %v2939
    %v2941 = vrot.slane %v2940, 1
    %v2942 = vadd.f32 %v2940, %v2941
    %v2943 = vsel %vm2879, %v2737, 0.0
    %v2944 = vrot.slane %v2943, 4
    %v2945 = vadd.f32 %v2943, %v2944
    %v2946 = vrot.slane %v2945, 2
    %v2947 = vadd.f32 %v2945, %v2946
    %v2948 = vrot.slane %v2947, 1
    %v2949 = vadd.f32 %v2947, %v2948
    %v2950 = vsel %vm2908, %v2876, 0.0
    %v2951 = vrot.slane %v2950, 4
    %v2952 = vadd.f32 %v2950, %v2951
    %v2953 = vrot.slane %v2952, 2
    %v2954 = vadd.f32 %v2952, %v2953
    %v2955 = vrot.slane %v2954, 1
    %v2956 = vadd.f32 %v2954, %v2955
    %v2957 = vmul.f32 %v2928, %v2916
    %v2958 = vmul.f32 %v2935, %v2916
    %v2959 = vmul.f32 %v2942, %v2916
    %v2960 = vmul.f32 %v2949, %v2916
    %v2961 = vmul.f32 %v2956, %v2916
    %v2962 = vmul.f32 %v2917, %v2917
    %v2963 = vmul.f32 %v2918, %v2918
    %v2964 = vmul.f32 %v2919, %v2919
    %v2965 = vmul.f32 %v2920, %v2920
    %v2966 = vmul.f32 %v2921, %v2921
    %v2967 = vsub.f32 %v2957, %v2962
    %v2968 = vsub.f32 %v2958, %v2963
    %v2969 = vsub.f32 %v2959, %v2964
    %v2970 = vsub.f32 %v2960, %v2965
    %v2971 = vsub.f32 %v2961, %v2966
    %v2972 = vmax.f32 %v2967, 0.0
    %v2973 = vmax.f32 %v2968, 0.0
    %v2974 = vmax.f32 %v2969, 0.0
    %v2975 = vmax.f32 %v2970, 0.0
    %v2976 = vmax.f32 %v2971, 0.0
    %v2977 = vsub.f32 %v472, %v2917
    %v2978 = vsub.f32 %v474, %v2918
    %v2979 = vsub.f32 %v921, %v2919
    %v2980 = vsub.f32 %v923, %v2920
    %v2981 = vsub.f32 %v1370, %v2921
    %v2982 = vsub.f32 %v478, %v2917
    %v2983 = vsub.f32 %v480, %v2918
    %v2984 = vsub.f32 %v927, %v2919
    %v2985 = vsub.f32 %v929, %v2920
    %v2986 = vsub.f32 %v1375, %v2921
    %v2987 = vsub.f32 %v484, %v2917
    %v2988 = vsub.f32 %v486, %v2918
    %v2989 = vsub.f32 %v933, %v2919
    %v2990 = vsub.f32 %v935, %v2920
    %v2991 = vsub.f32 %v1380, %v2921
    %v2992 = vsub.f32 %v490, %v2917
    %v2993 = vsub.f32 %v492, %v2918
    %v2994 = vsub.f32 %v939, %v2919
    %v2995 = vsub.f32 %v941, %v2920
    %v2996 = vsub.f32 %v1385, %v2921
    %v2997 = vsub.f32 %v496, %v2917
    %v2998 = vsub.f32 %v498, %v2918
    %v2999 = vsub.f32 %v945, %v2919
    %v3000 = vsub.f32 %v947, %v2920
    %v3001 = vsub.f32 %v1390, %v2921
    %v3002 = vsub.f32 %v502, %v2917
    %v3003 = vsub.f32 %v504, %v2918
    %v3004 = vsub.f32 %v951, %v2919
    %v3005 = vsub.f32 %v953, %v2920
    %v3006 = vsub.f32 %v1395, %v2921
    %v3007 = vsub.f32 %v508, %v2917
    %v3008 = vsub.f32 %v510, %v2918
    %v3009 = vsub.f32 %v957, %v2919
    %v3010 = vsub.f32 %v959, %v2920
    %v3011 = vsub.f32 %v1400, %v2921
    %v3012 = vsub.f32 %v514, %v2917
    %v3013 = vsub.f32 %v516, %v2918
    %v3014 = vsub.f32 %v963, %v2919
    %v3015 = vsub.f32 %v965, %v2920
    %v3016 = vsub.f32 %v1405, %v2921
    %v3017 = vsub.f32 %v520, %v2917
    %v3018 = vsub.f32 %v522, %v2918
    %v3019 = vsub.f32 %v969, %v2919
    %v3020 = vsub.f32 %v971, %v2920
    %v3021 = vsub.f32 %v1410, %v2921
    %v3022 = vsub.f32 %v526, %v2917
    %v3023 = vsub.f32 %v528, %v2918
    %v3024 = vsub.f32 %v975, %v2919
    %v3025 = vsub.f32 %v977, %v2920
    %v3026 = vsub.f32 %v1415, %v2921
    %v3027 = vsub.f32 %v532, %v2917
    %v3028 = vsub.f32 %v534, %v2918
    %v3029 = vsub.f32 %v981, %v2919
    %v3030 = vsub.f32 %v983, %v2920
    %v3031 = vsub.f32 %v1420, %v2921
    %v3032 = vsub.f32 %v538, %v2917
    %v3033 = vsub.f32 %v540, %v2918
    %v3034 = vsub.f32 %v987, %v2919
    %v3035 = vsub.f32 %v989, %v2920
    %v3036 = vsub.f32 %v1425, %v2921
    %v3037 = vsub.f32 %v544, %v2917
    %v3038 = vsub.f32 %v546, %v2918
    %v3039 = vsub.f32 %v993, %v2919
    %v3040 = vsub.f32 %v995, %v2920
    %v3041 = vsub.f32 %v1430, %v2921
    %v3042 = vsub.f32 %v550, %v2917
    %v3043 = vsub.f32 %v552, %v2918
    %v3044 = vsub.f32 %v999, %v2919
    %v3045 = vsub.f32 %v1001, %v2920
    %v3046 = vsub.f32 %v1435, %v2921
    %v3047 = vsub.f32 %v556, %v2917
    %v3048 = vsub.f32 %v558, %v2918
    %v3049 = vsub.f32 %v1005, %v2919
    %v3050 = vsub.f32 %v1007, %v2920
    %v3051 = vsub.f32 %v1440, %v2921
    %v3052 = vsub.f32 %v562, %v2917
    %v3053 = vsub.f32 %v564, %v2918
    %v3054 = vsub.f32 %v1011, %v2919
    %v3055 = vsub.f32 %v1013, %v2920
    %v3056 = vsub.f32 %v1445, %v2921
    %v3057 = vsub.f32 %v568, %v2917
    %v3058 = vsub.f32 %v570, %v2918
    %v3059 = vsub.f32 %v1017, %v2919
    %v3060 = vsub.f32 %v1019, %v2920
    %v3061 = vsub.f32 %v1450, %v2921
    %v3062 = vsub.f32 %v574, %v2917
    %v3063 = vsub.f32 %v576, %v2918
    %v3064 = vsub.f32 %v1023, %v2919
    %v3065 = vsub.f32 %v1025, %v2920
    %v3066 = vsub.f32 %v1455, %v2921
    %v3067 = vsub.f32 %v580, %v2917
    %v3068 = vsub.f32 %v582, %v2918
    %v3069 = vsub.f32 %v1029, %v2919
    %v3070 = vsub.f32 %v1031, %v2920
    %v3071 = vsub.f32 %v1460, %v2921
    %v3072 = vsub.f32 %v586, %v2917
    %v3073 = vsub.f32 %v588, %v2918
    %v3074 = vsub.f32 %v1035, %v2919
    %v3075 = vsub.f32 %v1037, %v2920
    %v3076 = vsub.f32 %v1465, %v2921
    %v3077 = vsub.f32 %v592, %v2917
    %v3078 = vsub.f32 %v594, %v2918
    %v3079 = vsub.f32 %v1041, %v2919
    %v3080 = vsub.f32 %v1043, %v2920
    %v3081 = vsub.f32 %v1470, %v2921
    %v3082 = vsub.f32 %v598, %v2917
    %v3083 = vsub.f32 %v600, %v2918
    %v3084 = vsub.f32 %v1047, %v2919
    %v3085 = vsub.f32 %v1049, %v2920
    %v3086 = vsub.f32 %v1475, %v2921
    %v3087 = vsub.f32 %v604, %v2917
    %v3088 = vsub.f32 %v606, %v2918
    %v3089 = vsub.f32 %v1053, %v2919
    %v3090 = vsub.f32 %v1055, %v2920
    %v3091 = vsub.f32 %v1480, %v2921
    %v3092 = vsub.f32 %v610, %v2917
    %v3093 = vsub.f32 %v612, %v2918
    %v3094 = vsub.f32 %v1059, %v2919
    %v3095 = vsub.f32 %v1061, %v2920
    %v3096 = vsub.f32 %v1485, %v2921
    %v3097 = vsub.f32 %v616, %v2917
    %v3098 = vsub.f32 %v618, %v2918
    %v3099 = vsub.f32 %v1065, %v2919
    %v3100 = vsub.f32 %v1067, %v2920
    %v3101 = vsub.f32 %v1490, %v2921
    %v3102 = vsub.f32 %v622, %v2917
    %v3103 = vsub.f32 %v624, %v2918
    %v3104 = vsub.f32 %v1071, %v2919
    %v3105 = vsub.f32 %v1073, %v2920
    %v3106 = vsub.f32 %v1495, %v2921
    %v3107 = vsub.f32 %v628, %v2917
    %v3108 = vsub.f32 %v630, %v2918
    %v3109 = vsub.f32 %v1077, %v2919
    %v3110 = vsub.f32 %v1079, %v2920
    %v3111 = vsub.f32 %v1500, %v2921
    %v3112 = vsub.f32 %v634, %v2917
    %v3113 = vsub.f32 %v636, %v2918
    %v3114 = vsub.f32 %v1083, %v2919
    %v3115 = vsub.f32 %v1085, %v2920
    %v3116 = vsub.f32 %v1505, %v2921
    %v3117 = vsub.f32 %v640, %v2917
    %v3118 = vsub.f32 %v642, %v2918
    %v3119 = vsub.f32 %v1089, %v2919
    %v3120 = vsub.f32 %v1091, %v2920
    %v3121 = vsub.f32 %v1510, %v2921
    %v3122 = vsub.f32 %v646, %v2917
    %v3123 = vsub.f32 %v648, %v2918
    %v3124 = vsub.f32 %v1095, %v2919
    %v3125 = vsub.f32 %v1097, %v2920
    %v3126 = vsub.f32 %v1515, %v2921
    %v3127 = vsub.f32 %v652, %v2917
    %v3128 = vsub.f32 %v654, %v2918
    %v3129 = vsub.f32 %v1101, %v2919
    %v3130 = vsub.f32 %v1103, %v2920
    %v3131 = vsub.f32 %v1520, %v2921
    %v3132 = vsub.f32 %v658, %v2917
    %v3133 = vsub.f32 %v660, %v2918
    %v3134 = vsub.f32 %v1107, %v2919
    %v3135 = vsub.f32 %v1109, %v2920
    %v3136 = vsub.f32 %v1525, %v2921
    %v3137 = vsub.f32 %v664, %v2917
    %v3138 = vsub.f32 %v666, %v2918
    %v3139 = vsub.f32 %v1113, %v2919
    %v3140 = vsub.f32 %v1115, %v2920
    %v3141 = vsub.f32 %v1530, %v2921
    %v3142 = vsub.f32 %v670, %v2917
    %v3143 = vsub.f32 %v672, %v2918
    %v3144 = vsub.f32 %v1119, %v2919
    %v3145 = vsub.f32 %v1121, %v2920
    %v3146 = vsub.f32 %v1535, %v2921
    %v3147 = vsub.f32 %v676, %v2917
    %v3148 = vsub.f32 %v678, %v2918
    %v3149 = vsub.f32 %v1125, %v2919
    %v3150 = vsub.f32 %v1127, %v2920
    %v3151 = vsub.f32 %v1540, %v2921
    %v3152 = vsub.f32 %v682, %v2917
    %v3153 = vsub.f32 %v684, %v2918
    %v3154 = vsub.f32 %v1131, %v2919
    %v3155 = vsub.f32 %v1133, %v2920
    %v3156 = vsub.f32 %v1545, %v2921
    %v3157 = vsub.f32 %v688, %v2917
    %v3158 = vsub.f32 %v690, %v2918
    %v3159 = vsub.f32 %v1137, %v2919
    %v3160 = vsub.f32 %v1139, %v2920
    %v3161 = vsub.f32 %v1550, %v2921
    %v3162 = vsub.f32 %v694, %v2917
    %v3163 = vsub.f32 %v696, %v2918
    %v3164 = vsub.f32 %v1143, %v2919
    %v3165 = vsub.f32 %v1145, %v2920
    %v3166 = vsub.f32 %v1555, %v2921
    %v3167 = vsub.f32 %v700, %v2917
    %v3168 = vsub.f32 %v702, %v2918
    %v3169 = vsub.f32 %v1149, %v2919
    %v3170 = vsub.f32 %v1151, %v2920
    %v3171 = vsub.f32 %v1560, %v2921
    %v3172 = vsub.f32 %v706, %v2917
    %v3173 = vsub.f32 %v708, %v2918
    %v3174 = vsub.f32 %v1155, %v2919
    %v3175 = vsub.f32 %v1157, %v2920
    %v3176 = vsub.f32 %v1565, %v2921
    %v3177 = vsub.f32 %v712, %v2917
    %v3178 = vsub.f32 %v714, %v2918
    %v3179 = vsub.f32 %v1161, %v2919
    %v3180 = vsub.f32 %v1163, %v2920
    %v3181 = vsub.f32 %v1570, %v2921
    %v3182 = vsub.f32 %v718, %v2917
    %v3183 = vsub.f32 %v720, %v2918
    %v3184 = vsub.f32 %v1167, %v2919
    %v3185 = vsub.f32 %v1169, %v2920
    %v3186 = vsub.f32 %v1575, %v2921
    %v3187 = vsub.f32 %v724, %v2917
    %v3188 = vsub.f32 %v726, %v2918
    %v3189 = vsub.f32 %v1173, %v2919
    %v3190 = vsub.f32 %v1175, %v2920
    %v3191 = vsub.f32 %v1580, %v2921
    %v3192 = vsub.f32 %v730, %v2917
    %v3193 = vsub.f32 %v732, %v2918
    %v3194 = vsub.f32 %v1179, %v2919
    %v3195 = vsub.f32 %v1181, %v2920
    %v3196 = vsub.f32 %v1585, %v2921
    %v3197 = vsub.f32 %v736, %v2917
    %v3198 = vsub.f32 %v738, %v2918
    %v3199 = vsub.f32 %v1185, %v2919
    %v3200 = vsub.f32 %v1187, %v2920
    %v3201 = vsub.f32 %v1590, %v2921
    %v3202 = vsub.f32 %v742, %v2917
    %v3203 = vsub.f32 %v744, %v2918
    %v3204 = vsub.f32 %v1191, %v2919
    %v3205 = vsub.f32 %v1193, %v2920
    %v3206 = vsub.f32 %v1595, %v2921
    %v3207 = vsub.f32 %v748, %v2917
    %v3208 = vsub.f32 %v750, %v2918
    %v3209 = vsub.f32 %v1197, %v2919
    %v3210 = vsub.f32 %v1199, %v2920
    %v3211 = vsub.f32 %v1600, %v2921
    %v3212 = vsub.f32 %v754, %v2917
    %v3213 = vsub.f32 %v756, %v2918
    %v3214 = vsub.f32 %v1203, %v2919
    %v3215 = vsub.f32 %v1205, %v2920
    %v3216 = vsub.f32 %v1605, %v2921
    %v3217 = vsub.f32 %v760, %v2917
    %v3218 = vsub.f32 %v762, %v2918
    %v3219 = vsub.f32 %v1209, %v2919
    %v3220 = vsub.f32 %v1211, %v2920
    %v3221 = vsub.f32 %v1610, %v2921
    %v3222 = vsub.f32 %v766, %v2917
    %v3223 = vsub.f32 %v768, %v2918
    %v3224 = vsub.f32 %v1215, %v2919
    %v3225 = vsub.f32 %v1217, %v2920
    %v3226 = vsub.f32 %v1615, %v2921
    %v3227 = vsub.f32 %v772, %v2917
    %v3228 = vsub.f32 %v774, %v2918
    %v3229 = vsub.f32 %v1221, %v2919
    %v3230 = vsub.f32 %v1223, %v2920
    %v3231 = vsub.f32 %v1620, %v2921
    %v3232 = vsub.f32 %v778, %v2917
    %v3233 = vsub.f32 %v780, %v2918
    %v3234 = vsub.f32 %v1227, %v2919
    %v3235 = vsub.f32 %v1229, %v2920
    %v3236 = vsub.f32 %v1625, %v2921
    %v3237 = vsub.f32 %v784, %v2917
    %v3238 = vsub.f32 %v786, %v2918
    %v3239 = vsub.f32 %v1233, %v2919
    %v3240 = vsub.f32 %v1235, %v2920
    %v3241 = vsub.f32 %v1630, %v2921
    %v3242 = vsub.f32 %v790, %v2917
    %v3243 = vsub.f32 %v792, %v2918
    %v3244 = vsub.f32 %v1239, %v2919
    %v3245 = vsub.f32 %v1241, %v2920
    %v3246 = vsub.f32 %v1635, %v2921
    %v3247 = vsub.f32 %v796, %v2917
    %v3248 = vsub.f32 %v798, %v2918
    %v3249 = vsub.f32 %v1245, %v2919
    %v3250 = vsub.f32 %v1247, %v2920
    %v3251 = vsub.f32 %v1640, %v2921
    %v3252 = vsub.f32 %v802, %v2917
    %v3253 = vsub.f32 %v804, %v2918
    %v3254 = vsub.f32 %v1251, %v2919
    %v3255 = vsub.f32 %v1253, %v2920
    %v3256 = vsub.f32 %v1645, %v2921
    %v3257 = vsub.f32 %v808, %v2917
    %v3258 = vsub.f32 %v810, %v2918
    %v3259 = vsub.f32 %v1257, %v2919
    %v3260 = vsub.f32 %v1259, %v2920
    %v3261 = vsub.f32 %v1650, %v2921
    %v3262 = vsub.f32 %v814, %v2917
    %v3263 = vsub.f32 %v816, %v2918
    %v3264 = vsub.f32 %v1263, %v2919
    %v3265 = vsub.f32 %v1265, %v2920
    %v3266 = vsub.f32 %v1655, %v2921
    %v3267 = vsub.f32 %v820, %v2917
    %v3268 = vsub.f32 %v822, %v2918
    %v3269 = vsub.f32 %v1269, %v2919
    %v3270 = vsub.f32 %v1271, %v2920
    %v3271 = vsub.f32 %v1660, %v2921
    %v3272 = vsub.f32 %v826, %v2917
    %v3273 = vsub.f32 %v828, %v2918
    %v3274 = vsub.f32 %v1275, %v2919
    %v3275 = vsub.f32 %v1277, %v2920
    %v3276 = vsub.f32 %v1665, %v2921
    %v3277 = vsub.f32 %v832, %v2917
    %v3278 = vsub.f32 %v834, %v2918
    %v3279 = vsub.f32 %v1281, %v2919
    %v3280 = vsub.f32 %v1283, %v2920
    %v3281 = vsub.f32 %v1670, %v2921
    %v3282 = vsub.f32 %v838, %v2917
    %v3283 = vsub.f32 %v840, %v2918
    %v3284 = vsub.f32 %v1287, %v2919
    %v3285 = vsub.f32 %v1289, %v2920
    %v3286 = vsub.f32 %v1675, %v2921
    %v3287 = vsub.f32 %v844, %v2917
    %v3288 = vsub.f32 %v846, %v2918
    %v3289 = vsub.f32 %v1293, %v2919
    %v3290 = vsub.f32 %v1295, %v2920
    %v3291 = vsub.f32 %v1680, %v2921
    %v3292 = vsub.f32 %v850, %v2917
    %v3293 = vsub.f32 %v852, %v2918
    %v3294 = vsub.f32 %v1299, %v2919
    %v3295 = vsub.f32 %v1301, %v2920
    %v3296 = vsub.f32 %v1685, %v2921
    %v3298 = vlaneseq
    %v3299 = vshrl.u32 %v3298, 7
    %v3300 = vsub.s32 0, %v3299
    %v3301 = vrot.slane %v43, %v3300
    %v3302 = vlaneseq
    %v3303 = vshrl.u32 %v3302, 7
    %v3304 = vsub.s32 1, %v3303
    %v3305 = vrot.slane %v43, %v3304
    %v3306 = vlaneseq
    %v3307 = vshrl.u32 %v3306, 7
    %v3308 = vsub.s32 2, %v3307
    %v3309 = vrot.slane %v43, %v3308
    %v3310 = vlaneseq
    %v3311 = vshrl.u32 %v3310, 7
    %v3312 = vsub.s32 3, %v3311
    %v3313 = vrot.slane %v43, %v3312
    %v3314 = vlaneseq
    %v3315 = vshrl.u32 %v3314, 7
    %v3316 = vsub.s32 4, %v3315
    %v3317 = vrot.slane %v43, %v3316
    %v3323 = vmul.f32 %v3301, %v2977
    %v3324 = vmul.f32 %v3305, %v2978
    %v3325 = vmul.f32 %v3309, %v2979
    %v3326 = vmul.f32 %v3313, %v2980
    %v3327 = vmul.f32 %v3317, %v2981
    %v3328 = vmul.f32 %v3301, %v2982
    %v3329 = vmul.f32 %v3305, %v2983
    %v3330 = vmul.f32 %v3309, %v2984
    %v3331 = vmul.f32 %v3313, %v2985
    %v3332 = vmul.f32 %v3317, %v2986
    %v3333 = vmul.f32 %v3301, %v2987
    %v3334 = vmul.f32 %v3305, %v2988
    %v3335 = vmul.f32 %v3309, %v2989
    %v3336 = vmul.f32 %v3313, %v2990
    %v3337 = vmul.f32 %v3317, %v2991
    %v3338 = vmul.f32 %v3301, %v2992
    %v3339 = vmul.f32 %v3305, %v2993
    %v3340 = vmul.f32 %v3309, %v2994
    %v3341 = vmul.f32 %v3313, %v2995
    %v3342 = vmul.f32 %v3317, %v2996
    %v3343 = vmul.f32 %v3301, %v2997
    %v3344 = vmul.f32 %v3305, %v2998
    %v3345 = vmul.f32 %v3309, %v2999
    %v3346 = vmul.f32 %v3313, %v3000
    %v3347 = vmul.f32 %v3317, %v3001
    %v3348 = vmul.f32 %v3301, %v3002
    %v3349 = vmul.f32 %v3305, %v3003
    %v3350 = vmul.f32 %v3309, %v3004
    %v3351 = vmul.f32 %v3313, %v3005
    %v3352 = vmul.f32 %v3317, %v3006
    %v3353 = vmul.f32 %v3301, %v3007
    %v3354 = vmul.f32 %v3305, %v3008
    %v3355 = vmul.f32 %v3309, %v3009
    %v3356 = vmul.f32 %v3313, %v3010
    %v3357 = vmul.f32 %v3317, %v3011
    %v3358 = vmul.f32 %v3301, %v3012
    %v3359 = vmul.f32 %v3305, %v3013
    %v3360 = vmul.f32 %v3309, %v3014
    %v3361 = vmul.f32 %v3313, %v3015
    %v3362 = vmul.f32 %v3317, %v3016
    %v3363 = vmul.f32 %v3301, %v3017
    %v3364 = vmul.f32 %v3305, %v3018
    %v3365 = vmul.f32 %v3309, %v3019
    %v3366 = vmul.f32 %v3313, %v3020
    %v3367 = vmul.f32 %v3317, %v3021
    %v3368 = vmul.f32 %v3301, %v3022
    %v3369 = vmul.f32 %v3305, %v3023
    %v3370 = vmul.f32 %v3309, %v3024
    %v3371 = vmul.f32 %v3313, %v3025
    %v3372 = vmul.f32 %v3317, %v3026
    %v3373 = vmul.f32 %v3301, %v3027
    %v3374 = vmul.f32 %v3305, %v3028
    %v3375 = vmul.f32 %v3309, %v3029
    %v3376 = vmul.f32 %v3313, %v3030
    %v3377 = vmul.f32 %v3317, %v3031
    %v3378 = vmul.f32 %v3301, %v3032
    %v3379 = vmul.f32 %v3305, %v3033
    %v3380 = vmul.f32 %v3309, %v3034
    %v3381 = vmul.f32 %v3313, %v3035
    %v3382 = vmul.f32 %v3317, %v3036
    %v3383 = vmul.f32 %v3301, %v3037
    %v3384 = vmul.f32 %v3305, %v3038
    %v3385 = vmul.f32 %v3309, %v3039
    %v3386 = vmul.f32 %v3313, %v3040
    %v3387 = vmul.f32 %v3317, %v3041
    %v3388 = vmul.f32 %v3301, %v3042
    %v3389 = vmul.f32 %v3305, %v3043
    %v3390 = vmul.f32 %v3309, %v3044
    %v3391 = vmul.f32 %v3313, %v3045
    %v3392 = vmul.f32 %v3317, %v3046
    %v3393 = vmul.f32 %v3301, %v3047
    %v3394 = vmul.f32 %v3305, %v3048
    %v3395 = vmul.f32 %v3309, %v3049
    %v3396 = vmul.f32 %v3313, %v3050
    %v3397 = vmul.f32 %v3317, %v3051
    %v3398 = vmul.f32 %v3301, %v3052
    %v3399 = vmul.f32 %v3305, %v3053
    %v3400 = vmul.f32 %v3309, %v3054
    %v3401 = vmul.f32 %v3313, %v3055
    %v3402 = vmul.f32 %v3317, %v3056
    %v3403 = vmul.f32 %v3301, %v3057
    %v3404 = vmul.f32 %v3305, %v3058
    %v3405 = vmul.f32 %v3309, %v3059
    %v3406 = vmul.f32 %v3313, %v3060
    %v3407 = vmul.f32 %v3317, %v3061
    %v3408 = vmul.f32 %v3301, %v3062
    %v3409 = vmul.f32 %v3305, %v3063
    %v3410 = vmul.f32 %v3309, %v3064
    %v3411 = vmul.f32 %v3313, %v3065
    %v3412 = vmul.f32 %v3317, %v3066
    %v3413 = vmul.f32 %v3301, %v3067
    %v3414 = vmul.f32 %v3305, %v3068
    %v3415 = vmul.f32 %v3309, %v3069
    %v3416 = vmul.f32 %v3313, %v3070
    %v3417 = vmul.f32 %v3317, %v3071
    %v3418 = vmul.f32 %v3301, %v3072
    %v3419 = vmul.f32 %v3305, %v3073
    %v3420 = vmul.f32 %v3309, %v3074
    %v3421 = vmul.f32 %v3313, %v3075
    %v3422 = vmul.f32 %v3317, %v3076
    %v3423 = vmul.f32 %v3301, %v3077
    %v3424 = vmul.f32 %v3305, %v3078
    %v3425 = vmul.f32 %v3309, %v3079
    %v3426 = vmul.f32 %v3313, %v3080
    %v3427 = vmul.f32 %v3317, %v3081
    %v3428 = vmul.f32 %v3301, %v3082
    %v3429 = vmul.f32 %v3305, %v3083
    %v3430 = vmul.f32 %v3309, %v3084
    %v3431 = vmul.f32 %v3313, %v3085
    %v3432 = vmul.f32 %v3317, %v3086
    %v3433 = vmul.f32 %v3301, %v3087
    %v3434 = vmul.f32 %v3305, %v3088
    %v3435 = vmul.f32 %v3309, %v3089
    %v3436 = vmul.f32 %v3313, %v3090
    %v3437 = vmul.f32 %v3317, %v3091
    %v3438 = vmul.f32 %v3301, %v3092
    %v3439 = vmul.f32 %v3305, %v3093
    %v3440 = vmul.f32 %v3309, %v3094
    %v3441 = vmul.f32 %v3313, %v3095
    %v3442 = vmul.f32 %v3317, %v3096
    %v3443 = vmul.f32 %v3301, %v3097
    %v3444 = vmul.f32 %v3305, %v3098
    %v3445 = vmul.f32 %v3309, %v3099
    %v3446 = vmul.f32 %v3313, %v3100
    %v3447 = vmul.f32 %v3317, %v3101
    %v3448 = vmul.f32 %v3301, %v3102
    %v3449 = vmul.f32 %v3305, %v3103
    %v3450 = vmul.f32 %v3309, %v3104
    %v3451 = vmul.f32 %v3313, %v3105
    %v3452 = vmul.f32 %v3317, %v3106
    %v3453 = vmul.f32 %v3301, %v3107
    %v3454 = vmul.f32 %v3305, %v3108
    %v3455 = vmul.f32 %v3309, %v3109
    %v3456 = vmul.f32 %v3313, %v3110
    %v3457 = vmul.f32 %v3317, %v3111
    %v3458 = vmul.f32 %v3301, %v3112
    %v3459 = vmul.f32 %v3305, %v3113
    %v3460 = vmul.f32 %v3309, %v3114
    %v3461 = vmul.f32 %v3313, %v3115
    %v3462 = vmul.f32 %v3317, %v3116
    %v3463 = vmul.f32 %v3301, %v3117
    %v3464 = vmul.f32 %v3305, %v3118
    %v3465 = vmul.f32 %v3309, %v3119
    %v3466 = vmul.f32 %v3313, %v3120
    %v3467 = vmul.f32 %v3317, %v3121
    %v3468 = vmul.f32 %v3301, %v3122
    %v3469 = vmul.f32 %v3305, %v3123
    %v3470 = vmul.f32 %v3309, %v3124
    %v3471 = vmul.f32 %v3313, %v3125
    %v3472 = vmul.f32 %v3317, %v3126
    %v3473 = vmul.f32 %v3301, %v3127
    %v3474 = vmul.f32 %v3305, %v3128
    %v3475 = vmul.f32 %v3309, %v3129
    %v3476 = vmul.f32 %v3313, %v3130
    %v3477 = vmul.f32 %v3317, %v3131
    %v3478 = vmul.f32 %v3301, %v3132
    %v3479 = vmul.f32 %v3305, %v3133
    %v3480 = vmul.f32 %v3309, %v3134
    %v3481 = vmul.f32 %v3313, %v3135
    %v3482 = vmul.f32 %v3317, %v3136
    %v3483 = vmul.f32 %v3301, %v3137
    %v3484 = vmul.f32 %v3305, %v3138
    %v3485 = vmul.f32 %v3309, %v3139
    %v3486 = vmul.f32 %v3313, %v3140
    %v3487 = vmul.f32 %v3317, %v3141
    %v3488 = vmul.f32 %v3301, %v3142
    %v3489 = vmul.f32 %v3305, %v3143
    %v3490 = vmul.f32 %v3309, %v3144
    %v3491 = vmul.f32 %v3313, %v3145
    %v3492 = vmul.f32 %v3317, %v3146
    %v3493 = vmul.f32 %v3301, %v3147
    %v3494 = vmul.f32 %v3305, %v3148
    %v3495 = vmul.f32 %v3309, %v3149
    %v3496 = vmul.f32 %v3313, %v3150
    %v3497 = vmul.f32 %v3317, %v3151
    %v3498 = vmul.f32 %v3301, %v3152
    %v3499 = vmul.f32 %v3305, %v3153
    %v3500 = vmul.f32 %v3309, %v3154
    %v3501 = vmul.f32 %v3313, %v3155
    %v3502 = vmul.f32 %v3317, %v3156
    %v3503 = vmul.f32 %v3301, %v3157
    %v3504 = vmul.f32 %v3305, %v3158
    %v3505 = vmul.f32 %v3309, %v3159
    %v3506 = vmul.f32 %v3313, %v3160
    %v3507 = vmul.f32 %v3317, %v3161
    %v3508 = vmul.f32 %v3301, %v3162
    %v3509 = vmul.f32 %v3305, %v3163
    %v3510 = vmul.f32 %v3309, %v3164
    %v3511 = vmul.f32 %v3313, %v3165
    %v3512 = vmul.f32 %v3317, %v3166
    %v3513 = vmul.f32 %v3301, %v3167
    %v3514 = vmul.f32 %v3305, %v3168
    %v3515 = vmul.f32 %v3309, %v3169
    %v3516 = vmul.f32 %v3313, %v3170
    %v3517 = vmul.f32 %v3317, %v3171
    %v3518 = vmul.f32 %v3301, %v3172
    %v3519 = vmul.f32 %v3305, %v3173
    %v3520 = vmul.f32 %v3309, %v3174
    %v3521 = vmul.f32 %v3313, %v3175
    %v3522 = vmul.f32 %v3317, %v3176
    %v3523 = vmul.f32 %v3301, %v3177
    %v3524 = vmul.f32 %v3305, %v3178
    %v3525 = vmul.f32 %v3309, %v3179
    %v3526 = vmul.f32 %v3313, %v3180
    %v3527 = vmul.f32 %v3317, %v3181
    %v3528 = vmul.f32 %v3301, %v3182
    %v3529 = vmul.f32 %v3305, %v3183
    %v3530 = vmul.f32 %v3309, %v3184
    %v3531 = vmul.f32 %v3313, %v3185
    %v3532 = vmul.f32 %v3317, %v3186
    %v3533 = vmul.f32 %v3301, %v3187
    %v3534 = vmul.f32 %v3305, %v3188
    %v3535 = vmul.f32 %v3309, %v3189
    %v3536 = vmul.f32 %v3313, %v3190
    %v3537 = vmul.f32 %v3317, %v3191
    %v3538 = vmul.f32 %v3301, %v3192
    %v3539 = vmul.f32 %v3305, %v3193
    %v3540 = vmul.f32 %v3309, %v3194
    %v3541 = vmul.f32 %v3313, %v3195
    %v3542 = vmul.f32 %v3317, %v3196
    %v3543 = vmul.f32 %v3301, %v3197
    %v3544 = vmul.f32 %v3305, %v3198
    %v3545 = vmul.f32 %v3309, %v3199
    %v3546 = vmul.f32 %v3313, %v3200
    %v3547 = vmul.f32 %v3317, %v3201
    %v3548 = vmul.f32 %v3301, %v3202
    %v3549 = vmul.f32 %v3305, %v3203
    %v3550 = vmul.f32 %v3309, %v3204
    %v3551 = vmul.f32 %v3313, %v3205
    %v3552 = vmul.f32 %v3317, %v3206
    %v3553 = vmul.f32 %v3301, %v3207
    %v3554 = vmul.f32 %v3305, %v3208
    %v3555 = vmul.f32 %v3309, %v3209
    %v3556 = vmul.f32 %v3313, %v3210
    %v3557 = vmul.f32 %v3317, %v3211
    %v3558 = vmul.f32 %v3301, %v3212
    %v3559 = vmul.f32 %v3305, %v3213
    %v3560 = vmul.f32 %v3309, %v3214
    %v3561 = vmul.f32 %v3313, %v3215
    %v3562 = vmul.f32 %v3317, %v3216
    %v3563 = vmul.f32 %v3301, %v3217
    %v3564 = vmul.f32 %v3305, %v3218
    %v3565 = vmul.f32 %v3309, %v3219
    %v3566 = vmul.f32 %v3313, %v3220
    %v3567 = vmul.f32 %v3317, %v3221
    %v3568 = vmul.f32 %v3301, %v3222
    %v3569 = vmul.f32 %v3305, %v3223
    %v3570 = vmul.f32 %v3309, %v3224
    %v3571 = vmul.f32 %v3313, %v3225
    %v3572 = vmul.f32 %v3317, %v3226
    %v3573 = vmul.f32 %v3301, %v3227
    %v3574 = vmul.f32 %v3305, %v3228
    %v3575 = vmul.f32 %v3309, %v3229
    %v3576 = vmul.f32 %v3313, %v3230
    %v3577 = vmul.f32 %v3317, %v3231
    %v3578 = vmul.f32 %v3301, %v3232
    %v3579 = vmul.f32 %v3305, %v3233
    %v3580 = vmul.f32 %v3309, %v3234
    %v3581 = vmul.f32 %v3313, %v3235
    %v3582 = vmul.f32 %v3317, %v3236
    %v3583 = vmul.f32 %v3301, %v3237
    %v3584 = vmul.f32 %v3305, %v3238
    %v3585 = vmul.f32 %v3309, %v3239
    %v3586 = vmul.f32 %v3313, %v3240
    %v3587 = vmul.f32 %v3317, %v3241
    %v3588 = vmul.f32 %v3301, %v3242
    %v3589 = vmul.f32 %v3305, %v3243
    %v3590 = vmul.f32 %v3309, %v3244
    %v3591 = vmul.f32 %v3313, %v3245
    %v3592 = vmul.f32 %v3317, %v3246
    %v3593 = vmul.f32 %v3301, %v3247
    %v3594 = vmul.f32 %v3305, %v3248
    %v3595 = vmul.f32 %v3309, %v3249
    %v3596 = vmul.f32 %v3313, %v3250
    %v3597 = vmul.f32 %v3317, %v3251
    %v3598 = vmul.f32 %v3301, %v3252
    %v3599 = vmul.f32 %v3305, %v3253
    %v3600 = vmul.f32 %v3309, %v3254
    %v3601 = vmul.f32 %v3313, %v3255
    %v3602 = vmul.f32 %v3317, %v3256
    %v3603 = vmul.f32 %v3301, %v3257
    %v3604 = vmul.f32 %v3305, %v3258
    %v3605 = vmul.f32 %v3309, %v3259
    %v3606 = vmul.f32 %v3313, %v3260
    %v3607 = vmul.f32 %v3317, %v3261
    %v3608 = vmul.f32 %v3301, %v3262
    %v3609 = vmul.f32 %v3305, %v3263
    %v3610 = vmul.f32 %v3309, %v3264
    %v3611 = vmul.f32 %v3313, %v3265
    %v3612 = vmul.f32 %v3317, %v3266
    %v3613 = vmul.f32 %v3301, %v3267
    %v3614 = vmul.f32 %v3305, %v3268
    %v3615 = vmul.f32 %v3309, %v3269
    %v3616 = vmul.f32 %v3313, %v3270
    %v3617 = vmul.f32 %v3317, %v3271
    %v3618 = vmul.f32 %v3301, %v3272
    %v3619 = vmul.f32 %v3305, %v3273
    %v3620 = vmul.f32 %v3309, %v3274
    %v3621 = vmul.f32 %v3313, %v3275
    %v3622 = vmul.f32 %v3317, %v3276
    %v3623 = vmul.f32 %v3301, %v3277
    %v3624 = vmul.f32 %v3305, %v3278
    %v3625 = vmul.f32 %v3309, %v3279
    %v3626 = vmul.f32 %v3313, %v3280
    %v3627 = vmul.f32 %v3317, %v3281
    %v3628 = vmul.f32 %v3301, %v3282
    %v3629 = vmul.f32 %v3305, %v3283
    %v3630 = vmul.f32 %v3309, %v3284
    %v3631 = vmul.f32 %v3313, %v3285
    %v3632 = vmul.f32 %v3317, %v3286
    %v3633 = vmul.f32 %v3301, %v3287
    %v3634 = vmul.f32 %v3305, %v3288
    %v3635 = vmul.f32 %v3309, %v3289
    %v3636 = vmul.f32 %v3313, %v3290
    %v3637 = vmul.f32 %v3317, %v3291
    %v3638 = vmul.f32 %v3301, %v3292
    %v3639 = vmul.f32 %v3305, %v3293
    %v3640 = vmul.f32 %v3309, %v3294
    %v3641 = vmul.f32 %v3313, %v3295
    %v3642 = vmul.f32 %v3317, %v3296
    %v3643 = vadd.f32 %v2972, 1e-05
    %v3644 = vadd.f32 %v2973, 1e-05
    %v3645 = vadd.f32 %v2974, 1e-05
    %v3646 = vadd.f32 %v2975, 1e-05
    %v3647 = vadd.f32 %v2976, 1e-05
    %v3648 = vrsqrt.pop %v3643
    %v3649 = vrsqrt.pop %v3644
    %v3650 = vrsqrt.pop %v3645
    %v3651 = vrsqrt.pop %v3646
    %v3652 = vrsqrt.pop %v3647
    %v3653 = vmul.f32 %v3323, %v3648
    %v3654 = vmul.f32 %v3324, %v3649
    %v3655 = vmul.f32 %v3325, %v3650
    %v3656 = vmul.f32 %v3326, %v3651
    %v3657 = vmul.f32 %v3327, %v3652
    %v3658 = vmul.f32 %v3328, %v3648
    %v3659 = vmul.f32 %v3329, %v3649
    %v3660 = vmul.f32 %v3330, %v3650
    %v3661 = vmul.f32 %v3331, %v3651
    %v3662 = vmul.f32 %v3332, %v3652
    %v3663 = vmul.f32 %v3333, %v3648
    %v3664 = vmul.f32 %v3334, %v3649
    %v3665 = vmul.f32 %v3335, %v3650
    %v3666 = vmul.f32 %v3336, %v3651
    %v3667 = vmul.f32 %v3337, %v3652
    %v3668 = vmul.f32 %v3338, %v3648
    %v3669 = vmul.f32 %v3339, %v3649
    %v3670 = vmul.f32 %v3340, %v3650
    %v3671 = vmul.f32 %v3341, %v3651
    %v3672 = vmul.f32 %v3342, %v3652
    %v3673 = vmul.f32 %v3343, %v3648
    %v3674 = vmul.f32 %v3344, %v3649
    %v3675 = vmul.f32 %v3345, %v3650
    %v3676 = vmul.f32 %v3346, %v3651
    %v3677 = vmul.f32 %v3347, %v3652
    %v3678 = vmul.f32 %v3348, %v3648
    %v3679 = vmul.f32 %v3349, %v3649
    %v3680 = vmul.f32 %v3350, %v3650
    %v3681 = vmul.f32 %v3351, %v3651
    %v3682 = vmul.f32 %v3352, %v3652
    %v3683 = vmul.f32 %v3353, %v3648
    %v3684 = vmul.f32 %v3354, %v3649
    %v3685 = vmul.f32 %v3355, %v3650
    %v3686 = vmul.f32 %v3356, %v3651
    %v3687 = vmul.f32 %v3357, %v3652
    %v3688 = vmul.f32 %v3358, %v3648
    %v3689 = vmul.f32 %v3359, %v3649
    %v3690 = vmul.f32 %v3360, %v3650
    %v3691 = vmul.f32 %v3361, %v3651
    %v3692 = vmul.f32 %v3362, %v3652
    %v3693 = vmul.f32 %v3363, %v3648
    %v3694 = vmul.f32 %v3364, %v3649
    %v3695 = vmul.f32 %v3365, %v3650
    %v3696 = vmul.f32 %v3366, %v3651
    %v3697 = vmul.f32 %v3367, %v3652
    %v3698 = vmul.f32 %v3368, %v3648
    %v3699 = vmul.f32 %v3369, %v3649
    %v3700 = vmul.f32 %v3370, %v3650
    %v3701 = vmul.f32 %v3371, %v3651
    %v3702 = vmul.f32 %v3372, %v3652
    %v3703 = vmul.f32 %v3373, %v3648
    %v3704 = vmul.f32 %v3374, %v3649
    %v3705 = vmul.f32 %v3375, %v3650
    %v3706 = vmul.f32 %v3376, %v3651
    %v3707 = vmul.f32 %v3377, %v3652
    %v3708 = vmul.f32 %v3378, %v3648
    %v3709 = vmul.f32 %v3379, %v3649
    %v3710 = vmul.f32 %v3380, %v3650
    %v3711 = vmul.f32 %v3381, %v3651
    %v3712 = vmul.f32 %v3382, %v3652
    %v3713 = vmul.f32 %v3383, %v3648
    %v3714 = vmul.f32 %v3384, %v3649
    %v3715 = vmul.f32 %v3385, %v3650
    %v3716 = vmul.f32 %v3386, %v3651
    %v3717 = vmul.f32 %v3387, %v3652
    %v3718 = vmul.f32 %v3388, %v3648
    %v3719 = vmul.f32 %v3389, %v3649
    %v3720 = vmul.f32 %v3390, %v3650
    %v3721 = vmul.f32 %v3391, %v3651
    %v3722 = vmul.f32 %v3392, %v3652
    %v3723 = vmul.f32 %v3393, %v3648
    %v3724 = vmul.f32 %v3394, %v3649
    %v3725 = vmul.f32 %v3395, %v3650
    %v3726 = vmul.f32 %v3396, %v3651
    %v3727 = vmul.f32 %v3397, %v3652
    %v3728 = vmul.f32 %v3398, %v3648
    %v3729 = vmul.f32 %v3399, %v3649
    %v3730 = vmul.f32 %v3400, %v3650
    %v3731 = vmul.f32 %v3401, %v3651
    %v3732 = vmul.f32 %v3402, %v3652
    %v3733 = vmul.f32 %v3403, %v3648
    %v3734 = vmul.f32 %v3404, %v3649
    %v3735 = vmul.f32 %v3405, %v3650
    %v3736 = vmul.f32 %v3406, %v3651
    %v3737 = vmul.f32 %v3407, %v3652
    %v3738 = vmul.f32 %v3408, %v3648
    %v3739 = vmul.f32 %v3409, %v3649
    %v3740 = vmul.f32 %v3410, %v3650
    %v3741 = vmul.f32 %v3411, %v3651
    %v3742 = vmul.f32 %v3412, %v3652
    %v3743 = vmul.f32 %v3413, %v3648
    %v3744 = vmul.f32 %v3414, %v3649
    %v3745 = vmul.f32 %v3415, %v3650
    %v3746 = vmul.f32 %v3416, %v3651
    %v3747 = vmul.f32 %v3417, %v3652
    %v3748 = vmul.f32 %v3418, %v3648
    %v3749 = vmul.f32 %v3419, %v3649
    %v3750 = vmul.f32 %v3420, %v3650
    %v3751 = vmul.f32 %v3421, %v3651
    %v3752 = vmul.f32 %v3422, %v3652
    %v3753 = vmul.f32 %v3423, %v3648
    %v3754 = vmul.f32 %v3424, %v3649
    %v3755 = vmul.f32 %v3425, %v3650
    %v3756 = vmul.f32 %v3426, %v3651
    %v3757 = vmul.f32 %v3427, %v3652
    %v3758 = vmul.f32 %v3428, %v3648
    %v3759 = vmul.f32 %v3429, %v3649
    %v3760 = vmul.f32 %v3430, %v3650
    %v3761 = vmul.f32 %v3431, %v3651
    %v3762 = vmul.f32 %v3432, %v3652
    %v3763 = vmul.f32 %v3433, %v3648
    %v3764 = vmul.f32 %v3434, %v3649
    %v3765 = vmul.f32 %v3435, %v3650
    %v3766 = vmul.f32 %v3436, %v3651
    %v3767 = vmul.f32 %v3437, %v3652
    %v3768 = vmul.f32 %v3438, %v3648
    %v3769 = vmul.f32 %v3439, %v3649
    %v3770 = vmul.f32 %v3440, %v3650
    %v3771 = vmul.f32 %v3441, %v3651
    %v3772 = vmul.f32 %v3442, %v3652
    %v3773 = vmul.f32 %v3443, %v3648
    %v3774 = vmul.f32 %v3444, %v3649
    %v3775 = vmul.f32 %v3445, %v3650
    %v3776 = vmul.f32 %v3446, %v3651
    %v3777 = vmul.f32 %v3447, %v3652
    %v3778 = vmul.f32 %v3448, %v3648
    %v3779 = vmul.f32 %v3449, %v3649
    %v3780 = vmul.f32 %v3450, %v3650
    %v3781 = vmul.f32 %v3451, %v3651
    %v3782 = vmul.f32 %v3452, %v3652
    %v3783 = vmul.f32 %v3453, %v3648
    %v3784 = vmul.f32 %v3454, %v3649
    %v3785 = vmul.f32 %v3455, %v3650
    %v3786 = vmul.f32 %v3456, %v3651
    %v3787 = vmul.f32 %v3457, %v3652
    %v3788 = vmul.f32 %v3458, %v3648
    %v3789 = vmul.f32 %v3459, %v3649
    %v3790 = vmul.f32 %v3460, %v3650
    %v3791 = vmul.f32 %v3461, %v3651
    %v3792 = vmul.f32 %v3462, %v3652
    %v3793 = vmul.f32 %v3463, %v3648
    %v3794 = vmul.f32 %v3464, %v3649
    %v3795 = vmul.f32 %v3465, %v3650
    %v3796 = vmul.f32 %v3466, %v3651
    %v3797 = vmul.f32 %v3467, %v3652
    %v3798 = vmul.f32 %v3468, %v3648
    %v3799 = vmul.f32 %v3469, %v3649
    %v3800 = vmul.f32 %v3470, %v3650
    %v3801 = vmul.f32 %v3471, %v3651
    %v3802 = vmul.f32 %v3472, %v3652
    %v3803 = vmul.f32 %v3473, %v3648
    %v3804 = vmul.f32 %v3474, %v3649
    %v3805 = vmul.f32 %v3475, %v3650
    %v3806 = vmul.f32 %v3476, %v3651
    %v3807 = vmul.f32 %v3477, %v3652
    %v3808 = vmul.f32 %v3478, %v3648
    %v3809 = vmul.f32 %v3479, %v3649
    %v3810 = vmul.f32 %v3480, %v3650
    %v3811 = vmul.f32 %v3481, %v3651
    %v3812 = vmul.f32 %v3482, %v3652
    %v3813 = vmul.f32 %v3483, %v3648
    %v3814 = vmul.f32 %v3484, %v3649
    %v3815 = vmul.f32 %v3485, %v3650
    %v3816 = vmul.f32 %v3486, %v3651
    %v3817 = vmul.f32 %v3487, %v3652
    %v3818 = vmul.f32 %v3488, %v3648
    %v3819 = vmul.f32 %v3489, %v3649
    %v3820 = vmul.f32 %v3490, %v3650
    %v3821 = vmul.f32 %v3491, %v3651
    %v3822 = vmul.f32 %v3492, %v3652
    %v3823 = vmul.f32 %v3493, %v3648
    %v3824 = vmul.f32 %v3494, %v3649
    %v3825 = vmul.f32 %v3495, %v3650
    %v3826 = vmul.f32 %v3496, %v3651
    %v3827 = vmul.f32 %v3497, %v3652
    %v3828 = vmul.f32 %v3498, %v3648
    %v3829 = vmul.f32 %v3499, %v3649
    %v3830 = vmul.f32 %v3500, %v3650
    %v3831 = vmul.f32 %v3501, %v3651
    %v3832 = vmul.f32 %v3502, %v3652
    %v3833 = vmul.f32 %v3503, %v3648
    %v3834 = vmul.f32 %v3504, %v3649
    %v3835 = vmul.f32 %v3505, %v3650
    %v3836 = vmul.f32 %v3506, %v3651
    %v3837 = vmul.f32 %v3507, %v3652
    %v3838 = vmul.f32 %v3508, %v3648
    %v3839 = vmul.f32 %v3509, %v3649
    %v3840 = vmul.f32 %v3510, %v3650
    %v3841 = vmul.f32 %v3511, %v3651
    %v3842 = vmul.f32 %v3512, %v3652
    %v3843 = vmul.f32 %v3513, %v3648
    %v3844 = vmul.f32 %v3514, %v3649
    %v3845 = vmul.f32 %v3515, %v3650
    %v3846 = vmul.f32 %v3516, %v3651
    %v3847 = vmul.f32 %v3517, %v3652
    %v3848 = vmul.f32 %v3518, %v3648
    %v3849 = vmul.f32 %v3519, %v3649
    %v3850 = vmul.f32 %v3520, %v3650
    %v3851 = vmul.f32 %v3521, %v3651
    %v3852 = vmul.f32 %v3522, %v3652
    %v3853 = vmul.f32 %v3523, %v3648
    %v3854 = vmul.f32 %v3524, %v3649
    %v3855 = vmul.f32 %v3525, %v3650
    %v3856 = vmul.f32 %v3526, %v3651
    %v3857 = vmul.f32 %v3527, %v3652
    %v3858 = vmul.f32 %v3528, %v3648
    %v3859 = vmul.f32 %v3529, %v3649
    %v3860 = vmul.f32 %v3530, %v3650
    %v3861 = vmul.f32 %v3531, %v3651
    %v3862 = vmul.f32 %v3532, %v3652
    %v3863 = vmul.f32 %v3533, %v3648
    %v3864 = vmul.f32 %v3534, %v3649
    %v3865 = vmul.f32 %v3535, %v3650
    %v3866 = vmul.f32 %v3536, %v3651
    %v3867 = vmul.f32 %v3537, %v3652
    %v3868 = vmul.f32 %v3538, %v3648
    %v3869 = vmul.f32 %v3539, %v3649
    %v3870 = vmul.f32 %v3540, %v3650
    %v3871 = vmul.f32 %v3541, %v3651
    %v3872 = vmul.f32 %v3542, %v3652
    %v3873 = vmul.f32 %v3543, %v3648
    %v3874 = vmul.f32 %v3544, %v3649
    %v3875 = vmul.f32 %v3545, %v3650
    %v3876 = vmul.f32 %v3546, %v3651
    %v3877 = vmul.f32 %v3547, %v3652
    %v3878 = vmul.f32 %v3548, %v3648
    %v3879 = vmul.f32 %v3549, %v3649
    %v3880 = vmul.f32 %v3550, %v3650
    %v3881 = vmul.f32 %v3551, %v3651
    %v3882 = vmul.f32 %v3552, %v3652
    %v3883 = vmul.f32 %v3553, %v3648
    %v3884 = vmul.f32 %v3554, %v3649
    %v3885 = vmul.f32 %v3555, %v3650
    %v3886 = vmul.f32 %v3556, %v3651
    %v3887 = vmul.f32 %v3557, %v3652
    %v3888 = vmul.f32 %v3558, %v3648
    %v3889 = vmul.f32 %v3559, %v3649
    %v3890 = vmul.f32 %v3560, %v3650
    %v3891 = vmul.f32 %v3561, %v3651
    %v3892 = vmul.f32 %v3562, %v3652
    %v3893 = vmul.f32 %v3563, %v3648
    %v3894 = vmul.f32 %v3564, %v3649
    %v3895 = vmul.f32 %v3565, %v3650
    %v3896 = vmul.f32 %v3566, %v3651
    %v3897 = vmul.f32 %v3567, %v3652
    %v3898 = vmul.f32 %v3568, %v3648
    %v3899 = vmul.f32 %v3569, %v3649
    %v3900 = vmul.f32 %v3570, %v3650
    %v3901 = vmul.f32 %v3571, %v3651
    %v3902 = vmul.f32 %v3572, %v3652
    %v3903 = vmul.f32 %v3573, %v3648
    %v3904 = vmul.f32 %v3574, %v3649
    %v3905 = vmul.f32 %v3575, %v3650
    %v3906 = vmul.f32 %v3576, %v3651
    %v3907 = vmul.f32 %v3577, %v3652
    %v3908 = vmul.f32 %v3578, %v3648
    %v3909 = vmul.f32 %v3579, %v3649
    %v3910 = vmul.f32 %v3580, %v3650
    %v3911 = vmul.f32 %v3581, %v3651
    %v3912 = vmul.f32 %v3582, %v3652
    %v3913 = vmul.f32 %v3583, %v3648
    %v3914 = vmul.f32 %v3584, %v3649
    %v3915 = vmul.f32 %v3585, %v3650
    %v3916 = vmul.f32 %v3586, %v3651
    %v3917 = vmul.f32 %v3587, %v3652
    %v3918 = vmul.f32 %v3588, %v3648
    %v3919 = vmul.f32 %v3589, %v3649
    %v3920 = vmul.f32 %v3590, %v3650
    %v3921 = vmul.f32 %v3591, %v3651
    %v3922 = vmul.f32 %v3592, %v3652
    %v3923 = vmul.f32 %v3593, %v3648
    %v3924 = vmul.f32 %v3594, %v3649
    %v3925 = vmul.f32 %v3595, %v3650
    %v3926 = vmul.f32 %v3596, %v3651
    %v3927 = vmul.f32 %v3597, %v3652
    %v3928 = vmul.f32 %v3598, %v3648
    %v3929 = vmul.f32 %v3599, %v3649
    %v3930 = vmul.f32 %v3600, %v3650
    %v3931 = vmul.f32 %v3601, %v3651
    %v3932 = vmul.f32 %v3602, %v3652
    %v3933 = vmul.f32 %v3603, %v3648
    %v3934 = vmul.f32 %v3604, %v3649
    %v3935 = vmul.f32 %v3605, %v3650
    %v3936 = vmul.f32 %v3606, %v3651
    %v3937 = vmul.f32 %v3607, %v3652
    %v3938 = vmul.f32 %v3608, %v3648
    %v3939 = vmul.f32 %v3609, %v3649
    %v3940 = vmul.f32 %v3610, %v3650
    %v3941 = vmul.f32 %v3611, %v3651
    %v3942 = vmul.f32 %v3612, %v3652
    %v3943 = vmul.f32 %v3613, %v3648
    %v3944 = vmul.f32 %v3614, %v3649
    %v3945 = vmul.f32 %v3615, %v3650
    %v3946 = vmul.f32 %v3616, %v3651
    %v3947 = vmul.f32 %v3617, %v3652
    %v3948 = vmul.f32 %v3618, %v3648
    %v3949 = vmul.f32 %v3619, %v3649
    %v3950 = vmul.f32 %v3620, %v3650
    %v3951 = vmul.f32 %v3621, %v3651
    %v3952 = vmul.f32 %v3622, %v3652
    %v3953 = vmul.f32 %v3623, %v3648
    %v3954 = vmul.f32 %v3624, %v3649
    %v3955 = vmul.f32 %v3625, %v3650
    %v3956 = vmul.f32 %v3626, %v3651
    %v3957 = vmul.f32 %v3627, %v3652
    %v3958 = vmul.f32 %v3628, %v3648
    %v3959 = vmul.f32 %v3629, %v3649
    %v3960 = vmul.f32 %v3630, %v3650
    %v3961 = vmul.f32 %v3631, %v3651
    %v3962 = vmul.f32 %v3632, %v3652
    %v3963 = vmul.f32 %v3633, %v3648
    %v3964 = vmul.f32 %v3634, %v3649
    %v3965 = vmul.f32 %v3635, %v3650
    %v3966 = vmul.f32 %v3636, %v3651
    %v3967 = vmul.f32 %v3637, %v3652
    %v3968 = vmul.f32 %v3638, %v3648
    %v3969 = vmul.f32 %v3639, %v3649
    %v3970 = vmul.f32 %v3640, %v3650
    %v3971 = vmul.f32 %v3641, %v3651
    %v3972 = vmul.f32 %v3642, %v3652
    %v3974 = vlaneseq
    %v3975 = vshrl.u32 %v3974, 7
    %v3976 = vsub.s32 0, %v3975
    %v3977 = vrot.slane %v47, %v3976
    %v3978 = vlaneseq
    %v3979 = vshrl.u32 %v3978, 7
    %v3980 = vsub.s32 1, %v3979
    %v3981 = vrot.slane %v47, %v3980
    %v3982 = vlaneseq
    %v3983 = vshrl.u32 %v3982, 7
    %v3984 = vsub.s32 2, %v3983
    %v3985 = vrot.slane %v47, %v3984
    %v3986 = vlaneseq
    %v3987 = vshrl.u32 %v3986, 7
    %v3988 = vsub.s32 3, %v3987
    %v3989 = vrot.slane %v47, %v3988
    %v3990 = vlaneseq
    %v3991 = vshrl.u32 %v3990, 7
    %v3992 = vsub.s32 4, %v3991
    %v3993 = vrot.slane %v47, %v3992
    %v3999 = vadd.f32 %v3653, %v3977
    %v4000 = vadd.f32 %v3654, %v3981
    %v4001 = vadd.f32 %v3655, %v3985
    %v4002 = vadd.f32 %v3656, %v3989
    %v4003 = vadd.f32 %v3657, %v3993
    %v4004 = vadd.f32 %v3658, %v3977
    %v4005 = vadd.f32 %v3659, %v3981
    %v4006 = vadd.f32 %v3660, %v3985
    %v4007 = vadd.f32 %v3661, %v3989
    %v4008 = vadd.f32 %v3662, %v3993
    %v4009 = vadd.f32 %v3663, %v3977
    %v4010 = vadd.f32 %v3664, %v3981
    %v4011 = vadd.f32 %v3665, %v3985
    %v4012 = vadd.f32 %v3666, %v3989
    %v4013 = vadd.f32 %v3667, %v3993
    %v4014 = vadd.f32 %v3668, %v3977
    %v4015 = vadd.f32 %v3669, %v3981
    %v4016 = vadd.f32 %v3670, %v3985
    %v4017 = vadd.f32 %v3671, %v3989
    %v4018 = vadd.f32 %v3672, %v3993
    %v4019 = vadd.f32 %v3673, %v3977
    %v4020 = vadd.f32 %v3674, %v3981
    %v4021 = vadd.f32 %v3675, %v3985
    %v4022 = vadd.f32 %v3676, %v3989
    %v4023 = vadd.f32 %v3677, %v3993
    %v4024 = vadd.f32 %v3678, %v3977
    %v4025 = vadd.f32 %v3679, %v3981
    %v4026 = vadd.f32 %v3680, %v3985
    %v4027 = vadd.f32 %v3681, %v3989
    %v4028 = vadd.f32 %v3682, %v3993
    %v4029 = vadd.f32 %v3683, %v3977
    %v4030 = vadd.f32 %v3684, %v3981
    %v4031 = vadd.f32 %v3685, %v3985
    %v4032 = vadd.f32 %v3686, %v3989
    %v4033 = vadd.f32 %v3687, %v3993
    %v4034 = vadd.f32 %v3688, %v3977
    %v4035 = vadd.f32 %v3689, %v3981
    %v4036 = vadd.f32 %v3690, %v3985
    %v4037 = vadd.f32 %v3691, %v3989
    %v4038 = vadd.f32 %v3692, %v3993
    %v4039 = vadd.f32 %v3693, %v3977
    %v4040 = vadd.f32 %v3694, %v3981
    %v4041 = vadd.f32 %v3695, %v3985
    %v4042 = vadd.f32 %v3696, %v3989
    %v4043 = vadd.f32 %v3697, %v3993
    %v4044 = vadd.f32 %v3698, %v3977
    %v4045 = vadd.f32 %v3699, %v3981
    %v4046 = vadd.f32 %v3700, %v3985
    %v4047 = vadd.f32 %v3701, %v3989
    %v4048 = vadd.f32 %v3702, %v3993
    %v4049 = vadd.f32 %v3703, %v3977
    %v4050 = vadd.f32 %v3704, %v3981
    %v4051 = vadd.f32 %v3705, %v3985
    %v4052 = vadd.f32 %v3706, %v3989
    %v4053 = vadd.f32 %v3707, %v3993
    %v4054 = vadd.f32 %v3708, %v3977
    %v4055 = vadd.f32 %v3709, %v3981
    %v4056 = vadd.f32 %v3710, %v3985
    %v4057 = vadd.f32 %v3711, %v3989
    %v4058 = vadd.f32 %v3712, %v3993
    %v4059 = vadd.f32 %v3713, %v3977
    %v4060 = vadd.f32 %v3714, %v3981
    %v4061 = vadd.f32 %v3715, %v3985
    %v4062 = vadd.f32 %v3716, %v3989
    %v4063 = vadd.f32 %v3717, %v3993
    %v4064 = vadd.f32 %v3718, %v3977
    %v4065 = vadd.f32 %v3719, %v3981
    %v4066 = vadd.f32 %v3720, %v3985
    %v4067 = vadd.f32 %v3721, %v3989
    %v4068 = vadd.f32 %v3722, %v3993
    %v4069 = vadd.f32 %v3723, %v3977
    %v4070 = vadd.f32 %v3724, %v3981
    %v4071 = vadd.f32 %v3725, %v3985
    %v4072 = vadd.f32 %v3726, %v3989
    %v4073 = vadd.f32 %v3727, %v3993
    %v4074 = vadd.f32 %v3728, %v3977
    %v4075 = vadd.f32 %v3729, %v3981
    %v4076 = vadd.f32 %v3730, %v3985
    %v4077 = vadd.f32 %v3731, %v3989
    %v4078 = vadd.f32 %v3732, %v3993
    %v4079 = vadd.f32 %v3733, %v3977
    %v4080 = vadd.f32 %v3734, %v3981
    %v4081 = vadd.f32 %v3735, %v3985
    %v4082 = vadd.f32 %v3736, %v3989
    %v4083 = vadd.f32 %v3737, %v3993
    %v4084 = vadd.f32 %v3738, %v3977
    %v4085 = vadd.f32 %v3739, %v3981
    %v4086 = vadd.f32 %v3740, %v3985
    %v4087 = vadd.f32 %v3741, %v3989
    %v4088 = vadd.f32 %v3742, %v3993
    %v4089 = vadd.f32 %v3743, %v3977
    %v4090 = vadd.f32 %v3744, %v3981
    %v4091 = vadd.f32 %v3745, %v3985
    %v4092 = vadd.f32 %v3746, %v3989
    %v4093 = vadd.f32 %v3747, %v3993
    %v4094 = vadd.f32 %v3748, %v3977
    %v4095 = vadd.f32 %v3749, %v3981
    %v4096 = vadd.f32 %v3750, %v3985
    %v4097 = vadd.f32 %v3751, %v3989
    %v4098 = vadd.f32 %v3752, %v3993
    %v4099 = vadd.f32 %v3753, %v3977
    %v4100 = vadd.f32 %v3754, %v3981
    %v4101 = vadd.f32 %v3755, %v3985
    %v4102 = vadd.f32 %v3756, %v3989
    %v4103 = vadd.f32 %v3757, %v3993
    %v4104 = vadd.f32 %v3758, %v3977
    %v4105 = vadd.f32 %v3759, %v3981
    %v4106 = vadd.f32 %v3760, %v3985
    %v4107 = vadd.f32 %v3761, %v3989
    %v4108 = vadd.f32 %v3762, %v3993
    %v4109 = vadd.f32 %v3763, %v3977
    %v4110 = vadd.f32 %v3764, %v3981
    %v4111 = vadd.f32 %v3765, %v3985
    %v4112 = vadd.f32 %v3766, %v3989
    %v4113 = vadd.f32 %v3767, %v3993
    %v4114 = vadd.f32 %v3768, %v3977
    %v4115 = vadd.f32 %v3769, %v3981
    %v4116 = vadd.f32 %v3770, %v3985
    %v4117 = vadd.f32 %v3771, %v3989
    %v4118 = vadd.f32 %v3772, %v3993
    %v4119 = vadd.f32 %v3773, %v3977
    %v4120 = vadd.f32 %v3774, %v3981
    %v4121 = vadd.f32 %v3775, %v3985
    %v4122 = vadd.f32 %v3776, %v3989
    %v4123 = vadd.f32 %v3777, %v3993
    %v4124 = vadd.f32 %v3778, %v3977
    %v4125 = vadd.f32 %v3779, %v3981
    %v4126 = vadd.f32 %v3780, %v3985
    %v4127 = vadd.f32 %v3781, %v3989
    %v4128 = vadd.f32 %v3782, %v3993
    %v4129 = vadd.f32 %v3783, %v3977
    %v4130 = vadd.f32 %v3784, %v3981
    %v4131 = vadd.f32 %v3785, %v3985
    %v4132 = vadd.f32 %v3786, %v3989
    %v4133 = vadd.f32 %v3787, %v3993
    %v4134 = vadd.f32 %v3788, %v3977
    %v4135 = vadd.f32 %v3789, %v3981
    %v4136 = vadd.f32 %v3790, %v3985
    %v4137 = vadd.f32 %v3791, %v3989
    %v4138 = vadd.f32 %v3792, %v3993
    %v4139 = vadd.f32 %v3793, %v3977
    %v4140 = vadd.f32 %v3794, %v3981
    %v4141 = vadd.f32 %v3795, %v3985
    %v4142 = vadd.f32 %v3796, %v3989
    %v4143 = vadd.f32 %v3797, %v3993
    %v4144 = vadd.f32 %v3798, %v3977
    %v4145 = vadd.f32 %v3799, %v3981
    %v4146 = vadd.f32 %v3800, %v3985
    %v4147 = vadd.f32 %v3801, %v3989
    %v4148 = vadd.f32 %v3802, %v3993
    %v4149 = vadd.f32 %v3803, %v3977
    %v4150 = vadd.f32 %v3804, %v3981
    %v4151 = vadd.f32 %v3805, %v3985
    %v4152 = vadd.f32 %v3806, %v3989
    %v4153 = vadd.f32 %v3807, %v3993
    %v4154 = vadd.f32 %v3808, %v3977
    %v4155 = vadd.f32 %v3809, %v3981
    %v4156 = vadd.f32 %v3810, %v3985
    %v4157 = vadd.f32 %v3811, %v3989
    %v4158 = vadd.f32 %v3812, %v3993
    %v4159 = vadd.f32 %v3813, %v3977
    %v4160 = vadd.f32 %v3814, %v3981
    %v4161 = vadd.f32 %v3815, %v3985
    %v4162 = vadd.f32 %v3816, %v3989
    %v4163 = vadd.f32 %v3817, %v3993
    %v4164 = vadd.f32 %v3818, %v3977
    %v4165 = vadd.f32 %v3819, %v3981
    %v4166 = vadd.f32 %v3820, %v3985
    %v4167 = vadd.f32 %v3821, %v3989
    %v4168 = vadd.f32 %v3822, %v3993
    %v4169 = vadd.f32 %v3823, %v3977
    %v4170 = vadd.f32 %v3824, %v3981
    %v4171 = vadd.f32 %v3825, %v3985
    %v4172 = vadd.f32 %v3826, %v3989
    %v4173 = vadd.f32 %v3827, %v3993
    %v4174 = vadd.f32 %v3828, %v3977
    %v4175 = vadd.f32 %v3829, %v3981
    %v4176 = vadd.f32 %v3830, %v3985
    %v4177 = vadd.f32 %v3831, %v3989
    %v4178 = vadd.f32 %v3832, %v3993
    %v4179 = vadd.f32 %v3833, %v3977
    %v4180 = vadd.f32 %v3834, %v3981
    %v4181 = vadd.f32 %v3835, %v3985
    %v4182 = vadd.f32 %v3836, %v3989
    %v4183 = vadd.f32 %v3837, %v3993
    %v4184 = vadd.f32 %v3838, %v3977
    %v4185 = vadd.f32 %v3839, %v3981
    %v4186 = vadd.f32 %v3840, %v3985
    %v4187 = vadd.f32 %v3841, %v3989
    %v4188 = vadd.f32 %v3842, %v3993
    %v4189 = vadd.f32 %v3843, %v3977
    %v4190 = vadd.f32 %v3844, %v3981
    %v4191 = vadd.f32 %v3845, %v3985
    %v4192 = vadd.f32 %v3846, %v3989
    %v4193 = vadd.f32 %v3847, %v3993
    %v4194 = vadd.f32 %v3848, %v3977
    %v4195 = vadd.f32 %v3849, %v3981
    %v4196 = vadd.f32 %v3850, %v3985
    %v4197 = vadd.f32 %v3851, %v3989
    %v4198 = vadd.f32 %v3852, %v3993
    %v4199 = vadd.f32 %v3853, %v3977
    %v4200 = vadd.f32 %v3854, %v3981
    %v4201 = vadd.f32 %v3855, %v3985
    %v4202 = vadd.f32 %v3856, %v3989
    %v4203 = vadd.f32 %v3857, %v3993
    %v4204 = vadd.f32 %v3858, %v3977
    %v4205 = vadd.f32 %v3859, %v3981
    %v4206 = vadd.f32 %v3860, %v3985
    %v4207 = vadd.f32 %v3861, %v3989
    %v4208 = vadd.f32 %v3862, %v3993
    %v4209 = vadd.f32 %v3863, %v3977
    %v4210 = vadd.f32 %v3864, %v3981
    %v4211 = vadd.f32 %v3865, %v3985
    %v4212 = vadd.f32 %v3866, %v3989
    %v4213 = vadd.f32 %v3867, %v3993
    %v4214 = vadd.f32 %v3868, %v3977
    %v4215 = vadd.f32 %v3869, %v3981
    %v4216 = vadd.f32 %v3870, %v3985
    %v4217 = vadd.f32 %v3871, %v3989
    %v4218 = vadd.f32 %v3872, %v3993
    %v4219 = vadd.f32 %v3873, %v3977
    %v4220 = vadd.f32 %v3874, %v3981
    %v4221 = vadd.f32 %v3875, %v3985
    %v4222 = vadd.f32 %v3876, %v3989
    %v4223 = vadd.f32 %v3877, %v3993
    %v4224 = vadd.f32 %v3878, %v3977
    %v4225 = vadd.f32 %v3879, %v3981
    %v4226 = vadd.f32 %v3880, %v3985
    %v4227 = vadd.f32 %v3881, %v3989
    %v4228 = vadd.f32 %v3882, %v3993
    %v4229 = vadd.f32 %v3883, %v3977
    %v4230 = vadd.f32 %v3884, %v3981
    %v4231 = vadd.f32 %v3885, %v3985
    %v4232 = vadd.f32 %v3886, %v3989
    %v4233 = vadd.f32 %v3887, %v3993
    %v4234 = vadd.f32 %v3888, %v3977
    %v4235 = vadd.f32 %v3889, %v3981
    %v4236 = vadd.f32 %v3890, %v3985
    %v4237 = vadd.f32 %v3891, %v3989
    %v4238 = vadd.f32 %v3892, %v3993
    %v4239 = vadd.f32 %v3893, %v3977
    %v4240 = vadd.f32 %v3894, %v3981
    %v4241 = vadd.f32 %v3895, %v3985
    %v4242 = vadd.f32 %v3896, %v3989
    %v4243 = vadd.f32 %v3897, %v3993
    %v4244 = vadd.f32 %v3898, %v3977
    %v4245 = vadd.f32 %v3899, %v3981
    %v4246 = vadd.f32 %v3900, %v3985
    %v4247 = vadd.f32 %v3901, %v3989
    %v4248 = vadd.f32 %v3902, %v3993
    %v4249 = vadd.f32 %v3903, %v3977
    %v4250 = vadd.f32 %v3904, %v3981
    %v4251 = vadd.f32 %v3905, %v3985
    %v4252 = vadd.f32 %v3906, %v3989
    %v4253 = vadd.f32 %v3907, %v3993
    %v4254 = vadd.f32 %v3908, %v3977
    %v4255 = vadd.f32 %v3909, %v3981
    %v4256 = vadd.f32 %v3910, %v3985
    %v4257 = vadd.f32 %v3911, %v3989
    %v4258 = vadd.f32 %v3912, %v3993
    %v4259 = vadd.f32 %v3913, %v3977
    %v4260 = vadd.f32 %v3914, %v3981
    %v4261 = vadd.f32 %v3915, %v3985
    %v4262 = vadd.f32 %v3916, %v3989
    %v4263 = vadd.f32 %v3917, %v3993
    %v4264 = vadd.f32 %v3918, %v3977
    %v4265 = vadd.f32 %v3919, %v3981
    %v4266 = vadd.f32 %v3920, %v3985
    %v4267 = vadd.f32 %v3921, %v3989
    %v4268 = vadd.f32 %v3922, %v3993
    %v4269 = vadd.f32 %v3923, %v3977
    %v4270 = vadd.f32 %v3924, %v3981
    %v4271 = vadd.f32 %v3925, %v3985
    %v4272 = vadd.f32 %v3926, %v3989
    %v4273 = vadd.f32 %v3927, %v3993
    %v4274 = vadd.f32 %v3928, %v3977
    %v4275 = vadd.f32 %v3929, %v3981
    %v4276 = vadd.f32 %v3930, %v3985
    %v4277 = vadd.f32 %v3931, %v3989
    %v4278 = vadd.f32 %v3932, %v3993
    %v4279 = vadd.f32 %v3933, %v3977
    %v4280 = vadd.f32 %v3934, %v3981
    %v4281 = vadd.f32 %v3935, %v3985
    %v4282 = vadd.f32 %v3936, %v3989
    %v4283 = vadd.f32 %v3937, %v3993
    %v4284 = vadd.f32 %v3938, %v3977
    %v4285 = vadd.f32 %v3939, %v3981
    %v4286 = vadd.f32 %v3940, %v3985
    %v4287 = vadd.f32 %v3941, %v3989
    %v4288 = vadd.f32 %v3942, %v3993
    %v4289 = vadd.f32 %v3943, %v3977
    %v4290 = vadd.f32 %v3944, %v3981
    %v4291 = vadd.f32 %v3945, %v3985
    %v4292 = vadd.f32 %v3946, %v3989
    %v4293 = vadd.f32 %v3947, %v3993
    %v4294 = vadd.f32 %v3948, %v3977
    %v4295 = vadd.f32 %v3949, %v3981
    %v4296 = vadd.f32 %v3950, %v3985
    %v4297 = vadd.f32 %v3951, %v3989
    %v4298 = vadd.f32 %v3952, %v3993
    %v4299 = vadd.f32 %v3953, %v3977
    %v4300 = vadd.f32 %v3954, %v3981
    %v4301 = vadd.f32 %v3955, %v3985
    %v4302 = vadd.f32 %v3956, %v3989
    %v4303 = vadd.f32 %v3957, %v3993
    %v4304 = vadd.f32 %v3958, %v3977
    %v4305 = vadd.f32 %v3959, %v3981
    %v4306 = vadd.f32 %v3960, %v3985
    %v4307 = vadd.f32 %v3961, %v3989
    %v4308 = vadd.f32 %v3962, %v3993
    %v4309 = vadd.f32 %v3963, %v3977
    %v4310 = vadd.f32 %v3964, %v3981
    %v4311 = vadd.f32 %v3965, %v3985
    %v4312 = vadd.f32 %v3966, %v3989
    %v4313 = vadd.f32 %v3967, %v3993
    %v4314 = vadd.f32 %v3968, %v3977
    %v4315 = vadd.f32 %v3969, %v3981
    %v4316 = vadd.f32 %v3970, %v3985
    %v4317 = vadd.f32 %v3971, %v3989
    %v4318 = vadd.f32 %v3972, %v3993
    %v4319 = vmax.f32 %v3999, 0.0
    %v4320 = vmax.f32 %v4000, 0.0
    %v4321 = vmax.f32 %v4001, 0.0
    %v4322 = vmax.f32 %v4002, 0.0
    %v4323 = vmax.f32 %v4003, 0.0
    %v4324 = vmax.f32 %v4004, 0.0
    %v4325 = vmax.f32 %v4005, 0.0
    %v4326 = vmax.f32 %v4006, 0.0
    %v4327 = vmax.f32 %v4007, 0.0
    %v4328 = vmax.f32 %v4008, 0.0
    %v4329 = vmax.f32 %v4009, 0.0
    %v4330 = vmax.f32 %v4010, 0.0
    %v4331 = vmax.f32 %v4011, 0.0
    %v4332 = vmax.f32 %v4012, 0.0
    %v4333 = vmax.f32 %v4013, 0.0
    %v4334 = vmax.f32 %v4014, 0.0
    %v4335 = vmax.f32 %v4015, 0.0
    %v4336 = vmax.f32 %v4016, 0.0
    %v4337 = vmax.f32 %v4017, 0.0
    %v4338 = vmax.f32 %v4018, 0.0
    %v4339 = vmax.f32 %v4019, 0.0
    %v4340 = vmax.f32 %v4020, 0.0
    %v4341 = vmax.f32 %v4021, 0.0
    %v4342 = vmax.f32 %v4022, 0.0
    %v4343 = vmax.f32 %v4023, 0.0
    %v4344 = vmax.f32 %v4024, 0.0
    %v4345 = vmax.f32 %v4025, 0.0
    %v4346 = vmax.f32 %v4026, 0.0
    %v4347 = vmax.f32 %v4027, 0.0
    %v4348 = vmax.f32 %v4028, 0.0
    %v4349 = vmax.f32 %v4029, 0.0
    %v4350 = vmax.f32 %v4030, 0.0
    %v4351 = vmax.f32 %v4031, 0.0
    %v4352 = vmax.f32 %v4032, 0.0
    %v4353 = vmax.f32 %v4033, 0.0
    %v4354 = vmax.f32 %v4034, 0.0
    %v4355 = vmax.f32 %v4035, 0.0
    %v4356 = vmax.f32 %v4036, 0.0
    %v4357 = vmax.f32 %v4037, 0.0
    %v4358 = vmax.f32 %v4038, 0.0
    %v4359 = vmax.f32 %v4039, 0.0
    %v4360 = vmax.f32 %v4040, 0.0
    %v4361 = vmax.f32 %v4041, 0.0
    %v4362 = vmax.f32 %v4042, 0.0
    %v4363 = vmax.f32 %v4043, 0.0
    %v4364 = vmax.f32 %v4044, 0.0
    %v4365 = vmax.f32 %v4045, 0.0
    %v4366 = vmax.f32 %v4046, 0.0
    %v4367 = vmax.f32 %v4047, 0.0
    %v4368 = vmax.f32 %v4048, 0.0
    %v4369 = vmax.f32 %v4049, 0.0
    %v4370 = vmax.f32 %v4050, 0.0
    %v4371 = vmax.f32 %v4051, 0.0
    %v4372 = vmax.f32 %v4052, 0.0
    %v4373 = vmax.f32 %v4053, 0.0
    %v4374 = vmax.f32 %v4054, 0.0
    %v4375 = vmax.f32 %v4055, 0.0
    %v4376 = vmax.f32 %v4056, 0.0
    %v4377 = vmax.f32 %v4057, 0.0
    %v4378 = vmax.f32 %v4058, 0.0
    %v4379 = vmax.f32 %v4059, 0.0
    %v4380 = vmax.f32 %v4060, 0.0
    %v4381 = vmax.f32 %v4061, 0.0
    %v4382 = vmax.f32 %v4062, 0.0
    %v4383 = vmax.f32 %v4063, 0.0
    %v4384 = vmax.f32 %v4064, 0.0
    %v4385 = vmax.f32 %v4065, 0.0
    %v4386 = vmax.f32 %v4066, 0.0
    %v4387 = vmax.f32 %v4067, 0.0
    %v4388 = vmax.f32 %v4068, 0.0
    %v4389 = vmax.f32 %v4069, 0.0
    %v4390 = vmax.f32 %v4070, 0.0
    %v4391 = vmax.f32 %v4071, 0.0
    %v4392 = vmax.f32 %v4072, 0.0
    %v4393 = vmax.f32 %v4073, 0.0
    %v4394 = vmax.f32 %v4074, 0.0
    %v4395 = vmax.f32 %v4075, 0.0
    %v4396 = vmax.f32 %v4076, 0.0
    %v4397 = vmax.f32 %v4077, 0.0
    %v4398 = vmax.f32 %v4078, 0.0
    %v4399 = vmax.f32 %v4079, 0.0
    %v4400 = vmax.f32 %v4080, 0.0
    %v4401 = vmax.f32 %v4081, 0.0
    %v4402 = vmax.f32 %v4082, 0.0
    %v4403 = vmax.f32 %v4083, 0.0
    %v4404 = vmax.f32 %v4084, 0.0
    %v4405 = vmax.f32 %v4085, 0.0
    %v4406 = vmax.f32 %v4086, 0.0
    %v4407 = vmax.f32 %v4087, 0.0
    %v4408 = vmax.f32 %v4088, 0.0
    %v4409 = vmax.f32 %v4089, 0.0
    %v4410 = vmax.f32 %v4090, 0.0
    %v4411 = vmax.f32 %v4091, 0.0
    %v4412 = vmax.f32 %v4092, 0.0
    %v4413 = vmax.f32 %v4093, 0.0
    %v4414 = vmax.f32 %v4094, 0.0
    %v4415 = vmax.f32 %v4095, 0.0
    %v4416 = vmax.f32 %v4096, 0.0
    %v4417 = vmax.f32 %v4097, 0.0
    %v4418 = vmax.f32 %v4098, 0.0
    %v4419 = vmax.f32 %v4099, 0.0
    %v4420 = vmax.f32 %v4100, 0.0
    %v4421 = vmax.f32 %v4101, 0.0
    %v4422 = vmax.f32 %v4102, 0.0
    %v4423 = vmax.f32 %v4103, 0.0
    %v4424 = vmax.f32 %v4104, 0.0
    %v4425 = vmax.f32 %v4105, 0.0
    %v4426 = vmax.f32 %v4106, 0.0
    %v4427 = vmax.f32 %v4107, 0.0
    %v4428 = vmax.f32 %v4108, 0.0
    %v4429 = vmax.f32 %v4109, 0.0
    %v4430 = vmax.f32 %v4110, 0.0
    %v4431 = vmax.f32 %v4111, 0.0
    %v4432 = vmax.f32 %v4112, 0.0
    %v4433 = vmax.f32 %v4113, 0.0
    %v4434 = vmax.f32 %v4114, 0.0
    %v4435 = vmax.f32 %v4115, 0.0
    %v4436 = vmax.f32 %v4116, 0.0
    %v4437 = vmax.f32 %v4117, 0.0
    %v4438 = vmax.f32 %v4118, 0.0
    %v4439 = vmax.f32 %v4119, 0.0
    %v4440 = vmax.f32 %v4120, 0.0
    %v4441 = vmax.f32 %v4121, 0.0
    %v4442 = vmax.f32 %v4122, 0.0
    %v4443 = vmax.f32 %v4123, 0.0
    %v4444 = vmax.f32 %v4124, 0.0
    %v4445 = vmax.f32 %v4125, 0.0
    %v4446 = vmax.f32 %v4126, 0.0
    %v4447 = vmax.f32 %v4127, 0.0
    %v4448 = vmax.f32 %v4128, 0.0
    %v4449 = vmax.f32 %v4129, 0.0
    %v4450 = vmax.f32 %v4130, 0.0
    %v4451 = vmax.f32 %v4131, 0.0
    %v4452 = vmax.f32 %v4132, 0.0
    %v4453 = vmax.f32 %v4133, 0.0
    %v4454 = vmax.f32 %v4134, 0.0
    %v4455 = vmax.f32 %v4135, 0.0
    %v4456 = vmax.f32 %v4136, 0.0
    %v4457 = vmax.f32 %v4137, 0.0
    %v4458 = vmax.f32 %v4138, 0.0
    %v4459 = vmax.f32 %v4139, 0.0
    %v4460 = vmax.f32 %v4140, 0.0
    %v4461 = vmax.f32 %v4141, 0.0
    %v4462 = vmax.f32 %v4142, 0.0
    %v4463 = vmax.f32 %v4143, 0.0
    %v4464 = vmax.f32 %v4144, 0.0
    %v4465 = vmax.f32 %v4145, 0.0
    %v4466 = vmax.f32 %v4146, 0.0
    %v4467 = vmax.f32 %v4147, 0.0
    %v4468 = vmax.f32 %v4148, 0.0
    %v4469 = vmax.f32 %v4149, 0.0
    %v4470 = vmax.f32 %v4150, 0.0
    %v4471 = vmax.f32 %v4151, 0.0
    %v4472 = vmax.f32 %v4152, 0.0
    %v4473 = vmax.f32 %v4153, 0.0
    %v4474 = vmax.f32 %v4154, 0.0
    %v4475 = vmax.f32 %v4155, 0.0
    %v4476 = vmax.f32 %v4156, 0.0
    %v4477 = vmax.f32 %v4157, 0.0
    %v4478 = vmax.f32 %v4158, 0.0
    %v4479 = vmax.f32 %v4159, 0.0
    %v4480 = vmax.f32 %v4160, 0.0
    %v4481 = vmax.f32 %v4161, 0.0
    %v4482 = vmax.f32 %v4162, 0.0
    %v4483 = vmax.f32 %v4163, 0.0
    %v4484 = vmax.f32 %v4164, 0.0
    %v4485 = vmax.f32 %v4165, 0.0
    %v4486 = vmax.f32 %v4166, 0.0
    %v4487 = vmax.f32 %v4167, 0.0
    %v4488 = vmax.f32 %v4168, 0.0
    %v4489 = vmax.f32 %v4169, 0.0
    %v4490 = vmax.f32 %v4170, 0.0
    %v4491 = vmax.f32 %v4171, 0.0
    %v4492 = vmax.f32 %v4172, 0.0
    %v4493 = vmax.f32 %v4173, 0.0
    %v4494 = vmax.f32 %v4174, 0.0
    %v4495 = vmax.f32 %v4175, 0.0
    %v4496 = vmax.f32 %v4176, 0.0
    %v4497 = vmax.f32 %v4177, 0.0
    %v4498 = vmax.f32 %v4178, 0.0
    %v4499 = vmax.f32 %v4179, 0.0
    %v4500 = vmax.f32 %v4180, 0.0
    %v4501 = vmax.f32 %v4181, 0.0
    %v4502 = vmax.f32 %v4182, 0.0
    %v4503 = vmax.f32 %v4183, 0.0
    %v4504 = vmax.f32 %v4184, 0.0
    %v4505 = vmax.f32 %v4185, 0.0
    %v4506 = vmax.f32 %v4186, 0.0
    %v4507 = vmax.f32 %v4187, 0.0
    %v4508 = vmax.f32 %v4188, 0.0
    %v4509 = vmax.f32 %v4189, 0.0
    %v4510 = vmax.f32 %v4190, 0.0
    %v4511 = vmax.f32 %v4191, 0.0
    %v4512 = vmax.f32 %v4192, 0.0
    %v4513 = vmax.f32 %v4193, 0.0
    %v4514 = vmax.f32 %v4194, 0.0
    %v4515 = vmax.f32 %v4195, 0.0
    %v4516 = vmax.f32 %v4196, 0.0
    %v4517 = vmax.f32 %v4197, 0.0
    %v4518 = vmax.f32 %v4198, 0.0
    %v4519 = vmax.f32 %v4199, 0.0
    %v4520 = vmax.f32 %v4200, 0.0
    %v4521 = vmax.f32 %v4201, 0.0
    %v4522 = vmax.f32 %v4202, 0.0
    %v4523 = vmax.f32 %v4203, 0.0
    %v4524 = vmax.f32 %v4204, 0.0
    %v4525 = vmax.f32 %v4205, 0.0
    %v4526 = vmax.f32 %v4206, 0.0
    %v4527 = vmax.f32 %v4207, 0.0
    %v4528 = vmax.f32 %v4208, 0.0
    %v4529 = vmax.f32 %v4209, 0.0
    %v4530 = vmax.f32 %v4210, 0.0
    %v4531 = vmax.f32 %v4211, 0.0
    %v4532 = vmax.f32 %v4212, 0.0
    %v4533 = vmax.f32 %v4213, 0.0
    %v4534 = vmax.f32 %v4214, 0.0
    %v4535 = vmax.f32 %v4215, 0.0
    %v4536 = vmax.f32 %v4216, 0.0
    %v4537 = vmax.f32 %v4217, 0.0
    %v4538 = vmax.f32 %v4218, 0.0
    %v4539 = vmax.f32 %v4219, 0.0
    %v4540 = vmax.f32 %v4220, 0.0
    %v4541 = vmax.f32 %v4221, 0.0
    %v4542 = vmax.f32 %v4222, 0.0
    %v4543 = vmax.f32 %v4223, 0.0
    %v4544 = vmax.f32 %v4224, 0.0
    %v4545 = vmax.f32 %v4225, 0.0
    %v4546 = vmax.f32 %v4226, 0.0
    %v4547 = vmax.f32 %v4227, 0.0
    %v4548 = vmax.f32 %v4228, 0.0
    %v4549 = vmax.f32 %v4229, 0.0
    %v4550 = vmax.f32 %v4230, 0.0
    %v4551 = vmax.f32 %v4231, 0.0
    %v4552 = vmax.f32 %v4232, 0.0
    %v4553 = vmax.f32 %v4233, 0.0
    %v4554 = vmax.f32 %v4234, 0.0
    %v4555 = vmax.f32 %v4235, 0.0
    %v4556 = vmax.f32 %v4236, 0.0
    %v4557 = vmax.f32 %v4237, 0.0
    %v4558 = vmax.f32 %v4238, 0.0
    %v4559 = vmax.f32 %v4239, 0.0
    %v4560 = vmax.f32 %v4240, 0.0
    %v4561 = vmax.f32 %v4241, 0.0
    %v4562 = vmax.f32 %v4242, 0.0
    %v4563 = vmax.f32 %v4243, 0.0
    %v4564 = vmax.f32 %v4244, 0.0
    %v4565 = vmax.f32 %v4245, 0.0
    %v4566 = vmax.f32 %v4246, 0.0
    %v4567 = vmax.f32 %v4247, 0.0
    %v4568 = vmax.f32 %v4248, 0.0
    %v4569 = vmax.f32 %v4249, 0.0
    %v4570 = vmax.f32 %v4250, 0.0
    %v4571 = vmax.f32 %v4251, 0.0
    %v4572 = vmax.f32 %v4252, 0.0
    %v4573 = vmax.f32 %v4253, 0.0
    %v4574 = vmax.f32 %v4254, 0.0
    %v4575 = vmax.f32 %v4255, 0.0
    %v4576 = vmax.f32 %v4256, 0.0
    %v4577 = vmax.f32 %v4257, 0.0
    %v4578 = vmax.f32 %v4258, 0.0
    %v4579 = vmax.f32 %v4259, 0.0
    %v4580 = vmax.f32 %v4260, 0.0
    %v4581 = vmax.f32 %v4261, 0.0
    %v4582 = vmax.f32 %v4262, 0.0
    %v4583 = vmax.f32 %v4263, 0.0
    %v4584 = vmax.f32 %v4264, 0.0
    %v4585 = vmax.f32 %v4265, 0.0
    %v4586 = vmax.f32 %v4266, 0.0
    %v4587 = vmax.f32 %v4267, 0.0
    %v4588 = vmax.f32 %v4268, 0.0
    %v4589 = vmax.f32 %v4269, 0.0
    %v4590 = vmax.f32 %v4270, 0.0
    %v4591 = vmax.f32 %v4271, 0.0
    %v4592 = vmax.f32 %v4272, 0.0
    %v4593 = vmax.f32 %v4273, 0.0
    %v4594 = vmax.f32 %v4274, 0.0
    %v4595 = vmax.f32 %v4275, 0.0
    %v4596 = vmax.f32 %v4276, 0.0
    %v4597 = vmax.f32 %v4277, 0.0
    %v4598 = vmax.f32 %v4278, 0.0
    %v4599 = vmax.f32 %v4279, 0.0
    %v4600 = vmax.f32 %v4280, 0.0
    %v4601 = vmax.f32 %v4281, 0.0
    %v4602 = vmax.f32 %v4282, 0.0
    %v4603 = vmax.f32 %v4283, 0.0
    %v4604 = vmax.f32 %v4284, 0.0
    %v4605 = vmax.f32 %v4285, 0.0
    %v4606 = vmax.f32 %v4286, 0.0
    %v4607 = vmax.f32 %v4287, 0.0
    %v4608 = vmax.f32 %v4288, 0.0
    %v4609 = vmax.f32 %v4289, 0.0
    %v4610 = vmax.f32 %v4290, 0.0
    %v4611 = vmax.f32 %v4291, 0.0
    %v4612 = vmax.f32 %v4292, 0.0
    %v4613 = vmax.f32 %v4293, 0.0
    %v4614 = vmax.f32 %v4294, 0.0
    %v4615 = vmax.f32 %v4295, 0.0
    %v4616 = vmax.f32 %v4296, 0.0
    %v4617 = vmax.f32 %v4297, 0.0
    %v4618 = vmax.f32 %v4298, 0.0
    %v4619 = vmax.f32 %v4299, 0.0
    %v4620 = vmax.f32 %v4300, 0.0
    %v4621 = vmax.f32 %v4301, 0.0
    %v4622 = vmax.f32 %v4302, 0.0
    %v4623 = vmax.f32 %v4303, 0.0
    %v4624 = vmax.f32 %v4304, 0.0
    %v4625 = vmax.f32 %v4305, 0.0
    %v4626 = vmax.f32 %v4306, 0.0
    %v4627 = vmax.f32 %v4307, 0.0
    %v4628 = vmax.f32 %v4308, 0.0
    %v4629 = vmax.f32 %v4309, 0.0
    %v4630 = vmax.f32 %v4310, 0.0
    %v4631 = vmax.f32 %v4311, 0.0
    %v4632 = vmax.f32 %v4312, 0.0
    %v4633 = vmax.f32 %v4313, 0.0
    %v4634 = vmax.f32 %v4314, 0.0
    %v4635 = vmax.f32 %v4315, 0.0
    %v4636 = vmax.f32 %v4316, 0.0
    %v4637 = vmax.f32 %v4317, 0.0
    %v4638 = vmax.f32 %v4318, 0.0
    %v4639 = vmul.f32 %v4319, %v4319
    %v4640 = vmul.f32 %v4320, %v4320
    %v4641 = vmul.f32 %v4321, %v4321
    %v4642 = vmul.f32 %v4322, %v4322
    %v4643 = vmul.f32 %v4323, %v4323
    %v4644 = vmul.f32 %v4324, %v4324
    %v4645 = vmul.f32 %v4325, %v4325
    %v4646 = vmul.f32 %v4326, %v4326
    %v4647 = vmul.f32 %v4327, %v4327
    %v4648 = vmul.f32 %v4328, %v4328
    %v4649 = vmul.f32 %v4329, %v4329
    %v4650 = vmul.f32 %v4330, %v4330
    %v4651 = vmul.f32 %v4331, %v4331
    %v4652 = vmul.f32 %v4332, %v4332
    %v4653 = vmul.f32 %v4333, %v4333
    %v4654 = vmul.f32 %v4334, %v4334
    %v4655 = vmul.f32 %v4335, %v4335
    %v4656 = vmul.f32 %v4336, %v4336
    %v4657 = vmul.f32 %v4337, %v4337
    %v4658 = vmul.f32 %v4338, %v4338
    %v4659 = vmul.f32 %v4339, %v4339
    %v4660 = vmul.f32 %v4340, %v4340
    %v4661 = vmul.f32 %v4341, %v4341
    %v4662 = vmul.f32 %v4342, %v4342
    %v4663 = vmul.f32 %v4343, %v4343
    %v4664 = vmul.f32 %v4344, %v4344
    %v4665 = vmul.f32 %v4345, %v4345
    %v4666 = vmul.f32 %v4346, %v4346
    %v4667 = vmul.f32 %v4347, %v4347
    %v4668 = vmul.f32 %v4348, %v4348
    %v4669 = vmul.f32 %v4349, %v4349
    %v4670 = vmul.f32 %v4350, %v4350
    %v4671 = vmul.f32 %v4351, %v4351
    %v4672 = vmul.f32 %v4352, %v4352
    %v4673 = vmul.f32 %v4353, %v4353
    %v4674 = vmul.f32 %v4354, %v4354
    %v4675 = vmul.f32 %v4355, %v4355
    %v4676 = vmul.f32 %v4356, %v4356
    %v4677 = vmul.f32 %v4357, %v4357
    %v4678 = vmul.f32 %v4358, %v4358
    %v4679 = vmul.f32 %v4359, %v4359
    %v4680 = vmul.f32 %v4360, %v4360
    %v4681 = vmul.f32 %v4361, %v4361
    %v4682 = vmul.f32 %v4362, %v4362
    %v4683 = vmul.f32 %v4363, %v4363
    %v4684 = vmul.f32 %v4364, %v4364
    %v4685 = vmul.f32 %v4365, %v4365
    %v4686 = vmul.f32 %v4366, %v4366
    %v4687 = vmul.f32 %v4367, %v4367
    %v4688 = vmul.f32 %v4368, %v4368
    %v4689 = vmul.f32 %v4369, %v4369
    %v4690 = vmul.f32 %v4370, %v4370
    %v4691 = vmul.f32 %v4371, %v4371
    %v4692 = vmul.f32 %v4372, %v4372
    %v4693 = vmul.f32 %v4373, %v4373
    %v4694 = vmul.f32 %v4374, %v4374
    %v4695 = vmul.f32 %v4375, %v4375
    %v4696 = vmul.f32 %v4376, %v4376
    %v4697 = vmul.f32 %v4377, %v4377
    %v4698 = vmul.f32 %v4378, %v4378
    %v4699 = vmul.f32 %v4379, %v4379
    %v4700 = vmul.f32 %v4380, %v4380
    %v4701 = vmul.f32 %v4381, %v4381
    %v4702 = vmul.f32 %v4382, %v4382
    %v4703 = vmul.f32 %v4383, %v4383
    %v4704 = vmul.f32 %v4384, %v4384
    %v4705 = vmul.f32 %v4385, %v4385
    %v4706 = vmul.f32 %v4386, %v4386
    %v4707 = vmul.f32 %v4387, %v4387
    %v4708 = vmul.f32 %v4388, %v4388
    %v4709 = vmul.f32 %v4389, %v4389
    %v4710 = vmul.f32 %v4390, %v4390
    %v4711 = vmul.f32 %v4391, %v4391
    %v4712 = vmul.f32 %v4392, %v4392
    %v4713 = vmul.f32 %v4393, %v4393
    %v4714 = vmul.f32 %v4394, %v4394
    %v4715 = vmul.f32 %v4395, %v4395
    %v4716 = vmul.f32 %v4396, %v4396
    %v4717 = vmul.f32 %v4397, %v4397
    %v4718 = vmul.f32 %v4398, %v4398
    %v4719 = vmul.f32 %v4399, %v4399
    %v4720 = vmul.f32 %v4400, %v4400
    %v4721 = vmul.f32 %v4401, %v4401
    %v4722 = vmul.f32 %v4402, %v4402
    %v4723 = vmul.f32 %v4403, %v4403
    %v4724 = vmul.f32 %v4404, %v4404
    %v4725 = vmul.f32 %v4405, %v4405
    %v4726 = vmul.f32 %v4406, %v4406
    %v4727 = vmul.f32 %v4407, %v4407
    %v4728 = vmul.f32 %v4408, %v4408
    %v4729 = vmul.f32 %v4409, %v4409
    %v4730 = vmul.f32 %v4410, %v4410
    %v4731 = vmul.f32 %v4411, %v4411
    %v4732 = vmul.f32 %v4412, %v4412
    %v4733 = vmul.f32 %v4413, %v4413
    %v4734 = vmul.f32 %v4414, %v4414
    %v4735 = vmul.f32 %v4415, %v4415
    %v4736 = vmul.f32 %v4416, %v4416
    %v4737 = vmul.f32 %v4417, %v4417
    %v4738 = vmul.f32 %v4418, %v4418
    %v4739 = vmul.f32 %v4419, %v4419
    %v4740 = vmul.f32 %v4420, %v4420
    %v4741 = vmul.f32 %v4421, %v4421
    %v4742 = vmul.f32 %v4422, %v4422
    %v4743 = vmul.f32 %v4423, %v4423
    %v4744 = vmul.f32 %v4424, %v4424
    %v4745 = vmul.f32 %v4425, %v4425
    %v4746 = vmul.f32 %v4426, %v4426
    %v4747 = vmul.f32 %v4427, %v4427
    %v4748 = vmul.f32 %v4428, %v4428
    %v4749 = vmul.f32 %v4429, %v4429
    %v4750 = vmul.f32 %v4430, %v4430
    %v4751 = vmul.f32 %v4431, %v4431
    %v4752 = vmul.f32 %v4432, %v4432
    %v4753 = vmul.f32 %v4433, %v4433
    %v4754 = vmul.f32 %v4434, %v4434
    %v4755 = vmul.f32 %v4435, %v4435
    %v4756 = vmul.f32 %v4436, %v4436
    %v4757 = vmul.f32 %v4437, %v4437
    %v4758 = vmul.f32 %v4438, %v4438
    %v4759 = vmul.f32 %v4439, %v4439
    %v4760 = vmul.f32 %v4440, %v4440
    %v4761 = vmul.f32 %v4441, %v4441
    %v4762 = vmul.f32 %v4442, %v4442
    %v4763 = vmul.f32 %v4443, %v4443
    %v4764 = vmul.f32 %v4444, %v4444
    %v4765 = vmul.f32 %v4445, %v4445
    %v4766 = vmul.f32 %v4446, %v4446
    %v4767 = vmul.f32 %v4447, %v4447
    %v4768 = vmul.f32 %v4448, %v4448
    %v4769 = vmul.f32 %v4449, %v4449
    %v4770 = vmul.f32 %v4450, %v4450
    %v4771 = vmul.f32 %v4451, %v4451
    %v4772 = vmul.f32 %v4452, %v4452
    %v4773 = vmul.f32 %v4453, %v4453
    %v4774 = vmul.f32 %v4454, %v4454
    %v4775 = vmul.f32 %v4455, %v4455
    %v4776 = vmul.f32 %v4456, %v4456
    %v4777 = vmul.f32 %v4457, %v4457
    %v4778 = vmul.f32 %v4458, %v4458
    %v4779 = vmul.f32 %v4459, %v4459
    %v4780 = vmul.f32 %v4460, %v4460
    %v4781 = vmul.f32 %v4461, %v4461
    %v4782 = vmul.f32 %v4462, %v4462
    %v4783 = vmul.f32 %v4463, %v4463
    %v4784 = vmul.f32 %v4464, %v4464
    %v4785 = vmul.f32 %v4465, %v4465
    %v4786 = vmul.f32 %v4466, %v4466
    %v4787 = vmul.f32 %v4467, %v4467
    %v4788 = vmul.f32 %v4468, %v4468
    %v4789 = vmul.f32 %v4469, %v4469
    %v4790 = vmul.f32 %v4470, %v4470
    %v4791 = vmul.f32 %v4471, %v4471
    %v4792 = vmul.f32 %v4472, %v4472
    %v4793 = vmul.f32 %v4473, %v4473
    %v4794 = vmul.f32 %v4474, %v4474
    %v4795 = vmul.f32 %v4475, %v4475
    %v4796 = vmul.f32 %v4476, %v4476
    %v4797 = vmul.f32 %v4477, %v4477
    %v4798 = vmul.f32 %v4478, %v4478
    %v4799 = vmul.f32 %v4479, %v4479
    %v4800 = vmul.f32 %v4480, %v4480
    %v4801 = vmul.f32 %v4481, %v4481
    %v4802 = vmul.f32 %v4482, %v4482
    %v4803 = vmul.f32 %v4483, %v4483
    %v4804 = vmul.f32 %v4484, %v4484
    %v4805 = vmul.f32 %v4485, %v4485
    %v4806 = vmul.f32 %v4486, %v4486
    %v4807 = vmul.f32 %v4487, %v4487
    %v4808 = vmul.f32 %v4488, %v4488
    %v4809 = vmul.f32 %v4489, %v4489
    %v4810 = vmul.f32 %v4490, %v4490
    %v4811 = vmul.f32 %v4491, %v4491
    %v4812 = vmul.f32 %v4492, %v4492
    %v4813 = vmul.f32 %v4493, %v4493
    %v4814 = vmul.f32 %v4494, %v4494
    %v4815 = vmul.f32 %v4495, %v4495
    %v4816 = vmul.f32 %v4496, %v4496
    %v4817 = vmul.f32 %v4497, %v4497
    %v4818 = vmul.f32 %v4498, %v4498
    %v4819 = vmul.f32 %v4499, %v4499
    %v4820 = vmul.f32 %v4500, %v4500
    %v4821 = vmul.f32 %v4501, %v4501
    %v4822 = vmul.f32 %v4502, %v4502
    %v4823 = vmul.f32 %v4503, %v4503
    %v4824 = vmul.f32 %v4504, %v4504
    %v4825 = vmul.f32 %v4505, %v4505
    %v4826 = vmul.f32 %v4506, %v4506
    %v4827 = vmul.f32 %v4507, %v4507
    %v4828 = vmul.f32 %v4508, %v4508
    %v4829 = vmul.f32 %v4509, %v4509
    %v4830 = vmul.f32 %v4510, %v4510
    %v4831 = vmul.f32 %v4511, %v4511
    %v4832 = vmul.f32 %v4512, %v4512
    %v4833 = vmul.f32 %v4513, %v4513
    %v4834 = vmul.f32 %v4514, %v4514
    %v4835 = vmul.f32 %v4515, %v4515
    %v4836 = vmul.f32 %v4516, %v4516
    %v4837 = vmul.f32 %v4517, %v4517
    %v4838 = vmul.f32 %v4518, %v4518
    %v4839 = vmul.f32 %v4519, %v4519
    %v4840 = vmul.f32 %v4520, %v4520
    %v4841 = vmul.f32 %v4521, %v4521
    %v4842 = vmul.f32 %v4522, %v4522
    %v4843 = vmul.f32 %v4523, %v4523
    %v4844 = vmul.f32 %v4524, %v4524
    %v4845 = vmul.f32 %v4525, %v4525
    %v4846 = vmul.f32 %v4526, %v4526
    %v4847 = vmul.f32 %v4527, %v4527
    %v4848 = vmul.f32 %v4528, %v4528
    %v4849 = vmul.f32 %v4529, %v4529
    %v4850 = vmul.f32 %v4530, %v4530
    %v4851 = vmul.f32 %v4531, %v4531
    %v4852 = vmul.f32 %v4532, %v4532
    %v4853 = vmul.f32 %v4533, %v4533
    %v4854 = vmul.f32 %v4534, %v4534
    %v4855 = vmul.f32 %v4535, %v4535
    %v4856 = vmul.f32 %v4536, %v4536
    %v4857 = vmul.f32 %v4537, %v4537
    %v4858 = vmul.f32 %v4538, %v4538
    %v4859 = vmul.f32 %v4539, %v4539
    %v4860 = vmul.f32 %v4540, %v4540
    %v4861 = vmul.f32 %v4541, %v4541
    %v4862 = vmul.f32 %v4542, %v4542
    %v4863 = vmul.f32 %v4543, %v4543
    %v4864 = vmul.f32 %v4544, %v4544
    %v4865 = vmul.f32 %v4545, %v4545
    %v4866 = vmul.f32 %v4546, %v4546
    %v4867 = vmul.f32 %v4547, %v4547
    %v4868 = vmul.f32 %v4548, %v4548
    %v4869 = vmul.f32 %v4549, %v4549
    %v4870 = vmul.f32 %v4550, %v4550
    %v4871 = vmul.f32 %v4551, %v4551
    %v4872 = vmul.f32 %v4552, %v4552
    %v4873 = vmul.f32 %v4553, %v4553
    %v4874 = vmul.f32 %v4554, %v4554
    %v4875 = vmul.f32 %v4555, %v4555
    %v4876 = vmul.f32 %v4556, %v4556
    %v4877 = vmul.f32 %v4557, %v4557
    %v4878 = vmul.f32 %v4558, %v4558
    %v4879 = vmul.f32 %v4559, %v4559
    %v4880 = vmul.f32 %v4560, %v4560
    %v4881 = vmul.f32 %v4561, %v4561
    %v4882 = vmul.f32 %v4562, %v4562
    %v4883 = vmul.f32 %v4563, %v4563
    %v4884 = vmul.f32 %v4564, %v4564
    %v4885 = vmul.f32 %v4565, %v4565
    %v4886 = vmul.f32 %v4566, %v4566
    %v4887 = vmul.f32 %v4567, %v4567
    %v4888 = vmul.f32 %v4568, %v4568
    %v4889 = vmul.f32 %v4569, %v4569
    %v4890 = vmul.f32 %v4570, %v4570
    %v4891 = vmul.f32 %v4571, %v4571
    %v4892 = vmul.f32 %v4572, %v4572
    %v4893 = vmul.f32 %v4573, %v4573
    %v4894 = vmul.f32 %v4574, %v4574
    %v4895 = vmul.f32 %v4575, %v4575
    %v4896 = vmul.f32 %v4576, %v4576
    %v4897 = vmul.f32 %v4577, %v4577
    %v4898 = vmul.f32 %v4578, %v4578
    %v4899 = vmul.f32 %v4579, %v4579
    %v4900 = vmul.f32 %v4580, %v4580
    %v4901 = vmul.f32 %v4581, %v4581
    %v4902 = vmul.f32 %v4582, %v4582
    %v4903 = vmul.f32 %v4583, %v4583
    %v4904 = vmul.f32 %v4584, %v4584
    %v4905 = vmul.f32 %v4585, %v4585
    %v4906 = vmul.f32 %v4586, %v4586
    %v4907 = vmul.f32 %v4587, %v4587
    %v4908 = vmul.f32 %v4588, %v4588
    %v4909 = vmul.f32 %v4589, %v4589
    %v4910 = vmul.f32 %v4590, %v4590
    %v4911 = vmul.f32 %v4591, %v4591
    %v4912 = vmul.f32 %v4592, %v4592
    %v4913 = vmul.f32 %v4593, %v4593
    %v4914 = vmul.f32 %v4594, %v4594
    %v4915 = vmul.f32 %v4595, %v4595
    %v4916 = vmul.f32 %v4596, %v4596
    %v4917 = vmul.f32 %v4597, %v4597
    %v4918 = vmul.f32 %v4598, %v4598
    %v4919 = vmul.f32 %v4599, %v4599
    %v4920 = vmul.f32 %v4600, %v4600
    %v4921 = vmul.f32 %v4601, %v4601
    %v4922 = vmul.f32 %v4602, %v4602
    %v4923 = vmul.f32 %v4603, %v4603
    %v4924 = vmul.f32 %v4604, %v4604
    %v4925 = vmul.f32 %v4605, %v4605
    %v4926 = vmul.f32 %v4606, %v4606
    %v4927 = vmul.f32 %v4607, %v4607
    %v4928 = vmul.f32 %v4608, %v4608
    %v4929 = vmul.f32 %v4609, %v4609
    %v4930 = vmul.f32 %v4610, %v4610
    %v4931 = vmul.f32 %v4611, %v4611
    %v4932 = vmul.f32 %v4612, %v4612
    %v4933 = vmul.f32 %v4613, %v4613
    %v4934 = vmul.f32 %v4614, %v4614
    %v4935 = vmul.f32 %v4615, %v4615
    %v4936 = vmul.f32 %v4616, %v4616
    %v4937 = vmul.f32 %v4617, %v4617
    %v4938 = vmul.f32 %v4618, %v4618
    %v4939 = vmul.f32 %v4619, %v4619
    %v4940 = vmul.f32 %v4620, %v4620
    %v4941 = vmul.f32 %v4621, %v4621
    %v4942 = vmul.f32 %v4622, %v4622
    %v4943 = vmul.f32 %v4623, %v4623
    %v4944 = vmul.f32 %v4624, %v4624
    %v4945 = vmul.f32 %v4625, %v4625
    %v4946 = vmul.f32 %v4626, %v4626
    %v4947 = vmul.f32 %v4627, %v4627
    %v4948 = vmul.f32 %v4628, %v4628
    %v4949 = vmul.f32 %v4629, %v4629
    %v4950 = vmul.f32 %v4630, %v4630
    %v4951 = vmul.f32 %v4631, %v4631
    %v4952 = vmul.f32 %v4632, %v4632
    %v4953 = vmul.f32 %v4633, %v4633
    %v4954 = vmul.f32 %v4634, %v4634
    %v4955 = vmul.f32 %v4635, %v4635
    %v4956 = vmul.f32 %v4636, %v4636
    %v4957 = vmul.f32 %v4637, %v4637
    %v4958 = vmul.f32 %v4638, %v4638
    %4959 = vmatprep.subr.mxu0 %v4320
    %4960 = vmatpush1.msra.mxu0 %v4319
    %4961 = vmatprep.subr.mxu0 %v4325
    %4962 = vmatpush1.msra.mxu0 %v4324
    %4963 = vmatprep.subr.mxu0 %v4330
    %4964 = vmatpush1.msra.mxu0 %v4329
    %4965 = vmatprep.subr.mxu0 %v4335
    %4966 = vmatpush1.msra.mxu0 %v4334
    %4967 = vmatprep.subr.mxu0 %v4340
    %4968 = vmatpush1.msra.mxu0 %v4339
    %4969 = vmatprep.subr.mxu0 %v4345
    %4970 = vmatpush1.msra.mxu0 %v4344
    %4971 = vmatprep.subr.mxu0 %v4350
    %4972 = vmatpush1.msra.mxu0 %v4349
    %4973 = vmatprep.subr.mxu0 %v4355
    %4974 = vmatpush1.msra.mxu0 %v4354
    %4975 = vmatprep.subr.mxu0 %v4360
    %4976 = vmatpush1.msra.mxu0 %v4359
    %4977 = vmatprep.subr.mxu0 %v4365
    %4978 = vmatpush1.msra.mxu0 %v4364
    %4979 = vmatprep.subr.mxu0 %v4370
    %4980 = vmatpush1.msra.mxu0 %v4369
    %4981 = vmatprep.subr.mxu0 %v4375
    %4982 = vmatpush1.msra.mxu0 %v4374
    %4983 = vmatprep.subr.mxu0 %v4380
    %4984 = vmatpush1.msra.mxu0 %v4379
    %4985 = vmatprep.subr.mxu0 %v4385
    %4986 = vmatpush1.msra.mxu0 %v4384
    %4987 = vmatprep.subr.mxu0 %v4390
    %4988 = vmatpush1.msra.mxu0 %v4389
    %4989 = vmatprep.subr.mxu0 %v4395
    %4990 = vmatpush1.msra.mxu0 %v4394
    %4991 = vmatprep.subr.mxu0 %v4400
    %4992 = vmatpush1.msra.mxu0 %v4399
    %4993 = vmatprep.subr.mxu0 %v4405
    %4994 = vmatpush1.msra.mxu0 %v4404
    %4995 = vmatprep.subr.mxu0 %v4410
    %4996 = vmatpush1.msra.mxu0 %v4409
    %4997 = vmatprep.subr.mxu0 %v4415
    %4998 = vmatpush1.msra.mxu0 %v4414
    %4999 = vmatprep.subr.mxu0 %v4420
    %5000 = vmatpush1.msra.mxu0 %v4419
    %5001 = vmatprep.subr.mxu0 %v4425
    %5002 = vmatpush1.msra.mxu0 %v4424
    %5003 = vmatprep.subr.mxu0 %v4430
    %5004 = vmatpush1.msra.mxu0 %v4429
    %5005 = vmatprep.subr.mxu0 %v4435
    %5006 = vmatpush1.msra.mxu0 %v4434
    %5007 = vmatprep.subr.mxu0 %v4440
    %5008 = vmatpush1.msra.mxu0 %v4439
    %5009 = vmatprep.subr.mxu0 %v4445
    %5010 = vmatpush1.msra.mxu0 %v4444
    %5011 = vmatprep.subr.mxu0 %v4450
    %5012 = vmatpush1.msra.mxu0 %v4449
    %5013 = vmatprep.subr.mxu0 %v4455
    %5014 = vmatpush1.msra.mxu0 %v4454
    %5015 = vmatprep.subr.mxu0 %v4460
    %5016 = vmatpush1.msra.mxu0 %v4459
    %5017 = vmatprep.subr.mxu0 %v4465
    %5018 = vmatpush1.msra.mxu0 %v4464
    %5019 = vmatprep.subr.mxu0 %v4470
    %5020 = vmatpush1.msra.mxu0 %v4469
    %5021 = vmatprep.subr.mxu0 %v4475
    %5022 = vmatpush1.msra.mxu0 %v4474
    %5023 = vmatprep.mubr.f32.mxu0 %v2025
    %5024 = vmatmul.mubr.f32.gmra.mrb[0].mxu0 %v2017
    %v5025 = vpop.f32.mrb[0].mxu0
    %v5026 = vadd.f32 0.0, %v5025
    %v5027 = vpop.f32.mrb[0].mxu0
    %v5028 = vadd.f32 0.0, %v5027
    %5029 = vdwg.mxu0
    %5030 = vmatprep.subr.mxu0 %v4480
    %5031 = vmatpush1.msra.mxu0 %v4479
    %5032 = vmatprep.subr.mxu0 %v4485
    %5033 = vmatpush1.msra.mxu0 %v4484
    %5034 = vmatprep.subr.mxu0 %v4490
    %5035 = vmatpush1.msra.mxu0 %v4489
    %5036 = vmatprep.subr.mxu0 %v4495
    %5037 = vmatpush1.msra.mxu0 %v4494
    %5038 = vmatprep.subr.mxu0 %v4500
    %5039 = vmatpush1.msra.mxu0 %v4499
    %5040 = vmatprep.subr.mxu0 %v4505
    %5041 = vmatpush1.msra.mxu0 %v4504
    %5042 = vmatprep.subr.mxu0 %v4510
    %5043 = vmatpush1.msra.mxu0 %v4509
    %5044 = vmatprep.subr.mxu0 %v4515
    %5045 = vmatpush1.msra.mxu0 %v4514
    %5046 = vmatprep.subr.mxu0 %v4520
    %5047 = vmatpush1.msra.mxu0 %v4519
    %5048 = vmatprep.subr.mxu0 %v4525
    %5049 = vmatpush1.msra.mxu0 %v4524
    %5050 = vmatprep.subr.mxu0 %v4530
    %5051 = vmatpush1.msra.mxu0 %v4529
    %5052 = vmatprep.subr.mxu0 %v4535
    %5053 = vmatpush1.msra.mxu0 %v4534
    %5054 = vmatprep.subr.mxu0 %v4540
    %5055 = vmatpush1.msra.mxu0 %v4539
    %5056 = vmatprep.subr.mxu0 %v4545
    %5057 = vmatpush1.msra.mxu0 %v4544
    %5058 = vmatprep.subr.mxu0 %v4550
    %5059 = vmatpush1.msra.mxu0 %v4549
    %5060 = vmatprep.subr.mxu0 %v4555
    %5061 = vmatpush1.msra.mxu0 %v4554
    %5062 = vmatprep.subr.mxu0 %v4560
    %5063 = vmatpush1.msra.mxu0 %v4559
    %5064 = vmatprep.subr.mxu0 %v4565
    %5065 = vmatpush1.msra.mxu0 %v4564
    %5066 = vmatprep.subr.mxu0 %v4570
    %5067 = vmatpush1.msra.mxu0 %v4569
    %5068 = vmatprep.subr.mxu0 %v4575
    %5069 = vmatpush1.msra.mxu0 %v4574
    %5070 = vmatprep.subr.mxu0 %v4580
    %5071 = vmatpush1.msra.mxu0 %v4579
    %5072 = vmatprep.subr.mxu0 %v4585
    %5073 = vmatpush1.msra.mxu0 %v4584
    %5074 = vmatprep.subr.mxu0 %v4590
    %5075 = vmatpush1.msra.mxu0 %v4589
    %5076 = vmatprep.subr.mxu0 %v4595
    %5077 = vmatpush1.msra.mxu0 %v4594
    %5078 = vmatprep.subr.mxu0 %v4600
    %5079 = vmatpush1.msra.mxu0 %v4599
    %5080 = vmatprep.subr.mxu0 %v4605
    %5081 = vmatpush1.msra.mxu0 %v4604
    %5082 = vmatprep.subr.mxu0 %v4610
    %5083 = vmatpush1.msra.mxu0 %v4609
    %5084 = vmatprep.subr.mxu0 %v4615
    %5085 = vmatpush1.msra.mxu0 %v4614
    %5086 = vmatprep.subr.mxu0 %v4620
    %5087 = vmatpush1.msra.mxu0 %v4619
    %5088 = vmatprep.subr.mxu0 %v4625
    %5089 = vmatpush1.msra.mxu0 %v4624
    %5090 = vmatprep.subr.mxu0 %v4630
    %5091 = vmatpush1.msra.mxu0 %v4629
    %5092 = vmatprep.subr.mxu0 %v4635
    %5093 = vmatpush1.msra.mxu0 %v4634
    %5094 = vmatprep.mubr.f32.mxu0 %v2026
    %5095 = vmatmul.mubr.f32.gmra.mrb[0].mxu0 %v2024
    %v5096 = vpop.f32.mrb[0].mxu0
    %v5097 = vadd.f32 %v5026, %v5096
    %v5098 = vpop.f32.mrb[0].mxu0
    %v5099 = vadd.f32 %v5028, %v5098
    %5100 = vdwg.mxu0
    %5101 = vmatprep.subr.mxu0 %v4322
    %5102 = vmatpush1.msra.mxu0 %v4321
    %5103 = vmatprep.subr.mxu0 %v4327
    %5104 = vmatpush1.msra.mxu0 %v4326
    %5105 = vmatprep.subr.mxu0 %v4332
    %5106 = vmatpush1.msra.mxu0 %v4331
    %5107 = vmatprep.subr.mxu0 %v4337
    %5108 = vmatpush1.msra.mxu0 %v4336
    %5109 = vmatprep.subr.mxu0 %v4342
    %5110 = vmatpush1.msra.mxu0 %v4341
    %5111 = vmatprep.subr.mxu0 %v4347
    %5112 = vmatpush1.msra.mxu0 %v4346
    %5113 = vmatprep.subr.mxu0 %v4352
    %5114 = vmatpush1.msra.mxu0 %v4351
    %5115 = vmatprep.subr.mxu0 %v4357
    %5116 = vmatpush1.msra.mxu0 %v4356
    %5117 = vmatprep.subr.mxu0 %v4362
    %5118 = vmatpush1.msra.mxu0 %v4361
    %5119 = vmatprep.subr.mxu0 %v4367
    %5120 = vmatpush1.msra.mxu0 %v4366
    %5121 = vmatprep.subr.mxu0 %v4372
    %5122 = vmatpush1.msra.mxu0 %v4371
    %5123 = vmatprep.subr.mxu0 %v4377
    %5124 = vmatpush1.msra.mxu0 %v4376
    %5125 = vmatprep.subr.mxu0 %v4382
    %5126 = vmatpush1.msra.mxu0 %v4381
    %5127 = vmatprep.subr.mxu0 %v4387
    %5128 = vmatpush1.msra.mxu0 %v4386
    %5129 = vmatprep.subr.mxu0 %v4392
    %5130 = vmatpush1.msra.mxu0 %v4391
    %5131 = vmatprep.subr.mxu0 %v4397
    %5132 = vmatpush1.msra.mxu0 %v4396
    %5133 = vmatprep.subr.mxu0 %v4402
    %5134 = vmatpush1.msra.mxu0 %v4401
    %5135 = vmatprep.subr.mxu0 %v4407
    %5136 = vmatpush1.msra.mxu0 %v4406
    %5137 = vmatprep.subr.mxu0 %v4412
    %5138 = vmatpush1.msra.mxu0 %v4411
    %5139 = vmatprep.subr.mxu0 %v4417
    %5140 = vmatpush1.msra.mxu0 %v4416
    %5141 = vmatprep.subr.mxu0 %v4422
    %5142 = vmatpush1.msra.mxu0 %v4421
    %5143 = vmatprep.subr.mxu0 %v4427
    %5144 = vmatpush1.msra.mxu0 %v4426
    %5145 = vmatprep.subr.mxu0 %v4432
    %5146 = vmatpush1.msra.mxu0 %v4431
    %5147 = vmatprep.subr.mxu0 %v4437
    %5148 = vmatpush1.msra.mxu0 %v4436
    %5149 = vmatprep.subr.mxu0 %v4442
    %5150 = vmatpush1.msra.mxu0 %v4441
    %5151 = vmatprep.subr.mxu0 %v4447
    %5152 = vmatpush1.msra.mxu0 %v4446
    %5153 = vmatprep.subr.mxu0 %v4452
    %5154 = vmatpush1.msra.mxu0 %v4451
    %5155 = vmatprep.subr.mxu0 %v4457
    %5156 = vmatpush1.msra.mxu0 %v4456
    %5157 = vmatprep.subr.mxu0 %v4462
    %5158 = vmatpush1.msra.mxu0 %v4461
    %5159 = vmatprep.subr.mxu0 %v4467
    %5160 = vmatpush1.msra.mxu0 %v4466
    %5161 = vmatprep.subr.mxu0 %v4472
    %5162 = vmatpush1.msra.mxu0 %v4471
    %5163 = vmatprep.subr.mxu0 %v4477
    %5164 = vmatpush1.msra.mxu0 %v4476
    %5165 = vmatprep.mubr.f32.mxu0 %v2025
    %5166 = vmatmul.mubr.f32.gmra.mrb[0].mxu0 %v2017
    %v5167 = vpop.f32.mrb[0].mxu0
    %v5168 = vadd.f32 0.0, %v5167
    %v5169 = vpop.f32.mrb[0].mxu0
    %v5170 = vadd.f32 0.0, %v5169
    %5171 = vdwg.mxu0
    %5172 = vmatprep.subr.mxu0 %v4482
    %5173 = vmatpush1.msra.mxu0 %v4481
    %5174 = vmatprep.subr.mxu0 %v4487
    %5175 = vmatpush1.msra.mxu0 %v4486
    %5176 = vmatprep.subr.mxu0 %v4492
    %5177 = vmatpush1.msra.mxu0 %v4491
    %5178 = vmatprep.subr.mxu0 %v4497
    %5179 = vmatpush1.msra.mxu0 %v4496
    %5180 = vmatprep.subr.mxu0 %v4502
    %5181 = vmatpush1.msra.mxu0 %v4501
    %5182 = vmatprep.subr.mxu0 %v4507
    %5183 = vmatpush1.msra.mxu0 %v4506
    %5184 = vmatprep.subr.mxu0 %v4512
    %5185 = vmatpush1.msra.mxu0 %v4511
    %5186 = vmatprep.subr.mxu0 %v4517
    %5187 = vmatpush1.msra.mxu0 %v4516
    %5188 = vmatprep.subr.mxu0 %v4522
    %5189 = vmatpush1.msra.mxu0 %v4521
    %5190 = vmatprep.subr.mxu0 %v4527
    %5191 = vmatpush1.msra.mxu0 %v4526
    %5192 = vmatprep.subr.mxu0 %v4532
    %5193 = vmatpush1.msra.mxu0 %v4531
    %5194 = vmatprep.subr.mxu0 %v4537
    %5195 = vmatpush1.msra.mxu0 %v4536
    %5196 = vmatprep.subr.mxu0 %v4542
    %5197 = vmatpush1.msra.mxu0 %v4541
    %5198 = vmatprep.subr.mxu0 %v4547
    %5199 = vmatpush1.msra.mxu0 %v4546
    %5200 = vmatprep.subr.mxu0 %v4552
    %5201 = vmatpush1.msra.mxu0 %v4551
    %5202 = vmatprep.subr.mxu0 %v4557
    %5203 = vmatpush1.msra.mxu0 %v4556
    %5204 = vmatprep.subr.mxu0 %v4562
    %5205 = vmatpush1.msra.mxu0 %v4561
    %5206 = vmatprep.subr.mxu0 %v4567
    %5207 = vmatpush1.msra.mxu0 %v4566
    %5208 = vmatprep.subr.mxu0 %v4572
    %5209 = vmatpush1.msra.mxu0 %v4571
    %5210 = vmatprep.subr.mxu0 %v4577
    %5211 = vmatpush1.msra.mxu0 %v4576
    %5212 = vmatprep.subr.mxu0 %v4582
    %5213 = vmatpush1.msra.mxu0 %v4581
    %5214 = vmatprep.subr.mxu0 %v4587
    %5215 = vmatpush1.msra.mxu0 %v4586
    %5216 = vmatprep.subr.mxu0 %v4592
    %5217 = vmatpush1.msra.mxu0 %v4591
    %5218 = vmatprep.subr.mxu0 %v4597
    %5219 = vmatpush1.msra.mxu0 %v4596
    %5220 = vmatprep.subr.mxu0 %v4602
    %5221 = vmatpush1.msra.mxu0 %v4601
    %5222 = vmatprep.subr.mxu0 %v4607
    %5223 = vmatpush1.msra.mxu0 %v4606
    %5224 = vmatprep.subr.mxu0 %v4612
    %5225 = vmatpush1.msra.mxu0 %v4611
    %5226 = vmatprep.subr.mxu0 %v4617
    %5227 = vmatpush1.msra.mxu0 %v4616
    %5228 = vmatprep.subr.mxu0 %v4622
    %5229 = vmatpush1.msra.mxu0 %v4621
    %5230 = vmatprep.subr.mxu0 %v4627
    %5231 = vmatpush1.msra.mxu0 %v4626
    %5232 = vmatprep.subr.mxu0 %v4632
    %5233 = vmatpush1.msra.mxu0 %v4631
    %5234 = vmatprep.subr.mxu0 %v4637
    %5235 = vmatpush1.msra.mxu0 %v4636
    %5236 = vmatprep.mubr.f32.mxu0 %v2026
    %5237 = vmatmul.mubr.f32.gmra.mrb[0].mxu0 %v2024
    %v5238 = vpop.f32.mrb[0].mxu0
    %v5239 = vadd.f32 %v5168, %v5238
    %v5240 = vpop.f32.mrb[0].mxu0
    %v5241 = vadd.f32 %v5170, %v5240
    %5242 = vdwg.mxu0
    %5243 = vmatprep.subr.mxu0 0.0
    %5244 = vmatpush1.msra.mxu0 %v4323
    %5245 = vmatprep.subr.mxu0 0.0
    %5246 = vmatpush1.msra.mxu0 %v4328
    %5247 = vmatprep.subr.mxu0 0.0
    %5248 = vmatpush1.msra.mxu0 %v4333
    %5249 = vmatprep.subr.mxu0 0.0
    %5250 = vmatpush1.msra.mxu0 %v4338
    %5251 = vmatprep.subr.mxu0 0.0
    %5252 = vmatpush1.msra.mxu0 %v4343
    %5253 = vmatprep.subr.mxu0 0.0
    %5254 = vmatpush1.msra.mxu0 %v4348
    %5255 = vmatprep.subr.mxu0 0.0
    %5256 = vmatpush1.msra.mxu0 %v4353
    %5257 = vmatprep.subr.mxu0 0.0
    %5258 = vmatpush1.msra.mxu0 %v4358
    %5259 = vmatprep.subr.mxu0 0.0
    %5260 = vmatpush1.msra.mxu0 %v4363
    %5261 = vmatprep.subr.mxu0 0.0
    %5262 = vmatpush1.msra.mxu0 %v4368
    %5263 = vmatprep.subr.mxu0 0.0
    %5264 = vmatpush1.msra.mxu0 %v4373
    %5265 = vmatprep.subr.mxu0 0.0
    %5266 = vmatpush1.msra.mxu0 %v4378
    %5267 = vmatprep.subr.mxu0 0.0
    %5268 = vmatpush1.msra.mxu0 %v4383
    %5269 = vmatprep.subr.mxu0 0.0
    %5270 = vmatpush1.msra.mxu0 %v4388
    %5271 = vmatprep.subr.mxu0 0.0
    %5272 = vmatpush1.msra.mxu0 %v4393
    %5273 = vmatprep.subr.mxu0 0.0
    %5274 = vmatpush1.msra.mxu0 %v4398
    %5275 = vmatprep.subr.mxu0 0.0
    %5276 = vmatpush1.msra.mxu0 %v4403
    %5277 = vmatprep.subr.mxu0 0.0
    %5278 = vmatpush1.msra.mxu0 %v4408
    %5279 = vmatprep.subr.mxu0 0.0
    %5280 = vmatpush1.msra.mxu0 %v4413
    %5281 = vmatprep.subr.mxu0 0.0
    %5282 = vmatpush1.msra.mxu0 %v4418
    %5283 = vmatprep.subr.mxu0 0.0
    %5284 = vmatpush1.msra.mxu0 %v4423
    %5285 = vmatprep.subr.mxu0 0.0
    %5286 = vmatpush1.msra.mxu0 %v4428
    %5287 = vmatprep.subr.mxu0 0.0
    %5288 = vmatpush1.msra.mxu0 %v4433
    %5289 = vmatprep.subr.mxu0 0.0
    %5290 = vmatpush1.msra.mxu0 %v4438
    %5291 = vmatprep.subr.mxu0 0.0
    %5292 = vmatpush1.msra.mxu0 %v4443
    %5293 = vmatprep.subr.mxu0 0.0
    %5294 = vmatpush1.msra.mxu0 %v4448
    %5295 = vmatprep.subr.mxu0 0.0
    %5296 = vmatpush1.msra.mxu0 %v4453
    %5297 = vmatprep.subr.mxu0 0.0
    %5298 = vmatpush1.msra.mxu0 %v4458
    %5299 = vmatprep.subr.mxu0 0.0
    %5300 = vmatpush1.msra.mxu0 %v4463
    %5301 = vmatprep.subr.mxu0 0.0
    %5302 = vmatpush1.msra.mxu0 %v4468
    %5303 = vmatprep.subr.mxu0 0.0
    %5304 = vmatpush1.msra.mxu0 %v4473
    %5305 = vmatprep.subr.mxu0 0.0
    %5306 = vmatpush1.msra.mxu0 %v4478
    %5307 = vmatprep.mubr.f32.mxu0 %v2025
    %5308 = vmatmul.mubr.f32.gmra.mrb[0].mxu0 %v2017
    %v5309 = vpop.f32.mrb[0].mxu0
    %v5310 = vadd.f32 0.0, %v5309
    %v5311 = vpop.f32.mrb[0].mxu0
    %5312 = vdwg.mxu0
    %5313 = vmatprep.subr.mxu0 0.0
    %5314 = vmatpush1.msra.mxu0 %v4483
    %5315 = vmatprep.subr.mxu0 0.0
    %5316 = vmatpush1.msra.mxu0 %v4488
    %5317 = vmatprep.subr.mxu0 0.0
    %5318 = vmatpush1.msra.mxu0 %v4493
    %5319 = vmatprep.subr.mxu0 0.0
    %5320 = vmatpush1.msra.mxu0 %v4498
    %5321 = vmatprep.subr.mxu0 0.0
    %5322 = vmatpush1.msra.mxu0 %v4503
    %5323 = vmatprep.subr.mxu0 0.0
    %5324 = vmatpush1.msra.mxu0 %v4508
    %5325 = vmatprep.subr.mxu0 0.0
    %5326 = vmatpush1.msra.mxu0 %v4513
    %5327 = vmatprep.subr.mxu0 0.0
    %5328 = vmatpush1.msra.mxu0 %v4518
    %5329 = vmatprep.subr.mxu0 0.0
    %5330 = vmatpush1.msra.mxu0 %v4523
    %5331 = vmatprep.subr.mxu0 0.0
    %5332 = vmatpush1.msra.mxu0 %v4528
    %5333 = vmatprep.subr.mxu0 0.0
    %5334 = vmatpush1.msra.mxu0 %v4533
    %5335 = vmatprep.subr.mxu0 0.0
    %5336 = vmatpush1.msra.mxu0 %v4538
    %5337 = vmatprep.subr.mxu0 0.0
    %5338 = vmatpush1.msra.mxu0 %v4543
    %5339 = vmatprep.subr.mxu0 0.0
    %5340 = vmatpush1.msra.mxu0 %v4548
    %5341 = vmatprep.subr.mxu0 0.0
    %5342 = vmatpush1.msra.mxu0 %v4553
    %5343 = vmatprep.subr.mxu0 0.0
    %5344 = vmatpush1.msra.mxu0 %v4558
    %5345 = vmatprep.subr.mxu0 0.0
    %5346 = vmatpush1.msra.mxu0 %v4563
    %5347 = vmatprep.subr.mxu0 0.0
    %5348 = vmatpush1.msra.mxu0 %v4568
    %5349 = vmatprep.subr.mxu0 0.0
    %5350 = vmatpush1.msra.mxu0 %v4573
    %5351 = vmatprep.subr.mxu0 0.0
    %5352 = vmatpush1.msra.mxu0 %v4578
    %5353 = vmatprep.subr.mxu0 0.0
    %5354 = vmatpush1.msra.mxu0 %v4583
    %5355 = vmatprep.subr.mxu0 0.0
    %5356 = vmatpush1.msra.mxu0 %v4588
    %5357 = vmatprep.subr.mxu0 0.0
    %5358 = vmatpush1.msra.mxu0 %v4593
    %5359 = vmatprep.subr.mxu0 0.0
    %5360 = vmatpush1.msra.mxu0 %v4598
    %5361 = vmatprep.subr.mxu0 0.0
    %5362 = vmatpush1.msra.mxu0 %v4603
    %5363 = vmatprep.subr.mxu0 0.0
    %5364 = vmatpush1.msra.mxu0 %v4608
    %5365 = vmatprep.subr.mxu0 0.0
    %5366 = vmatpush1.msra.mxu0 %v4613
    %5367 = vmatprep.subr.mxu0 0.0
    %5368 = vmatpush1.msra.mxu0 %v4618
    %5369 = vmatprep.subr.mxu0 0.0
    %5370 = vmatpush1.msra.mxu0 %v4623
    %5371 = vmatprep.subr.mxu0 0.0
    %5372 = vmatpush1.msra.mxu0 %v4628
    %5373 = vmatprep.subr.mxu0 0.0
    %5374 = vmatpush1.msra.mxu0 %v4633
    %5375 = vmatprep.subr.mxu0 0.0
    %5376 = vmatpush1.msra.mxu0 %v4638
    %5377 = vmatprep.mubr.f32.mxu0 %v2026
    %5378 = vmatmul.mubr.f32.gmra.mrb[0].mxu0 %v2024
    %v5379 = vpop.f32.mrb[0].mxu0
    %v5380 = vadd.f32 %v5310, %v5379
    %v5381 = vpop.f32.mrb[0].mxu0
    %5382 = vdwg.mxu0
    %5383 = vmatprep.subr.mxu0 %v4640
    %5384 = vmatpush1.msra.mxu0 %v4639
    %5385 = vmatprep.subr.mxu0 %v4645
    %5386 = vmatpush1.msra.mxu0 %v4644
    %5387 = vmatprep.subr.mxu0 %v4650
    %5388 = vmatpush1.msra.mxu0 %v4649
    %5389 = vmatprep.subr.mxu0 %v4655
    %5390 = vmatpush1.msra.mxu0 %v4654
    %5391 = vmatprep.subr.mxu0 %v4660
    %5392 = vmatpush1.msra.mxu0 %v4659
    %5393 = vmatprep.subr.mxu0 %v4665
    %5394 = vmatpush1.msra.mxu0 %v4664
    %5395 = vmatprep.subr.mxu0 %v4670
    %5396 = vmatpush1.msra.mxu0 %v4669
    %5397 = vmatprep.subr.mxu0 %v4675
    %5398 = vmatpush1.msra.mxu0 %v4674
    %5399 = vmatprep.subr.mxu0 %v4680
    %5400 = vmatpush1.msra.mxu0 %v4679
    %5401 = vmatprep.subr.mxu0 %v4685
    %5402 = vmatpush1.msra.mxu0 %v4684
    %5403 = vmatprep.subr.mxu0 %v4690
    %5404 = vmatpush1.msra.mxu0 %v4689
    %5405 = vmatprep.subr.mxu0 %v4695
    %5406 = vmatpush1.msra.mxu0 %v4694
    %5407 = vmatprep.subr.mxu0 %v4700
    %5408 = vmatpush1.msra.mxu0 %v4699
    %5409 = vmatprep.subr.mxu0 %v4705
    %5410 = vmatpush1.msra.mxu0 %v4704
    %5411 = vmatprep.subr.mxu0 %v4710
    %5412 = vmatpush1.msra.mxu0 %v4709
    %5413 = vmatprep.subr.mxu0 %v4715
    %5414 = vmatpush1.msra.mxu0 %v4714
    %5415 = vmatprep.subr.mxu0 %v4720
    %5416 = vmatpush1.msra.mxu0 %v4719
    %5417 = vmatprep.subr.mxu0 %v4725
    %5418 = vmatpush1.msra.mxu0 %v4724
    %5419 = vmatprep.subr.mxu0 %v4730
    %5420 = vmatpush1.msra.mxu0 %v4729
    %5421 = vmatprep.subr.mxu0 %v4735
    %5422 = vmatpush1.msra.mxu0 %v4734
    %5423 = vmatprep.subr.mxu0 %v4740
    %5424 = vmatpush1.msra.mxu0 %v4739
    %5425 = vmatprep.subr.mxu0 %v4745
    %5426 = vmatpush1.msra.mxu0 %v4744
    %5427 = vmatprep.subr.mxu0 %v4750
    %5428 = vmatpush1.msra.mxu0 %v4749
    %5429 = vmatprep.subr.mxu0 %v4755
    %5430 = vmatpush1.msra.mxu0 %v4754
    %5431 = vmatprep.subr.mxu0 %v4760
    %5432 = vmatpush1.msra.mxu0 %v4759
    %5433 = vmatprep.subr.mxu0 %v4765
    %5434 = vmatpush1.msra.mxu0 %v4764
    %5435 = vmatprep.subr.mxu0 %v4770
    %5436 = vmatpush1.msra.mxu0 %v4769
    %5437 = vmatprep.subr.mxu0 %v4775
    %5438 = vmatpush1.msra.mxu0 %v4774
    %5439 = vmatprep.subr.mxu0 %v4780
    %5440 = vmatpush1.msra.mxu0 %v4779
    %5441 = vmatprep.subr.mxu0 %v4785
    %5442 = vmatpush1.msra.mxu0 %v4784
    %5443 = vmatprep.subr.mxu0 %v4790
    %5444 = vmatpush1.msra.mxu0 %v4789
    %5445 = vmatprep.subr.mxu0 %v4795
    %5446 = vmatpush1.msra.mxu0 %v4794
    %5447 = vmatprep.mubr.f32.mxu0 %v2025
    %5448 = vmatmul.mubr.f32.gmra.mrb[0].mxu0 %v2017
    %v5449 = vpop.f32.mrb[0].mxu0
    %v5450 = vadd.f32 0.0, %v5449
    %v5451 = vpop.f32.mrb[0].mxu0
    %v5452 = vadd.f32 0.0, %v5451
    %5453 = vdwg.mxu0
    %5454 = vmatprep.subr.mxu0 %v4800
    %5455 = vmatpush1.msra.mxu0 %v4799
    %5456 = vmatprep.subr.mxu0 %v4805
    %5457 = vmatpush1.msra.mxu0 %v4804
    %5458 = vmatprep.subr.mxu0 %v4810
    %5459 = vmatpush1.msra.mxu0 %v4809
    %5460 = vmatprep.subr.mxu0 %v4815
    %5461 = vmatpush1.msra.mxu0 %v4814
    %5462 = vmatprep.subr.mxu0 %v4820
    %5463 = vmatpush1.msra.mxu0 %v4819
    %5464 = vmatprep.subr.mxu0 %v4825
    %5465 = vmatpush1.msra.mxu0 %v4824
    %5466 = vmatprep.subr.mxu0 %v4830
    %5467 = vmatpush1.msra.mxu0 %v4829
    %5468 = vmatprep.subr.mxu0 %v4835
    %5469 = vmatpush1.msra.mxu0 %v4834
    %5470 = vmatprep.subr.mxu0 %v4840
    %5471 = vmatpush1.msra.mxu0 %v4839
    %5472 = vmatprep.subr.mxu0 %v4845
    %5473 = vmatpush1.msra.mxu0 %v4844
    %5474 = vmatprep.subr.mxu0 %v4850
    %5475 = vmatpush1.msra.mxu0 %v4849
    %5476 = vmatprep.subr.mxu0 %v4855
    %5477 = vmatpush1.msra.mxu0 %v4854
    %5478 = vmatprep.subr.mxu0 %v4860
    %5479 = vmatpush1.msra.mxu0 %v4859
    %5480 = vmatprep.subr.mxu0 %v4865
    %5481 = vmatpush1.msra.mxu0 %v4864
    %5482 = vmatprep.subr.mxu0 %v4870
    %5483 = vmatpush1.msra.mxu0 %v4869
    %5484 = vmatprep.subr.mxu0 %v4875
    %5485 = vmatpush1.msra.mxu0 %v4874
    %5486 = vmatprep.subr.mxu0 %v4880
    %5487 = vmatpush1.msra.mxu0 %v4879
    %5488 = vmatprep.subr.mxu0 %v4885
    %5489 = vmatpush1.msra.mxu0 %v4884
    %5490 = vmatprep.subr.mxu0 %v4890
    %5491 = vmatpush1.msra.mxu0 %v4889
    %5492 = vmatprep.subr.mxu0 %v4895
    %5493 = vmatpush1.msra.mxu0 %v4894
    %5494 = vmatprep.subr.mxu0 %v4900
    %5495 = vmatpush1.msra.mxu0 %v4899
    %5496 = vmatprep.subr.mxu0 %v4905
    %5497 = vmatpush1.msra.mxu0 %v4904
    %5498 = vmatprep.subr.mxu0 %v4910
    %5499 = vmatpush1.msra.mxu0 %v4909
    %5500 = vmatprep.subr.mxu0 %v4915
    %5501 = vmatpush1.msra.mxu0 %v4914
    %5502 = vmatprep.subr.mxu0 %v4920
    %5503 = vmatpush1.msra.mxu0 %v4919
    %5504 = vmatprep.subr.mxu0 %v4925
    %5505 = vmatpush1.msra.mxu0 %v4924
    %5506 = vmatprep.subr.mxu0 %v4930
    %5507 = vmatpush1.msra.mxu0 %v4929
    %5508 = vmatprep.subr.mxu0 %v4935
    %5509 = vmatpush1.msra.mxu0 %v4934
    %5510 = vmatprep.subr.mxu0 %v4940
    %5511 = vmatpush1.msra.mxu0 %v4939
    %5512 = vmatprep.subr.mxu0 %v4945
    %5513 = vmatpush1.msra.mxu0 %v4944
    %5514 = vmatprep.subr.mxu0 %v4950
    %5515 = vmatpush1.msra.mxu0 %v4949
    %5516 = vmatprep.subr.mxu0 %v4955
    %5517 = vmatpush1.msra.mxu0 %v4954
    %5518 = vmatprep.mubr.f32.mxu0 %v2026
    %5519 = vmatmul.mubr.f32.gmra.mrb[0].mxu0 %v2024
    %v5520 = vpop.f32.mrb[0].mxu0
    %v5521 = vadd.f32 %v5450, %v5520
    %v5522 = vpop.f32.mrb[0].mxu0
    %v5523 = vadd.f32 %v5452, %v5522
    %5524 = vdwg.mxu0
    %5525 = vmatprep.subr.mxu0 %v4642
    %5526 = vmatpush1.msra.mxu0 %v4641
    %5527 = vmatprep.subr.mxu0 %v4647
    %5528 = vmatpush1.msra.mxu0 %v4646
    %5529 = vmatprep.subr.mxu0 %v4652
    %5530 = vmatpush1.msra.mxu0 %v4651
    %5531 = vmatprep.subr.mxu0 %v4657
    %5532 = vmatpush1.msra.mxu0 %v4656
    %5533 = vmatprep.subr.mxu0 %v4662
    %5534 = vmatpush1.msra.mxu0 %v4661
    %5535 = vmatprep.subr.mxu0 %v4667
    %5536 = vmatpush1.msra.mxu0 %v4666
    %5537 = vmatprep.subr.mxu0 %v4672
    %5538 = vmatpush1.msra.mxu0 %v4671
    %5539 = vmatprep.subr.mxu0 %v4677
    %5540 = vmatpush1.msra.mxu0 %v4676
    %5541 = vmatprep.subr.mxu0 %v4682
    %5542 = vmatpush1.msra.mxu0 %v4681
    %5543 = vmatprep.subr.mxu0 %v4687
    %5544 = vmatpush1.msra.mxu0 %v4686
    %5545 = vmatprep.subr.mxu0 %v4692
    %5546 = vmatpush1.msra.mxu0 %v4691
    %5547 = vmatprep.subr.mxu0 %v4697
    %5548 = vmatpush1.msra.mxu0 %v4696
    %5549 = vmatprep.subr.mxu0 %v4702
    %5550 = vmatpush1.msra.mxu0 %v4701
    %5551 = vmatprep.subr.mxu0 %v4707
    %5552 = vmatpush1.msra.mxu0 %v4706
    %5553 = vmatprep.subr.mxu0 %v4712
    %5554 = vmatpush1.msra.mxu0 %v4711
    %5555 = vmatprep.subr.mxu0 %v4717
    %5556 = vmatpush1.msra.mxu0 %v4716
    %5557 = vmatprep.subr.mxu0 %v4722
    %5558 = vmatpush1.msra.mxu0 %v4721
    %5559 = vmatprep.subr.mxu0 %v4727
    %5560 = vmatpush1.msra.mxu0 %v4726
    %5561 = vmatprep.subr.mxu0 %v4732
    %5562 = vmatpush1.msra.mxu0 %v4731
    %5563 = vmatprep.subr.mxu0 %v4737
    %5564 = vmatpush1.msra.mxu0 %v4736
    %5565 = vmatprep.subr.mxu0 %v4742
    %5566 = vmatpush1.msra.mxu0 %v4741
    %5567 = vmatprep.subr.mxu0 %v4747
    %5568 = vmatpush1.msra.mxu0 %v4746
    %5569 = vmatprep.subr.mxu0 %v4752
    %5570 = vmatpush1.msra.mxu0 %v4751
    %5571 = vmatprep.subr.mxu0 %v4757
    %5572 = vmatpush1.msra.mxu0 %v4756
    %5573 = vmatprep.subr.mxu0 %v4762
    %5574 = vmatpush1.msra.mxu0 %v4761
    %5575 = vmatprep.subr.mxu0 %v4767
    %5576 = vmatpush1.msra.mxu0 %v4766
    %5577 = vmatprep.subr.mxu0 %v4772
    %5578 = vmatpush1.msra.mxu0 %v4771
    %5579 = vmatprep.subr.mxu0 %v4777
    %5580 = vmatpush1.msra.mxu0 %v4776
    %5581 = vmatprep.subr.mxu0 %v4782
    %5582 = vmatpush1.msra.mxu0 %v4781
    %5583 = vmatprep.subr.mxu0 %v4787
    %5584 = vmatpush1.msra.mxu0 %v4786
    %5585 = vmatprep.subr.mxu0 %v4792
    %5586 = vmatpush1.msra.mxu0 %v4791
    %5587 = vmatprep.subr.mxu0 %v4797
    %5588 = vmatpush1.msra.mxu0 %v4796
    %5589 = vmatprep.mubr.f32.mxu0 %v2025
    %5590 = vmatmul.mubr.f32.gmra.mrb[0].mxu0 %v2017
    %v5591 = vpop.f32.mrb[0].mxu0
    %v5592 = vadd.f32 0.0, %v5591
    %v5593 = vpop.f32.mrb[0].mxu0
    %v5594 = vadd.f32 0.0, %v5593
    %5595 = vdwg.mxu0
    %5596 = vmatprep.subr.mxu0 %v4802
    %5597 = vmatpush1.msra.mxu0 %v4801
    %5598 = vmatprep.subr.mxu0 %v4807
    %5599 = vmatpush1.msra.mxu0 %v4806
    %5600 = vmatprep.subr.mxu0 %v4812
    %5601 = vmatpush1.msra.mxu0 %v4811
    %5602 = vmatprep.subr.mxu0 %v4817
    %5603 = vmatpush1.msra.mxu0 %v4816
    %5604 = vmatprep.subr.mxu0 %v4822
    %5605 = vmatpush1.msra.mxu0 %v4821
    %5606 = vmatprep.subr.mxu0 %v4827
    %5607 = vmatpush1.msra.mxu0 %v4826
    %5608 = vmatprep.subr.mxu0 %v4832
    %5609 = vmatpush1.msra.mxu0 %v4831
    %5610 = vmatprep.subr.mxu0 %v4837
    %5611 = vmatpush1.msra.mxu0 %v4836
    %5612 = vmatprep.subr.mxu0 %v4842
    %5613 = vmatpush1.msra.mxu0 %v4841
    %5614 = vmatprep.subr.mxu0 %v4847
    %5615 = vmatpush1.msra.mxu0 %v4846
    %5616 = vmatprep.subr.mxu0 %v4852
    %5617 = vmatpush1.msra.mxu0 %v4851
    %5618 = vmatprep.subr.mxu0 %v4857
    %5619 = vmatpush1.msra.mxu0 %v4856
    %5620 = vmatprep.subr.mxu0 %v4862
    %5621 = vmatpush1.msra.mxu0 %v4861
    %5622 = vmatprep.subr.mxu0 %v4867
    %5623 = vmatpush1.msra.mxu0 %v4866
    %5624 = vmatprep.subr.mxu0 %v4872
    %5625 = vmatpush1.msra.mxu0 %v4871
    %5626 = vmatprep.subr.mxu0 %v4877
    %5627 = vmatpush1.msra.mxu0 %v4876
    %5628 = vmatprep.subr.mxu0 %v4882
    %5629 = vmatpush1.msra.mxu0 %v4881
    %5630 = vmatprep.subr.mxu0 %v4887
    %5631 = vmatpush1.msra.mxu0 %v4886
    %5632 = vmatprep.subr.mxu0 %v4892
    %5633 = vmatpush1.msra.mxu0 %v4891
    %5634 = vmatprep.subr.mxu0 %v4897
    %5635 = vmatpush1.msra.mxu0 %v4896
    %5636 = vmatprep.subr.mxu0 %v4902
    %5637 = vmatpush1.msra.mxu0 %v4901
    %5638 = vmatprep.subr.mxu0 %v4907
    %5639 = vmatpush1.msra.mxu0 %v4906
    %5640 = vmatprep.subr.mxu0 %v4912
    %5641 = vmatpush1.msra.mxu0 %v4911
    %5642 = vmatprep.subr.mxu0 %v4917
    %5643 = vmatpush1.msra.mxu0 %v4916
    %5644 = vmatprep.subr.mxu0 %v4922
    %5645 = vmatpush1.msra.mxu0 %v4921
    %5646 = vmatprep.subr.mxu0 %v4927
    %5647 = vmatpush1.msra.mxu0 %v4926
    %5648 = vmatprep.subr.mxu0 %v4932
    %5649 = vmatpush1.msra.mxu0 %v4931
    %5650 = vmatprep.subr.mxu0 %v4937
    %5651 = vmatpush1.msra.mxu0 %v4936
    %5652 = vmatprep.subr.mxu0 %v4942
    %5653 = vmatpush1.msra.mxu0 %v4941
    %5654 = vmatprep.subr.mxu0 %v4947
    %5655 = vmatpush1.msra.mxu0 %v4946
    %5656 = vmatprep.subr.mxu0 %v4952
    %5657 = vmatpush1.msra.mxu0 %v4951
    %5658 = vmatprep.subr.mxu0 %v4957
    %5659 = vmatpush1.msra.mxu0 %v4956
    %5660 = vmatprep.mubr.f32.mxu0 %v2026
    %5661 = vmatmul.mubr.f32.gmra.mrb[0].mxu0 %v2024
    %v5662 = vpop.f32.mrb[0].mxu0
    %v5663 = vadd.f32 %v5592, %v5662
    %v5664 = vpop.f32.mrb[0].mxu0
    %v5665 = vadd.f32 %v5594, %v5664
    %5666 = vdwg.mxu0
    %5667 = vmatprep.subr.mxu0 0.0
    %5668 = vmatpush1.msra.mxu0 %v4643
    %5669 = vmatprep.subr.mxu0 0.0
    %5670 = vmatpush1.msra.mxu0 %v4648
    %5671 = vmatprep.subr.mxu0 0.0
    %5672 = vmatpush1.msra.mxu0 %v4653
    %5673 = vmatprep.subr.mxu0 0.0
    %5674 = vmatpush1.msra.mxu0 %v4658
    %5675 = vmatprep.subr.mxu0 0.0
    %5676 = vmatpush1.msra.mxu0 %v4663
    %5677 = vmatprep.subr.mxu0 0.0
    %5678 = vmatpush1.msra.mxu0 %v4668
    %5679 = vmatprep.subr.mxu0 0.0
    %5680 = vmatpush1.msra.mxu0 %v4673
    %5681 = vmatprep.subr.mxu0 0.0
    %5682 = vmatpush1.msra.mxu0 %v4678
    %5683 = vmatprep.subr.mxu0 0.0
    %5684 = vmatpush1.msra.mxu0 %v4683
    %5685 = vmatprep.subr.mxu0 0.0
    %5686 = vmatpush1.msra.mxu0 %v4688
    %5687 = vmatprep.subr.mxu0 0.0
    %5688 = vmatpush1.msra.mxu0 %v4693
    %5689 = vmatprep.subr.mxu0 0.0
    %5690 = vmatpush1.msra.mxu0 %v4698
    %5691 = vmatprep.subr.mxu0 0.0
    %5692 = vmatpush1.msra.mxu0 %v4703
    %5693 = vmatprep.subr.mxu0 0.0
    %5694 = vmatpush1.msra.mxu0 %v4708
    %5695 = vmatprep.subr.mxu0 0.0
    %5696 = vmatpush1.msra.mxu0 %v4713
    %5697 = vmatprep.subr.mxu0 0.0
    %5698 = vmatpush1.msra.mxu0 %v4718
    %5699 = vmatprep.subr.mxu0 0.0
    %5700 = vmatpush1.msra.mxu0 %v4723
    %5701 = vmatprep.subr.mxu0 0.0
    %5702 = vmatpush1.msra.mxu0 %v4728
    %5703 = vmatprep.subr.mxu0 0.0
    %5704 = vmatpush1.msra.mxu0 %v4733
    %5705 = vmatprep.subr.mxu0 0.0
    %5706 = vmatpush1.msra.mxu0 %v4738
    %5707 = vmatprep.subr.mxu0 0.0
    %5708 = vmatpush1.msra.mxu0 %v4743
    %5709 = vmatprep.subr.mxu0 0.0
    %5710 = vmatpush1.msra.mxu0 %v4748
    %5711 = vmatprep.subr.mxu0 0.0
    %5712 = vmatpush1.msra.mxu0 %v4753
    %5713 = vmatprep.subr.mxu0 0.0
    %5714 = vmatpush1.msra.mxu0 %v4758
    %5715 = vmatprep.subr.mxu0 0.0
    %5716 = vmatpush1.msra.mxu0 %v4763
    %5717 = vmatprep.subr.mxu0 0.0
    %5718 = vmatpush1.msra.mxu0 %v4768
    %5719 = vmatprep.subr.mxu0 0.0
    %5720 = vmatpush1.msra.mxu0 %v4773
    %5721 = vmatprep.subr.mxu0 0.0
    %5722 = vmatpush1.msra.mxu0 %v4778
    %5723 = vmatprep.subr.mxu0 0.0
    %5724 = vmatpush1.msra.mxu0 %v4783
    %5725 = vmatprep.subr.mxu0 0.0
    %5726 = vmatpush1.msra.mxu0 %v4788
    %5727 = vmatprep.subr.mxu0 0.0
    %5728 = vmatpush1.msra.mxu0 %v4793
    %5729 = vmatprep.subr.mxu0 0.0
    %5730 = vmatpush1.msra.mxu0 %v4798
    %5731 = vmatprep.mubr.f32.mxu0 %v2025
    %5732 = vmatmul.mubr.f32.gmra.mrb[0].mxu0 %v2017
    %v5733 = vpop.f32.mrb[0].mxu0
    %v5734 = vadd.f32 0.0, %v5733
    %v5735 = vpop.f32.mrb[0].mxu0
    %5736 = vdwg.mxu0
    %5737 = vmatprep.subr.mxu0 0.0
    %5738 = vmatpush1.msra.mxu0 %v4803
    %5739 = vmatprep.subr.mxu0 0.0
    %5740 = vmatpush1.msra.mxu0 %v4808
    %5741 = vmatprep.subr.mxu0 0.0
    %5742 = vmatpush1.msra.mxu0 %v4813
    %5743 = vmatprep.subr.mxu0 0.0
    %5744 = vmatpush1.msra.mxu0 %v4818
    %5745 = vmatprep.subr.mxu0 0.0
    %5746 = vmatpush1.msra.mxu0 %v4823
    %5747 = vmatprep.subr.mxu0 0.0
    %5748 = vmatpush1.msra.mxu0 %v4828
    %5749 = vmatprep.subr.mxu0 0.0
    %5750 = vmatpush1.msra.mxu0 %v4833
    %5751 = vmatprep.subr.mxu0 0.0
    %5752 = vmatpush1.msra.mxu0 %v4838
    %5753 = vmatprep.subr.mxu0 0.0
    %5754 = vmatpush1.msra.mxu0 %v4843
    %5755 = vmatprep.subr.mxu0 0.0
    %5756 = vmatpush1.msra.mxu0 %v4848
    %5757 = vmatprep.subr.mxu0 0.0
    %5758 = vmatpush1.msra.mxu0 %v4853
    %5759 = vmatprep.subr.mxu0 0.0
    %5760 = vmatpush1.msra.mxu0 %v4858
    %5761 = vmatprep.subr.mxu0 0.0
    %5762 = vmatpush1.msra.mxu0 %v4863
    %5763 = vmatprep.subr.mxu0 0.0
    %5764 = vmatpush1.msra.mxu0 %v4868
    %5765 = vmatprep.subr.mxu0 0.0
    %5766 = vmatpush1.msra.mxu0 %v4873
    %5767 = vmatprep.subr.mxu0 0.0
    %5768 = vmatpush1.msra.mxu0 %v4878
    %5769 = vmatprep.subr.mxu0 0.0
    %5770 = vmatpush1.msra.mxu0 %v4883
    %5771 = vmatprep.subr.mxu0 0.0
    %5772 = vmatpush1.msra.mxu0 %v4888
    %5773 = vmatprep.subr.mxu0 0.0
    %5774 = vmatpush1.msra.mxu0 %v4893
    %5775 = vmatprep.subr.mxu0 0.0
    %5776 = vmatpush1.msra.mxu0 %v4898
    %5777 = vmatprep.subr.mxu0 0.0
    %5778 = vmatpush1.msra.mxu0 %v4903
    %5779 = vmatprep.subr.mxu0 0.0
    %5780 = vmatpush1.msra.mxu0 %v4908
    %5781 = vmatprep.subr.mxu0 0.0
    %5782 = vmatpush1.msra.mxu0 %v4913
    %5783 = vmatprep.subr.mxu0 0.0
    %5784 = vmatpush1.msra.mxu0 %v4918
    %5785 = vmatprep.subr.mxu0 0.0
    %5786 = vmatpush1.msra.mxu0 %v4923
    %5787 = vmatprep.subr.mxu0 0.0
    %5788 = vmatpush1.msra.mxu0 %v4928
    %5789 = vmatprep.subr.mxu0 0.0
    %5790 = vmatpush1.msra.mxu0 %v4933
    %5791 = vmatprep.subr.mxu0 0.0
    %5792 = vmatpush1.msra.mxu0 %v4938
    %5793 = vmatprep.subr.mxu0 0.0
    %5794 = vmatpush1.msra.mxu0 %v4943
    %5795 = vmatprep.subr.mxu0 0.0
    %5796 = vmatpush1.msra.mxu0 %v4948
    %5797 = vmatprep.subr.mxu0 0.0
    %5798 = vmatpush1.msra.mxu0 %v4953
    %5799 = vmatprep.subr.mxu0 0.0
    %5800 = vmatpush1.msra.mxu0 %v4958
    %5801 = vmatprep.mubr.f32.mxu0 %v2026
    %5802 = vmatmul.mubr.f32.gmra.mrb[0].mxu0 %v2024
    %v5803 = vpop.f32.mrb[0].mxu0
    %v5804 = vadd.f32 %v5734, %v5803
    %v5805 = vpop.f32.mrb[0].mxu0
    %5806 = vdwg.mxu0
    %v5807 = vmul.f32 %v5097, %v5097
    %v5808 = vmul.f32 %v5099, %v5099
    %v5809 = vmul.f32 %v5239, %v5239
    %v5810 = vmul.f32 %v5241, %v5241
    %v5811 = vmul.f32 %v5380, %v5380
    %v5812 = vsub.f32 %v5521, %v5807
    %v5813 = vsub.f32 %v5523, %v5808
    %v5814 = vsub.f32 %v5663, %v5809
    %v5815 = vsub.f32 %v5665, %v5810
    %v5816 = vsub.f32 %v5804, %v5811
    %v5817 = vmax.f32 %v5812, 0.0
    %v5818 = vmax.f32 %v5813, 0.0
    %v5819 = vmax.f32 %v5814, 0.0
    %v5820 = vmax.f32 %v5815, 0.0
    %v5821 = vmax.f32 %v5816, 0.0
    %v5822 = vmul.f32 %v5817, 1.0039216
    %v5823 = vmul.f32 %v5818, 1.0039216
    %v5824 = vmul.f32 %v5819, 1.0039216
    %v5825 = vmul.f32 %v5820, 1.0039216
    %v5826 = vmul.f32 %v5821, 1.0039216
    %v5827 = vrsqrt.pop %v5822
    %v5828 = vmul.f32 %v5822, %v5827
    %vm5829 = vcmp.eq.f32.partialorder %v5822, inf
    %v5830 = vsel %vm5829, %v5822, %v5828
    %vm5831 = vcmp.eq.f32.partialorder %v5822, 0.0
    %v5832 = vand.u32 %v5822, 2147483648
    %v5833 = vsel %vm5831, %v5832, %v5830
    %v5834 = vrsqrt.pop %v5823
    %v5835 = vmul.f32 %v5823, %v5834
    %vm5836 = vcmp.eq.f32.partialorder %v5823, inf
    %v5837 = vsel %vm5836, %v5823, %v5835
    %vm5838 = vcmp.eq.f32.partialorder %v5823, 0.0
    %v5839 = vand.u32 %v5823, 2147483648
    %v5840 = vsel %vm5838, %v5839, %v5837
    %v5841 = vrsqrt.pop %v5824
    %v5842 = vmul.f32 %v5824, %v5841
    %vm5843 = vcmp.eq.f32.partialorder %v5824, inf
    %v5844 = vsel %vm5843, %v5824, %v5842
    %vm5845 = vcmp.eq.f32.partialorder %v5824, 0.0
    %v5846 = vand.u32 %v5824, 2147483648
    %v5847 = vsel %vm5845, %v5846, %v5844
    %v5848 = vrsqrt.pop %v5825
    %v5849 = vmul.f32 %v5825, %v5848
    %vm5850 = vcmp.eq.f32.partialorder %v5825, inf
    %v5851 = vsel %vm5850, %v5825, %v5849
    %vm5852 = vcmp.eq.f32.partialorder %v5825, 0.0
    %v5853 = vand.u32 %v5825, 2147483648
    %v5854 = vsel %vm5852, %v5853, %v5851
    %v5855 = vrsqrt.pop %v5826
    %v5856 = vmul.f32 %v5826, %v5855
    %vm5857 = vcmp.eq.f32.partialorder %v5826, inf
    %v5858 = vsel %vm5857, %v5826, %v5856
    %vm5859 = vcmp.eq.f32.partialorder %v5826, 0.0
    %v5860 = vand.u32 %v5826, 2147483648
    %v5861 = vsel %vm5859, %v5860, %v5858
    %v5862 = vpack.c.bf16 %v5097, %v5097
    %v5863 = vpack.c.bf16 %v5099, %v5099
    %v5864 = vpack.c.bf16 %v5239, %v5239
    %v5865 = vpack.c.bf16 %v5241, %v5241
    %v5866 = vpack.c.bf16 %v5380, %v5380
    %v5867 = vld [vmem:[%s4] sm:$0xff]
    %v5868 = vld [vmem:[%s4 + $0x8] sm:$0xff]
    %v5869 = vld [vmem:[%s4 + $0x10] sm:$0xf]
    %v5870 = vld [vmem:[%s4 + $0x14] sm:$0xff]
    %v5871 = vld [vmem:[%s4 + $0x1c] sm:$0xff]
    %v5872 = vld [vmem:[%s4 + $0x24] sm:$0xf]
    %v5873 = vld [vmem:[%s4 + $0x28] sm:$0xff]
    %v5874 = vld [vmem:[%s4 + $0x30] sm:$0xff]
    %v5875 = vld [vmem:[%s4 + $0x38] sm:$0xf]
    %v5876 = vld [vmem:[%s4 + $0x3c] sm:$0xff]
    %v5877 = vld [vmem:[%s4 + $0x44] sm:$0xff]
    %v5878 = vld [vmem:[%s4 + $0x4c] sm:$0xf]
    %v5879 = vld [vmem:[%s4 + $0x50] sm:$0xff]
    %v5880 = vld [vmem:[%s4 + $0x58] sm:$0xff]
    %v5881 = vld [vmem:[%s4 + $0x60] sm:$0xf]
    %v5882 = vld [vmem:[%s4 + $0x64] sm:$0xff]
    %v5883 = vld [vmem:[%s4 + $0x6c] sm:$0xff]
    %v5884 = vld [vmem:[%s4 + $0x74] sm:$0xf]
    %v5885 = vld [vmem:[%s4 + $0x78] sm:$0xff]
    %v5886 = vld [vmem:[%s4 + $0x80] sm:$0xff]
    %v5887 = vld [vmem:[%s4 + $0x88] sm:$0xf]
    %v5888 = vld [vmem:[%s4 + $0x8c] sm:$0xff]
    %v5889 = vld [vmem:[%s4 + $0x94] sm:$0xff]
    %v5890 = vld [vmem:[%s4 + $0x9c] sm:$0xf]
    %v5891 = vld [vmem:[%s4 + $0xa0] sm:$0xff]
    %v5892 = vld [vmem:[%s4 + $0xa8] sm:$0xff]
    %v5893 = vld [vmem:[%s4 + $0xb0] sm:$0xf]
    %v5894 = vld [vmem:[%s4 + $0xb4] sm:$0xff]
    %v5895 = vld [vmem:[%s4 + $0xbc] sm:$0xff]
    %v5896 = vld [vmem:[%s4 + $0xc4] sm:$0xf]
    %v5897 = vld [vmem:[%s4 + $0xc8] sm:$0xff]
    %v5898 = vld [vmem:[%s4 + $0xd0] sm:$0xff]
    %v5899 = vld [vmem:[%s4 + $0xd8] sm:$0xf]
    %v5900 = vld [vmem:[%s4 + $0xdc] sm:$0xff]
    %v5901 = vld [vmem:[%s4 + $0xe4] sm:$0xff]
    %v5902 = vld [vmem:[%s4 + $0xec] sm:$0xf]
    %v5903 = vld [vmem:[%s4 + $0xf0] sm:$0xff]
    %v5904 = vld [vmem:[%s4 + $0xf8] sm:$0xff]
    %v5905 = vld [vmem:[%s4 + $0x100] sm:$0xf]
    %v5906 = vld [vmem:[%s4 + $0x104] sm:$0xff]
    %v5907 = vld [vmem:[%s4 + $0x10c] sm:$0xff]
    %v5908 = vld [vmem:[%s4 + $0x114] sm:$0xf]
    %v5909 = vld [vmem:[%s4 + $0x118] sm:$0xff]
    %v5910 = vld [vmem:[%s4 + $0x120] sm:$0xff]
    %v5911 = vld [vmem:[%s4 + $0x128] sm:$0xf]
    %v5912 = vld [vmem:[%s4 + $0x12c] sm:$0xff]
    %v5913 = vld [vmem:[%s4 + $0x134] sm:$0xff]
    %v5914 = vld [vmem:[%s4 + $0x13c] sm:$0xf]
    %v5915 = vld [vmem:[%s4 + $0x140] sm:$0xff]
    %v5916 = vld [vmem:[%s4 + $0x148] sm:$0xff]
    %v5917 = vld [vmem:[%s4 + $0x150] sm:$0xf]
    %v5918 = vld [vmem:[%s4 + $0x154] sm:$0xff]
    %v5919 = vld [vmem:[%s4 + $0x15c] sm:$0xff]
    %v5920 = vld [vmem:[%s4 + $0x164] sm:$0xf]
    %v5921 = vld [vmem:[%s4 + $0x168] sm:$0xff]
    %v5922 = vld [vmem:[%s4 + $0x170] sm:$0xff]
    %v5923 = vld [vmem:[%s4 + $0x178] sm:$0xf]
    %v5924 = vld [vmem:[%s4 + $0x17c] sm:$0xff]
    %v5925 = vld [vmem:[%s4 + $0x184] sm:$0xff]
    %v5926 = vld [vmem:[%s4 + $0x18c] sm:$0xf]
    %v5927 = vld [vmem:[%s4 + $0x190] sm:$0xff]
    %v5928 = vld [vmem:[%s4 + $0x198] sm:$0xff]
    %v5929 = vld [vmem:[%s4 + $0x1a0] sm:$0xf]
    %v5930 = vld [vmem:[%s4 + $0x1a4] sm:$0xff]
    %v5931 = vld [vmem:[%s4 + $0x1ac] sm:$0xff]
    %v5932 = vld [vmem:[%s4 + $0x1b4] sm:$0xf]
    %v5933 = vld [vmem:[%s4 + $0x1b8] sm:$0xff]
    %v5934 = vld [vmem:[%s4 + $0x1c0] sm:$0xff]
    %v5935 = vld [vmem:[%s4 + $0x1c8] sm:$0xf]
    %v5936 = vld [vmem:[%s4 + $0x1cc] sm:$0xff]
    %v5937 = vld [vmem:[%s4 + $0x1d4] sm:$0xff]
    %v5938 = vld [vmem:[%s4 + $0x1dc] sm:$0xf]
    %v5939 = vld [vmem:[%s4 + $0x1e0] sm:$0xff]
    %v5940 = vld [vmem:[%s4 + $0x1e8] sm:$0xff]
    %v5941 = vld [vmem:[%s4 + $0x1f0] sm:$0xf]
    %v5942 = vld [vmem:[%s4 + $0x1f4] sm:$0xff]
    %v5943 = vld [vmem:[%s4 + $0x1fc] sm:$0xff]
    %v5944 = vld [vmem:[%s4 + $0x204] sm:$0xf]
    %v5945 = vld [vmem:[%s4 + $0x208] sm:$0xff]
    %v5946 = vld [vmem:[%s4 + $0x210] sm:$0xff]
    %v5947 = vld [vmem:[%s4 + $0x218] sm:$0xf]
    %v5948 = vld [vmem:[%s4 + $0x21c] sm:$0xff]
    %v5949 = vld [vmem:[%s4 + $0x224] sm:$0xff]
    %v5950 = vld [vmem:[%s4 + $0x22c] sm:$0xf]
    %v5951 = vld [vmem:[%s4 + $0x230] sm:$0xff]
    %v5952 = vld [vmem:[%s4 + $0x238] sm:$0xff]
    %v5953 = vld [vmem:[%s4 + $0x240] sm:$0xf]
    %v5954 = vld [vmem:[%s4 + $0x244] sm:$0xff]
    %v5955 = vld [vmem:[%s4 + $0x24c] sm:$0xff]
    %v5956 = vld [vmem:[%s4 + $0x254] sm:$0xf]
    %v5957 = vld [vmem:[%s4 + $0x258] sm:$0xff]
    %v5958 = vld [vmem:[%s4 + $0x260] sm:$0xff]
    %v5959 = vld [vmem:[%s4 + $0x268] sm:$0xf]
    %v5960 = vld [vmem:[%s4 + $0x26c] sm:$0xff]
    %v5961 = vld [vmem:[%s4 + $0x274] sm:$0xff]
    %v5962 = vld [vmem:[%s4 + $0x27c] sm:$0xf]
    %v5963 = vld [vmem:[%s4 + $0x280] sm:$0xff]
    %v5964 = vld [vmem:[%s4 + $0x288] sm:$0xff]
    %v5965 = vld [vmem:[%s4 + $0x290] sm:$0xf]
    %v5966 = vld [vmem:[%s4 + $0x294] sm:$0xff]
    %v5967 = vld [vmem:[%s4 + $0x29c] sm:$0xff]
    %v5968 = vld [vmem:[%s4 + $0x2a4] sm:$0xf]
    %v5969 = vld [vmem:[%s4 + $0x2a8] sm:$0xff]
    %v5970 = vld [vmem:[%s4 + $0x2b0] sm:$0xff]
    %v5971 = vld [vmem:[%s4 + $0x2b8] sm:$0xf]
    %v5972 = vld [vmem:[%s4 + $0x2bc] sm:$0xff]
    %v5973 = vld [vmem:[%s4 + $0x2c4] sm:$0xff]
    %v5974 = vld [vmem:[%s4 + $0x2cc] sm:$0xf]
    %v5975 = vld [vmem:[%s4 + $0x2d0] sm:$0xff]
    %v5976 = vld [vmem:[%s4 + $0x2d8] sm:$0xff]
    %v5977 = vld [vmem:[%s4 + $0x2e0] sm:$0xf]
    %v5978 = vld [vmem:[%s4 + $0x2e4] sm:$0xff]
    %v5979 = vld [vmem:[%s4 + $0x2ec] sm:$0xff]
    %v5980 = vld [vmem:[%s4 + $0x2f4] sm:$0xf]
    %v5981 = vld [vmem:[%s4 + $0x2f8] sm:$0xff]
    %v5982 = vld [vmem:[%s4 + $0x300] sm:$0xff]
    %v5983 = vld [vmem:[%s4 + $0x308] sm:$0xf]
    %v5984 = vld [vmem:[%s4 + $0x30c] sm:$0xff]
    %v5985 = vld [vmem:[%s4 + $0x314] sm:$0xff]
    %v5986 = vld [vmem:[%s4 + $0x31c] sm:$0xf]
    %v5987 = vld [vmem:[%s4 + $0x320] sm:$0xff]
    %v5988 = vld [vmem:[%s4 + $0x328] sm:$0xff]
    %v5989 = vld [vmem:[%s4 + $0x330] sm:$0xf]
    %v5990 = vld [vmem:[%s4 + $0x334] sm:$0xff]
    %v5991 = vld [vmem:[%s4 + $0x33c] sm:$0xff]
    %v5992 = vld [vmem:[%s4 + $0x344] sm:$0xf]
    %v5993 = vld [vmem:[%s4 + $0x348] sm:$0xff]
    %v5994 = vld [vmem:[%s4 + $0x350] sm:$0xff]
    %v5995 = vld [vmem:[%s4 + $0x358] sm:$0xf]
    %v5996 = vld [vmem:[%s4 + $0x35c] sm:$0xff]
    %v5997 = vld [vmem:[%s4 + $0x364] sm:$0xff]
    %v5998 = vld [vmem:[%s4 + $0x36c] sm:$0xf]
    %v5999 = vld [vmem:[%s4 + $0x370] sm:$0xff]
    %v6000 = vld [vmem:[%s4 + $0x378] sm:$0xff]
    %v6001 = vld [vmem:[%s4 + $0x380] sm:$0xf]
    %v6002 = vld [vmem:[%s4 + $0x384] sm:$0xff]
    %v6003 = vld [vmem:[%s4 + $0x38c] sm:$0xff]
    %v6004 = vld [vmem:[%s4 + $0x394] sm:$0xf]
    %v6005 = vld [vmem:[%s4 + $0x398] sm:$0xff]
    %v6006 = vld [vmem:[%s4 + $0x3a0] sm:$0xff]
    %v6007 = vld [vmem:[%s4 + $0x3a8] sm:$0xf]
    %v6008 = vld [vmem:[%s4 + $0x3ac] sm:$0xff]
    %v6009 = vld [vmem:[%s4 + $0x3b4] sm:$0xff]
    %v6010 = vld [vmem:[%s4 + $0x3bc] sm:$0xf]
    %v6011 = vld [vmem:[%s4 + $0x3c0] sm:$0xff]
    %v6012 = vld [vmem:[%s4 + $0x3c8] sm:$0xff]
    %v6013 = vld [vmem:[%s4 + $0x3d0] sm:$0xf]
    %v6014 = vld [vmem:[%s4 + $0x3d4] sm:$0xff]
    %v6015 = vld [vmem:[%s4 + $0x3dc] sm:$0xff]
    %v6016 = vld [vmem:[%s4 + $0x3e4] sm:$0xf]
    %v6017 = vld [vmem:[%s4 + $0x3e8] sm:$0xff]
    %v6018 = vld [vmem:[%s4 + $0x3f0] sm:$0xff]
    %v6019 = vld [vmem:[%s4 + $0x3f8] sm:$0xf]
    %v6020 = vld [vmem:[%s4 + $0x3fc] sm:$0xff]
    %v6021 = vld [vmem:[%s4 + $0x404] sm:$0xff]
    %v6022 = vld [vmem:[%s4 + $0x40c] sm:$0xf]
    %v6023 = vld [vmem:[%s4 + $0x410] sm:$0xff]
    %v6024 = vld [vmem:[%s4 + $0x418] sm:$0xff]
    %v6025 = vld [vmem:[%s4 + $0x420] sm:$0xf]
    %v6026 = vld [vmem:[%s4 + $0x424] sm:$0xff]
    %v6027 = vld [vmem:[%s4 + $0x42c] sm:$0xff]
    %v6028 = vld [vmem:[%s4 + $0x434] sm:$0xf]
    %v6029 = vld [vmem:[%s4 + $0x438] sm:$0xff]
    %v6030 = vld [vmem:[%s4 + $0x440] sm:$0xff]
    %v6031 = vld [vmem:[%s4 + $0x448] sm:$0xf]
    %v6032 = vld [vmem:[%s4 + $0x44c] sm:$0xff]
    %v6033 = vld [vmem:[%s4 + $0x454] sm:$0xff]
    %v6034 = vld [vmem:[%s4 + $0x45c] sm:$0xf]
    %v6035 = vld [vmem:[%s4 + $0x460] sm:$0xff]
    %v6036 = vld [vmem:[%s4 + $0x468] sm:$0xff]
    %v6037 = vld [vmem:[%s4 + $0x470] sm:$0xf]
    %v6038 = vld [vmem:[%s4 + $0x474] sm:$0xff]
    %v6039 = vld [vmem:[%s4 + $0x47c] sm:$0xff]
    %v6040 = vld [vmem:[%s4 + $0x484] sm:$0xf]
    %v6041 = vld [vmem:[%s4 + $0x488] sm:$0xff]
    %v6042 = vld [vmem:[%s4 + $0x490] sm:$0xff]
    %v6043 = vld [vmem:[%s4 + $0x498] sm:$0xf]
    %v6044 = vld [vmem:[%s4 + $0x49c] sm:$0xff]
    %v6045 = vld [vmem:[%s4 + $0x4a4] sm:$0xff]
    %v6046 = vld [vmem:[%s4 + $0x4ac] sm:$0xf]
    %v6047 = vld [vmem:[%s4 + $0x4b0] sm:$0xff]
    %v6048 = vld [vmem:[%s4 + $0x4b8] sm:$0xff]
    %v6049 = vld [vmem:[%s4 + $0x4c0] sm:$0xf]
    %v6050 = vld [vmem:[%s4 + $0x4c4] sm:$0xff]
    %v6051 = vld [vmem:[%s4 + $0x4cc] sm:$0xff]
    %v6052 = vld [vmem:[%s4 + $0x4d4] sm:$0xf]
    %v6053 = vld [vmem:[%s4 + $0x4d8] sm:$0xff]
    %v6054 = vld [vmem:[%s4 + $0x4e0] sm:$0xff]
    %v6055 = vld [vmem:[%s4 + $0x4e8] sm:$0xf]
    %v6056 = vld [vmem:[%s4 + $0x4ec] sm:$0xff]
    %v6057 = vld [vmem:[%s4 + $0x4f4] sm:$0xff]
    %v6058 = vld [vmem:[%s4 + $0x4fc] sm:$0xf]
    %v6059 = vld [vmem:[%s4 + $0x500] sm:$0xff]
    %v6060 = vld [vmem:[%s4 + $0x508] sm:$0xff]
    %v6061 = vld [vmem:[%s4 + $0x510] sm:$0xf]
    %v6062 = vld [vmem:[%s4 + $0x514] sm:$0xff]
    %v6063 = vld [vmem:[%s4 + $0x51c] sm:$0xff]
    %v6064 = vld [vmem:[%s4 + $0x524] sm:$0xf]
    %v6065 = vld [vmem:[%s4 + $0x528] sm:$0xff]
    %v6066 = vld [vmem:[%s4 + $0x530] sm:$0xff]
    %v6067 = vld [vmem:[%s4 + $0x538] sm:$0xf]
    %v6068 = vld [vmem:[%s4 + $0x53c] sm:$0xff]
    %v6069 = vld [vmem:[%s4 + $0x544] sm:$0xff]
    %v6070 = vld [vmem:[%s4 + $0x54c] sm:$0xf]
    %v6071 = vld [vmem:[%s4 + $0x550] sm:$0xff]
    %v6072 = vld [vmem:[%s4 + $0x558] sm:$0xff]
    %v6073 = vld [vmem:[%s4 + $0x560] sm:$0xf]
    %v6074 = vld [vmem:[%s4 + $0x564] sm:$0xff]
    %v6075 = vld [vmem:[%s4 + $0x56c] sm:$0xff]
    %v6076 = vld [vmem:[%s4 + $0x574] sm:$0xf]
    %v6077 = vld [vmem:[%s4 + $0x578] sm:$0xff]
    %v6078 = vld [vmem:[%s4 + $0x580] sm:$0xff]
    %v6079 = vld [vmem:[%s4 + $0x588] sm:$0xf]
    %v6080 = vld [vmem:[%s4 + $0x58c] sm:$0xff]
    %v6081 = vld [vmem:[%s4 + $0x594] sm:$0xff]
    %v6082 = vld [vmem:[%s4 + $0x59c] sm:$0xf]
    %v6083 = vpack.c.bf16 %v5833, %v5833
    %v6084 = vpack.c.bf16 %v5840, %v5840
    %v6085 = vpack.c.bf16 %v5847, %v5847
    %v6086 = vpack.c.bf16 %v5854, %v5854
    %v6087 = vpack.c.bf16 %v5861, %v5861
    %v6088 = vld [vmem:[%s4 + $0x5a0] sm:$0xff]
    %v6089 = vld [vmem:[%s4 + $0x5a8] sm:$0xff]
    %v6090 = vld [vmem:[%s4 + $0x5b0] sm:$0xf]
    %v6091 = vld [vmem:[%s4 + $0x5b4] sm:$0xff]
    %v6092 = vld [vmem:[%s4 + $0x5bc] sm:$0xff]
    %v6093 = vld [vmem:[%s4 + $0x5c4] sm:$0xf]
    %v6094 = vld [vmem:[%s4 + $0x5c8] sm:$0xff]
    %v6095 = vld [vmem:[%s4 + $0x5d0] sm:$0xff]
    %v6096 = vld [vmem:[%s4 + $0x5d8] sm:$0xf]
    %v6097 = vld [vmem:[%s4 + $0x5dc] sm:$0xff]
    %v6098 = vld [vmem:[%s4 + $0x5e4] sm:$0xff]
    %v6099 = vld [vmem:[%s4 + $0x5ec] sm:$0xf]
    %v6100 = vld [vmem:[%s4 + $0x5f0] sm:$0xff]
    %v6101 = vld [vmem:[%s4 + $0x5f8] sm:$0xff]
    %v6102 = vld [vmem:[%s4 + $0x600] sm:$0xf]
    %v6103 = vld [vmem:[%s4 + $0x604] sm:$0xff]
    %v6104 = vld [vmem:[%s4 + $0x60c] sm:$0xff]
    %v6105 = vld [vmem:[%s4 + $0x614] sm:$0xf]
    %v6106 = vld [vmem:[%s4 + $0x618] sm:$0xff]
    %v6107 = vld [vmem:[%s4 + $0x620] sm:$0xff]
    %v6108 = vld [vmem:[%s4 + $0x628] sm:$0xf]
    %v6109 = vld [vmem:[%s4 + $0x62c] sm:$0xff]
    %v6110 = vld [vmem:[%s4 + $0x634] sm:$0xff]
    %v6111 = vld [vmem:[%s4 + $0x63c] sm:$0xf]
    %v6112 = vld [vmem:[%s4 + $0x640] sm:$0xff]
    %v6113 = vld [vmem:[%s4 + $0x648] sm:$0xff]
    %v6114 = vld [vmem:[%s4 + $0x650] sm:$0xf]
    %v6115 = vld [vmem:[%s4 + $0x654] sm:$0xff]
    %v6116 = vld [vmem:[%s4 + $0x65c] sm:$0xff]
    %v6117 = vld [vmem:[%s4 + $0x664] sm:$0xf]
    %v6118 = vld [vmem:[%s4 + $0x668] sm:$0xff]
    %v6119 = vld [vmem:[%s4 + $0x670] sm:$0xff]
    %v6120 = vld [vmem:[%s4 + $0x678] sm:$0xf]
    %v6121 = vld [vmem:[%s4 + $0x67c] sm:$0xff]
    %v6122 = vld [vmem:[%s4 + $0x684] sm:$0xff]
    %v6123 = vld [vmem:[%s4 + $0x68c] sm:$0xf]
    %v6124 = vld [vmem:[%s4 + $0x690] sm:$0xff]
    %v6125 = vld [vmem:[%s4 + $0x698] sm:$0xff]
    %v6126 = vld [vmem:[%s4 + $0x6a0] sm:$0xf]
    %v6127 = vld [vmem:[%s4 + $0x6a4] sm:$0xff]
    %v6128 = vld [vmem:[%s4 + $0x6ac] sm:$0xff]
    %v6129 = vld [vmem:[%s4 + $0x6b4] sm:$0xf]
    %v6130 = vld [vmem:[%s4 + $0x6b8] sm:$0xff]
    %v6131 = vld [vmem:[%s4 + $0x6c0] sm:$0xff]
    %v6132 = vld [vmem:[%s4 + $0x6c8] sm:$0xf]
    %v6133 = vld [vmem:[%s4 + $0x6cc] sm:$0xff]
    %v6134 = vld [vmem:[%s4 + $0x6d4] sm:$0xff]
    %v6135 = vld [vmem:[%s4 + $0x6dc] sm:$0xf]
    %v6136 = vld [vmem:[%s4 + $0x6e0] sm:$0xff]
    %v6137 = vld [vmem:[%s4 + $0x6e8] sm:$0xff]
    %v6138 = vld [vmem:[%s4 + $0x6f0] sm:$0xf]
    %v6139 = vld [vmem:[%s4 + $0x6f4] sm:$0xff]
    %v6140 = vld [vmem:[%s4 + $0x6fc] sm:$0xff]
    %v6141 = vld [vmem:[%s4 + $0x704] sm:$0xf]
    %v6142 = vld [vmem:[%s4 + $0x708] sm:$0xff]
    %v6143 = vld [vmem:[%s4 + $0x710] sm:$0xff]
    %v6144 = vld [vmem:[%s4 + $0x718] sm:$0xf]
    %v6145 = vld [vmem:[%s4 + $0x71c] sm:$0xff]
    %v6146 = vld [vmem:[%s4 + $0x724] sm:$0xff]
    %v6147 = vld [vmem:[%s4 + $0x72c] sm:$0xf]
    %v6148 = vld [vmem:[%s4 + $0x730] sm:$0xff]
    %v6149 = vld [vmem:[%s4 + $0x738] sm:$0xff]
    %v6150 = vld [vmem:[%s4 + $0x740] sm:$0xf]
    %v6151 = vld [vmem:[%s4 + $0x744] sm:$0xff]
    %v6152 = vld [vmem:[%s4 + $0x74c] sm:$0xff]
    %v6153 = vld [vmem:[%s4 + $0x754] sm:$0xf]
    %v6154 = vld [vmem:[%s4 + $0x758] sm:$0xff]
    %v6155 = vld [vmem:[%s4 + $0x760] sm:$0xff]
    %v6156 = vld [vmem:[%s4 + $0x768] sm:$0xf]
    %v6157 = vld [vmem:[%s4 + $0x76c] sm:$0xff]
    %v6158 = vld [vmem:[%s4 + $0x774] sm:$0xff]
    %v6159 = vld [vmem:[%s4 + $0x77c] sm:$0xf]
    %v6160 = vld [vmem:[%s4 + $0x780] sm:$0xff]
    %v6161 = vld [vmem:[%s4 + $0x788] sm:$0xff]
    %v6162 = vld [vmem:[%s4 + $0x790] sm:$0xf]
    %v6163 = vld [vmem:[%s4 + $0x794] sm:$0xff]
    %v6164 = vld [vmem:[%s4 + $0x79c] sm:$0xff]
    %v6165 = vld [vmem:[%s4 + $0x7a4] sm:$0xf]
    %v6166 = vld [vmem:[%s4 + $0x7a8] sm:$0xff]
    %v6167 = vld [vmem:[%s4 + $0x7b0] sm:$0xff]
    %v6168 = vld [vmem:[%s4 + $0x7b8] sm:$0xf]
    %v6169 = vld [vmem:[%s4 + $0x7bc] sm:$0xff]
    %v6170 = vld [vmem:[%s4 + $0x7c4] sm:$0xff]
    %v6171 = vld [vmem:[%s4 + $0x7cc] sm:$0xf]
    %v6172 = vld [vmem:[%s4 + $0x7d0] sm:$0xff]
    %v6173 = vld [vmem:[%s4 + $0x7d8] sm:$0xff]
    %v6174 = vld [vmem:[%s4 + $0x7e0] sm:$0xf]
    %v6175 = vld [vmem:[%s4 + $0x7e4] sm:$0xff]
    %v6176 = vld [vmem:[%s4 + $0x7ec] sm:$0xff]
    %v6177 = vld [vmem:[%s4 + $0x7f4] sm:$0xf]
    %v6178 = vld [vmem:[%s4 + $0x7f8] sm:$0xff]
    %v6179 = vld [vmem:[%s4 + $0x800] sm:$0xff]
    %v6180 = vld [vmem:[%s4 + $0x808] sm:$0xf]
    %v6181 = vld [vmem:[%s4 + $0x80c] sm:$0xff]
    %v6182 = vld [vmem:[%s4 + $0x814] sm:$0xff]
    %v6183 = vld [vmem:[%s4 + $0x81c] sm:$0xf]
    %v6184 = vld [vmem:[%s4 + $0x820] sm:$0xff]
    %v6185 = vld [vmem:[%s4 + $0x828] sm:$0xff]
    %v6186 = vld [vmem:[%s4 + $0x830] sm:$0xf]
    %v6187 = vld [vmem:[%s4 + $0x834] sm:$0xff]
    %v6188 = vld [vmem:[%s4 + $0x83c] sm:$0xff]
    %v6189 = vld [vmem:[%s4 + $0x844] sm:$0xf]
    %v6190 = vld [vmem:[%s4 + $0x848] sm:$0xff]
    %v6191 = vld [vmem:[%s4 + $0x850] sm:$0xff]
    %v6192 = vld [vmem:[%s4 + $0x858] sm:$0xf]
    %v6193 = vld [vmem:[%s4 + $0x85c] sm:$0xff]
    %v6194 = vld [vmem:[%s4 + $0x864] sm:$0xff]
    %v6195 = vld [vmem:[%s4 + $0x86c] sm:$0xf]
    %v6196 = vld [vmem:[%s4 + $0x870] sm:$0xff]
    %v6197 = vld [vmem:[%s4 + $0x878] sm:$0xff]
    %v6198 = vld [vmem:[%s4 + $0x880] sm:$0xf]
    %v6199 = vld [vmem:[%s4 + $0x884] sm:$0xff]
    %v6200 = vld [vmem:[%s4 + $0x88c] sm:$0xff]
    %v6201 = vld [vmem:[%s4 + $0x894] sm:$0xf]
    %v6202 = vld [vmem:[%s4 + $0x898] sm:$0xff]
    %v6203 = vld [vmem:[%s4 + $0x8a0] sm:$0xff]
    %v6204 = vld [vmem:[%s4 + $0x8a8] sm:$0xf]
    %v6205 = vld [vmem:[%s4 + $0x8ac] sm:$0xff]
    %v6206 = vld [vmem:[%s4 + $0x8b4] sm:$0xff]
    %v6207 = vld [vmem:[%s4 + $0x8bc] sm:$0xf]
    %v6208 = vld [vmem:[%s4 + $0x8c0] sm:$0xff]
    %v6209 = vld [vmem:[%s4 + $0x8c8] sm:$0xff]
    %v6210 = vld [vmem:[%s4 + $0x8d0] sm:$0xf]
    %v6211 = vld [vmem:[%s4 + $0x8d4] sm:$0xff]
    %v6212 = vld [vmem:[%s4 + $0x8dc] sm:$0xff]
    %v6213 = vld [vmem:[%s4 + $0x8e4] sm:$0xf]
    %v6214 = vld [vmem:[%s4 + $0x8e8] sm:$0xff]
    %v6215 = vld [vmem:[%s4 + $0x8f0] sm:$0xff]
    %v6216 = vld [vmem:[%s4 + $0x8f8] sm:$0xf]
    %v6217 = vld [vmem:[%s4 + $0x8fc] sm:$0xff]
    %v6218 = vld [vmem:[%s4 + $0x904] sm:$0xff]
    %v6219 = vld [vmem:[%s4 + $0x90c] sm:$0xf]
    %v6220 = vld [vmem:[%s4 + $0x910] sm:$0xff]
    %v6221 = vld [vmem:[%s4 + $0x918] sm:$0xff]
    %v6222 = vld [vmem:[%s4 + $0x920] sm:$0xf]
    %v6223 = vld [vmem:[%s4 + $0x924] sm:$0xff]
    %v6224 = vld [vmem:[%s4 + $0x92c] sm:$0xff]
    %v6225 = vld [vmem:[%s4 + $0x934] sm:$0xf]
    %v6226 = vld [vmem:[%s4 + $0x938] sm:$0xff]
    %v6227 = vld [vmem:[%s4 + $0x940] sm:$0xff]
    %v6228 = vld [vmem:[%s4 + $0x948] sm:$0xf]
    %v6229 = vld [vmem:[%s4 + $0x94c] sm:$0xff]
    %v6230 = vld [vmem:[%s4 + $0x954] sm:$0xff]
    %v6231 = vld [vmem:[%s4 + $0x95c] sm:$0xf]
    %v6232 = vld [vmem:[%s4 + $0x960] sm:$0xff]
    %v6233 = vld [vmem:[%s4 + $0x968] sm:$0xff]
    %v6234 = vld [vmem:[%s4 + $0x970] sm:$0xf]
    %v6235 = vld [vmem:[%s4 + $0x974] sm:$0xff]
    %v6236 = vld [vmem:[%s4 + $0x97c] sm:$0xff]
    %v6237 = vld [vmem:[%s4 + $0x984] sm:$0xf]
    %v6238 = vld [vmem:[%s4 + $0x988] sm:$0xff]
    %v6239 = vld [vmem:[%s4 + $0x990] sm:$0xff]
    %v6240 = vld [vmem:[%s4 + $0x998] sm:$0xf]
    %v6241 = vld [vmem:[%s4 + $0x99c] sm:$0xff]
    %v6242 = vld [vmem:[%s4 + $0x9a4] sm:$0xff]
    %v6243 = vld [vmem:[%s4 + $0x9ac] sm:$0xf]
    %v6244 = vld [vmem:[%s4 + $0x9b0] sm:$0xff]
    %v6245 = vld [vmem:[%s4 + $0x9b8] sm:$0xff]
    %v6246 = vld [vmem:[%s4 + $0x9c0] sm:$0xf]
    %v6247 = vld [vmem:[%s4 + $0x9c4] sm:$0xff]
    %v6248 = vld [vmem:[%s4 + $0x9cc] sm:$0xff]
    %v6249 = vld [vmem:[%s4 + $0x9d4] sm:$0xf]
    %v6250 = vld [vmem:[%s4 + $0x9d8] sm:$0xff]
    %v6251 = vld [vmem:[%s4 + $0x9e0] sm:$0xff]
    %v6252 = vld [vmem:[%s4 + $0x9e8] sm:$0xf]
    %v6253 = vld [vmem:[%s4 + $0x9ec] sm:$0xff]
    %v6254 = vld [vmem:[%s4 + $0x9f4] sm:$0xff]
    %v6255 = vld [vmem:[%s4 + $0x9fc] sm:$0xf]
    %v6256 = vld [vmem:[%s4 + $0xa00] sm:$0xff]
    %v6257 = vld [vmem:[%s4 + $0xa08] sm:$0xff]
    %v6258 = vld [vmem:[%s4 + $0xa10] sm:$0xf]
    %v6259 = vld [vmem:[%s4 + $0xa14] sm:$0xff]
    %v6260 = vld [vmem:[%s4 + $0xa1c] sm:$0xff]
    %v6261 = vld [vmem:[%s4 + $0xa24] sm:$0xf]
    %v6262 = vld [vmem:[%s4 + $0xa28] sm:$0xff]
    %v6263 = vld [vmem:[%s4 + $0xa30] sm:$0xff]
    %v6264 = vld [vmem:[%s4 + $0xa38] sm:$0xf]
    %v6265 = vld [vmem:[%s4 + $0xa3c] sm:$0xff]
    %v6266 = vld [vmem:[%s4 + $0xa44] sm:$0xff]
    %v6267 = vld [vmem:[%s4 + $0xa4c] sm:$0xf]
    %v6268 = vld [vmem:[%s4 + $0xa50] sm:$0xff]
    %v6269 = vld [vmem:[%s4 + $0xa58] sm:$0xff]
    %v6270 = vld [vmem:[%s4 + $0xa60] sm:$0xf]
    %v6271 = vld [vmem:[%s4 + $0xa64] sm:$0xff]
    %v6272 = vld [vmem:[%s4 + $0xa6c] sm:$0xff]
    %v6273 = vld [vmem:[%s4 + $0xa74] sm:$0xf]
    %v6274 = vld [vmem:[%s4 + $0xa78] sm:$0xff]
    %v6275 = vld [vmem:[%s4 + $0xa80] sm:$0xff]
    %v6276 = vld [vmem:[%s4 + $0xa88] sm:$0xf]
    %v6277 = vld [vmem:[%s4 + $0xa8c] sm:$0xff]
    %v6278 = vld [vmem:[%s4 + $0xa94] sm:$0xff]
    %v6279 = vld [vmem:[%s4 + $0xa9c] sm:$0xf]
    %v6280 = vld [vmem:[%s4 + $0xaa0] sm:$0xff]
    %v6281 = vld [vmem:[%s4 + $0xaa8] sm:$0xff]
    %v6282 = vld [vmem:[%s4 + $0xab0] sm:$0xf]
    %v6283 = vld [vmem:[%s4 + $0xab4] sm:$0xff]
    %v6284 = vld [vmem:[%s4 + $0xabc] sm:$0xff]
    %v6285 = vld [vmem:[%s4 + $0xac4] sm:$0xf]
    %v6286 = vld [vmem:[%s4 + $0xac8] sm:$0xff]
    %v6287 = vld [vmem:[%s4 + $0xad0] sm:$0xff]
    %v6288 = vld [vmem:[%s4 + $0xad8] sm:$0xf]
    %v6289 = vld [vmem:[%s4 + $0xadc] sm:$0xff]
    %v6290 = vld [vmem:[%s4 + $0xae4] sm:$0xff]
    %v6291 = vld [vmem:[%s4 + $0xaec] sm:$0xf]
    %v6292 = vld [vmem:[%s4 + $0xaf0] sm:$0xff]
    %v6293 = vld [vmem:[%s4 + $0xaf8] sm:$0xff]
    %v6294 = vld [vmem:[%s4 + $0xb00] sm:$0xf]
    %v6295 = vld [vmem:[%s4 + $0xb04] sm:$0xff]
    %v6296 = vld [vmem:[%s4 + $0xb0c] sm:$0xff]
    %v6297 = vld [vmem:[%s4 + $0xb14] sm:$0xf]
    %v6298 = vld [vmem:[%s4 + $0xb18] sm:$0xff]
    %v6299 = vld [vmem:[%s4 + $0xb20] sm:$0xff]
    %v6300 = vld [vmem:[%s4 + $0xb28] sm:$0xf]
    %v6301 = vld [vmem:[%s4 + $0xb2c] sm:$0xff]
    %v6302 = vld [vmem:[%s4 + $0xb34] sm:$0xff]
    %v6303 = vld [vmem:[%s4 + $0xb3c] sm:$0xf]
    %v6520 = vunpack.c.l.b16 %v6088
    %v6521 = vunpack.c.h.b16 %v6088
    %v6522 = vunpack.c.l.b16 %v6089
    %v6523 = vunpack.c.h.b16 %v6089
    %v6524 = vunpack.c.l.b16 %v6090
    %v6525 = vunpack.c.l.b16 %v6091
    %v6526 = vunpack.c.h.b16 %v6091
    %v6527 = vunpack.c.l.b16 %v6092
    %v6528 = vunpack.c.h.b16 %v6092
    %v6529 = vunpack.c.l.b16 %v6093
    %v6530 = vunpack.c.l.b16 %v6094
    %v6531 = vunpack.c.h.b16 %v6094
    %v6532 = vunpack.c.l.b16 %v6095
    %v6533 = vunpack.c.h.b16 %v6095
    %v6534 = vunpack.c.l.b16 %v6096
    %v6535 = vunpack.c.l.b16 %v6097
    %v6536 = vunpack.c.h.b16 %v6097
    %v6537 = vunpack.c.l.b16 %v6098
    %v6538 = vunpack.c.h.b16 %v6098
    %v6539 = vunpack.c.l.b16 %v6099
    %v6540 = vunpack.c.l.b16 %v6100
    %v6541 = vunpack.c.h.b16 %v6100
    %v6542 = vunpack.c.l.b16 %v6101
    %v6543 = vunpack.c.h.b16 %v6101
    %v6544 = vunpack.c.l.b16 %v6102
    %v6545 = vunpack.c.l.b16 %v6103
    %v6546 = vunpack.c.h.b16 %v6103
    %v6547 = vunpack.c.l.b16 %v6104
    %v6548 = vunpack.c.h.b16 %v6104
    %v6549 = vunpack.c.l.b16 %v6105
    %v6550 = vunpack.c.l.b16 %v6106
    %v6551 = vunpack.c.h.b16 %v6106
    %v6552 = vunpack.c.l.b16 %v6107
    %v6553 = vunpack.c.h.b16 %v6107
    %v6554 = vunpack.c.l.b16 %v6108
    %v6555 = vunpack.c.l.b16 %v6109
    %v6556 = vunpack.c.h.b16 %v6109
    %v6557 = vunpack.c.l.b16 %v6110
    %v6558 = vunpack.c.h.b16 %v6110
    %v6559 = vunpack.c.l.b16 %v6111
    %v6560 = vunpack.c.l.b16 %v6112
    %v6561 = vunpack.c.h.b16 %v6112
    %v6562 = vunpack.c.l.b16 %v6113
    %v6563 = vunpack.c.h.b16 %v6113
    %v6564 = vunpack.c.l.b16 %v6114
    %v6565 = vunpack.c.l.b16 %v6115
    %v6566 = vunpack.c.h.b16 %v6115
    %v6567 = vunpack.c.l.b16 %v6116
    %v6568 = vunpack.c.h.b16 %v6116
    %v6569 = vunpack.c.l.b16 %v6117
    %v6570 = vunpack.c.l.b16 %v6118
    %v6571 = vunpack.c.h.b16 %v6118
    %v6572 = vunpack.c.l.b16 %v6119
    %v6573 = vunpack.c.h.b16 %v6119
    %v6574 = vunpack.c.l.b16 %v6120
    %v6575 = vunpack.c.l.b16 %v6121
    %v6576 = vunpack.c.h.b16 %v6121
    %v6577 = vunpack.c.l.b16 %v6122
    %v6578 = vunpack.c.h.b16 %v6122
    %v6579 = vunpack.c.l.b16 %v6123
    %v6580 = vunpack.c.l.b16 %v6124
    %v6581 = vunpack.c.h.b16 %v6124
    %v6582 = vunpack.c.l.b16 %v6125
    %v6583 = vunpack.c.h.b16 %v6125
    %v6584 = vunpack.c.l.b16 %v6126
    %v6585 = vunpack.c.l.b16 %v6127
    %v6586 = vunpack.c.h.b16 %v6127
    %v6587 = vunpack.c.l.b16 %v6128
    %v6588 = vunpack.c.h.b16 %v6128
    %v6589 = vunpack.c.l.b16 %v6129
    %v6590 = vunpack.c.l.b16 %v6130
    %v6591 = vunpack.c.h.b16 %v6130
    %v6592 = vunpack.c.l.b16 %v6131
    %v6593 = vunpack.c.h.b16 %v6131
    %v6594 = vunpack.c.l.b16 %v6132
    %v6595 = vunpack.c.l.b16 %v6133
    %v6596 = vunpack.c.h.b16 %v6133
    %v6597 = vunpack.c.l.b16 %v6134
    %v6598 = vunpack.c.h.b16 %v6134
    %v6599 = vunpack.c.l.b16 %v6135
    %v6600 = vunpack.c.l.b16 %v6136
    %v6601 = vunpack.c.h.b16 %v6136
    %v6602 = vunpack.c.l.b16 %v6137
    %v6603 = vunpack.c.h.b16 %v6137
    %v6604 = vunpack.c.l.b16 %v6138
    %v6605 = vunpack.c.l.b16 %v6139
    %v6606 = vunpack.c.h.b16 %v6139
    %v6607 = vunpack.c.l.b16 %v6140
    %v6608 = vunpack.c.h.b16 %v6140
    %v6609 = vunpack.c.l.b16 %v6141
    %v6610 = vunpack.c.l.b16 %v6142
    %v6611 = vunpack.c.h.b16 %v6142
    %v6612 = vunpack.c.l.b16 %v6143
    %v6613 = vunpack.c.h.b16 %v6143
    %v6614 = vunpack.c.l.b16 %v6144
    %v6615 = vunpack.c.l.b16 %v6145
    %v6616 = vunpack.c.h.b16 %v6145
    %v6617 = vunpack.c.l.b16 %v6146
    %v6618 = vunpack.c.h.b16 %v6146
    %v6619 = vunpack.c.l.b16 %v6147
    %v6620 = vunpack.c.l.b16 %v6148
    %v6621 = vunpack.c.h.b16 %v6148
    %v6622 = vunpack.c.l.b16 %v6149
    %v6623 = vunpack.c.h.b16 %v6149
    %v6624 = vunpack.c.l.b16 %v6150
    %v6625 = vunpack.c.l.b16 %v6151
    %v6626 = vunpack.c.h.b16 %v6151
    %v6627 = vunpack.c.l.b16 %v6152
    %v6628 = vunpack.c.h.b16 %v6152
    %v6629 = vunpack.c.l.b16 %v6153
    %v6630 = vunpack.c.l.b16 %v6154
    %v6631 = vunpack.c.h.b16 %v6154
    %v6632 = vunpack.c.l.b16 %v6155
    %v6633 = vunpack.c.h.b16 %v6155
    %v6634 = vunpack.c.l.b16 %v6156
    %v6635 = vunpack.c.l.b16 %v6157
    %v6636 = vunpack.c.h.b16 %v6157
    %v6637 = vunpack.c.l.b16 %v6158
    %v6638 = vunpack.c.h.b16 %v6158
    %v6639 = vunpack.c.l.b16 %v6159
    %v6640 = vunpack.c.l.b16 %v6160
    %v6641 = vunpack.c.h.b16 %v6160
    %v6642 = vunpack.c.l.b16 %v6161
    %v6643 = vunpack.c.h.b16 %v6161
    %v6644 = vunpack.c.l.b16 %v6162
    %v6645 = vunpack.c.l.b16 %v6163
    %v6646 = vunpack.c.h.b16 %v6163
    %v6647 = vunpack.c.l.b16 %v6164
    %v6648 = vunpack.c.h.b16 %v6164
    %v6649 = vunpack.c.l.b16 %v6165
    %v6650 = vunpack.c.l.b16 %v6166
    %v6651 = vunpack.c.h.b16 %v6166
    %v6652 = vunpack.c.l.b16 %v6167
    %v6653 = vunpack.c.h.b16 %v6167
    %v6654 = vunpack.c.l.b16 %v6168
    %v6655 = vunpack.c.l.b16 %v6169
    %v6656 = vunpack.c.h.b16 %v6169
    %v6657 = vunpack.c.l.b16 %v6170
    %v6658 = vunpack.c.h.b16 %v6170
    %v6659 = vunpack.c.l.b16 %v6171
    %v6660 = vunpack.c.l.b16 %v6172
    %v6661 = vunpack.c.h.b16 %v6172
    %v6662 = vunpack.c.l.b16 %v6173
    %v6663 = vunpack.c.h.b16 %v6173
    %v6664 = vunpack.c.l.b16 %v6174
    %v6665 = vunpack.c.l.b16 %v6175
    %v6666 = vunpack.c.h.b16 %v6175
    %v6667 = vunpack.c.l.b16 %v6176
    %v6668 = vunpack.c.h.b16 %v6176
    %v6669 = vunpack.c.l.b16 %v6177
    %v6670 = vunpack.c.l.b16 %v6178
    %v6671 = vunpack.c.h.b16 %v6178
    %v6672 = vunpack.c.l.b16 %v6179
    %v6673 = vunpack.c.h.b16 %v6179
    %v6674 = vunpack.c.l.b16 %v6180
    %v6675 = vunpack.c.l.b16 %v6181
    %v6676 = vunpack.c.h.b16 %v6181
    %v6677 = vunpack.c.l.b16 %v6182
    %v6678 = vunpack.c.h.b16 %v6182
    %v6679 = vunpack.c.l.b16 %v6183
    %v6680 = vunpack.c.l.b16 %v6184
    %v6681 = vunpack.c.h.b16 %v6184
    %v6682 = vunpack.c.l.b16 %v6185
    %v6683 = vunpack.c.h.b16 %v6185
    %v6684 = vunpack.c.l.b16 %v6186
    %v6685 = vunpack.c.l.b16 %v6187
    %v6686 = vunpack.c.h.b16 %v6187
    %v6687 = vunpack.c.l.b16 %v6188
    %v6688 = vunpack.c.h.b16 %v6188
    %v6689 = vunpack.c.l.b16 %v6189
    %v6690 = vunpack.c.l.b16 %v6190
    %v6691 = vunpack.c.h.b16 %v6190
    %v6692 = vunpack.c.l.b16 %v6191
    %v6693 = vunpack.c.h.b16 %v6191
    %v6694 = vunpack.c.l.b16 %v6192
    %v6695 = vunpack.c.l.b16 %v6193
    %v6696 = vunpack.c.h.b16 %v6193
    %v6697 = vunpack.c.l.b16 %v6194
    %v6698 = vunpack.c.h.b16 %v6194
    %v6699 = vunpack.c.l.b16 %v6195
    %v6700 = vunpack.c.l.b16 %v6196
    %v6701 = vunpack.c.h.b16 %v6196
    %v6702 = vunpack.c.l.b16 %v6197
    %v6703 = vunpack.c.h.b16 %v6197
    %v6704 = vunpack.c.l.b16 %v6198
    %v6705 = vunpack.c.l.b16 %v6199
    %v6706 = vunpack.c.h.b16 %v6199
    %v6707 = vunpack.c.l.b16 %v6200
    %v6708 = vunpack.c.h.b16 %v6200
    %v6709 = vunpack.c.l.b16 %v6201
    %v6710 = vunpack.c.l.b16 %v6202
    %v6711 = vunpack.c.h.b16 %v6202
    %v6712 = vunpack.c.l.b16 %v6203
    %v6713 = vunpack.c.h.b16 %v6203
    %v6714 = vunpack.c.l.b16 %v6204
    %v6715 = vunpack.c.l.b16 %v6205
    %v6716 = vunpack.c.h.b16 %v6205
    %v6717 = vunpack.c.l.b16 %v6206
    %v6718 = vunpack.c.h.b16 %v6206
    %v6719 = vunpack.c.l.b16 %v6207
    %v6720 = vunpack.c.l.b16 %v6208
    %v6721 = vunpack.c.h.b16 %v6208
    %v6722 = vunpack.c.l.b16 %v6209
    %v6723 = vunpack.c.h.b16 %v6209
    %v6724 = vunpack.c.l.b16 %v6210
    %v6725 = vunpack.c.l.b16 %v6211
    %v6726 = vunpack.c.h.b16 %v6211
    %v6727 = vunpack.c.l.b16 %v6212
    %v6728 = vunpack.c.h.b16 %v6212
    %v6729 = vunpack.c.l.b16 %v6213
    %v6730 = vunpack.c.l.b16 %v6214
    %v6731 = vunpack.c.h.b16 %v6214
    %v6732 = vunpack.c.l.b16 %v6215
    %v6733 = vunpack.c.h.b16 %v6215
    %v6734 = vunpack.c.l.b16 %v6216
    %v6735 = vunpack.c.l.b16 %v6217
    %v6736 = vunpack.c.h.b16 %v6217
    %v6737 = vunpack.c.l.b16 %v6218
    %v6738 = vunpack.c.h.b16 %v6218
    %v6739 = vunpack.c.l.b16 %v6219
    %v6740 = vunpack.c.l.b16 %v6220
    %v6741 = vunpack.c.h.b16 %v6220
    %v6742 = vunpack.c.l.b16 %v6221
    %v6743 = vunpack.c.h.b16 %v6221
    %v6744 = vunpack.c.l.b16 %v6222
    %v6745 = vunpack.c.l.b16 %v6223
    %v6746 = vunpack.c.h.b16 %v6223
    %v6747 = vunpack.c.l.b16 %v6224
    %v6748 = vunpack.c.h.b16 %v6224
    %v6749 = vunpack.c.l.b16 %v6225
    %v6750 = vunpack.c.l.b16 %v6226
    %v6751 = vunpack.c.h.b16 %v6226
    %v6752 = vunpack.c.l.b16 %v6227
    %v6753 = vunpack.c.h.b16 %v6227
    %v6754 = vunpack.c.l.b16 %v6228
    %v6755 = vunpack.c.l.b16 %v6229
    %v6756 = vunpack.c.h.b16 %v6229
    %v6757 = vunpack.c.l.b16 %v6230
    %v6758 = vunpack.c.h.b16 %v6230
    %v6759 = vunpack.c.l.b16 %v6231
    %v6760 = vunpack.c.l.b16 %v6232
    %v6761 = vunpack.c.h.b16 %v6232
    %v6762 = vunpack.c.l.b16 %v6233
    %v6763 = vunpack.c.h.b16 %v6233
    %v6764 = vunpack.c.l.b16 %v6234
    %v6765 = vunpack.c.l.b16 %v6235
    %v6766 = vunpack.c.h.b16 %v6235
    %v6767 = vunpack.c.l.b16 %v6236
    %v6768 = vunpack.c.h.b16 %v6236
    %v6769 = vunpack.c.l.b16 %v6237
    %v6770 = vunpack.c.l.b16 %v6238
    %v6771 = vunpack.c.h.b16 %v6238
    %v6772 = vunpack.c.l.b16 %v6239
    %v6773 = vunpack.c.h.b16 %v6239
    %v6774 = vunpack.c.l.b16 %v6240
    %v6775 = vunpack.c.l.b16 %v6241
    %v6776 = vunpack.c.h.b16 %v6241
    %v6777 = vunpack.c.l.b16 %v6242
    %v6778 = vunpack.c.h.b16 %v6242
    %v6779 = vunpack.c.l.b16 %v6243
    %v6780 = vunpack.c.l.b16 %v6244
    %v6781 = vunpack.c.h.b16 %v6244
    %v6782 = vunpack.c.l.b16 %v6245
    %v6783 = vunpack.c.h.b16 %v6245
    %v6784 = vunpack.c.l.b16 %v6246
    %v6785 = vunpack.c.l.b16 %v6247
    %v6786 = vunpack.c.h.b16 %v6247
    %v6787 = vunpack.c.l.b16 %v6248
    %v6788 = vunpack.c.h.b16 %v6248
    %v6789 = vunpack.c.l.b16 %v6249
    %v6790 = vunpack.c.l.b16 %v6250
    %v6791 = vunpack.c.h.b16 %v6250
    %v6792 = vunpack.c.l.b16 %v6251
    %v6793 = vunpack.c.h.b16 %v6251
    %v6794 = vunpack.c.l.b16 %v6252
    %v6795 = vunpack.c.l.b16 %v6253
    %v6796 = vunpack.c.h.b16 %v6253
    %v6797 = vunpack.c.l.b16 %v6254
    %v6798 = vunpack.c.h.b16 %v6254
    %v6799 = vunpack.c.l.b16 %v6255
    %v6800 = vunpack.c.l.b16 %v6256
    %v6801 = vunpack.c.h.b16 %v6256
    %v6802 = vunpack.c.l.b16 %v6257
    %v6803 = vunpack.c.h.b16 %v6257
    %v6804 = vunpack.c.l.b16 %v6258
    %v6805 = vunpack.c.l.b16 %v6259
    %v6806 = vunpack.c.h.b16 %v6259
    %v6807 = vunpack.c.l.b16 %v6260
    %v6808 = vunpack.c.h.b16 %v6260
    %v6809 = vunpack.c.l.b16 %v6261
    %v6810 = vunpack.c.l.b16 %v6262
    %v6811 = vunpack.c.h.b16 %v6262
    %v6812 = vunpack.c.l.b16 %v6263
    %v6813 = vunpack.c.h.b16 %v6263
    %v6814 = vunpack.c.l.b16 %v6264
    %v6815 = vunpack.c.l.b16 %v6265
    %v6816 = vunpack.c.h.b16 %v6265
    %v6817 = vunpack.c.l.b16 %v6266
    %v6818 = vunpack.c.h.b16 %v6266
    %v6819 = vunpack.c.l.b16 %v6267
    %v6820 = vunpack.c.l.b16 %v6268
    %v6821 = vunpack.c.h.b16 %v6268
    %v6822 = vunpack.c.l.b16 %v6269
    %v6823 = vunpack.c.h.b16 %v6269
    %v6824 = vunpack.c.l.b16 %v6270
    %v6825 = vunpack.c.l.b16 %v6271
    %v6826 = vunpack.c.h.b16 %v6271
    %v6827 = vunpack.c.l.b16 %v6272
    %v6828 = vunpack.c.h.b16 %v6272
    %v6829 = vunpack.c.l.b16 %v6273
    %v6830 = vunpack.c.l.b16 %v6274
    %v6831 = vunpack.c.h.b16 %v6274
    %v6832 = vunpack.c.l.b16 %v6275
    %v6833 = vunpack.c.h.b16 %v6275
    %v6834 = vunpack.c.l.b16 %v6276
    %v6835 = vunpack.c.l.b16 %v6277
    %v6836 = vunpack.c.h.b16 %v6277
    %v6837 = vunpack.c.l.b16 %v6278
    %v6838 = vunpack.c.h.b16 %v6278
    %v6839 = vunpack.c.l.b16 %v6279
    %v6840 = vunpack.c.l.b16 %v6280
    %v6841 = vunpack.c.h.b16 %v6280
    %v6842 = vunpack.c.l.b16 %v6281
    %v6843 = vunpack.c.h.b16 %v6281
    %v6844 = vunpack.c.l.b16 %v6282
    %v6845 = vunpack.c.l.b16 %v6283
    %v6846 = vunpack.c.h.b16 %v6283
    %v6847 = vunpack.c.l.b16 %v6284
    %v6848 = vunpack.c.h.b16 %v6284
    %v6849 = vunpack.c.l.b16 %v6285
    %v6850 = vunpack.c.l.b16 %v6286
    %v6851 = vunpack.c.h.b16 %v6286
    %v6852 = vunpack.c.l.b16 %v6287
    %v6853 = vunpack.c.h.b16 %v6287
    %v6854 = vunpack.c.l.b16 %v6288
    %v6855 = vunpack.c.l.b16 %v6289
    %v6856 = vunpack.c.h.b16 %v6289
    %v6857 = vunpack.c.l.b16 %v6290
    %v6858 = vunpack.c.h.b16 %v6290
    %v6859 = vunpack.c.l.b16 %v6291
    %v6860 = vunpack.c.l.b16 %v6292
    %v6861 = vunpack.c.h.b16 %v6292
    %v6862 = vunpack.c.l.b16 %v6293
    %v6863 = vunpack.c.h.b16 %v6293
    %v6864 = vunpack.c.l.b16 %v6294
    %v6865 = vunpack.c.l.b16 %v6295
    %v6866 = vunpack.c.h.b16 %v6295
    %v6867 = vunpack.c.l.b16 %v6296
    %v6868 = vunpack.c.h.b16 %v6296
    %v6869 = vunpack.c.l.b16 %v6297
    %v6870 = vunpack.c.l.b16 %v6298
    %v6871 = vunpack.c.h.b16 %v6298
    %v6872 = vunpack.c.l.b16 %v6299
    %v6873 = vunpack.c.h.b16 %v6299
    %v6874 = vunpack.c.l.b16 %v6300
    %v6875 = vunpack.c.l.b16 %v6301
    %v6876 = vunpack.c.h.b16 %v6301
    %v6877 = vunpack.c.l.b16 %v6302
    %v6878 = vunpack.c.h.b16 %v6302
    %v6879 = vunpack.c.l.b16 %v6303
    %v6880 = vpack.c.b16 %v6525, %v6520
    %v6881 = vpack.c.b16 %v6526, %v6521
    %v6882 = vpack.c.b16 %v6527, %v6522
    %v6883 = vpack.c.b16 %v6528, %v6523
    %v6884 = vpack.c.b16 %v6529, %v6524
    %v6885 = vpack.c.b16 %v6535, %v6530
    %v6886 = vpack.c.b16 %v6536, %v6531
    %v6887 = vpack.c.b16 %v6537, %v6532
    %v6888 = vpack.c.b16 %v6538, %v6533
    %v6889 = vpack.c.b16 %v6539, %v6534
    %v6890 = vpack.c.b16 %v6545, %v6540
    %v6891 = vpack.c.b16 %v6546, %v6541
    %v6892 = vpack.c.b16 %v6547, %v6542
    %v6893 = vpack.c.b16 %v6548, %v6543
    %v6894 = vpack.c.b16 %v6549, %v6544
    %v6895 = vpack.c.b16 %v6555, %v6550
    %v6896 = vpack.c.b16 %v6556, %v6551
    %v6897 = vpack.c.b16 %v6557, %v6552
    %v6898 = vpack.c.b16 %v6558, %v6553
    %v6899 = vpack.c.b16 %v6559, %v6554
    %v6900 = vpack.c.b16 %v6565, %v6560
    %v6901 = vpack.c.b16 %v6566, %v6561
    %v6902 = vpack.c.b16 %v6567, %v6562
    %v6903 = vpack.c.b16 %v6568, %v6563
    %v6904 = vpack.c.b16 %v6569, %v6564
    %v6905 = vpack.c.b16 %v6575, %v6570
    %v6906 = vpack.c.b16 %v6576, %v6571
    %v6907 = vpack.c.b16 %v6577, %v6572
    %v6908 = vpack.c.b16 %v6578, %v6573
    %v6909 = vpack.c.b16 %v6579, %v6574
    %v6910 = vpack.c.b16 %v6585, %v6580
    %v6911 = vpack.c.b16 %v6586, %v6581
    %v6912 = vpack.c.b16 %v6587, %v6582
    %v6913 = vpack.c.b16 %v6588, %v6583
    %v6914 = vpack.c.b16 %v6589, %v6584
    %v6915 = vpack.c.b16 %v6595, %v6590
    %v6916 = vpack.c.b16 %v6596, %v6591
    %v6917 = vpack.c.b16 %v6597, %v6592
    %v6918 = vpack.c.b16 %v6598, %v6593
    %v6919 = vpack.c.b16 %v6599, %v6594
    %v6920 = vpack.c.b16 %v6605, %v6600
    %v6921 = vpack.c.b16 %v6606, %v6601
    %v6922 = vpack.c.b16 %v6607, %v6602
    %v6923 = vpack.c.b16 %v6608, %v6603
    %v6924 = vpack.c.b16 %v6609, %v6604
    %v6925 = vpack.c.b16 %v6615, %v6610
    %v6926 = vpack.c.b16 %v6616, %v6611
    %v6927 = vpack.c.b16 %v6617, %v6612
    %v6928 = vpack.c.b16 %v6618, %v6613
    %v6929 = vpack.c.b16 %v6619, %v6614
    %v6930 = vpack.c.b16 %v6625, %v6620
    %v6931 = vpack.c.b16 %v6626, %v6621
    %v6932 = vpack.c.b16 %v6627, %v6622
    %v6933 = vpack.c.b16 %v6628, %v6623
    %v6934 = vpack.c.b16 %v6629, %v6624
    %v6935 = vpack.c.b16 %v6635, %v6630
    %v6936 = vpack.c.b16 %v6636, %v6631
    %v6937 = vpack.c.b16 %v6637, %v6632
    %v6938 = vpack.c.b16 %v6638, %v6633
    %v6939 = vpack.c.b16 %v6639, %v6634
    %v6940 = vpack.c.b16 %v6645, %v6640
    %v6941 = vpack.c.b16 %v6646, %v6641
    %v6942 = vpack.c.b16 %v6647, %v6642
    %v6943 = vpack.c.b16 %v6648, %v6643
    %v6944 = vpack.c.b16 %v6649, %v6644
    %v6945 = vpack.c.b16 %v6655, %v6650
    %v6946 = vpack.c.b16 %v6656, %v6651
    %v6947 = vpack.c.b16 %v6657, %v6652
    %v6948 = vpack.c.b16 %v6658, %v6653
    %v6949 = vpack.c.b16 %v6659, %v6654
    %v6950 = vpack.c.b16 %v6665, %v6660
    %v6951 = vpack.c.b16 %v6666, %v6661
    %v6952 = vpack.c.b16 %v6667, %v6662
    %v6953 = vpack.c.b16 %v6668, %v6663
    %v6954 = vpack.c.b16 %v6669, %v6664
    %v6955 = vpack.c.b16 %v6675, %v6670
    %v6956 = vpack.c.b16 %v6676, %v6671
    %v6957 = vpack.c.b16 %v6677, %v6672
    %v6958 = vpack.c.b16 %v6678, %v6673
    %v6959 = vpack.c.b16 %v6679, %v6674
    %v6960 = vpack.c.b16 %v6685, %v6680
    %v6961 = vpack.c.b16 %v6686, %v6681
    %v6962 = vpack.c.b16 %v6687, %v6682
    %v6963 = vpack.c.b16 %v6688, %v6683
    %v6964 = vpack.c.b16 %v6689, %v6684
    %v6965 = vpack.c.b16 %v6695, %v6690
    %v6966 = vpack.c.b16 %v6696, %v6691
    %v6967 = vpack.c.b16 %v6697, %v6692
    %v6968 = vpack.c.b16 %v6698, %v6693
    %v6969 = vpack.c.b16 %v6699, %v6694
    %v6970 = vpack.c.b16 %v6705, %v6700
    %v6971 = vpack.c.b16 %v6706, %v6701
    %v6972 = vpack.c.b16 %v6707, %v6702
    %v6973 = vpack.c.b16 %v6708, %v6703
    %v6974 = vpack.c.b16 %v6709, %v6704
    %v6975 = vpack.c.b16 %v6715, %v6710
    %v6976 = vpack.c.b16 %v6716, %v6711
    %v6977 = vpack.c.b16 %v6717, %v6712
    %v6978 = vpack.c.b16 %v6718, %v6713
    %v6979 = vpack.c.b16 %v6719, %v6714
    %v6980 = vpack.c.b16 %v6725, %v6720
    %v6981 = vpack.c.b16 %v6726, %v6721
    %v6982 = vpack.c.b16 %v6727, %v6722
    %v6983 = vpack.c.b16 %v6728, %v6723
    %v6984 = vpack.c.b16 %v6729, %v6724
    %v6985 = vpack.c.b16 %v6735, %v6730
    %v6986 = vpack.c.b16 %v6736, %v6731
    %v6987 = vpack.c.b16 %v6737, %v6732
    %v6988 = vpack.c.b16 %v6738, %v6733
    %v6989 = vpack.c.b16 %v6739, %v6734
    %v6990 = vpack.c.b16 %v6745, %v6740
    %v6991 = vpack.c.b16 %v6746, %v6741
    %v6992 = vpack.c.b16 %v6747, %v6742
    %v6993 = vpack.c.b16 %v6748, %v6743
    %v6994 = vpack.c.b16 %v6749, %v6744
    %v6995 = vpack.c.b16 %v6755, %v6750
    %v6996 = vpack.c.b16 %v6756, %v6751
    %v6997 = vpack.c.b16 %v6757, %v6752
    %v6998 = vpack.c.b16 %v6758, %v6753
    %v6999 = vpack.c.b16 %v6759, %v6754
    %v7000 = vpack.c.b16 %v6765, %v6760
    %v7001 = vpack.c.b16 %v6766, %v6761
    %v7002 = vpack.c.b16 %v6767, %v6762
    %v7003 = vpack.c.b16 %v6768, %v6763
    %v7004 = vpack.c.b16 %v6769, %v6764
    %v7005 = vpack.c.b16 %v6775, %v6770
    %v7006 = vpack.c.b16 %v6776, %v6771
    %v7007 = vpack.c.b16 %v6777, %v6772
    %v7008 = vpack.c.b16 %v6778, %v6773
    %v7009 = vpack.c.b16 %v6779, %v6774
    %v7010 = vpack.c.b16 %v6785, %v6780
    %v7011 = vpack.c.b16 %v6786, %v6781
    %v7012 = vpack.c.b16 %v6787, %v6782
    %v7013 = vpack.c.b16 %v6788, %v6783
    %v7014 = vpack.c.b16 %v6789, %v6784
    %v7015 = vpack.c.b16 %v6795, %v6790
    %v7016 = vpack.c.b16 %v6796, %v6791
    %v7017 = vpack.c.b16 %v6797, %v6792
    %v7018 = vpack.c.b16 %v6798, %v6793
    %v7019 = vpack.c.b16 %v6799, %v6794
    %v7020 = vpack.c.b16 %v6805, %v6800
    %v7021 = vpack.c.b16 %v6806, %v6801
    %v7022 = vpack.c.b16 %v6807, %v6802
    %v7023 = vpack.c.b16 %v6808, %v6803
    %v7024 = vpack.c.b16 %v6809, %v6804
    %v7025 = vpack.c.b16 %v6815, %v6810
    %v7026 = vpack.c.b16 %v6816, %v6811
    %v7027 = vpack.c.b16 %v6817, %v6812
    %v7028 = vpack.c.b16 %v6818, %v6813
    %v7029 = vpack.c.b16 %v6819, %v6814
    %v7030 = vpack.c.b16 %v6825, %v6820
    %v7031 = vpack.c.b16 %v6826, %v6821
    %v7032 = vpack.c.b16 %v6827, %v6822
    %v7033 = vpack.c.b16 %v6828, %v6823
    %v7034 = vpack.c.b16 %v6829, %v6824
    %v7035 = vpack.c.b16 %v6835, %v6830
    %v7036 = vpack.c.b16 %v6836, %v6831
    %v7037 = vpack.c.b16 %v6837, %v6832
    %v7038 = vpack.c.b16 %v6838, %v6833
    %v7039 = vpack.c.b16 %v6839, %v6834
    %v7040 = vpack.c.b16 %v6845, %v6840
    %v7041 = vpack.c.b16 %v6846, %v6841
    %v7042 = vpack.c.b16 %v6847, %v6842
    %v7043 = vpack.c.b16 %v6848, %v6843
    %v7044 = vpack.c.b16 %v6849, %v6844
    %v7045 = vpack.c.b16 %v6855, %v6850
    %v7046 = vpack.c.b16 %v6856, %v6851
    %v7047 = vpack.c.b16 %v6857, %v6852
    %v7048 = vpack.c.b16 %v6858, %v6853
    %v7049 = vpack.c.b16 %v6859, %v6854
    %v7050 = vpack.c.b16 %v6865, %v6860
    %v7051 = vpack.c.b16 %v6866, %v6861
    %v7052 = vpack.c.b16 %v6867, %v6862
    %v7053 = vpack.c.b16 %v6868, %v6863
    %v7054 = vpack.c.b16 %v6869, %v6864
    %v7055 = vpack.c.b16 %v6875, %v6870
    %v7056 = vpack.c.b16 %v6876, %v6871
    %v7057 = vpack.c.b16 %v6877, %v6872
    %v7058 = vpack.c.b16 %v6878, %v6873
    %v7059 = vpack.c.b16 %v6879, %v6874
    %vm7240 = vcmask 523264
    %v7242 = vsel %vm7240, %v6087, 0
    %7244 = vmatprep.subr.bf16.mxu0 %v6881
    %7245 = vmatpush1.bf16.msra.mxu0 %v6880
    %7246 = vmatprep.subr.bf16.mxu0 %v6886
    %7247 = vmatpush1.bf16.msra.mxu0 %v6885
    %7248 = vmatprep.subr.bf16.mxu0 %v6891
    %7249 = vmatpush1.bf16.msra.mxu0 %v6890
    %7250 = vmatprep.subr.bf16.mxu0 %v6896
    %7251 = vmatpush1.bf16.msra.mxu0 %v6895
    %7252 = vmatprep.subr.bf16.mxu0 %v6901
    %7253 = vmatpush1.bf16.msra.mxu0 %v6900
    %7254 = vmatprep.subr.bf16.mxu0 %v6906
    %7255 = vmatpush1.bf16.msra.mxu0 %v6905
    %7256 = vmatprep.subr.bf16.mxu0 %v6911
    %7257 = vmatpush1.bf16.msra.mxu0 %v6910
    %7258 = vmatprep.subr.bf16.mxu0 %v6916
    %7259 = vmatpush1.bf16.msra.mxu0 %v6915
    %7260 = vmatprep.subr.bf16.mxu0 %v6921
    %7261 = vmatpush1.bf16.msra.mxu0 %v6920
    %7262 = vmatprep.subr.bf16.mxu0 %v6926
    %7263 = vmatpush1.bf16.msra.mxu0 %v6925
    %7264 = vmatprep.subr.bf16.mxu0 %v6931
    %7265 = vmatpush1.bf16.msra.mxu0 %v6930
    %7266 = vmatprep.subr.bf16.mxu0 %v6936
    %7267 = vmatpush1.bf16.msra.mxu0 %v6935
    %7268 = vmatprep.subr.bf16.mxu0 %v6941
    %7269 = vmatpush1.bf16.msra.mxu0 %v6940
    %7270 = vmatprep.subr.bf16.mxu0 %v6946
    %7271 = vmatpush1.bf16.msra.mxu0 %v6945
    %7272 = vmatprep.subr.bf16.mxu0 %v6951
    %7273 = vmatpush1.bf16.msra.mxu0 %v6950
    %7274 = vmatprep.subr.bf16.mxu0 %v6956
    %7275 = vmatpush1.bf16.msra.mxu0 %v6955
    %7276 = vmatprep.mubr.bf16.mxu0 %v6084
    %7277 = vmatmul.mubr.bf16.gmra.mrb[0].mxu0 %v6083
    %v7278 = vpop.f32.mrb[0].mxu0
    %v7279 = vadd.f32 0.0, %v7278
    %v7280 = vpop.f32.mrb[0].mxu0
    %v7281 = vadd.f32 0.0, %v7280
    %v7282 = vpop.f32.mrb[0].mxu0
    %v7283 = vpop.f32.mrb[0].mxu0
    %7284 = vdwg.mxu0
    %7285 = vmatprep.subr.bf16.mxu0 %v6961
    %7286 = vmatpush1.bf16.msra.mxu0 %v6960
    %7287 = vmatprep.subr.bf16.mxu0 %v6966
    %7288 = vmatpush1.bf16.msra.mxu0 %v6965
    %7289 = vmatprep.subr.bf16.mxu0 %v6971
    %7290 = vmatpush1.bf16.msra.mxu0 %v6970
    %7291 = vmatprep.subr.bf16.mxu0 %v6976
    %7292 = vmatpush1.bf16.msra.mxu0 %v6975
    %7293 = vmatprep.subr.bf16.mxu0 %v6981
    %7294 = vmatpush1.bf16.msra.mxu0 %v6980
    %7295 = vmatprep.subr.bf16.mxu0 %v6986
    %7296 = vmatpush1.bf16.msra.mxu0 %v6985
    %7297 = vmatprep.subr.bf16.mxu0 %v6991
    %7298 = vmatpush1.bf16.msra.mxu0 %v6990
    %7299 = vmatprep.subr.bf16.mxu0 %v6996
    %7300 = vmatpush1.bf16.msra.mxu0 %v6995
    %7301 = vmatprep.subr.bf16.mxu0 %v7001
    %7302 = vmatpush1.bf16.msra.mxu0 %v7000
    %7303 = vmatprep.subr.bf16.mxu0 %v7006
    %7304 = vmatpush1.bf16.msra.mxu0 %v7005
    %7305 = vmatprep.subr.bf16.mxu0 %v7011
    %7306 = vmatpush1.bf16.msra.mxu0 %v7010
    %7307 = vmatprep.subr.bf16.mxu0 %v7016
    %7308 = vmatpush1.bf16.msra.mxu0 %v7015
    %7309 = vmatprep.subr.bf16.mxu0 %v7021
    %7310 = vmatpush1.bf16.msra.mxu0 %v7020
    %7311 = vmatprep.subr.bf16.mxu0 %v7026
    %7312 = vmatpush1.bf16.msra.mxu0 %v7025
    %7313 = vmatprep.subr.bf16.mxu0 %v7031
    %7314 = vmatpush1.bf16.msra.mxu0 %v7030
    %7315 = vmatprep.subr.bf16.mxu0 %v7036
    %7316 = vmatpush1.bf16.msra.mxu0 %v7035
    %7317 = vmatprep.mubr.bf16.mxu0 %v6086
    %7318 = vmatmul.mubr.bf16.gmra.mrb[0].mxu0 %v6085
    %v7319 = vpop.f32.mrb[0].mxu0
    %v7320 = vadd.f32 %v7279, %v7319
    %v7321 = vpop.f32.mrb[0].mxu0
    %v7322 = vadd.f32 %v7281, %v7321
    %v7323 = vpop.f32.mrb[0].mxu0
    %v7324 = vpop.f32.mrb[0].mxu0
    %7325 = vdwg.mxu0
    %7326 = vmatprep.subr.bf16.mxu0 %v7041
    %7327 = vmatpush1.bf16.msra.mxu0 %v7040
    %7328 = vmatprep.subr.bf16.mxu0 %v7046
    %7329 = vmatpush1.bf16.msra.mxu0 %v7045
    %7330 = vmatprep.subr.bf16.mxu0 %v7051
    %7331 = vmatpush1.bf16.msra.mxu0 %v7050
    %7332 = vmatprep.subr.bf16.mxu0 %v7056
    %7333 = vmatpush1.bf16.msra.mxu0 %v7055
    %7334 = vmatprep.subr.bf16.mxu0 0
    %7335 = vmatpush1.bf16.msra.mxu0 0
    %7336 = vmatprep.subr.bf16.mxu0 0
    %7337 = vmatpush1.bf16.msra.mxu0 0
    %7338 = vmatprep.subr.bf16.mxu0 0
    %7339 = vmatpush1.bf16.msra.mxu0 0
    %7340 = vmatprep.subr.bf16.mxu0 0
    %7341 = vmatpush1.bf16.msra.mxu0 0
    %7342 = vmatprep.subr.bf16.mxu0 0
    %7343 = vmatpush1.bf16.msra.mxu0 0
    %7344 = vmatprep.subr.bf16.mxu0 0
    %7345 = vmatpush1.bf16.msra.mxu0 0
    %7346 = vmatprep.subr.bf16.mxu0 0
    %7347 = vmatpush1.bf16.msra.mxu0 0
    %7348 = vmatprep.subr.bf16.mxu0 0
    %7349 = vmatpush1.bf16.msra.mxu0 0
    %7350 = vmatprep.subr.bf16.mxu0 0
    %7351 = vmatpush1.bf16.msra.mxu0 0
    %7352 = vmatprep.subr.bf16.mxu0 0
    %7353 = vmatpush1.bf16.msra.mxu0 0
    %7354 = vmatprep.subr.bf16.mxu0 0
    %7355 = vmatpush1.bf16.msra.mxu0 0
    %7356 = vmatprep.subr.bf16.mxu0 0
    %7357 = vmatpush1.bf16.msra.mxu0 0
    %7358 = vmatprep.mubr.bf16.mxu0 0
    %7359 = vmatmul.mubr.bf16.gmra.mrb[0].mxu0 %v7242
    %v7360 = vpop.f32.mrb[0].mxu0
    %v7361 = vadd.f32 %v7320, %v7360
    %v7362 = vpop.f32.mrb[0].mxu0
    %v7363 = vadd.f32 %v7322, %v7362
    %v7364 = vpop.f32.mrb[0].mxu0
    %v7365 = vpop.f32.mrb[0].mxu0
    %7366 = vdwg.mxu0
    %7367 = vmatprep.subr.bf16.mxu0 %v6883
    %7368 = vmatpush1.bf16.msra.mxu0 %v6882
    %7369 = vmatprep.subr.bf16.mxu0 %v6888
    %7370 = vmatpush1.bf16.msra.mxu0 %v6887
    %7371 = vmatprep.subr.bf16.mxu0 %v6893
    %7372 = vmatpush1.bf16.msra.mxu0 %v6892
    %7373 = vmatprep.subr.bf16.mxu0 %v6898
    %7374 = vmatpush1.bf16.msra.mxu0 %v6897
    %7375 = vmatprep.subr.bf16.mxu0 %v6903
    %7376 = vmatpush1.bf16.msra.mxu0 %v6902
    %7377 = vmatprep.subr.bf16.mxu0 %v6908
    %7378 = vmatpush1.bf16.msra.mxu0 %v6907
    %7379 = vmatprep.subr.bf16.mxu0 %v6913
    %7380 = vmatpush1.bf16.msra.mxu0 %v6912
    %7381 = vmatprep.subr.bf16.mxu0 %v6918
    %7382 = vmatpush1.bf16.msra.mxu0 %v6917
    %7383 = vmatprep.subr.bf16.mxu0 %v6923
    %7384 = vmatpush1.bf16.msra.mxu0 %v6922
    %7385 = vmatprep.subr.bf16.mxu0 %v6928
    %7386 = vmatpush1.bf16.msra.mxu0 %v6927
    %7387 = vmatprep.subr.bf16.mxu0 %v6933
    %7388 = vmatpush1.bf16.msra.mxu0 %v6932
    %7389 = vmatprep.subr.bf16.mxu0 %v6938
    %7390 = vmatpush1.bf16.msra.mxu0 %v6937
    %7391 = vmatprep.subr.bf16.mxu0 %v6943
    %7392 = vmatpush1.bf16.msra.mxu0 %v6942
    %7393 = vmatprep.subr.bf16.mxu0 %v6948
    %7394 = vmatpush1.bf16.msra.mxu0 %v6947
    %7395 = vmatprep.subr.bf16.mxu0 %v6953
    %7396 = vmatpush1.bf16.msra.mxu0 %v6952
    %7397 = vmatprep.subr.bf16.mxu0 %v6958
    %7398 = vmatpush1.bf16.msra.mxu0 %v6957
    %7399 = vmatprep.mubr.bf16.mxu0 %v6084
    %7400 = vmatmul.mubr.bf16.gmra.mrb[0].mxu0 %v6083
    %v7401 = vpop.f32.mrb[0].mxu0
    %v7402 = vadd.f32 0.0, %v7401
    %v7403 = vpop.f32.mrb[0].mxu0
    %v7404 = vadd.f32 0.0, %v7403
    %v7405 = vpop.f32.mrb[0].mxu0
    %v7406 = vpop.f32.mrb[0].mxu0
    %7407 = vdwg.mxu0
    %7408 = vmatprep.subr.bf16.mxu0 %v6963
    %7409 = vmatpush1.bf16.msra.mxu0 %v6962
    %7410 = vmatprep.subr.bf16.mxu0 %v6968
    %7411 = vmatpush1.bf16.msra.mxu0 %v6967
    %7412 = vmatprep.subr.bf16.mxu0 %v6973
    %7413 = vmatpush1.bf16.msra.mxu0 %v6972
    %7414 = vmatprep.subr.bf16.mxu0 %v6978
    %7415 = vmatpush1.bf16.msra.mxu0 %v6977
    %7416 = vmatprep.subr.bf16.mxu0 %v6983
    %7417 = vmatpush1.bf16.msra.mxu0 %v6982
    %7418 = vmatprep.subr.bf16.mxu0 %v6988
    %7419 = vmatpush1.bf16.msra.mxu0 %v6987
    %7420 = vmatprep.subr.bf16.mxu0 %v6993
    %7421 = vmatpush1.bf16.msra.mxu0 %v6992
    %7422 = vmatprep.subr.bf16.mxu0 %v6998
    %7423 = vmatpush1.bf16.msra.mxu0 %v6997
    %7424 = vmatprep.subr.bf16.mxu0 %v7003
    %7425 = vmatpush1.bf16.msra.mxu0 %v7002
    %7426 = vmatprep.subr.bf16.mxu0 %v7008
    %7427 = vmatpush1.bf16.msra.mxu0 %v7007
    %7428 = vmatprep.subr.bf16.mxu0 %v7013
    %7429 = vmatpush1.bf16.msra.mxu0 %v7012
    %7430 = vmatprep.subr.bf16.mxu0 %v7018
    %7431 = vmatpush1.bf16.msra.mxu0 %v7017
    %7432 = vmatprep.subr.bf16.mxu0 %v7023
    %7433 = vmatpush1.bf16.msra.mxu0 %v7022
    %7434 = vmatprep.subr.bf16.mxu0 %v7028
    %7435 = vmatpush1.bf16.msra.mxu0 %v7027
    %7436 = vmatprep.subr.bf16.mxu0 %v7033
    %7437 = vmatpush1.bf16.msra.mxu0 %v7032
    %7438 = vmatprep.subr.bf16.mxu0 %v7038
    %7439 = vmatpush1.bf16.msra.mxu0 %v7037
    %7440 = vmatprep.mubr.bf16.mxu0 %v6086
    %7441 = vmatmul.mubr.bf16.gmra.mrb[0].mxu0 %v6085
    %v7442 = vpop.f32.mrb[0].mxu0
    %v7443 = vadd.f32 %v7402, %v7442
    %v7444 = vpop.f32.mrb[0].mxu0
    %v7445 = vadd.f32 %v7404, %v7444
    %v7446 = vpop.f32.mrb[0].mxu0
    %v7447 = vpop.f32.mrb[0].mxu0
    %7448 = vdwg.mxu0
    %7449 = vmatprep.subr.bf16.mxu0 %v7043
    %7450 = vmatpush1.bf16.msra.mxu0 %v7042
    %7451 = vmatprep.subr.bf16.mxu0 %v7048
    %7452 = vmatpush1.bf16.msra.mxu0 %v7047
    %7453 = vmatprep.subr.bf16.mxu0 %v7053
    %7454 = vmatpush1.bf16.msra.mxu0 %v7052
    %7455 = vmatprep.subr.bf16.mxu0 %v7058
    %7456 = vmatpush1.bf16.msra.mxu0 %v7057
    %7457 = vmatprep.subr.bf16.mxu0 0
    %7458 = vmatpush1.bf16.msra.mxu0 0
    %7459 = vmatprep.subr.bf16.mxu0 0
    %7460 = vmatpush1.bf16.msra.mxu0 0
    %7461 = vmatprep.subr.bf16.mxu0 0
    %7462 = vmatpush1.bf16.msra.mxu0 0
    %7463 = vmatprep.subr.bf16.mxu0 0
    %7464 = vmatpush1.bf16.msra.mxu0 0
    %7465 = vmatprep.subr.bf16.mxu0 0
    %7466 = vmatpush1.bf16.msra.mxu0 0
    %7467 = vmatprep.subr.bf16.mxu0 0
    %7468 = vmatpush1.bf16.msra.mxu0 0
    %7469 = vmatprep.subr.bf16.mxu0 0
    %7470 = vmatpush1.bf16.msra.mxu0 0
    %7471 = vmatprep.subr.bf16.mxu0 0
    %7472 = vmatpush1.bf16.msra.mxu0 0
    %7473 = vmatprep.subr.bf16.mxu0 0
    %7474 = vmatpush1.bf16.msra.mxu0 0
    %7475 = vmatprep.subr.bf16.mxu0 0
    %7476 = vmatpush1.bf16.msra.mxu0 0
    %7477 = vmatprep.subr.bf16.mxu0 0
    %7478 = vmatpush1.bf16.msra.mxu0 0
    %7479 = vmatprep.subr.bf16.mxu0 0
    %7480 = vmatpush1.bf16.msra.mxu0 0
    %7481 = vmatprep.mubr.bf16.mxu0 0
    %7482 = vmatmul.mubr.bf16.gmra.mrb[0].mxu0 %v7242
    %v7483 = vpop.f32.mrb[0].mxu0
    %v7484 = vadd.f32 %v7443, %v7483
    %v7485 = vpop.f32.mrb[0].mxu0
    %v7486 = vadd.f32 %v7445, %v7485
    %v7487 = vpop.f32.mrb[0].mxu0
    %v7488 = vpop.f32.mrb[0].mxu0
    %7489 = vdwg.mxu0
    %7490 = vmatprep.subr.bf16.mxu0 0
    %7491 = vmatpush1.bf16.msra.mxu0 %v6884
    %7492 = vmatprep.subr.bf16.mxu0 0
    %7493 = vmatpush1.bf16.msra.mxu0 %v6889
    %7494 = vmatprep.subr.bf16.mxu0 0
    %7495 = vmatpush1.bf16.msra.mxu0 %v6894
    %7496 = vmatprep.subr.bf16.mxu0 0
    %7497 = vmatpush1.bf16.msra.mxu0 %v6899
    %7498 = vmatprep.subr.bf16.mxu0 0
    %7499 = vmatpush1.bf16.msra.mxu0 %v6904
    %7500 = vmatprep.subr.bf16.mxu0 0
    %7501 = vmatpush1.bf16.msra.mxu0 %v6909
    %7502 = vmatprep.subr.bf16.mxu0 0
    %7503 = vmatpush1.bf16.msra.mxu0 %v6914
    %7504 = vmatprep.subr.bf16.mxu0 0
    %7505 = vmatpush1.bf16.msra.mxu0 %v6919
    %7506 = vmatprep.subr.bf16.mxu0 0
    %7507 = vmatpush1.bf16.msra.mxu0 %v6924
    %7508 = vmatprep.subr.bf16.mxu0 0
    %7509 = vmatpush1.bf16.msra.mxu0 %v6929
    %7510 = vmatprep.subr.bf16.mxu0 0
    %7511 = vmatpush1.bf16.msra.mxu0 %v6934
    %7512 = vmatprep.subr.bf16.mxu0 0
    %7513 = vmatpush1.bf16.msra.mxu0 %v6939
    %7514 = vmatprep.subr.bf16.mxu0 0
    %7515 = vmatpush1.bf16.msra.mxu0 %v6944
    %7516 = vmatprep.subr.bf16.mxu0 0
    %7517 = vmatpush1.bf16.msra.mxu0 %v6949
    %7518 = vmatprep.subr.bf16.mxu0 0
    %7519 = vmatpush1.bf16.msra.mxu0 %v6954
    %7520 = vmatprep.subr.bf16.mxu0 0
    %7521 = vmatpush1.bf16.msra.mxu0 %v6959
    %7522 = vmatprep.mubr.bf16.mxu0 %v6084
    %7523 = vmatmul.mubr.bf16.gmra.mrb[0].mxu0 %v6083
    %v7524 = vpop.f32.mrb[0].mxu0
    %v7525 = vadd.f32 0.0, %v7524
    %v7526 = vpop.f32.mrb[0].mxu0
    %v7527 = vpop.f32.mrb[0].mxu0
    %v7528 = vpop.f32.mrb[0].mxu0
    %7529 = vdwg.mxu0
    %7530 = vmatprep.subr.bf16.mxu0 0
    %7531 = vmatpush1.bf16.msra.mxu0 %v6964
    %7532 = vmatprep.subr.bf16.mxu0 0
    %7533 = vmatpush1.bf16.msra.mxu0 %v6969
    %7534 = vmatprep.subr.bf16.mxu0 0
    %7535 = vmatpush1.bf16.msra.mxu0 %v6974
    %7536 = vmatprep.subr.bf16.mxu0 0
    %7537 = vmatpush1.bf16.msra.mxu0 %v6979
    %7538 = vmatprep.subr.bf16.mxu0 0
    %7539 = vmatpush1.bf16.msra.mxu0 %v6984
    %7540 = vmatprep.subr.bf16.mxu0 0
    %7541 = vmatpush1.bf16.msra.mxu0 %v6989
    %7542 = vmatprep.subr.bf16.mxu0 0
    %7543 = vmatpush1.bf16.msra.mxu0 %v6994
    %7544 = vmatprep.subr.bf16.mxu0 0
    %7545 = vmatpush1.bf16.msra.mxu0 %v6999
    %7546 = vmatprep.subr.bf16.mxu0 0
    %7547 = vmatpush1.bf16.msra.mxu0 %v7004
    %7548 = vmatprep.subr.bf16.mxu0 0
    %7549 = vmatpush1.bf16.msra.mxu0 %v7009
    %7550 = vmatprep.subr.bf16.mxu0 0
    %7551 = vmatpush1.bf16.msra.mxu0 %v7014
    %7552 = vmatprep.subr.bf16.mxu0 0
    %7553 = vmatpush1.bf16.msra.mxu0 %v7019
    %7554 = vmatprep.subr.bf16.mxu0 0
    %7555 = vmatpush1.bf16.msra.mxu0 %v7024
    %7556 = vmatprep.subr.bf16.mxu0 0
    %7557 = vmatpush1.bf16.msra.mxu0 %v7029
    %7558 = vmatprep.subr.bf16.mxu0 0
    %7559 = vmatpush1.bf16.msra.mxu0 %v7034
    %7560 = vmatprep.subr.bf16.mxu0 0
    %7561 = vmatpush1.bf16.msra.mxu0 %v7039
    %7562 = vmatprep.mubr.bf16.mxu0 %v6086
    %7563 = vmatmul.mubr.bf16.gmra.mrb[0].mxu0 %v6085
    %v7564 = vpop.f32.mrb[0].mxu0
    %v7565 = vadd.f32 %v7525, %v7564
    %v7566 = vpop.f32.mrb[0].mxu0
    %v7567 = vpop.f32.mrb[0].mxu0
    %v7568 = vpop.f32.mrb[0].mxu0
    %7569 = vdwg.mxu0
    %7570 = vmatprep.subr.bf16.mxu0 0
    %7571 = vmatpush1.bf16.msra.mxu0 %v7044
    %7572 = vmatprep.subr.bf16.mxu0 0
    %7573 = vmatpush1.bf16.msra.mxu0 %v7049
    %7574 = vmatprep.subr.bf16.mxu0 0
    %7575 = vmatpush1.bf16.msra.mxu0 %v7054
    %7576 = vmatprep.subr.bf16.mxu0 0
    %7577 = vmatpush1.bf16.msra.mxu0 %v7059
    %7578 = vmatprep.subr.bf16.mxu0 0
    %7579 = vmatpush1.bf16.msra.mxu0 0
    %7580 = vmatprep.subr.bf16.mxu0 0
    %7581 = vmatpush1.bf16.msra.mxu0 0
    %7582 = vmatprep.subr.bf16.mxu0 0
    %7583 = vmatpush1.bf16.msra.mxu0 0
    %7584 = vmatprep.subr.bf16.mxu0 0
    %7585 = vmatpush1.bf16.msra.mxu0 0
    %7586 = vmatprep.subr.bf16.mxu0 0
    %7587 = vmatpush1.bf16.msra.mxu0 0
    %7588 = vmatprep.subr.bf16.mxu0 0
    %7589 = vmatpush1.bf16.msra.mxu0 0
    %7590 = vmatprep.subr.bf16.mxu0 0
    %7591 = vmatpush1.bf16.msra.mxu0 0
    %7592 = vmatprep.subr.bf16.mxu0 0
    %7593 = vmatpush1.bf16.msra.mxu0 0
    %7594 = vmatprep.subr.bf16.mxu0 0
    %7595 = vmatpush1.bf16.msra.mxu0 0
    %7596 = vmatprep.subr.bf16.mxu0 0
    %7597 = vmatpush1.bf16.msra.mxu0 0
    %7598 = vmatprep.subr.bf16.mxu0 0
    %7599 = vmatpush1.bf16.msra.mxu0 0
    %7600 = vmatprep.subr.bf16.mxu0 0
    %7601 = vmatpush1.bf16.msra.mxu0 0
    %7602 = vmatprep.mubr.bf16.mxu0 0
    %7603 = vmatmul.mubr.bf16.gmra.mrb[0].mxu0 %v7242
    %v7604 = vpop.f32.mrb[0].mxu0
    %v7605 = vadd.f32 %v7565, %v7604
    %v7606 = vpop.f32.mrb[0].mxu0
    %v7607 = vpop.f32.mrb[0].mxu0
    %v7608 = vpop.f32.mrb[0].mxu0
    %7609 = vdwg.mxu0
    %v7826 = vunpack.c.l.b16 %v5867
    %v7827 = vunpack.c.h.b16 %v5867
    %v7828 = vunpack.c.l.b16 %v5868
    %v7829 = vunpack.c.h.b16 %v5868
    %v7830 = vunpack.c.l.b16 %v5869
    %v7831 = vunpack.c.l.b16 %v5870
    %v7832 = vunpack.c.h.b16 %v5870
    %v7833 = vunpack.c.l.b16 %v5871
    %v7834 = vunpack.c.h.b16 %v5871
    %v7835 = vunpack.c.l.b16 %v5872
    %v7836 = vunpack.c.l.b16 %v5873
    %v7837 = vunpack.c.h.b16 %v5873
    %v7838 = vunpack.c.l.b16 %v5874
    %v7839 = vunpack.c.h.b16 %v5874
    %v7840 = vunpack.c.l.b16 %v5875
    %v7841 = vunpack.c.l.b16 %v5876
    %v7842 = vunpack.c.h.b16 %v5876
    %v7843 = vunpack.c.l.b16 %v5877
    %v7844 = vunpack.c.h.b16 %v5877
    %v7845 = vunpack.c.l.b16 %v5878
    %v7846 = vunpack.c.l.b16 %v5879
    %v7847 = vunpack.c.h.b16 %v5879
    %v7848 = vunpack.c.l.b16 %v5880
    %v7849 = vunpack.c.h.b16 %v5880
    %v7850 = vunpack.c.l.b16 %v5881
    %v7851 = vunpack.c.l.b16 %v5882
    %v7852 = vunpack.c.h.b16 %v5882
    %v7853 = vunpack.c.l.b16 %v5883
    %v7854 = vunpack.c.h.b16 %v5883
    %v7855 = vunpack.c.l.b16 %v5884
    %v7856 = vunpack.c.l.b16 %v5885
    %v7857 = vunpack.c.h.b16 %v5885
    %v7858 = vunpack.c.l.b16 %v5886
    %v7859 = vunpack.c.h.b16 %v5886
    %v7860 = vunpack.c.l.b16 %v5887
    %v7861 = vunpack.c.l.b16 %v5888
    %v7862 = vunpack.c.h.b16 %v5888
    %v7863 = vunpack.c.l.b16 %v5889
    %v7864 = vunpack.c.h.b16 %v5889
    %v7865 = vunpack.c.l.b16 %v5890
    %v7866 = vunpack.c.l.b16 %v5891
    %v7867 = vunpack.c.h.b16 %v5891
    %v7868 = vunpack.c.l.b16 %v5892
    %v7869 = vunpack.c.h.b16 %v5892
    %v7870 = vunpack.c.l.b16 %v5893
    %v7871 = vunpack.c.l.b16 %v5894
    %v7872 = vunpack.c.h.b16 %v5894
    %v7873 = vunpack.c.l.b16 %v5895
    %v7874 = vunpack.c.h.b16 %v5895
    %v7875 = vunpack.c.l.b16 %v5896
    %v7876 = vunpack.c.l.b16 %v5897
    %v7877 = vunpack.c.h.b16 %v5897
    %v7878 = vunpack.c.l.b16 %v5898
    %v7879 = vunpack.c.h.b16 %v5898
    %v7880 = vunpack.c.l.b16 %v5899
    %v7881 = vunpack.c.l.b16 %v5900
    %v7882 = vunpack.c.h.b16 %v5900
    %v7883 = vunpack.c.l.b16 %v5901
    %v7884 = vunpack.c.h.b16 %v5901
    %v7885 = vunpack.c.l.b16 %v5902
    %v7886 = vunpack.c.l.b16 %v5903
    %v7887 = vunpack.c.h.b16 %v5903
    %v7888 = vunpack.c.l.b16 %v5904
    %v7889 = vunpack.c.h.b16 %v5904
    %v7890 = vunpack.c.l.b16 %v5905
    %v7891 = vunpack.c.l.b16 %v5906
    %v7892 = vunpack.c.h.b16 %v5906
    %v7893 = vunpack.c.l.b16 %v5907
    %v7894 = vunpack.c.h.b16 %v5907
    %v7895 = vunpack.c.l.b16 %v5908
    %v7896 = vunpack.c.l.b16 %v5909
    %v7897 = vunpack.c.h.b16 %v5909
    %v7898 = vunpack.c.l.b16 %v5910
    %v7899 = vunpack.c.h.b16 %v5910
    %v7900 = vunpack.c.l.b16 %v5911
    %v7901 = vunpack.c.l.b16 %v5912
    %v7902 = vunpack.c.h.b16 %v5912
    %v7903 = vunpack.c.l.b16 %v5913
    %v7904 = vunpack.c.h.b16 %v5913
    %v7905 = vunpack.c.l.b16 %v5914
    %v7906 = vunpack.c.l.b16 %v5915
    %v7907 = vunpack.c.h.b16 %v5915
    %v7908 = vunpack.c.l.b16 %v5916
    %v7909 = vunpack.c.h.b16 %v5916
    %v7910 = vunpack.c.l.b16 %v5917
    %v7911 = vunpack.c.l.b16 %v5918
    %v7912 = vunpack.c.h.b16 %v5918
    %v7913 = vunpack.c.l.b16 %v5919
    %v7914 = vunpack.c.h.b16 %v5919
    %v7915 = vunpack.c.l.b16 %v5920
    %v7916 = vunpack.c.l.b16 %v5921
    %v7917 = vunpack.c.h.b16 %v5921
    %v7918 = vunpack.c.l.b16 %v5922
    %v7919 = vunpack.c.h.b16 %v5922
    %v7920 = vunpack.c.l.b16 %v5923
    %v7921 = vunpack.c.l.b16 %v5924
    %v7922 = vunpack.c.h.b16 %v5924
    %v7923 = vunpack.c.l.b16 %v5925
    %v7924 = vunpack.c.h.b16 %v5925
    %v7925 = vunpack.c.l.b16 %v5926
    %v7926 = vunpack.c.l.b16 %v5927
    %v7927 = vunpack.c.h.b16 %v5927
    %v7928 = vunpack.c.l.b16 %v5928
    %v7929 = vunpack.c.h.b16 %v5928
    %v7930 = vunpack.c.l.b16 %v5929
    %v7931 = vunpack.c.l.b16 %v5930
    %v7932 = vunpack.c.h.b16 %v5930
    %v7933 = vunpack.c.l.b16 %v5931
    %v7934 = vunpack.c.h.b16 %v5931
    %v7935 = vunpack.c.l.b16 %v5932
    %v7936 = vunpack.c.l.b16 %v5933
    %v7937 = vunpack.c.h.b16 %v5933
    %v7938 = vunpack.c.l.b16 %v5934
    %v7939 = vunpack.c.h.b16 %v5934
    %v7940 = vunpack.c.l.b16 %v5935
    %v7941 = vunpack.c.l.b16 %v5936
    %v7942 = vunpack.c.h.b16 %v5936
    %v7943 = vunpack.c.l.b16 %v5937
    %v7944 = vunpack.c.h.b16 %v5937
    %v7945 = vunpack.c.l.b16 %v5938
    %v7946 = vunpack.c.l.b16 %v5939
    %v7947 = vunpack.c.h.b16 %v5939
    %v7948 = vunpack.c.l.b16 %v5940
    %v7949 = vunpack.c.h.b16 %v5940
    %v7950 = vunpack.c.l.b16 %v5941
    %v7951 = vunpack.c.l.b16 %v5942
    %v7952 = vunpack.c.h.b16 %v5942
    %v7953 = vunpack.c.l.b16 %v5943
    %v7954 = vunpack.c.h.b16 %v5943
    %v7955 = vunpack.c.l.b16 %v5944
    %v7956 = vunpack.c.l.b16 %v5945
    %v7957 = vunpack.c.h.b16 %v5945
    %v7958 = vunpack.c.l.b16 %v5946
    %v7959 = vunpack.c.h.b16 %v5946
    %v7960 = vunpack.c.l.b16 %v5947
    %v7961 = vunpack.c.l.b16 %v5948
    %v7962 = vunpack.c.h.b16 %v5948
    %v7963 = vunpack.c.l.b16 %v5949
    %v7964 = vunpack.c.h.b16 %v5949
    %v7965 = vunpack.c.l.b16 %v5950
    %v7966 = vunpack.c.l.b16 %v5951
    %v7967 = vunpack.c.h.b16 %v5951
    %v7968 = vunpack.c.l.b16 %v5952
    %v7969 = vunpack.c.h.b16 %v5952
    %v7970 = vunpack.c.l.b16 %v5953
    %v7971 = vunpack.c.l.b16 %v5954
    %v7972 = vunpack.c.h.b16 %v5954
    %v7973 = vunpack.c.l.b16 %v5955
    %v7974 = vunpack.c.h.b16 %v5955
    %v7975 = vunpack.c.l.b16 %v5956
    %v7976 = vunpack.c.l.b16 %v5957
    %v7977 = vunpack.c.h.b16 %v5957
    %v7978 = vunpack.c.l.b16 %v5958
    %v7979 = vunpack.c.h.b16 %v5958
    %v7980 = vunpack.c.l.b16 %v5959
    %v7981 = vunpack.c.l.b16 %v5960
    %v7982 = vunpack.c.h.b16 %v5960
    %v7983 = vunpack.c.l.b16 %v5961
    %v7984 = vunpack.c.h.b16 %v5961
    %v7985 = vunpack.c.l.b16 %v5962
    %v7986 = vunpack.c.l.b16 %v5963
    %v7987 = vunpack.c.h.b16 %v5963
    %v7988 = vunpack.c.l.b16 %v5964
    %v7989 = vunpack.c.h.b16 %v5964
    %v7990 = vunpack.c.l.b16 %v5965
    %v7991 = vunpack.c.l.b16 %v5966
    %v7992 = vunpack.c.h.b16 %v5966
    %v7993 = vunpack.c.l.b16 %v5967
    %v7994 = vunpack.c.h.b16 %v5967
    %v7995 = vunpack.c.l.b16 %v5968
    %v7996 = vunpack.c.l.b16 %v5969
    %v7997 = vunpack.c.h.b16 %v5969
    %v7998 = vunpack.c.l.b16 %v5970
    %v7999 = vunpack.c.h.b16 %v5970
    %v8000 = vunpack.c.l.b16 %v5971
    %v8001 = vunpack.c.l.b16 %v5972
    %v8002 = vunpack.c.h.b16 %v5972
    %v8003 = vunpack.c.l.b16 %v5973
    %v8004 = vunpack.c.h.b16 %v5973
    %v8005 = vunpack.c.l.b16 %v5974
    %v8006 = vunpack.c.l.b16 %v5975
    %v8007 = vunpack.c.h.b16 %v5975
    %v8008 = vunpack.c.l.b16 %v5976
    %v8009 = vunpack.c.h.b16 %v5976
    %v8010 = vunpack.c.l.b16 %v5977
    %v8011 = vunpack.c.l.b16 %v5978
    %v8012 = vunpack.c.h.b16 %v5978
    %v8013 = vunpack.c.l.b16 %v5979
    %v8014 = vunpack.c.h.b16 %v5979
    %v8015 = vunpack.c.l.b16 %v5980
    %v8016 = vunpack.c.l.b16 %v5981
    %v8017 = vunpack.c.h.b16 %v5981
    %v8018 = vunpack.c.l.b16 %v5982
    %v8019 = vunpack.c.h.b16 %v5982
    %v8020 = vunpack.c.l.b16 %v5983
    %v8021 = vunpack.c.l.b16 %v5984
    %v8022 = vunpack.c.h.b16 %v5984
    %v8023 = vunpack.c.l.b16 %v5985
    %v8024 = vunpack.c.h.b16 %v5985
    %v8025 = vunpack.c.l.b16 %v5986
    %v8026 = vunpack.c.l.b16 %v5987
    %v8027 = vunpack.c.h.b16 %v5987
    %v8028 = vunpack.c.l.b16 %v5988
    %v8029 = vunpack.c.h.b16 %v5988
    %v8030 = vunpack.c.l.b16 %v5989
    %v8031 = vunpack.c.l.b16 %v5990
    %v8032 = vunpack.c.h.b16 %v5990
    %v8033 = vunpack.c.l.b16 %v5991
    %v8034 = vunpack.c.h.b16 %v5991
    %v8035 = vunpack.c.l.b16 %v5992
    %v8036 = vunpack.c.l.b16 %v5993
    %v8037 = vunpack.c.h.b16 %v5993
    %v8038 = vunpack.c.l.b16 %v5994
    %v8039 = vunpack.c.h.b16 %v5994
    %v8040 = vunpack.c.l.b16 %v5995
    %v8041 = vunpack.c.l.b16 %v5996
    %v8042 = vunpack.c.h.b16 %v5996
    %v8043 = vunpack.c.l.b16 %v5997
    %v8044 = vunpack.c.h.b16 %v5997
    %v8045 = vunpack.c.l.b16 %v5998
    %v8046 = vunpack.c.l.b16 %v5999
    %v8047 = vunpack.c.h.b16 %v5999
    %v8048 = vunpack.c.l.b16 %v6000
    %v8049 = vunpack.c.h.b16 %v6000
    %v8050 = vunpack.c.l.b16 %v6001
    %v8051 = vunpack.c.l.b16 %v6002
    %v8052 = vunpack.c.h.b16 %v6002
    %v8053 = vunpack.c.l.b16 %v6003
    %v8054 = vunpack.c.h.b16 %v6003
    %v8055 = vunpack.c.l.b16 %v6004
    %v8056 = vunpack.c.l.b16 %v6005
    %v8057 = vunpack.c.h.b16 %v6005
    %v8058 = vunpack.c.l.b16 %v6006
    %v8059 = vunpack.c.h.b16 %v6006
    %v8060 = vunpack.c.l.b16 %v6007
    %v8061 = vunpack.c.l.b16 %v6008
    %v8062 = vunpack.c.h.b16 %v6008
    %v8063 = vunpack.c.l.b16 %v6009
    %v8064 = vunpack.c.h.b16 %v6009
    %v8065 = vunpack.c.l.b16 %v6010
    %v8066 = vunpack.c.l.b16 %v6011
    %v8067 = vunpack.c.h.b16 %v6011
    %v8068 = vunpack.c.l.b16 %v6012
    %v8069 = vunpack.c.h.b16 %v6012
    %v8070 = vunpack.c.l.b16 %v6013
    %v8071 = vunpack.c.l.b16 %v6014
    %v8072 = vunpack.c.h.b16 %v6014
    %v8073 = vunpack.c.l.b16 %v6015
    %v8074 = vunpack.c.h.b16 %v6015
    %v8075 = vunpack.c.l.b16 %v6016
    %v8076 = vunpack.c.l.b16 %v6017
    %v8077 = vunpack.c.h.b16 %v6017
    %v8078 = vunpack.c.l.b16 %v6018
    %v8079 = vunpack.c.h.b16 %v6018
    %v8080 = vunpack.c.l.b16 %v6019
    %v8081 = vunpack.c.l.b16 %v6020
    %v8082 = vunpack.c.h.b16 %v6020
    %v8083 = vunpack.c.l.b16 %v6021
    %v8084 = vunpack.c.h.b16 %v6021
    %v8085 = vunpack.c.l.b16 %v6022
    %v8086 = vunpack.c.l.b16 %v6023
    %v8087 = vunpack.c.h.b16 %v6023
    %v8088 = vunpack.c.l.b16 %v6024
    %v8089 = vunpack.c.h.b16 %v6024
    %v8090 = vunpack.c.l.b16 %v6025
    %v8091 = vunpack.c.l.b16 %v6026
    %v8092 = vunpack.c.h.b16 %v6026
    %v8093 = vunpack.c.l.b16 %v6027
    %v8094 = vunpack.c.h.b16 %v6027
    %v8095 = vunpack.c.l.b16 %v6028
    %v8096 = vunpack.c.l.b16 %v6029
    %v8097 = vunpack.c.h.b16 %v6029
    %v8098 = vunpack.c.l.b16 %v6030
    %v8099 = vunpack.c.h.b16 %v6030
    %v8100 = vunpack.c.l.b16 %v6031
    %v8101 = vunpack.c.l.b16 %v6032
    %v8102 = vunpack.c.h.b16 %v6032
    %v8103 = vunpack.c.l.b16 %v6033
    %v8104 = vunpack.c.h.b16 %v6033
    %v8105 = vunpack.c.l.b16 %v6034
    %v8106 = vunpack.c.l.b16 %v6035
    %v8107 = vunpack.c.h.b16 %v6035
    %v8108 = vunpack.c.l.b16 %v6036
    %v8109 = vunpack.c.h.b16 %v6036
    %v8110 = vunpack.c.l.b16 %v6037
    %v8111 = vunpack.c.l.b16 %v6038
    %v8112 = vunpack.c.h.b16 %v6038
    %v8113 = vunpack.c.l.b16 %v6039
    %v8114 = vunpack.c.h.b16 %v6039
    %v8115 = vunpack.c.l.b16 %v6040
    %v8116 = vunpack.c.l.b16 %v6041
    %v8117 = vunpack.c.h.b16 %v6041
    %v8118 = vunpack.c.l.b16 %v6042
    %v8119 = vunpack.c.h.b16 %v6042
    %v8120 = vunpack.c.l.b16 %v6043
    %v8121 = vunpack.c.l.b16 %v6044
    %v8122 = vunpack.c.h.b16 %v6044
    %v8123 = vunpack.c.l.b16 %v6045
    %v8124 = vunpack.c.h.b16 %v6045
    %v8125 = vunpack.c.l.b16 %v6046
    %v8126 = vunpack.c.l.b16 %v6047
    %v8127 = vunpack.c.h.b16 %v6047
    %v8128 = vunpack.c.l.b16 %v6048
    %v8129 = vunpack.c.h.b16 %v6048
    %v8130 = vunpack.c.l.b16 %v6049
    %v8131 = vunpack.c.l.b16 %v6050
    %v8132 = vunpack.c.h.b16 %v6050
    %v8133 = vunpack.c.l.b16 %v6051
    %v8134 = vunpack.c.h.b16 %v6051
    %v8135 = vunpack.c.l.b16 %v6052
    %v8136 = vunpack.c.l.b16 %v6053
    %v8137 = vunpack.c.h.b16 %v6053
    %v8138 = vunpack.c.l.b16 %v6054
    %v8139 = vunpack.c.h.b16 %v6054
    %v8140 = vunpack.c.l.b16 %v6055
    %v8141 = vunpack.c.l.b16 %v6056
    %v8142 = vunpack.c.h.b16 %v6056
    %v8143 = vunpack.c.l.b16 %v6057
    %v8144 = vunpack.c.h.b16 %v6057
    %v8145 = vunpack.c.l.b16 %v6058
    %v8146 = vunpack.c.l.b16 %v6059
    %v8147 = vunpack.c.h.b16 %v6059
    %v8148 = vunpack.c.l.b16 %v6060
    %v8149 = vunpack.c.h.b16 %v6060
    %v8150 = vunpack.c.l.b16 %v6061
    %v8151 = vunpack.c.l.b16 %v6062
    %v8152 = vunpack.c.h.b16 %v6062
    %v8153 = vunpack.c.l.b16 %v6063
    %v8154 = vunpack.c.h.b16 %v6063
    %v8155 = vunpack.c.l.b16 %v6064
    %v8156 = vunpack.c.l.b16 %v6065
    %v8157 = vunpack.c.h.b16 %v6065
    %v8158 = vunpack.c.l.b16 %v6066
    %v8159 = vunpack.c.h.b16 %v6066
    %v8160 = vunpack.c.l.b16 %v6067
    %v8161 = vunpack.c.l.b16 %v6068
    %v8162 = vunpack.c.h.b16 %v6068
    %v8163 = vunpack.c.l.b16 %v6069
    %v8164 = vunpack.c.h.b16 %v6069
    %v8165 = vunpack.c.l.b16 %v6070
    %v8166 = vunpack.c.l.b16 %v6071
    %v8167 = vunpack.c.h.b16 %v6071
    %v8168 = vunpack.c.l.b16 %v6072
    %v8169 = vunpack.c.h.b16 %v6072
    %v8170 = vunpack.c.l.b16 %v6073
    %v8171 = vunpack.c.l.b16 %v6074
    %v8172 = vunpack.c.h.b16 %v6074
    %v8173 = vunpack.c.l.b16 %v6075
    %v8174 = vunpack.c.h.b16 %v6075
    %v8175 = vunpack.c.l.b16 %v6076
    %v8176 = vunpack.c.l.b16 %v6077
    %v8177 = vunpack.c.h.b16 %v6077
    %v8178 = vunpack.c.l.b16 %v6078
    %v8179 = vunpack.c.h.b16 %v6078
    %v8180 = vunpack.c.l.b16 %v6079
    %v8181 = vunpack.c.l.b16 %v6080
    %v8182 = vunpack.c.h.b16 %v6080
    %v8183 = vunpack.c.l.b16 %v6081
    %v8184 = vunpack.c.h.b16 %v6081
    %v8185 = vunpack.c.l.b16 %v6082
    %v8186 = vpack.c.b16 %v7831, %v7826
    %v8187 = vpack.c.b16 %v7832, %v7827
    %v8188 = vpack.c.b16 %v7833, %v7828
    %v8189 = vpack.c.b16 %v7834, %v7829
    %v8190 = vpack.c.b16 %v7835, %v7830
    %v8191 = vpack.c.b16 %v7841, %v7836
    %v8192 = vpack.c.b16 %v7842, %v7837
    %v8193 = vpack.c.b16 %v7843, %v7838
    %v8194 = vpack.c.b16 %v7844, %v7839
    %v8195 = vpack.c.b16 %v7845, %v7840
    %v8196 = vpack.c.b16 %v7851, %v7846
    %v8197 = vpack.c.b16 %v7852, %v7847
    %v8198 = vpack.c.b16 %v7853, %v7848
    %v8199 = vpack.c.b16 %v7854, %v7849
    %v8200 = vpack.c.b16 %v7855, %v7850
    %v8201 = vpack.c.b16 %v7861, %v7856
    %v8202 = vpack.c.b16 %v7862, %v7857
    %v8203 = vpack.c.b16 %v7863, %v7858
    %v8204 = vpack.c.b16 %v7864, %v7859
    %v8205 = vpack.c.b16 %v7865, %v7860
    %v8206 = vpack.c.b16 %v7871, %v7866
    %v8207 = vpack.c.b16 %v7872, %v7867
    %v8208 = vpack.c.b16 %v7873, %v7868
    %v8209 = vpack.c.b16 %v7874, %v7869
    %v8210 = vpack.c.b16 %v7875, %v7870
    %v8211 = vpack.c.b16 %v7881, %v7876
    %v8212 = vpack.c.b16 %v7882, %v7877
    %v8213 = vpack.c.b16 %v7883, %v7878
    %v8214 = vpack.c.b16 %v7884, %v7879
    %v8215 = vpack.c.b16 %v7885, %v7880
    %v8216 = vpack.c.b16 %v7891, %v7886
    %v8217 = vpack.c.b16 %v7892, %v7887
    %v8218 = vpack.c.b16 %v7893, %v7888
    %v8219 = vpack.c.b16 %v7894, %v7889
    %v8220 = vpack.c.b16 %v7895, %v7890
    %v8221 = vpack.c.b16 %v7901, %v7896
    %v8222 = vpack.c.b16 %v7902, %v7897
    %v8223 = vpack.c.b16 %v7903, %v7898
    %v8224 = vpack.c.b16 %v7904, %v7899
    %v8225 = vpack.c.b16 %v7905, %v7900
    %v8226 = vpack.c.b16 %v7911, %v7906
    %v8227 = vpack.c.b16 %v7912, %v7907
    %v8228 = vpack.c.b16 %v7913, %v7908
    %v8229 = vpack.c.b16 %v7914, %v7909
    %v8230 = vpack.c.b16 %v7915, %v7910
    %v8231 = vpack.c.b16 %v7921, %v7916
    %v8232 = vpack.c.b16 %v7922, %v7917
    %v8233 = vpack.c.b16 %v7923, %v7918
    %v8234 = vpack.c.b16 %v7924, %v7919
    %v8235 = vpack.c.b16 %v7925, %v7920
    %v8236 = vpack.c.b16 %v7931, %v7926
    %v8237 = vpack.c.b16 %v7932, %v7927
    %v8238 = vpack.c.b16 %v7933, %v7928
    %v8239 = vpack.c.b16 %v7934, %v7929
    %v8240 = vpack.c.b16 %v7935, %v7930
    %v8241 = vpack.c.b16 %v7941, %v7936
    %v8242 = vpack.c.b16 %v7942, %v7937
    %v8243 = vpack.c.b16 %v7943, %v7938
    %v8244 = vpack.c.b16 %v7944, %v7939
    %v8245 = vpack.c.b16 %v7945, %v7940
    %v8246 = vpack.c.b16 %v7951, %v7946
    %v8247 = vpack.c.b16 %v7952, %v7947
    %v8248 = vpack.c.b16 %v7953, %v7948
    %v8249 = vpack.c.b16 %v7954, %v7949
    %v8250 = vpack.c.b16 %v7955, %v7950
    %v8251 = vpack.c.b16 %v7961, %v7956
    %v8252 = vpack.c.b16 %v7962, %v7957
    %v8253 = vpack.c.b16 %v7963, %v7958
    %v8254 = vpack.c.b16 %v7964, %v7959
    %v8255 = vpack.c.b16 %v7965, %v7960
    %v8256 = vpack.c.b16 %v7971, %v7966
    %v8257 = vpack.c.b16 %v7972, %v7967
    %v8258 = vpack.c.b16 %v7973, %v7968
    %v8259 = vpack.c.b16 %v7974, %v7969
    %v8260 = vpack.c.b16 %v7975, %v7970
    %v8261 = vpack.c.b16 %v7981, %v7976
    %v8262 = vpack.c.b16 %v7982, %v7977
    %v8263 = vpack.c.b16 %v7983, %v7978
    %v8264 = vpack.c.b16 %v7984, %v7979
    %v8265 = vpack.c.b16 %v7985, %v7980
    %v8266 = vpack.c.b16 %v7991, %v7986
    %v8267 = vpack.c.b16 %v7992, %v7987
    %v8268 = vpack.c.b16 %v7993, %v7988
    %v8269 = vpack.c.b16 %v7994, %v7989
    %v8270 = vpack.c.b16 %v7995, %v7990
    %v8271 = vpack.c.b16 %v8001, %v7996
    %v8272 = vpack.c.b16 %v8002, %v7997
    %v8273 = vpack.c.b16 %v8003, %v7998
    %v8274 = vpack.c.b16 %v8004, %v7999
    %v8275 = vpack.c.b16 %v8005, %v8000
    %v8276 = vpack.c.b16 %v8011, %v8006
    %v8277 = vpack.c.b16 %v8012, %v8007
    %v8278 = vpack.c.b16 %v8013, %v8008
    %v8279 = vpack.c.b16 %v8014, %v8009
    %v8280 = vpack.c.b16 %v8015, %v8010
    %v8281 = vpack.c.b16 %v8021, %v8016
    %v8282 = vpack.c.b16 %v8022, %v8017
    %v8283 = vpack.c.b16 %v8023, %v8018
    %v8284 = vpack.c.b16 %v8024, %v8019
    %v8285 = vpack.c.b16 %v8025, %v8020
    %v8286 = vpack.c.b16 %v8031, %v8026
    %v8287 = vpack.c.b16 %v8032, %v8027
    %v8288 = vpack.c.b16 %v8033, %v8028
    %v8289 = vpack.c.b16 %v8034, %v8029
    %v8290 = vpack.c.b16 %v8035, %v8030
    %v8291 = vpack.c.b16 %v8041, %v8036
    %v8292 = vpack.c.b16 %v8042, %v8037
    %v8293 = vpack.c.b16 %v8043, %v8038
    %v8294 = vpack.c.b16 %v8044, %v8039
    %v8295 = vpack.c.b16 %v8045, %v8040
    %v8296 = vpack.c.b16 %v8051, %v8046
    %v8297 = vpack.c.b16 %v8052, %v8047
    %v8298 = vpack.c.b16 %v8053, %v8048
    %v8299 = vpack.c.b16 %v8054, %v8049
    %v8300 = vpack.c.b16 %v8055, %v8050
    %v8301 = vpack.c.b16 %v8061, %v8056
    %v8302 = vpack.c.b16 %v8062, %v8057
    %v8303 = vpack.c.b16 %v8063, %v8058
    %v8304 = vpack.c.b16 %v8064, %v8059
    %v8305 = vpack.c.b16 %v8065, %v8060
    %v8306 = vpack.c.b16 %v8071, %v8066
    %v8307 = vpack.c.b16 %v8072, %v8067
    %v8308 = vpack.c.b16 %v8073, %v8068
    %v8309 = vpack.c.b16 %v8074, %v8069
    %v8310 = vpack.c.b16 %v8075, %v8070
    %v8311 = vpack.c.b16 %v8081, %v8076
    %v8312 = vpack.c.b16 %v8082, %v8077
    %v8313 = vpack.c.b16 %v8083, %v8078
    %v8314 = vpack.c.b16 %v8084, %v8079
    %v8315 = vpack.c.b16 %v8085, %v8080
    %v8316 = vpack.c.b16 %v8091, %v8086
    %v8317 = vpack.c.b16 %v8092, %v8087
    %v8318 = vpack.c.b16 %v8093, %v8088
    %v8319 = vpack.c.b16 %v8094, %v8089
    %v8320 = vpack.c.b16 %v8095, %v8090
    %v8321 = vpack.c.b16 %v8101, %v8096
    %v8322 = vpack.c.b16 %v8102, %v8097
    %v8323 = vpack.c.b16 %v8103, %v8098
    %v8324 = vpack.c.b16 %v8104, %v8099
    %v8325 = vpack.c.b16 %v8105, %v8100
    %v8326 = vpack.c.b16 %v8111, %v8106
    %v8327 = vpack.c.b16 %v8112, %v8107
    %v8328 = vpack.c.b16 %v8113, %v8108
    %v8329 = vpack.c.b16 %v8114, %v8109
    %v8330 = vpack.c.b16 %v8115, %v8110
    %v8331 = vpack.c.b16 %v8121, %v8116
    %v8332 = vpack.c.b16 %v8122, %v8117
    %v8333 = vpack.c.b16 %v8123, %v8118
    %v8334 = vpack.c.b16 %v8124, %v8119
    %v8335 = vpack.c.b16 %v8125, %v8120
    %v8336 = vpack.c.b16 %v8131, %v8126
    %v8337 = vpack.c.b16 %v8132, %v8127
    %v8338 = vpack.c.b16 %v8133, %v8128
    %v8339 = vpack.c.b16 %v8134, %v8129
    %v8340 = vpack.c.b16 %v8135, %v8130
    %v8341 = vpack.c.b16 %v8141, %v8136
    %v8342 = vpack.c.b16 %v8142, %v8137
    %v8343 = vpack.c.b16 %v8143, %v8138
    %v8344 = vpack.c.b16 %v8144, %v8139
    %v8345 = vpack.c.b16 %v8145, %v8140
    %v8346 = vpack.c.b16 %v8151, %v8146
    %v8347 = vpack.c.b16 %v8152, %v8147
    %v8348 = vpack.c.b16 %v8153, %v8148
    %v8349 = vpack.c.b16 %v8154, %v8149
    %v8350 = vpack.c.b16 %v8155, %v8150
    %v8351 = vpack.c.b16 %v8161, %v8156
    %v8352 = vpack.c.b16 %v8162, %v8157
    %v8353 = vpack.c.b16 %v8163, %v8158
    %v8354 = vpack.c.b16 %v8164, %v8159
    %v8355 = vpack.c.b16 %v8165, %v8160
    %v8356 = vpack.c.b16 %v8171, %v8166
    %v8357 = vpack.c.b16 %v8172, %v8167
    %v8358 = vpack.c.b16 %v8173, %v8168
    %v8359 = vpack.c.b16 %v8174, %v8169
    %v8360 = vpack.c.b16 %v8175, %v8170
    %v8361 = vpack.c.b16 %v8181, %v8176
    %v8362 = vpack.c.b16 %v8182, %v8177
    %v8363 = vpack.c.b16 %v8183, %v8178
    %v8364 = vpack.c.b16 %v8184, %v8179
    %v8365 = vpack.c.b16 %v8185, %v8180
    %v8547 = vsel %vm7240, %v5866, 0
    %8549 = vmatprep.subr.bf16.mxu0 %v8187
    %8550 = vmatpush1.bf16.msra.mxu0 %v8186
    %8551 = vmatprep.subr.bf16.mxu0 %v8192
    %8552 = vmatpush1.bf16.msra.mxu0 %v8191
    %8553 = vmatprep.subr.bf16.mxu0 %v8197
    %8554 = vmatpush1.bf16.msra.mxu0 %v8196
    %8555 = vmatprep.subr.bf16.mxu0 %v8202
    %8556 = vmatpush1.bf16.msra.mxu0 %v8201
    %8557 = vmatprep.subr.bf16.mxu0 %v8207
    %8558 = vmatpush1.bf16.msra.mxu0 %v8206
    %8559 = vmatprep.subr.bf16.mxu0 %v8212
    %8560 = vmatpush1.bf16.msra.mxu0 %v8211
    %8561 = vmatprep.subr.bf16.mxu0 %v8217
    %8562 = vmatpush1.bf16.msra.mxu0 %v8216
    %8563 = vmatprep.subr.bf16.mxu0 %v8222
    %8564 = vmatpush1.bf16.msra.mxu0 %v8221
    %8565 = vmatprep.subr.bf16.mxu0 %v8227
    %8566 = vmatpush1.bf16.msra.mxu0 %v8226
    %8567 = vmatprep.subr.bf16.mxu0 %v8232
    %8568 = vmatpush1.bf16.msra.mxu0 %v8231
    %8569 = vmatprep.subr.bf16.mxu0 %v8237
    %8570 = vmatpush1.bf16.msra.mxu0 %v8236
    %8571 = vmatprep.subr.bf16.mxu0 %v8242
    %8572 = vmatpush1.bf16.msra.mxu0 %v8241
    %8573 = vmatprep.subr.bf16.mxu0 %v8247
    %8574 = vmatpush1.bf16.msra.mxu0 %v8246
    %8575 = vmatprep.subr.bf16.mxu0 %v8252
    %8576 = vmatpush1.bf16.msra.mxu0 %v8251
    %8577 = vmatprep.subr.bf16.mxu0 %v8257
    %8578 = vmatpush1.bf16.msra.mxu0 %v8256
    %8579 = vmatprep.subr.bf16.mxu0 %v8262
    %8580 = vmatpush1.bf16.msra.mxu0 %v8261
    %8581 = vmatprep.mubr.bf16.mxu0 %v5863
    %8582 = vmatmul.mubr.bf16.gmra.mrb[0].mxu0 %v5862
    %v8583 = vpop.f32.mrb[0].mxu0
    %v8584 = vadd.f32 %v7361, %v8583
    %v8585 = vpop.f32.mrb[0].mxu0
    %v8586 = vadd.f32 %v7363, %v8585
    %v8587 = vpop.f32.mrb[0].mxu0
    %v8588 = vpop.f32.mrb[0].mxu0
    %8589 = vdwg.mxu0
    %8590 = vmatprep.subr.bf16.mxu0 %v8267
    %8591 = vmatpush1.bf16.msra.mxu0 %v8266
    %8592 = vmatprep.subr.bf16.mxu0 %v8272
    %8593 = vmatpush1.bf16.msra.mxu0 %v8271
    %8594 = vmatprep.subr.bf16.mxu0 %v8277
    %8595 = vmatpush1.bf16.msra.mxu0 %v8276
    %8596 = vmatprep.subr.bf16.mxu0 %v8282
    %8597 = vmatpush1.bf16.msra.mxu0 %v8281
    %8598 = vmatprep.subr.bf16.mxu0 %v8287
    %8599 = vmatpush1.bf16.msra.mxu0 %v8286
    %8600 = vmatprep.subr.bf16.mxu0 %v8292
    %8601 = vmatpush1.bf16.msra.mxu0 %v8291
    %8602 = vmatprep.subr.bf16.mxu0 %v8297
    %8603 = vmatpush1.bf16.msra.mxu0 %v8296
    %8604 = vmatprep.subr.bf16.mxu0 %v8302
    %8605 = vmatpush1.bf16.msra.mxu0 %v8301
    %8606 = vmatprep.subr.bf16.mxu0 %v8307
    %8607 = vmatpush1.bf16.msra.mxu0 %v8306
    %8608 = vmatprep.subr.bf16.mxu0 %v8312
    %8609 = vmatpush1.bf16.msra.mxu0 %v8311
    %8610 = vmatprep.subr.bf16.mxu0 %v8317
    %8611 = vmatpush1.bf16.msra.mxu0 %v8316
    %8612 = vmatprep.subr.bf16.mxu0 %v8322
    %8613 = vmatpush1.bf16.msra.mxu0 %v8321
    %8614 = vmatprep.subr.bf16.mxu0 %v8327
    %8615 = vmatpush1.bf16.msra.mxu0 %v8326
    %8616 = vmatprep.subr.bf16.mxu0 %v8332
    %8617 = vmatpush1.bf16.msra.mxu0 %v8331
    %8618 = vmatprep.subr.bf16.mxu0 %v8337
    %8619 = vmatpush1.bf16.msra.mxu0 %v8336
    %8620 = vmatprep.subr.bf16.mxu0 %v8342
    %8621 = vmatpush1.bf16.msra.mxu0 %v8341
    %8622 = vmatprep.mubr.bf16.mxu0 %v5865
    %8623 = vmatmul.mubr.bf16.gmra.mrb[0].mxu0 %v5864
    %v8624 = vpop.f32.mrb[0].mxu0
    %v8625 = vadd.f32 %v8584, %v8624
    %v8626 = vpop.f32.mrb[0].mxu0
    %v8627 = vadd.f32 %v8586, %v8626
    %v8628 = vpop.f32.mrb[0].mxu0
    %v8629 = vpop.f32.mrb[0].mxu0
    %8630 = vdwg.mxu0
    %8631 = vmatprep.subr.bf16.mxu0 %v8347
    %8632 = vmatpush1.bf16.msra.mxu0 %v8346
    %8633 = vmatprep.subr.bf16.mxu0 %v8352
    %8634 = vmatpush1.bf16.msra.mxu0 %v8351
    %8635 = vmatprep.subr.bf16.mxu0 %v8357
    %8636 = vmatpush1.bf16.msra.mxu0 %v8356
    %8637 = vmatprep.subr.bf16.mxu0 %v8362
    %8638 = vmatpush1.bf16.msra.mxu0 %v8361
    %8639 = vmatprep.subr.bf16.mxu0 0
    %8640 = vmatpush1.bf16.msra.mxu0 0
    %8641 = vmatprep.subr.bf16.mxu0 0
    %8642 = vmatpush1.bf16.msra.mxu0 0
    %8643 = vmatprep.subr.bf16.mxu0 0
    %8644 = vmatpush1.bf16.msra.mxu0 0
    %8645 = vmatprep.subr.bf16.mxu0 0
    %8646 = vmatpush1.bf16.msra.mxu0 0
    %8647 = vmatprep.subr.bf16.mxu0 0
    %8648 = vmatpush1.bf16.msra.mxu0 0
    %8649 = vmatprep.subr.bf16.mxu0 0
    %8650 = vmatpush1.bf16.msra.mxu0 0
    %8651 = vmatprep.subr.bf16.mxu0 0
    %8652 = vmatpush1.bf16.msra.mxu0 0
    %8653 = vmatprep.subr.bf16.mxu0 0
    %8654 = vmatpush1.bf16.msra.mxu0 0
    %8655 = vmatprep.subr.bf16.mxu0 0
    %8656 = vmatpush1.bf16.msra.mxu0 0
    %8657 = vmatprep.subr.bf16.mxu0 0
    %8658 = vmatpush1.bf16.msra.mxu0 0
    %8659 = vmatprep.subr.bf16.mxu0 0
    %8660 = vmatpush1.bf16.msra.mxu0 0
    %8661 = vmatprep.subr.bf16.mxu0 0
    %8662 = vmatpush1.bf16.msra.mxu0 0
    %8663 = vmatprep.mubr.bf16.mxu0 0
    %8664 = vmatmul.mubr.bf16.gmra.mrb[0].mxu0 %v8547
    %v8665 = vpop.f32.mrb[0].mxu0
    %v8666 = vadd.f32 %v8625, %v8665
    %v8667 = vpop.f32.mrb[0].mxu0
    %v8668 = vadd.f32 %v8627, %v8667
    %v8669 = vpop.f32.mrb[0].mxu0
    %v8670 = vpop.f32.mrb[0].mxu0
    %8671 = vdwg.mxu0
    %8672 = vmatprep.subr.bf16.mxu0 %v8189
    %8673 = vmatpush1.bf16.msra.mxu0 %v8188
    %8674 = vmatprep.subr.bf16.mxu0 %v8194
    %8675 = vmatpush1.bf16.msra.mxu0 %v8193
    %8676 = vmatprep.subr.bf16.mxu0 %v8199
    %8677 = vmatpush1.bf16.msra.mxu0 %v8198
    %8678 = vmatprep.subr.bf16.mxu0 %v8204
    %8679 = vmatpush1.bf16.msra.mxu0 %v8203
    %8680 = vmatprep.subr.bf16.mxu0 %v8209
    %8681 = vmatpush1.bf16.msra.mxu0 %v8208
    %8682 = vmatprep.subr.bf16.mxu0 %v8214
    %8683 = vmatpush1.bf16.msra.mxu0 %v8213
    %8684 = vmatprep.subr.bf16.mxu0 %v8219
    %8685 = vmatpush1.bf16.msra.mxu0 %v8218
    %8686 = vmatprep.subr.bf16.mxu0 %v8224
    %8687 = vmatpush1.bf16.msra.mxu0 %v8223
    %8688 = vmatprep.subr.bf16.mxu0 %v8229
    %8689 = vmatpush1.bf16.msra.mxu0 %v8228
    %8690 = vmatprep.subr.bf16.mxu0 %v8234
    %8691 = vmatpush1.bf16.msra.mxu0 %v8233
    %8692 = vmatprep.subr.bf16.mxu0 %v8239
    %8693 = vmatpush1.bf16.msra.mxu0 %v8238
    %8694 = vmatprep.subr.bf16.mxu0 %v8244
    %8695 = vmatpush1.bf16.msra.mxu0 %v8243
    %8696 = vmatprep.subr.bf16.mxu0 %v8249
    %8697 = vmatpush1.bf16.msra.mxu0 %v8248
    %8698 = vmatprep.subr.bf16.mxu0 %v8254
    %8699 = vmatpush1.bf16.msra.mxu0 %v8253
    %8700 = vmatprep.subr.bf16.mxu0 %v8259
    %8701 = vmatpush1.bf16.msra.mxu0 %v8258
    %8702 = vmatprep.subr.bf16.mxu0 %v8264
    %8703 = vmatpush1.bf16.msra.mxu0 %v8263
    %8704 = vmatprep.mubr.bf16.mxu0 %v5863
    %8705 = vmatmul.mubr.bf16.gmra.mrb[0].mxu0 %v5862
    %v8706 = vpop.f32.mrb[0].mxu0
    %v8707 = vadd.f32 %v7484, %v8706
    %v8708 = vpop.f32.mrb[0].mxu0
    %v8709 = vadd.f32 %v7486, %v8708
    %v8710 = vpop.f32.mrb[0].mxu0
    %v8711 = vpop.f32.mrb[0].mxu0
    %8712 = vdwg.mxu0
    %8713 = vmatprep.subr.bf16.mxu0 %v8269
    %8714 = vmatpush1.bf16.msra.mxu0 %v8268
    %8715 = vmatprep.subr.bf16.mxu0 %v8274
    %8716 = vmatpush1.bf16.msra.mxu0 %v8273
    %8717 = vmatprep.subr.bf16.mxu0 %v8279
    %8718 = vmatpush1.bf16.msra.mxu0 %v8278
    %8719 = vmatprep.subr.bf16.mxu0 %v8284
    %8720 = vmatpush1.bf16.msra.mxu0 %v8283
    %8721 = vmatprep.subr.bf16.mxu0 %v8289
    %8722 = vmatpush1.bf16.msra.mxu0 %v8288
    %8723 = vmatprep.subr.bf16.mxu0 %v8294
    %8724 = vmatpush1.bf16.msra.mxu0 %v8293
    %8725 = vmatprep.subr.bf16.mxu0 %v8299
    %8726 = vmatpush1.bf16.msra.mxu0 %v8298
    %8727 = vmatprep.subr.bf16.mxu0 %v8304
    %8728 = vmatpush1.bf16.msra.mxu0 %v8303
    %8729 = vmatprep.subr.bf16.mxu0 %v8309
    %8730 = vmatpush1.bf16.msra.mxu0 %v8308
    %8731 = vmatprep.subr.bf16.mxu0 %v8314
    %8732 = vmatpush1.bf16.msra.mxu0 %v8313
    %8733 = vmatprep.subr.bf16.mxu0 %v8319
    %8734 = vmatpush1.bf16.msra.mxu0 %v8318
    %8735 = vmatprep.subr.bf16.mxu0 %v8324
    %8736 = vmatpush1.bf16.msra.mxu0 %v8323
    %8737 = vmatprep.subr.bf16.mxu0 %v8329
    %8738 = vmatpush1.bf16.msra.mxu0 %v8328
    %8739 = vmatprep.subr.bf16.mxu0 %v8334
    %8740 = vmatpush1.bf16.msra.mxu0 %v8333
    %8741 = vmatprep.subr.bf16.mxu0 %v8339
    %8742 = vmatpush1.bf16.msra.mxu0 %v8338
    %8743 = vmatprep.subr.bf16.mxu0 %v8344
    %8744 = vmatpush1.bf16.msra.mxu0 %v8343
    %8745 = vmatprep.mubr.bf16.mxu0 %v5865
    %8746 = vmatmul.mubr.bf16.gmra.mrb[0].mxu0 %v5864
    %v8747 = vpop.f32.mrb[0].mxu0
    %v8748 = vadd.f32 %v8707, %v8747
    %v8749 = vpop.f32.mrb[0].mxu0
    %v8750 = vadd.f32 %v8709, %v8749
    %v8751 = vpop.f32.mrb[0].mxu0
    %v8752 = vpop.f32.mrb[0].mxu0
    %8753 = vdwg.mxu0
    %8754 = vmatprep.subr.bf16.mxu0 %v8349
    %8755 = vmatpush1.bf16.msra.mxu0 %v8348
    %8756 = vmatprep.subr.bf16.mxu0 %v8354
    %8757 = vmatpush1.bf16.msra.mxu0 %v8353
    %8758 = vmatprep.subr.bf16.mxu0 %v8359
    %8759 = vmatpush1.bf16.msra.mxu0 %v8358
    %8760 = vmatprep.subr.bf16.mxu0 %v8364
    %8761 = vmatpush1.bf16.msra.mxu0 %v8363
    %8762 = vmatprep.subr.bf16.mxu0 0
    %8763 = vmatpush1.bf16.msra.mxu0 0
    %8764 = vmatprep.subr.bf16.mxu0 0
    %8765 = vmatpush1.bf16.msra.mxu0 0
    %8766 = vmatprep.subr.bf16.mxu0 0
    %8767 = vmatpush1.bf16.msra.mxu0 0
    %8768 = vmatprep.subr.bf16.mxu0 0
    %8769 = vmatpush1.bf16.msra.mxu0 0
    %8770 = vmatprep.subr.bf16.mxu0 0
    %8771 = vmatpush1.bf16.msra.mxu0 0
    %8772 = vmatprep.subr.bf16.mxu0 0
    %8773 = vmatpush1.bf16.msra.mxu0 0
    %8774 = vmatprep.subr.bf16.mxu0 0
    %8775 = vmatpush1.bf16.msra.mxu0 0
    %8776 = vmatprep.subr.bf16.mxu0 0
    %8777 = vmatpush1.bf16.msra.mxu0 0
    %8778 = vmatprep.subr.bf16.mxu0 0
    %8779 = vmatpush1.bf16.msra.mxu0 0
    %8780 = vmatprep.subr.bf16.mxu0 0
    %8781 = vmatpush1.bf16.msra.mxu0 0
    %8782 = vmatprep.subr.bf16.mxu0 0
    %8783 = vmatpush1.bf16.msra.mxu0 0
    %8784 = vmatprep.subr.bf16.mxu0 0
    %8785 = vmatpush1.bf16.msra.mxu0 0
    %8786 = vmatprep.mubr.bf16.mxu0 0
    %8787 = vmatmul.mubr.bf16.gmra.mrb[0].mxu0 %v8547
    %v8788 = vpop.f32.mrb[0].mxu0
    %v8789 = vadd.f32 %v8748, %v8788
    %v8790 = vpop.f32.mrb[0].mxu0
    %v8791 = vadd.f32 %v8750, %v8790
    %v8792 = vpop.f32.mrb[0].mxu0
    %v8793 = vpop.f32.mrb[0].mxu0
    %8794 = vdwg.mxu0
    %8795 = vmatprep.subr.bf16.mxu0 0
    %8796 = vmatpush1.bf16.msra.mxu0 %v8190
    %8797 = vmatprep.subr.bf16.mxu0 0
    %8798 = vmatpush1.bf16.msra.mxu0 %v8195
    %8799 = vmatprep.subr.bf16.mxu0 0
    %8800 = vmatpush1.bf16.msra.mxu0 %v8200
    %8801 = vmatprep.subr.bf16.mxu0 0
    %8802 = vmatpush1.bf16.msra.mxu0 %v8205
    %8803 = vmatprep.subr.bf16.mxu0 0
    %8804 = vmatpush1.bf16.msra.mxu0 %v8210
    %8805 = vmatprep.subr.bf16.mxu0 0
    %8806 = vmatpush1.bf16.msra.mxu0 %v8215
    %8807 = vmatprep.subr.bf16.mxu0 0
    %8808 = vmatpush1.bf16.msra.mxu0 %v8220
    %8809 = vmatprep.subr.bf16.mxu0 0
    %8810 = vmatpush1.bf16.msra.mxu0 %v8225
    %8811 = vmatprep.subr.bf16.mxu0 0
    %8812 = vmatpush1.bf16.msra.mxu0 %v8230
    %8813 = vmatprep.subr.bf16.mxu0 0
    %8814 = vmatpush1.bf16.msra.mxu0 %v8235
    %8815 = vmatprep.subr.bf16.mxu0 0
    %8816 = vmatpush1.bf16.msra.mxu0 %v8240
    %8817 = vmatprep.subr.bf16.mxu0 0
    %8818 = vmatpush1.bf16.msra.mxu0 %v8245
    %8819 = vmatprep.subr.bf16.mxu0 0
    %8820 = vmatpush1.bf16.msra.mxu0 %v8250
    %8821 = vmatprep.subr.bf16.mxu0 0
    %8822 = vmatpush1.bf16.msra.mxu0 %v8255
    %8823 = vmatprep.subr.bf16.mxu0 0
    %8824 = vmatpush1.bf16.msra.mxu0 %v8260
    %8825 = vmatprep.subr.bf16.mxu0 0
    %8826 = vmatpush1.bf16.msra.mxu0 %v8265
    %8827 = vmatprep.mubr.bf16.mxu0 %v5863
    %8828 = vmatmul.mubr.bf16.gmra.mrb[0].mxu0 %v5862
    %v8829 = vpop.f32.mrb[0].mxu0
    %v8830 = vadd.f32 %v7605, %v8829
    %v8831 = vpop.f32.mrb[0].mxu0
    %v8832 = vpop.f32.mrb[0].mxu0
    %v8833 = vpop.f32.mrb[0].mxu0
    %8834 = vdwg.mxu0
    %8835 = vmatprep.subr.bf16.mxu0 0
    %8836 = vmatpush1.bf16.msra.mxu0 %v8270
    %8837 = vmatprep.subr.bf16.mxu0 0
    %8838 = vmatpush1.bf16.msra.mxu0 %v8275
    %8839 = vmatprep.subr.bf16.mxu0 0
    %8840 = vmatpush1.bf16.msra.mxu0 %v8280
    %8841 = vmatprep.subr.bf16.mxu0 0
    %8842 = vmatpush1.bf16.msra.mxu0 %v8285
    %8843 = vmatprep.subr.bf16.mxu0 0
    %8844 = vmatpush1.bf16.msra.mxu0 %v8290
    %8845 = vmatprep.subr.bf16.mxu0 0
    %8846 = vmatpush1.bf16.msra.mxu0 %v8295
    %8847 = vmatprep.subr.bf16.mxu0 0
    %8848 = vmatpush1.bf16.msra.mxu0 %v8300
    %8849 = vmatprep.subr.bf16.mxu0 0
    %8850 = vmatpush1.bf16.msra.mxu0 %v8305
    %8851 = vmatprep.subr.bf16.mxu0 0
    %8852 = vmatpush1.bf16.msra.mxu0 %v8310
    %8853 = vmatprep.subr.bf16.mxu0 0
    %8854 = vmatpush1.bf16.msra.mxu0 %v8315
    %8855 = vmatprep.subr.bf16.mxu0 0
    %8856 = vmatpush1.bf16.msra.mxu0 %v8320
    %8857 = vmatprep.subr.bf16.mxu0 0
    %8858 = vmatpush1.bf16.msra.mxu0 %v8325
    %8859 = vmatprep.subr.bf16.mxu0 0
    %8860 = vmatpush1.bf16.msra.mxu0 %v8330
    %8861 = vmatprep.subr.bf16.mxu0 0
    %8862 = vmatpush1.bf16.msra.mxu0 %v8335
    %8863 = vmatprep.subr.bf16.mxu0 0
    %8864 = vmatpush1.bf16.msra.mxu0 %v8340
    %8865 = vmatprep.subr.bf16.mxu0 0
    %8866 = vmatpush1.bf16.msra.mxu0 %v8345
    %8867 = vmatprep.mubr.bf16.mxu0 %v5865
    %8868 = vmatmul.mubr.bf16.gmra.mrb[0].mxu0 %v5864
    %v8869 = vpop.f32.mrb[0].mxu0
    %v8870 = vadd.f32 %v8830, %v8869
    %v8871 = vpop.f32.mrb[0].mxu0
    %v8872 = vpop.f32.mrb[0].mxu0
    %v8873 = vpop.f32.mrb[0].mxu0
    %8874 = vdwg.mxu0
    %8875 = vmatprep.subr.bf16.mxu0 0
    %8876 = vmatpush1.bf16.msra.mxu0 %v8350
    %8877 = vmatprep.subr.bf16.mxu0 0
    %8878 = vmatpush1.bf16.msra.mxu0 %v8355
    %8879 = vmatprep.subr.bf16.mxu0 0
    %8880 = vmatpush1.bf16.msra.mxu0 %v8360
    %8881 = vmatprep.subr.bf16.mxu0 0
    %8882 = vmatpush1.bf16.msra.mxu0 %v8365
    %8883 = vmatprep.subr.bf16.mxu0 0
    %8884 = vmatpush1.bf16.msra.mxu0 0
    %8885 = vmatprep.subr.bf16.mxu0 0
    %8886 = vmatpush1.bf16.msra.mxu0 0
    %8887 = vmatprep.subr.bf16.mxu0 0
    %8888 = vmatpush1.bf16.msra.mxu0 0
    %8889 = vmatprep.subr.bf16.mxu0 0
    %8890 = vmatpush1.bf16.msra.mxu0 0
    %8891 = vmatprep.subr.bf16.mxu0 0
    %8892 = vmatpush1.bf16.msra.mxu0 0
    %8893 = vmatprep.subr.bf16.mxu0 0
    %8894 = vmatpush1.bf16.msra.mxu0 0
    %8895 = vmatprep.subr.bf16.mxu0 0
    %8896 = vmatpush1.bf16.msra.mxu0 0
    %8897 = vmatprep.subr.bf16.mxu0 0
    %8898 = vmatpush1.bf16.msra.mxu0 0
    %8899 = vmatprep.subr.bf16.mxu0 0
    %8900 = vmatpush1.bf16.msra.mxu0 0
    %8901 = vmatprep.subr.bf16.mxu0 0
    %8902 = vmatpush1.bf16.msra.mxu0 0
    %8903 = vmatprep.subr.bf16.mxu0 0
    %8904 = vmatpush1.bf16.msra.mxu0 0
    %8905 = vmatprep.subr.bf16.mxu0 0
    %8906 = vmatpush1.bf16.msra.mxu0 0
    %8907 = vmatprep.mubr.bf16.mxu0 0
    %8908 = vmatmul.mubr.bf16.gmra.mrb[0].mxu0 %v8547
    %v8909 = vpop.f32.mrb[0].mxu0
    %v8910 = vadd.f32 %v8870, %v8909
    %v8911 = vpop.f32.mrb[0].mxu0
    %v8912 = vpop.f32.mrb[0].mxu0
    %v8913 = vpop.f32.mrb[0].mxu0
    %8914 = vdwg.mxu0
    %v8916 = vlaneseq
    %v8917 = vshrl.u32 %v8916, 7
    %v8918 = vsub.s32 0, %v8917
    %v8919 = vrot.slane %v51, %v8918
    %v8920 = vlaneseq
    %v8921 = vshrl.u32 %v8920, 7
    %v8922 = vsub.s32 1, %v8921
    %v8923 = vrot.slane %v51, %v8922
    %v8924 = vlaneseq
    %v8925 = vshrl.u32 %v8924, 7
    %v8926 = vsub.s32 2, %v8925
    %v8927 = vrot.slane %v51, %v8926
    %v8928 = vlaneseq
    %v8929 = vshrl.u32 %v8928, 7
    %v8930 = vsub.s32 3, %v8929
    %v8931 = vrot.slane %v51, %v8930
    %v8932 = vlaneseq
    %v8933 = vshrl.u32 %v8932, 7
    %v8934 = vsub.s32 4, %v8933
    %v8935 = vrot.slane %v51, %v8934
    %v8941 = vadd.f32 %v8666, %v8919
    %v8942 = vadd.f32 %v8668, %v8923
    %v8943 = vadd.f32 %v8789, %v8927
    %v8944 = vadd.f32 %v8791, %v8931
    %v8945 = vadd.f32 %v8910, %v8935
    %v8946 = vsel %vm2879, %v8941, 0.0
    %v8947 = vrot.slane %v8946, 4
    %v8948 = vadd.f32 %v8946, %v8947
    %v8949 = vrot.slane %v8948, 2
    %v8950 = vadd.f32 %v8948, %v8949
    %v8951 = vrot.slane %v8950, 1
    %v8952 = vadd.f32 %v8950, %v8951
    %v8953 = vsel %vm2879, %v8942, 0.0
    %v8954 = vrot.slane %v8953, 4
    %v8955 = vadd.f32 %v8953, %v8954
    %v8956 = vrot.slane %v8955, 2
    %v8957 = vadd.f32 %v8955, %v8956
    %v8958 = vrot.slane %v8957, 1
    %v8959 = vadd.f32 %v8957, %v8958
    %v8960 = vsel %vm2879, %v8943, 0.0
    %v8961 = vrot.slane %v8960, 4
    %v8962 = vadd.f32 %v8960, %v8961
    %v8963 = vrot.slane %v8962, 2
    %v8964 = vadd.f32 %v8962, %v8963
    %v8965 = vrot.slane %v8964, 1
    %v8966 = vadd.f32 %v8964, %v8965
    %v8967 = vsel %vm2879, %v8944, 0.0
    %v8968 = vrot.slane %v8967, 4
    %v8969 = vadd.f32 %v8967, %v8968
    %v8970 = vrot.slane %v8969, 2
    %v8971 = vadd.f32 %v8969, %v8970
    %v8972 = vrot.slane %v8971, 1
    %v8973 = vadd.f32 %v8971, %v8972
    %v8974 = vsel %vm2908, %v8945, 0.0
    %v8975 = vrot.slane %v8974, 4
    %v8976 = vadd.f32 %v8974, %v8975
    %v8977 = vrot.slane %v8976, 2
    %v8978 = vadd.f32 %v8976, %v8977
    %v8979 = vrot.slane %v8978, 1
    %v8980 = vadd.f32 %v8978, %v8979
    %v8981 = vmul.f32 %v8952, %v2916
    %v8982 = vmul.f32 %v8959, %v2916
    %v8983 = vmul.f32 %v8966, %v2916
    %v8984 = vmul.f32 %v8973, %v2916
    %v8985 = vmul.f32 %v8980, %v2916
    %v8986 = vsub.f32 %v8941, %v8981
    %v8987 = vsub.f32 %v8942, %v8982
    %v8988 = vsub.f32 %v8943, %v8983
    %v8989 = vsub.f32 %v8944, %v8984
    %v8990 = vsub.f32 %v8945, %v8985
    %v8991 = vmul.f32 %v8986, %v8986
    %v8992 = vmul.f32 %v8987, %v8987
    %v8993 = vmul.f32 %v8988, %v8988
    %v8994 = vmul.f32 %v8989, %v8989
    %v8995 = vmul.f32 %v8990, %v8990
    %v8996 = vsel %vm2879, %v8991, 0.0
    %v8997 = vrot.slane %v8996, 4
    %v8998 = vadd.f32 %v8996, %v8997
    %v8999 = vrot.slane %v8998, 2
    %v9000 = vadd.f32 %v8998, %v8999
    %v9001 = vrot.slane %v9000, 1
    %v9002 = vadd.f32 %v9000, %v9001
    %v9003 = vsel %vm2879, %v8992, 0.0
    %v9004 = vrot.slane %v9003, 4
    %v9005 = vadd.f32 %v9003, %v9004
    %v9006 = vrot.slane %v9005, 2
    %v9007 = vadd.f32 %v9005, %v9006
    %v9008 = vrot.slane %v9007, 1
    %v9009 = vadd.f32 %v9007, %v9008
    %v9010 = vsel %vm2879, %v8993, 0.0
    %v9011 = vrot.slane %v9010, 4
    %v9012 = vadd.f32 %v9010, %v9011
    %v9013 = vrot.slane %v9012, 2
    %v9014 = vadd.f32 %v9012, %v9013
    %v9015 = vrot.slane %v9014, 1
    %v9016 = vadd.f32 %v9014, %v9015
    %v9017 = vsel %vm2879, %v8994, 0.0
    %v9018 = vrot.slane %v9017, 4
    %v9019 = vadd.f32 %v9017, %v9018
    %v9020 = vrot.slane %v9019, 2
    %v9021 = vadd.f32 %v9019, %v9020
    %v9022 = vrot.slane %v9021, 1
    %v9023 = vadd.f32 %v9021, %v9022
    %v9024 = vsel %vm2908, %v8995, 0.0
    %v9025 = vrot.slane %v9024, 4
    %v9026 = vadd.f32 %v9024, %v9025
    %v9027 = vrot.slane %v9026, 2
    %v9028 = vadd.f32 %v9026, %v9027
    %v9029 = vrot.slane %v9028, 1
    %v9030 = vadd.f32 %v9028, %v9029
    %v9031 = vmul.f32 %v9002, %v2916
    %v9032 = vmul.f32 %v9009, %v2916
    %v9033 = vmul.f32 %v9016, %v2916
    %v9034 = vmul.f32 %v9023, %v2916
    %v9035 = vmul.f32 %v9030, %v2916
    %v9037 = vlaneseq
    %v9038 = vshrl.u32 %v9037, 7
    %v9039 = vsub.s32 0, %v9038
    %v9040 = vrot.slane %v55, %v9039
    %v9041 = vlaneseq
    %v9042 = vshrl.u32 %v9041, 7
    %v9043 = vsub.s32 1, %v9042
    %v9044 = vrot.slane %v55, %v9043
    %v9045 = vlaneseq
    %v9046 = vshrl.u32 %v9045, 7
    %v9047 = vsub.s32 2, %v9046
    %v9048 = vrot.slane %v55, %v9047
    %v9049 = vlaneseq
    %v9050 = vshrl.u32 %v9049, 7
    %v9051 = vsub.s32 3, %v9050
    %v9052 = vrot.slane %v55, %v9051
    %v9053 = vlaneseq
    %v9054 = vshrl.u32 %v9053, 7
    %v9055 = vsub.s32 4, %v9054
    %v9056 = vrot.slane %v55, %v9055
    %v9062 = vmul.f32 %v9040, %v8986
    %v9063 = vmul.f32 %v9044, %v8987
    %v9064 = vmul.f32 %v9048, %v8988
    %v9065 = vmul.f32 %v9052, %v8989
    %v9066 = vmul.f32 %v9056, %v8990
    %v9067 = vadd.f32 %v9031, 1e-05
    %v9068 = vadd.f32 %v9032, 1e-05
    %v9069 = vadd.f32 %v9033, 1e-05
    %v9070 = vadd.f32 %v9034, 1e-05
    %v9071 = vadd.f32 %v9035, 1e-05
    %v9072 = vrsqrt.pop %v9067
    %v9073 = vrsqrt.pop %v9068
    %v9074 = vrsqrt.pop %v9069
    %v9075 = vrsqrt.pop %v9070
    %v9076 = vrsqrt.pop %v9071
    %v9077 = vmul.f32 %v9062, %v9072
    %v9078 = vmul.f32 %v9063, %v9073
    %v9079 = vmul.f32 %v9064, %v9074
    %v9080 = vmul.f32 %v9065, %v9075
    %v9081 = vmul.f32 %v9066, %v9076
    %v9083 = vlaneseq
    %v9084 = vshrl.u32 %v9083, 7
    %v9085 = vsub.s32 0, %v9084
    %v9086 = vrot.slane %v59, %v9085
    %v9087 = vlaneseq
    %v9088 = vshrl.u32 %v9087, 7
    %v9089 = vsub.s32 1, %v9088
    %v9090 = vrot.slane %v59, %v9089
    %v9091 = vlaneseq
    %v9092 = vshrl.u32 %v9091, 7
    %v9093 = vsub.s32 2, %v9092
    %v9094 = vrot.slane %v59, %v9093
    %v9095 = vlaneseq
    %v9096 = vshrl.u32 %v9095, 7
    %v9097 = vsub.s32 3, %v9096
    %v9098 = vrot.slane %v59, %v9097
    %v9099 = vlaneseq
    %v9100 = vshrl.u32 %v9099, 7
    %v9101 = vsub.s32 4, %v9100
    %v9102 = vrot.slane %v59, %v9101
    %v9108 = vadd.f32 %v9077, %v9086
    %v9109 = vadd.f32 %v9078, %v9090
    %v9110 = vadd.f32 %v9079, %v9094
    %v9111 = vadd.f32 %v9080, %v9098
    %v9112 = vadd.f32 %v9081, %v9102
    %v9113 = vmax.f32 %v9108, 0.0
    %v9114 = vmax.f32 %v9109, 0.0
    %v9115 = vmax.f32 %v9110, 0.0
    %v9116 = vmax.f32 %v9111, 0.0
    %v9117 = vmax.f32 %v9112, 0.0
    %v9118 = vpack.c.bf16 %v9113, %v9113
    %v9119 = vpack.c.bf16 %v9114, %v9114
    %v9120 = vpack.c.bf16 %v9115, %v9115
    %v9121 = vpack.c.bf16 %v9116, %v9116
    %v9122 = vpack.c.bf16 %v9117, %v9117
    %v9123 = vld [vmem:[%s5] sm:$0xff]
    %v9124 = vld [vmem:[%s5 + $0x8] sm:$0xff]
    %v9125 = vld [vmem:[%s5 + $0x10] sm:$0xff]
    %v9126 = vld [vmem:[%s5 + $0x18] sm:$0xff]
    %v9127 = vld [vmem:[%s5 + $0x20] sm:$0xf]
    %v9128 = vld [vmem:[%s5 + $0x24] sm:$0xff]
    %v9129 = vld [vmem:[%s5 + $0x2c] sm:$0xff]
    %v9130 = vld [vmem:[%s5 + $0x34] sm:$0xff]
    %v9131 = vld [vmem:[%s5 + $0x3c] sm:$0xff]
    %v9132 = vld [vmem:[%s5 + $0x44] sm:$0xf]
    %v9133 = vld [vmem:[%s5 + $0x48] sm:$0xff]
    %v9134 = vld [vmem:[%s5 + $0x50] sm:$0xff]
    %v9135 = vld [vmem:[%s5 + $0x58] sm:$0xff]
    %v9136 = vld [vmem:[%s5 + $0x60] sm:$0xff]
    %v9137 = vld [vmem:[%s5 + $0x68] sm:$0xf]
    %v9138 = vld [vmem:[%s5 + $0x6c] sm:$0xff]
    %v9139 = vld [vmem:[%s5 + $0x74] sm:$0xff]
    %v9140 = vld [vmem:[%s5 + $0x7c] sm:$0xff]
    %v9141 = vld [vmem:[%s5 + $0x84] sm:$0xff]
    %v9142 = vld [vmem:[%s5 + $0x8c] sm:$0xf]
    %v9143 = vld [vmem:[%s5 + $0x90] sm:$0xff]
    %v9144 = vld [vmem:[%s5 + $0x98] sm:$0xff]
    %v9145 = vld [vmem:[%s5 + $0xa0] sm:$0xff]
    %v9146 = vld [vmem:[%s5 + $0xa8] sm:$0xff]
    %v9147 = vld [vmem:[%s5 + $0xb0] sm:$0xf]
    %v9148 = vld [vmem:[%s5 + $0xb4] sm:$0xff]
    %v9149 = vld [vmem:[%s5 + $0xbc] sm:$0xff]
    %v9150 = vld [vmem:[%s5 + $0xc4] sm:$0xff]
    %v9151 = vld [vmem:[%s5 + $0xcc] sm:$0xff]
    %v9152 = vld [vmem:[%s5 + $0xd4] sm:$0xf]
    %v9153 = vld [vmem:[%s5 + $0xd8] sm:$0xff]
    %v9154 = vld [vmem:[%s5 + $0xe0] sm:$0xff]
    %v9155 = vld [vmem:[%s5 + $0xe8] sm:$0xff]
    %v9156 = vld [vmem:[%s5 + $0xf0] sm:$0xff]
    %v9157 = vld [vmem:[%s5 + $0xf8] sm:$0xf]
    %v9158 = vld [vmem:[%s5 + $0xfc] sm:$0xff]
    %v9159 = vld [vmem:[%s5 + $0x104] sm:$0xff]
    %v9160 = vld [vmem:[%s5 + $0x10c] sm:$0xff]
    %v9161 = vld [vmem:[%s5 + $0x114] sm:$0xff]
    %v9162 = vld [vmem:[%s5 + $0x11c] sm:$0xf]
    %v9163 = vld [vmem:[%s5 + $0x120] sm:$0xff]
    %v9164 = vld [vmem:[%s5 + $0x128] sm:$0xff]
    %v9165 = vld [vmem:[%s5 + $0x130] sm:$0xff]
    %v9166 = vld [vmem:[%s5 + $0x138] sm:$0xff]
    %v9167 = vld [vmem:[%s5 + $0x140] sm:$0xf]
    %v9168 = vld [vmem:[%s5 + $0x144] sm:$0xff]
    %v9169 = vld [vmem:[%s5 + $0x14c] sm:$0xff]
    %v9170 = vld [vmem:[%s5 + $0x154] sm:$0xff]
    %v9171 = vld [vmem:[%s5 + $0x15c] sm:$0xff]
    %v9172 = vld [vmem:[%s5 + $0x164] sm:$0xf]
    %v9173 = vld [vmem:[%s5 + $0x168] sm:$0xff]
    %v9174 = vld [vmem:[%s5 + $0x170] sm:$0xff]
    %v9175 = vld [vmem:[%s5 + $0x178] sm:$0xff]
    %v9176 = vld [vmem:[%s5 + $0x180] sm:$0xff]
    %v9177 = vld [vmem:[%s5 + $0x188] sm:$0xf]
    %v9178 = vld [vmem:[%s5 + $0x18c] sm:$0xff]
    %v9179 = vld [vmem:[%s5 + $0x194] sm:$0xff]
    %v9180 = vld [vmem:[%s5 + $0x19c] sm:$0xff]
    %v9181 = vld [vmem:[%s5 + $0x1a4] sm:$0xff]
    %v9182 = vld [vmem:[%s5 + $0x1ac] sm:$0xf]
    %v9183 = vld [vmem:[%s5 + $0x1b0] sm:$0xff]
    %v9184 = vld [vmem:[%s5 + $0x1b8] sm:$0xff]
    %v9185 = vld [vmem:[%s5 + $0x1c0] sm:$0xff]
    %v9186 = vld [vmem:[%s5 + $0x1c8] sm:$0xff]
    %v9187 = vld [vmem:[%s5 + $0x1d0] sm:$0xf]
    %v9188 = vld [vmem:[%s5 + $0x1d4] sm:$0xff]
    %v9189 = vld [vmem:[%s5 + $0x1dc] sm:$0xff]
    %v9190 = vld [vmem:[%s5 + $0x1e4] sm:$0xff]
    %v9191 = vld [vmem:[%s5 + $0x1ec] sm:$0xff]
    %v9192 = vld [vmem:[%s5 + $0x1f4] sm:$0xf]
    %v9193 = vld [vmem:[%s5 + $0x1f8] sm:$0xff]
    %v9194 = vld [vmem:[%s5 + $0x200] sm:$0xff]
    %v9195 = vld [vmem:[%s5 + $0x208] sm:$0xff]
    %v9196 = vld [vmem:[%s5 + $0x210] sm:$0xff]
    %v9197 = vld [vmem:[%s5 + $0x218] sm:$0xf]
    %v9198 = vld [vmem:[%s5 + $0x21c] sm:$0xff]
    %v9199 = vld [vmem:[%s5 + $0x224] sm:$0xff]
    %v9200 = vld [vmem:[%s5 + $0x22c] sm:$0xff]
    %v9201 = vld [vmem:[%s5 + $0x234] sm:$0xff]
    %v9202 = vld [vmem:[%s5 + $0x23c] sm:$0xf]
    %v9203 = vld [vmem:[%s5 + $0x240] sm:$0xff]
    %v9204 = vld [vmem:[%s5 + $0x248] sm:$0xff]
    %v9205 = vld [vmem:[%s5 + $0x250] sm:$0xff]
    %v9206 = vld [vmem:[%s5 + $0x258] sm:$0xff]
    %v9207 = vld [vmem:[%s5 + $0x260] sm:$0xf]
    %v9208 = vld [vmem:[%s5 + $0x264] sm:$0xff]
    %v9209 = vld [vmem:[%s5 + $0x26c] sm:$0xff]
    %v9210 = vld [vmem:[%s5 + $0x274] sm:$0xff]
    %v9211 = vld [vmem:[%s5 + $0x27c] sm:$0xff]
    %v9212 = vld [vmem:[%s5 + $0x284] sm:$0xf]
    %v9213 = vld [vmem:[%s5 + $0x288] sm:$0xff]
    %v9214 = vld [vmem:[%s5 + $0x290] sm:$0xff]
    %v9215 = vld [vmem:[%s5 + $0x298] sm:$0xff]
    %v9216 = vld [vmem:[%s5 + $0x2a0] sm:$0xff]
    %v9217 = vld [vmem:[%s5 + $0x2a8] sm:$0xf]
    %v9218 = vld [vmem:[%s5 + $0x2ac] sm:$0xff]
    %v9219 = vld [vmem:[%s5 + $0x2b4] sm:$0xff]
    %v9220 = vld [vmem:[%s5 + $0x2bc] sm:$0xff]
    %v9221 = vld [vmem:[%s5 + $0x2c4] sm:$0xff]
    %v9222 = vld [vmem:[%s5 + $0x2cc] sm:$0xf]
    %v9223 = vld [vmem:[%s5 + $0x2d0] sm:$0xff]
    %v9224 = vld [vmem:[%s5 + $0x2d8] sm:$0xff]
    %v9225 = vld [vmem:[%s5 + $0x2e0] sm:$0xff]
    %v9226 = vld [vmem:[%s5 + $0x2e8] sm:$0xff]
    %v9227 = vld [vmem:[%s5 + $0x2f0] sm:$0xf]
    %v9228 = vld [vmem:[%s5 + $0x2f4] sm:$0xff]
    %v9229 = vld [vmem:[%s5 + $0x2fc] sm:$0xff]
    %v9230 = vld [vmem:[%s5 + $0x304] sm:$0xff]
    %v9231 = vld [vmem:[%s5 + $0x30c] sm:$0xff]
    %v9232 = vld [vmem:[%s5 + $0x314] sm:$0xf]
    %v9233 = vld [vmem:[%s5 + $0x318] sm:$0xff]
    %v9234 = vld [vmem:[%s5 + $0x320] sm:$0xff]
    %v9235 = vld [vmem:[%s5 + $0x328] sm:$0xff]
    %v9236 = vld [vmem:[%s5 + $0x330] sm:$0xff]
    %v9237 = vld [vmem:[%s5 + $0x338] sm:$0xf]
    %v9238 = vld [vmem:[%s5 + $0x33c] sm:$0xff]
    %v9239 = vld [vmem:[%s5 + $0x344] sm:$0xff]
    %v9240 = vld [vmem:[%s5 + $0x34c] sm:$0xff]
    %v9241 = vld [vmem:[%s5 + $0x354] sm:$0xff]
    %v9242 = vld [vmem:[%s5 + $0x35c] sm:$0xf]
    %v9243 = vld [vmem:[%s5 + $0x360] sm:$0xff]
    %v9244 = vld [vmem:[%s5 + $0x368] sm:$0xff]
    %v9245 = vld [vmem:[%s5 + $0x370] sm:$0xff]
    %v9246 = vld [vmem:[%s5 + $0x378] sm:$0xff]
    %v9247 = vld [vmem:[%s5 + $0x380] sm:$0xf]
    %v9248 = vld [vmem:[%s5 + $0x384] sm:$0xff]
    %v9249 = vld [vmem:[%s5 + $0x38c] sm:$0xff]
    %v9250 = vld [vmem:[%s5 + $0x394] sm:$0xff]
    %v9251 = vld [vmem:[%s5 + $0x39c] sm:$0xff]
    %v9252 = vld [vmem:[%s5 + $0x3a4] sm:$0xf]
    %v9253 = vld [vmem:[%s5 + $0x3a8] sm:$0xff]
    %v9254 = vld [vmem:[%s5 + $0x3b0] sm:$0xff]
    %v9255 = vld [vmem:[%s5 + $0x3b8] sm:$0xff]
    %v9256 = vld [vmem:[%s5 + $0x3c0] sm:$0xff]
    %v9257 = vld [vmem:[%s5 + $0x3c8] sm:$0xf]
    %v9258 = vld [vmem:[%s5 + $0x3cc] sm:$0xff]
    %v9259 = vld [vmem:[%s5 + $0x3d4] sm:$0xff]
    %v9260 = vld [vmem:[%s5 + $0x3dc] sm:$0xff]
    %v9261 = vld [vmem:[%s5 + $0x3e4] sm:$0xff]
    %v9262 = vld [vmem:[%s5 + $0x3ec] sm:$0xf]
    %v9263 = vld [vmem:[%s5 + $0x3f0] sm:$0xff]
    %v9264 = vld [vmem:[%s5 + $0x3f8] sm:$0xff]
    %v9265 = vld [vmem:[%s5 + $0x400] sm:$0xff]
    %v9266 = vld [vmem:[%s5 + $0x408] sm:$0xff]
    %v9267 = vld [vmem:[%s5 + $0x410] sm:$0xf]
    %v9268 = vld [vmem:[%s5 + $0x414] sm:$0xff]
    %v9269 = vld [vmem:[%s5 + $0x41c] sm:$0xff]
    %v9270 = vld [vmem:[%s5 + $0x424] sm:$0xff]
    %v9271 = vld [vmem:[%s5 + $0x42c] sm:$0xff]
    %v9272 = vld [vmem:[%s5 + $0x434] sm:$0xf]
    %v9273 = vld [vmem:[%s5 + $0x438] sm:$0xff]
    %v9274 = vld [vmem:[%s5 + $0x440] sm:$0xff]
    %v9275 = vld [vmem:[%s5 + $0x448] sm:$0xff]
    %v9276 = vld [vmem:[%s5 + $0x450] sm:$0xff]
    %v9277 = vld [vmem:[%s5 + $0x458] sm:$0xf]
    %v9278 = vld [vmem:[%s5 + $0x45c] sm:$0xff]
    %v9279 = vld [vmem:[%s5 + $0x464] sm:$0xff]
    %v9280 = vld [vmem:[%s5 + $0x46c] sm:$0xff]
    %v9281 = vld [vmem:[%s5 + $0x474] sm:$0xff]
    %v9282 = vld [vmem:[%s5 + $0x47c] sm:$0xf]
    %v9283 = vld [vmem:[%s5 + $0x480] sm:$0xff]
    %v9284 = vld [vmem:[%s5 + $0x488] sm:$0xff]
    %v9285 = vld [vmem:[%s5 + $0x490] sm:$0xff]
    %v9286 = vld [vmem:[%s5 + $0x498] sm:$0xff]
    %v9287 = vld [vmem:[%s5 + $0x4a0] sm:$0xf]
    %v9288 = vld [vmem:[%s5 + $0x4a4] sm:$0xff]
    %v9289 = vld [vmem:[%s5 + $0x4ac] sm:$0xff]
    %v9290 = vld [vmem:[%s5 + $0x4b4] sm:$0xff]
    %v9291 = vld [vmem:[%s5 + $0x4bc] sm:$0xff]
    %v9292 = vld [vmem:[%s5 + $0x4c4] sm:$0xf]
    %v9293 = vld [vmem:[%s5 + $0x4c8] sm:$0xff]
    %v9294 = vld [vmem:[%s5 + $0x4d0] sm:$0xff]
    %v9295 = vld [vmem:[%s5 + $0x4d8] sm:$0xff]
    %v9296 = vld [vmem:[%s5 + $0x4e0] sm:$0xff]
    %v9297 = vld [vmem:[%s5 + $0x4e8] sm:$0xf]
    %v9298 = vld [vmem:[%s5 + $0x4ec] sm:$0xff]
    %v9299 = vld [vmem:[%s5 + $0x4f4] sm:$0xff]
    %v9300 = vld [vmem:[%s5 + $0x4fc] sm:$0xff]
    %v9301 = vld [vmem:[%s5 + $0x504] sm:$0xff]
    %v9302 = vld [vmem:[%s5 + $0x50c] sm:$0xf]
    %v9303 = vld [vmem:[%s5 + $0x510] sm:$0xff]
    %v9304 = vld [vmem:[%s5 + $0x518] sm:$0xff]
    %v9305 = vld [vmem:[%s5 + $0x520] sm:$0xff]
    %v9306 = vld [vmem:[%s5 + $0x528] sm:$0xff]
    %v9307 = vld [vmem:[%s5 + $0x530] sm:$0xf]
    %v9308 = vld [vmem:[%s5 + $0x534] sm:$0xff]
    %v9309 = vld [vmem:[%s5 + $0x53c] sm:$0xff]
    %v9310 = vld [vmem:[%s5 + $0x544] sm:$0xff]
    %v9311 = vld [vmem:[%s5 + $0x54c] sm:$0xff]
    %v9312 = vld [vmem:[%s5 + $0x554] sm:$0xf]
    %v9313 = vld [vmem:[%s5 + $0x558] sm:$0xff]
    %v9314 = vld [vmem:[%s5 + $0x560] sm:$0xff]
    %v9315 = vld [vmem:[%s5 + $0x568] sm:$0xff]
    %v9316 = vld [vmem:[%s5 + $0x570] sm:$0xff]
    %v9317 = vld [vmem:[%s5 + $0x578] sm:$0xf]
    %v9318 = vld [vmem:[%s5 + $0x57c] sm:$0xff]
    %v9319 = vld [vmem:[%s5 + $0x584] sm:$0xff]
    %v9320 = vld [vmem:[%s5 + $0x58c] sm:$0xff]
    %v9321 = vld [vmem:[%s5 + $0x594] sm:$0xff]
    %v9322 = vld [vmem:[%s5 + $0x59c] sm:$0xf]
    %v9323 = vld [vmem:[%s5 + $0x5a0] sm:$0xff]
    %v9324 = vld [vmem:[%s5 + $0x5a8] sm:$0xff]
    %v9325 = vld [vmem:[%s5 + $0x5b0] sm:$0xff]
    %v9326 = vld [vmem:[%s5 + $0x5b8] sm:$0xff]
    %v9327 = vld [vmem:[%s5 + $0x5c0] sm:$0xf]
    %v9328 = vld [vmem:[%s5 + $0x5c4] sm:$0xff]
    %v9329 = vld [vmem:[%s5 + $0x5cc] sm:$0xff]
    %v9330 = vld [vmem:[%s5 + $0x5d4] sm:$0xff]
    %v9331 = vld [vmem:[%s5 + $0x5dc] sm:$0xff]
    %v9332 = vld [vmem:[%s5 + $0x5e4] sm:$0xf]
    %v9333 = vld [vmem:[%s5 + $0x5e8] sm:$0xff]
    %v9334 = vld [vmem:[%s5 + $0x5f0] sm:$0xff]
    %v9335 = vld [vmem:[%s5 + $0x5f8] sm:$0xff]
    %v9336 = vld [vmem:[%s5 + $0x600] sm:$0xff]
    %v9337 = vld [vmem:[%s5 + $0x608] sm:$0xf]
    %v9338 = vld [vmem:[%s5 + $0x60c] sm:$0xff]
    %v9339 = vld [vmem:[%s5 + $0x614] sm:$0xff]
    %v9340 = vld [vmem:[%s5 + $0x61c] sm:$0xff]
    %v9341 = vld [vmem:[%s5 + $0x624] sm:$0xff]
    %v9342 = vld [vmem:[%s5 + $0x62c] sm:$0xf]
    %v9343 = vld [vmem:[%s5 + $0x630] sm:$0xff]
    %v9344 = vld [vmem:[%s5 + $0x638] sm:$0xff]
    %v9345 = vld [vmem:[%s5 + $0x640] sm:$0xff]
    %v9346 = vld [vmem:[%s5 + $0x648] sm:$0xff]
    %v9347 = vld [vmem:[%s5 + $0x650] sm:$0xf]
    %v9348 = vld [vmem:[%s5 + $0x654] sm:$0xff]
    %v9349 = vld [vmem:[%s5 + $0x65c] sm:$0xff]
    %v9350 = vld [vmem:[%s5 + $0x664] sm:$0xff]
    %v9351 = vld [vmem:[%s5 + $0x66c] sm:$0xff]
    %v9352 = vld [vmem:[%s5 + $0x674] sm:$0xf]
    %v9353 = vld [vmem:[%s5 + $0x678] sm:$0xff]
    %v9354 = vld [vmem:[%s5 + $0x680] sm:$0xff]
    %v9355 = vld [vmem:[%s5 + $0x688] sm:$0xff]
    %v9356 = vld [vmem:[%s5 + $0x690] sm:$0xff]
    %v9357 = vld [vmem:[%s5 + $0x698] sm:$0xf]
    %v9358 = vld [vmem:[%s5 + $0x69c] sm:$0xff]
    %v9359 = vld [vmem:[%s5 + $0x6a4] sm:$0xff]
    %v9360 = vld [vmem:[%s5 + $0x6ac] sm:$0xff]
    %v9361 = vld [vmem:[%s5 + $0x6b4] sm:$0xff]
    %v9362 = vld [vmem:[%s5 + $0x6bc] sm:$0xf]
    %v9363 = vld [vmem:[%s5 + $0x6c0] sm:$0xff]
    %v9364 = vld [vmem:[%s5 + $0x6c8] sm:$0xff]
    %v9365 = vld [vmem:[%s5 + $0x6d0] sm:$0xff]
    %v9366 = vld [vmem:[%s5 + $0x6d8] sm:$0xff]
    %v9367 = vld [vmem:[%s5 + $0x6e0] sm:$0xf]
    %v9368 = vld [vmem:[%s5 + $0x6e4] sm:$0xff]
    %v9369 = vld [vmem:[%s5 + $0x6ec] sm:$0xff]
    %v9370 = vld [vmem:[%s5 + $0x6f4] sm:$0xff]
    %v9371 = vld [vmem:[%s5 + $0x6fc] sm:$0xff]
    %v9372 = vld [vmem:[%s5 + $0x704] sm:$0xf]
    %v9373 = vld [vmem:[%s5 + $0x708] sm:$0xff]
    %v9374 = vld [vmem:[%s5 + $0x710] sm:$0xff]
    %v9375 = vld [vmem:[%s5 + $0x718] sm:$0xff]
    %v9376 = vld [vmem:[%s5 + $0x720] sm:$0xff]
    %v9377 = vld [vmem:[%s5 + $0x728] sm:$0xf]
    %v9378 = vld [vmem:[%s5 + $0x72c] sm:$0xff]
    %v9379 = vld [vmem:[%s5 + $0x734] sm:$0xff]
    %v9380 = vld [vmem:[%s5 + $0x73c] sm:$0xff]
    %v9381 = vld [vmem:[%s5 + $0x744] sm:$0xff]
    %v9382 = vld [vmem:[%s5 + $0x74c] sm:$0xf]
    %v9383 = vld [vmem:[%s5 + $0x750] sm:$0xff]
    %v9384 = vld [vmem:[%s5 + $0x758] sm:$0xff]
    %v9385 = vld [vmem:[%s5 + $0x760] sm:$0xff]
    %v9386 = vld [vmem:[%s5 + $0x768] sm:$0xff]
    %v9387 = vld [vmem:[%s5 + $0x770] sm:$0xf]
    %v9388 = vld [vmem:[%s5 + $0x774] sm:$0xff]
    %v9389 = vld [vmem:[%s5 + $0x77c] sm:$0xff]
    %v9390 = vld [vmem:[%s5 + $0x784] sm:$0xff]
    %v9391 = vld [vmem:[%s5 + $0x78c] sm:$0xff]
    %v9392 = vld [vmem:[%s5 + $0x794] sm:$0xf]
    %v9393 = vld [vmem:[%s5 + $0x798] sm:$0xff]
    %v9394 = vld [vmem:[%s5 + $0x7a0] sm:$0xff]
    %v9395 = vld [vmem:[%s5 + $0x7a8] sm:$0xff]
    %v9396 = vld [vmem:[%s5 + $0x7b0] sm:$0xff]
    %v9397 = vld [vmem:[%s5 + $0x7b8] sm:$0xf]
    %v9398 = vld [vmem:[%s5 + $0x7bc] sm:$0xff]
    %v9399 = vld [vmem:[%s5 + $0x7c4] sm:$0xff]
    %v9400 = vld [vmem:[%s5 + $0x7cc] sm:$0xff]
    %v9401 = vld [vmem:[%s5 + $0x7d4] sm:$0xff]
    %v9402 = vld [vmem:[%s5 + $0x7dc] sm:$0xf]
    %v9403 = vld [vmem:[%s5 + $0x7e0] sm:$0xff]
    %v9404 = vld [vmem:[%s5 + $0x7e8] sm:$0xff]
    %v9405 = vld [vmem:[%s5 + $0x7f0] sm:$0xff]
    %v9406 = vld [vmem:[%s5 + $0x7f8] sm:$0xff]
    %v9407 = vld [vmem:[%s5 + $0x800] sm:$0xf]
    %v9408 = vld [vmem:[%s5 + $0x804] sm:$0xff]
    %v9409 = vld [vmem:[%s5 + $0x80c] sm:$0xff]
    %v9410 = vld [vmem:[%s5 + $0x814] sm:$0xff]
    %v9411 = vld [vmem:[%s5 + $0x81c] sm:$0xff]
    %v9412 = vld [vmem:[%s5 + $0x824] sm:$0xf]
    %v9413 = vld [vmem:[%s5 + $0x828] sm:$0xff]
    %v9414 = vld [vmem:[%s5 + $0x830] sm:$0xff]
    %v9415 = vld [vmem:[%s5 + $0x838] sm:$0xff]
    %v9416 = vld [vmem:[%s5 + $0x840] sm:$0xff]
    %v9417 = vld [vmem:[%s5 + $0x848] sm:$0xf]
    %v9418 = vld [vmem:[%s5 + $0x84c] sm:$0xff]
    %v9419 = vld [vmem:[%s5 + $0x854] sm:$0xff]
    %v9420 = vld [vmem:[%s5 + $0x85c] sm:$0xff]
    %v9421 = vld [vmem:[%s5 + $0x864] sm:$0xff]
    %v9422 = vld [vmem:[%s5 + $0x86c] sm:$0xf]
    %v9423 = vld [vmem:[%s5 + $0x870] sm:$0xff]
    %v9424 = vld [vmem:[%s5 + $0x878] sm:$0xff]
    %v9425 = vld [vmem:[%s5 + $0x880] sm:$0xff]
    %v9426 = vld [vmem:[%s5 + $0x888] sm:$0xff]
    %v9427 = vld [vmem:[%s5 + $0x890] sm:$0xf]
    %v9428 = vld [vmem:[%s5 + $0x894] sm:$0xff]
    %v9429 = vld [vmem:[%s5 + $0x89c] sm:$0xff]
    %v9430 = vld [vmem:[%s5 + $0x8a4] sm:$0xff]
    %v9431 = vld [vmem:[%s5 + $0x8ac] sm:$0xff]
    %v9432 = vld [vmem:[%s5 + $0x8b4] sm:$0xf]
    %v9433 = vld [vmem:[%s5 + $0x8b8] sm:$0xff]
    %v9434 = vld [vmem:[%s5 + $0x8c0] sm:$0xff]
    %v9435 = vld [vmem:[%s5 + $0x8c8] sm:$0xff]
    %v9436 = vld [vmem:[%s5 + $0x8d0] sm:$0xff]
    %v9437 = vld [vmem:[%s5 + $0x8d8] sm:$0xf]
    %v9438 = vld [vmem:[%s5 + $0x8dc] sm:$0xff]
    %v9439 = vld [vmem:[%s5 + $0x8e4] sm:$0xff]
    %v9440 = vld [vmem:[%s5 + $0x8ec] sm:$0xff]
    %v9441 = vld [vmem:[%s5 + $0x8f4] sm:$0xff]
    %v9442 = vld [vmem:[%s5 + $0x8fc] sm:$0xf]
    %v9443 = vld [vmem:[%s5 + $0x900] sm:$0xff]
    %v9444 = vld [vmem:[%s5 + $0x908] sm:$0xff]
    %v9445 = vld [vmem:[%s5 + $0x910] sm:$0xff]
    %v9446 = vld [vmem:[%s5 + $0x918] sm:$0xff]
    %v9447 = vld [vmem:[%s5 + $0x920] sm:$0xf]
    %v9448 = vld [vmem:[%s5 + $0x924] sm:$0xff]
    %v9449 = vld [vmem:[%s5 + $0x92c] sm:$0xff]
    %v9450 = vld [vmem:[%s5 + $0x934] sm:$0xff]
    %v9451 = vld [vmem:[%s5 + $0x93c] sm:$0xff]
    %v9452 = vld [vmem:[%s5 + $0x944] sm:$0xf]
    %v9453 = vld [vmem:[%s5 + $0x948] sm:$0xff]
    %v9454 = vld [vmem:[%s5 + $0x950] sm:$0xff]
    %v9455 = vld [vmem:[%s5 + $0x958] sm:$0xff]
    %v9456 = vld [vmem:[%s5 + $0x960] sm:$0xff]
    %v9457 = vld [vmem:[%s5 + $0x968] sm:$0xf]
    %v9458 = vld [vmem:[%s5 + $0x96c] sm:$0xff]
    %v9459 = vld [vmem:[%s5 + $0x974] sm:$0xff]
    %v9460 = vld [vmem:[%s5 + $0x97c] sm:$0xff]
    %v9461 = vld [vmem:[%s5 + $0x984] sm:$0xff]
    %v9462 = vld [vmem:[%s5 + $0x98c] sm:$0xf]
    %v9463 = vld [vmem:[%s5 + $0x990] sm:$0xff]
    %v9464 = vld [vmem:[%s5 + $0x998] sm:$0xff]
    %v9465 = vld [vmem:[%s5 + $0x9a0] sm:$0xff]
    %v9466 = vld [vmem:[%s5 + $0x9a8] sm:$0xff]
    %v9467 = vld [vmem:[%s5 + $0x9b0] sm:$0xf]
    %v9468 = vld [vmem:[%s5 + $0x9b4] sm:$0xff]
    %v9469 = vld [vmem:[%s5 + $0x9bc] sm:$0xff]
    %v9470 = vld [vmem:[%s5 + $0x9c4] sm:$0xff]
    %v9471 = vld [vmem:[%s5 + $0x9cc] sm:$0xff]
    %v9472 = vld [vmem:[%s5 + $0x9d4] sm:$0xf]
    %v9473 = vld [vmem:[%s5 + $0x9d8] sm:$0xff]
    %v9474 = vld [vmem:[%s5 + $0x9e0] sm:$0xff]
    %v9475 = vld [vmem:[%s5 + $0x9e8] sm:$0xff]
    %v9476 = vld [vmem:[%s5 + $0x9f0] sm:$0xff]
    %v9477 = vld [vmem:[%s5 + $0x9f8] sm:$0xf]
    %v9478 = vld [vmem:[%s5 + $0x9fc] sm:$0xff]
    %v9479 = vld [vmem:[%s5 + $0xa04] sm:$0xff]
    %v9480 = vld [vmem:[%s5 + $0xa0c] sm:$0xff]
    %v9481 = vld [vmem:[%s5 + $0xa14] sm:$0xff]
    %v9482 = vld [vmem:[%s5 + $0xa1c] sm:$0xf]
    %v9485 = vlaneseq
    %v9486 = vshrl.u32 %v9485, 7
    %v9487 = vsub.s32 0, %v9486
    %v9488 = vrot.slane %v63, %v9487
    %v9489 = vlaneseq
    %v9490 = vshrl.u32 %v9489, 7
    %v9491 = vsub.s32 1, %v9490
    %v9492 = vrot.slane %v63, %v9491
    %v9493 = vlaneseq
    %v9494 = vshrl.u32 %v9493, 7
    %v9495 = vsub.s32 2, %v9494
    %v9496 = vrot.slane %v63, %v9495
    %v9497 = vlaneseq
    %v9498 = vshrl.u32 %v9497, 7
    %v9499 = vsub.s32 3, %v9498
    %v9500 = vrot.slane %v63, %v9499
    %v9501 = vlaneseq
    %v9502 = vshrl.u32 %v9501, 7
    %v9503 = vsub.s32 4, %v9502
    %v9504 = vrot.slane %v63, %v9503
    %v9505 = vlaneseq
    %v9506 = vshrl.u32 %v9505, 7
    %v9507 = vsub.s32 5, %v9506
    %v9508 = vrot.slane %v63, %v9507
    %v9509 = vlaneseq
    %v9510 = vshrl.u32 %v9509, 7
    %v9511 = vsub.s32 6, %v9510
    %v9512 = vrot.slane %v63, %v9511
    %v9513 = vlaneseq
    %v9514 = vshrl.u32 %v9513, 7
    %v9515 = vsub.s32 7, %v9514
    %v9516 = vrot.slane %v63, %v9515
    %v9517 = vlaneseq
    %v9518 = vshrl.u32 %v9517, 7
    %v9519 = vsub.s32 0, %v9518
    %v9520 = vrot.slane %v65, %v9519
    %v9890 = vunpack.c.l.b16 %v9123
    %v9891 = vunpack.c.h.b16 %v9123
    %v9892 = vunpack.c.l.b16 %v9124
    %v9893 = vunpack.c.h.b16 %v9124
    %v9894 = vunpack.c.l.b16 %v9125
    %v9895 = vunpack.c.h.b16 %v9125
    %v9896 = vunpack.c.l.b16 %v9126
    %v9897 = vunpack.c.h.b16 %v9126
    %v9898 = vunpack.c.l.b16 %v9127
    %v9899 = vunpack.c.l.b16 %v9128
    %v9900 = vunpack.c.h.b16 %v9128
    %v9901 = vunpack.c.l.b16 %v9129
    %v9902 = vunpack.c.h.b16 %v9129
    %v9903 = vunpack.c.l.b16 %v9130
    %v9904 = vunpack.c.h.b16 %v9130
    %v9905 = vunpack.c.l.b16 %v9131
    %v9906 = vunpack.c.h.b16 %v9131
    %v9907 = vunpack.c.l.b16 %v9132
    %v9908 = vunpack.c.l.b16 %v9133
    %v9909 = vunpack.c.h.b16 %v9133
    %v9910 = vunpack.c.l.b16 %v9134
    %v9911 = vunpack.c.h.b16 %v9134
    %v9912 = vunpack.c.l.b16 %v9135
    %v9913 = vunpack.c.h.b16 %v9135
    %v9914 = vunpack.c.l.b16 %v9136
    %v9915 = vunpack.c.h.b16 %v9136
    %v9916 = vunpack.c.l.b16 %v9137
    %v9917 = vunpack.c.l.b16 %v9138
    %v9918 = vunpack.c.h.b16 %v9138
    %v9919 = vunpack.c.l.b16 %v9139
    %v9920 = vunpack.c.h.b16 %v9139
    %v9921 = vunpack.c.l.b16 %v9140
    %v9922 = vunpack.c.h.b16 %v9140
    %v9923 = vunpack.c.l.b16 %v9141
    %v9924 = vunpack.c.h.b16 %v9141
    %v9925 = vunpack.c.l.b16 %v9142
    %v9926 = vunpack.c.l.b16 %v9143
    %v9927 = vunpack.c.h.b16 %v9143
    %v9928 = vunpack.c.l.b16 %v9144
    %v9929 = vunpack.c.h.b16 %v9144
    %v9930 = vunpack.c.l.b16 %v9145
    %v9931 = vunpack.c.h.b16 %v9145
    %v9932 = vunpack.c.l.b16 %v9146
    %v9933 = vunpack.c.h.b16 %v9146
    %v9934 = vunpack.c.l.b16 %v9147
    %v9935 = vunpack.c.l.b16 %v9148
    %v9936 = vunpack.c.h.b16 %v9148
    %v9937 = vunpack.c.l.b16 %v9149
    %v9938 = vunpack.c.h.b16 %v9149
    %v9939 = vunpack.c.l.b16 %v9150
    %v9940 = vunpack.c.h.b16 %v9150
    %v9941 = vunpack.c.l.b16 %v9151
    %v9942 = vunpack.c.h.b16 %v9151
    %v9943 = vunpack.c.l.b16 %v9152
    %v9944 = vunpack.c.l.b16 %v9153
    %v9945 = vunpack.c.h.b16 %v9153
    %v9946 = vunpack.c.l.b16 %v9154
    %v9947 = vunpack.c.h.b16 %v9154
    %v9948 = vunpack.c.l.b16 %v9155
    %v9949 = vunpack.c.h.b16 %v9155
    %v9950 = vunpack.c.l.b16 %v9156
    %v9951 = vunpack.c.h.b16 %v9156
    %v9952 = vunpack.c.l.b16 %v9157
    %v9953 = vunpack.c.l.b16 %v9158
    %v9954 = vunpack.c.h.b16 %v9158
    %v9955 = vunpack.c.l.b16 %v9159
    %v9956 = vunpack.c.h.b16 %v9159
    %v9957 = vunpack.c.l.b16 %v9160
    %v9958 = vunpack.c.h.b16 %v9160
    %v9959 = vunpack.c.l.b16 %v9161
    %v9960 = vunpack.c.h.b16 %v9161
    %v9961 = vunpack.c.l.b16 %v9162
    %v9962 = vunpack.c.l.b16 %v9163
    %v9963 = vunpack.c.h.b16 %v9163
    %v9964 = vunpack.c.l.b16 %v9164
    %v9965 = vunpack.c.h.b16 %v9164
    %v9966 = vunpack.c.l.b16 %v9165
    %v9967 = vunpack.c.h.b16 %v9165
    %v9968 = vunpack.c.l.b16 %v9166
    %v9969 = vunpack.c.h.b16 %v9166
    %v9970 = vunpack.c.l.b16 %v9167
    %v9971 = vunpack.c.l.b16 %v9168
    %v9972 = vunpack.c.h.b16 %v9168
    %v9973 = vunpack.c.l.b16 %v9169
    %v9974 = vunpack.c.h.b16 %v9169
    %v9975 = vunpack.c.l.b16 %v9170
    %v9976 = vunpack.c.h.b16 %v9170
    %v9977 = vunpack.c.l.b16 %v9171
    %v9978 = vunpack.c.h.b16 %v9171
    %v9979 = vunpack.c.l.b16 %v9172
    %v9980 = vunpack.c.l.b16 %v9173
    %v9981 = vunpack.c.h.b16 %v9173
    %v9982 = vunpack.c.l.b16 %v9174
    %v9983 = vunpack.c.h.b16 %v9174
    %v9984 = vunpack.c.l.b16 %v9175
    %v9985 = vunpack.c.h.b16 %v9175
    %v9986 = vunpack.c.l.b16 %v9176
    %v9987 = vunpack.c.h.b16 %v9176
    %v9988 = vunpack.c.l.b16 %v9177
    %v9989 = vunpack.c.l.b16 %v9178
    %v9990 = vunpack.c.h.b16 %v9178
    %v9991 = vunpack.c.l.b16 %v9179
    %v9992 = vunpack.c.h.b16 %v9179
    %v9993 = vunpack.c.l.b16 %v9180
    %v9994 = vunpack.c.h.b16 %v9180
    %v9995 = vunpack.c.l.b16 %v9181
    %v9996 = vunpack.c.h.b16 %v9181
    %v9997 = vunpack.c.l.b16 %v9182
    %v9998 = vunpack.c.l.b16 %v9183
    %v9999 = vunpack.c.h.b16 %v9183
    %v10000 = vunpack.c.l.b16 %v9184
    %v10001 = vunpack.c.h.b16 %v9184
    %v10002 = vunpack.c.l.b16 %v9185
    %v10003 = vunpack.c.h.b16 %v9185
    %v10004 = vunpack.c.l.b16 %v9186
    %v10005 = vunpack.c.h.b16 %v9186
    %v10006 = vunpack.c.l.b16 %v9187
    %v10007 = vunpack.c.l.b16 %v9188
    %v10008 = vunpack.c.h.b16 %v9188
    %v10009 = vunpack.c.l.b16 %v9189
    %v10010 = vunpack.c.h.b16 %v9189
    %v10011 = vunpack.c.l.b16 %v9190
    %v10012 = vunpack.c.h.b16 %v9190
    %v10013 = vunpack.c.l.b16 %v9191
    %v10014 = vunpack.c.h.b16 %v9191
    %v10015 = vunpack.c.l.b16 %v9192
    %v10016 = vunpack.c.l.b16 %v9193
    %v10017 = vunpack.c.h.b16 %v9193
    %v10018 = vunpack.c.l.b16 %v9194
    %v10019 = vunpack.c.h.b16 %v9194
    %v10020 = vunpack.c.l.b16 %v9195
    %v10021 = vunpack.c.h.b16 %v9195
    %v10022 = vunpack.c.l.b16 %v9196
    %v10023 = vunpack.c.h.b16 %v9196
    %v10024 = vunpack.c.l.b16 %v9197
    %v10025 = vunpack.c.l.b16 %v9198
    %v10026 = vunpack.c.h.b16 %v9198
    %v10027 = vunpack.c.l.b16 %v9199
    %v10028 = vunpack.c.h.b16 %v9199
    %v10029 = vunpack.c.l.b16 %v9200
    %v10030 = vunpack.c.h.b16 %v9200
    %v10031 = vunpack.c.l.b16 %v9201
    %v10032 = vunpack.c.h.b16 %v9201
    %v10033 = vunpack.c.l.b16 %v9202
    %v10034 = vunpack.c.l.b16 %v9203
    %v10035 = vunpack.c.h.b16 %v9203
    %v10036 = vunpack.c.l.b16 %v9204
    %v10037 = vunpack.c.h.b16 %v9204
    %v10038 = vunpack.c.l.b16 %v9205
    %v10039 = vunpack.c.h.b16 %v9205
    %v10040 = vunpack.c.l.b16 %v9206
    %v10041 = vunpack.c.h.b16 %v9206
    %v10042 = vunpack.c.l.b16 %v9207
    %v10043 = vunpack.c.l.b16 %v9208
    %v10044 = vunpack.c.h.b16 %v9208
    %v10045 = vunpack.c.l.b16 %v9209
    %v10046 = vunpack.c.h.b16 %v9209
    %v10047 = vunpack.c.l.b16 %v9210
    %v10048 = vunpack.c.h.b16 %v9210
    %v10049 = vunpack.c.l.b16 %v9211
    %v10050 = vunpack.c.h.b16 %v9211
    %v10051 = vunpack.c.l.b16 %v9212
    %v10052 = vunpack.c.l.b16 %v9213
    %v10053 = vunpack.c.h.b16 %v9213
    %v10054 = vunpack.c.l.b16 %v9214
    %v10055 = vunpack.c.h.b16 %v9214
    %v10056 = vunpack.c.l.b16 %v9215
    %v10057 = vunpack.c.h.b16 %v9215
    %v10058 = vunpack.c.l.b16 %v9216
    %v10059 = vunpack.c.h.b16 %v9216
    %v10060 = vunpack.c.l.b16 %v9217
    %v10061 = vunpack.c.l.b16 %v9218
    %v10062 = vunpack.c.h.b16 %v9218
    %v10063 = vunpack.c.l.b16 %v9219
    %v10064 = vunpack.c.h.b16 %v9219
    %v10065 = vunpack.c.l.b16 %v9220
    %v10066 = vunpack.c.h.b16 %v9220
    %v10067 = vunpack.c.l.b16 %v9221
    %v10068 = vunpack.c.h.b16 %v9221
    %v10069 = vunpack.c.l.b16 %v9222
    %v10070 = vunpack.c.l.b16 %v9223
    %v10071 = vunpack.c.h.b16 %v9223
    %v10072 = vunpack.c.l.b16 %v9224
    %v10073 = vunpack.c.h.b16 %v9224
    %v10074 = vunpack.c.l.b16 %v9225
    %v10075 = vunpack.c.h.b16 %v9225
    %v10076 = vunpack.c.l.b16 %v9226
    %v10077 = vunpack.c.h.b16 %v9226
    %v10078 = vunpack.c.l.b16 %v9227
    %v10079 = vunpack.c.l.b16 %v9228
    %v10080 = vunpack.c.h.b16 %v9228
    %v10081 = vunpack.c.l.b16 %v9229
    %v10082 = vunpack.c.h.b16 %v9229
    %v10083 = vunpack.c.l.b16 %v9230
    %v10084 = vunpack.c.h.b16 %v9230
    %v10085 = vunpack.c.l.b16 %v9231
    %v10086 = vunpack.c.h.b16 %v9231
    %v10087 = vunpack.c.l.b16 %v9232
    %v10088 = vunpack.c.l.b16 %v9233
    %v10089 = vunpack.c.h.b16 %v9233
    %v10090 = vunpack.c.l.b16 %v9234
    %v10091 = vunpack.c.h.b16 %v9234
    %v10092 = vunpack.c.l.b16 %v9235
    %v10093 = vunpack.c.h.b16 %v9235
    %v10094 = vunpack.c.l.b16 %v9236
    %v10095 = vunpack.c.h.b16 %v9236
    %v10096 = vunpack.c.l.b16 %v9237
    %v10097 = vunpack.c.l.b16 %v9238
    %v10098 = vunpack.c.h.b16 %v9238
    %v10099 = vunpack.c.l.b16 %v9239
    %v10100 = vunpack.c.h.b16 %v9239
    %v10101 = vunpack.c.l.b16 %v9240
    %v10102 = vunpack.c.h.b16 %v9240
    %v10103 = vunpack.c.l.b16 %v9241
    %v10104 = vunpack.c.h.b16 %v9241
    %v10105 = vunpack.c.l.b16 %v9242
    %v10106 = vunpack.c.l.b16 %v9243
    %v10107 = vunpack.c.h.b16 %v9243
    %v10108 = vunpack.c.l.b16 %v9244
    %v10109 = vunpack.c.h.b16 %v9244
    %v10110 = vunpack.c.l.b16 %v9245
    %v10111 = vunpack.c.h.b16 %v9245
    %v10112 = vunpack.c.l.b16 %v9246
    %v10113 = vunpack.c.h.b16 %v9246
    %v10114 = vunpack.c.l.b16 %v9247
    %v10115 = vunpack.c.l.b16 %v9248
    %v10116 = vunpack.c.h.b16 %v9248
    %v10117 = vunpack.c.l.b16 %v9249
    %v10118 = vunpack.c.h.b16 %v9249
    %v10119 = vunpack.c.l.b16 %v9250
    %v10120 = vunpack.c.h.b16 %v9250
    %v10121 = vunpack.c.l.b16 %v9251
    %v10122 = vunpack.c.h.b16 %v9251
    %v10123 = vunpack.c.l.b16 %v9252
    %v10124 = vunpack.c.l.b16 %v9253
    %v10125 = vunpack.c.h.b16 %v9253
    %v10126 = vunpack.c.l.b16 %v9254
    %v10127 = vunpack.c.h.b16 %v9254
    %v10128 = vunpack.c.l.b16 %v9255
    %v10129 = vunpack.c.h.b16 %v9255
    %v10130 = vunpack.c.l.b16 %v9256
    %v10131 = vunpack.c.h.b16 %v9256
    %v10132 = vunpack.c.l.b16 %v9257
    %v10133 = vunpack.c.l.b16 %v9258
    %v10134 = vunpack.c.h.b16 %v9258
    %v10135 = vunpack.c.l.b16 %v9259
    %v10136 = vunpack.c.h.b16 %v9259
    %v10137 = vunpack.c.l.b16 %v9260
    %v10138 = vunpack.c.h.b16 %v9260
    %v10139 = vunpack.c.l.b16 %v9261
    %v10140 = vunpack.c.h.b16 %v9261
    %v10141 = vunpack.c.l.b16 %v9262
    %v10142 = vunpack.c.l.b16 %v9263
    %v10143 = vunpack.c.h.b16 %v9263
    %v10144 = vunpack.c.l.b16 %v9264
    %v10145 = vunpack.c.h.b16 %v9264
    %v10146 = vunpack.c.l.b16 %v9265
    %v10147 = vunpack.c.h.b16 %v9265
    %v10148 = vunpack.c.l.b16 %v9266
    %v10149 = vunpack.c.h.b16 %v9266
    %v10150 = vunpack.c.l.b16 %v9267
    %v10151 = vunpack.c.l.b16 %v9268
    %v10152 = vunpack.c.h.b16 %v9268
    %v10153 = vunpack.c.l.b16 %v9269
    %v10154 = vunpack.c.h.b16 %v9269
    %v10155 = vunpack.c.l.b16 %v9270
    %v10156 = vunpack.c.h.b16 %v9270
    %v10157 = vunpack.c.l.b16 %v9271
    %v10158 = vunpack.c.h.b16 %v9271
    %v10159 = vunpack.c.l.b16 %v9272
    %v10160 = vunpack.c.l.b16 %v9273
    %v10161 = vunpack.c.h.b16 %v9273
    %v10162 = vunpack.c.l.b16 %v9274
    %v10163 = vunpack.c.h.b16 %v9274
    %v10164 = vunpack.c.l.b16 %v9275
    %v10165 = vunpack.c.h.b16 %v9275
    %v10166 = vunpack.c.l.b16 %v9276
    %v10167 = vunpack.c.h.b16 %v9276
    %v10168 = vunpack.c.l.b16 %v9277
    %v10169 = vunpack.c.l.b16 %v9278
    %v10170 = vunpack.c.h.b16 %v9278
    %v10171 = vunpack.c.l.b16 %v9279
    %v10172 = vunpack.c.h.b16 %v9279
    %v10173 = vunpack.c.l.b16 %v9280
    %v10174 = vunpack.c.h.b16 %v9280
    %v10175 = vunpack.c.l.b16 %v9281
    %v10176 = vunpack.c.h.b16 %v9281
    %v10177 = vunpack.c.l.b16 %v9282
    %v10178 = vunpack.c.l.b16 %v9283
    %v10179 = vunpack.c.h.b16 %v9283
    %v10180 = vunpack.c.l.b16 %v9284
    %v10181 = vunpack.c.h.b16 %v9284
    %v10182 = vunpack.c.l.b16 %v9285
    %v10183 = vunpack.c.h.b16 %v9285
    %v10184 = vunpack.c.l.b16 %v9286
    %v10185 = vunpack.c.h.b16 %v9286
    %v10186 = vunpack.c.l.b16 %v9287
    %v10187 = vunpack.c.l.b16 %v9288
    %v10188 = vunpack.c.h.b16 %v9288
    %v10189 = vunpack.c.l.b16 %v9289
    %v10190 = vunpack.c.h.b16 %v9289
    %v10191 = vunpack.c.l.b16 %v9290
    %v10192 = vunpack.c.h.b16 %v9290
    %v10193 = vunpack.c.l.b16 %v9291
    %v10194 = vunpack.c.h.b16 %v9291
    %v10195 = vunpack.c.l.b16 %v9292
    %v10196 = vunpack.c.l.b16 %v9293
    %v10197 = vunpack.c.h.b16 %v9293
    %v10198 = vunpack.c.l.b16 %v9294
    %v10199 = vunpack.c.h.b16 %v9294
    %v10200 = vunpack.c.l.b16 %v9295
    %v10201 = vunpack.c.h.b16 %v9295
    %v10202 = vunpack.c.l.b16 %v9296
    %v10203 = vunpack.c.h.b16 %v9296
    %v10204 = vunpack.c.l.b16 %v9297
    %v10205 = vunpack.c.l.b16 %v9298
    %v10206 = vunpack.c.h.b16 %v9298
    %v10207 = vunpack.c.l.b16 %v9299
    %v10208 = vunpack.c.h.b16 %v9299
    %v10209 = vunpack.c.l.b16 %v9300
    %v10210 = vunpack.c.h.b16 %v9300
    %v10211 = vunpack.c.l.b16 %v9301
    %v10212 = vunpack.c.h.b16 %v9301
    %v10213 = vunpack.c.l.b16 %v9302
    %v10214 = vunpack.c.l.b16 %v9303
    %v10215 = vunpack.c.h.b16 %v9303
    %v10216 = vunpack.c.l.b16 %v9304
    %v10217 = vunpack.c.h.b16 %v9304
    %v10218 = vunpack.c.l.b16 %v9305
    %v10219 = vunpack.c.h.b16 %v9305
    %v10220 = vunpack.c.l.b16 %v9306
    %v10221 = vunpack.c.h.b16 %v9306
    %v10222 = vunpack.c.l.b16 %v9307
    %v10223 = vunpack.c.l.b16 %v9308
    %v10224 = vunpack.c.h.b16 %v9308
    %v10225 = vunpack.c.l.b16 %v9309
    %v10226 = vunpack.c.h.b16 %v9309
    %v10227 = vunpack.c.l.b16 %v9310
    %v10228 = vunpack.c.h.b16 %v9310
    %v10229 = vunpack.c.l.b16 %v9311
    %v10230 = vunpack.c.h.b16 %v9311
    %v10231 = vunpack.c.l.b16 %v9312
    %v10232 = vunpack.c.l.b16 %v9313
    %v10233 = vunpack.c.h.b16 %v9313
    %v10234 = vunpack.c.l.b16 %v9314
    %v10235 = vunpack.c.h.b16 %v9314
    %v10236 = vunpack.c.l.b16 %v9315
    %v10237 = vunpack.c.h.b16 %v9315
    %v10238 = vunpack.c.l.b16 %v9316
    %v10239 = vunpack.c.h.b16 %v9316
    %v10240 = vunpack.c.l.b16 %v9317
    %v10241 = vunpack.c.l.b16 %v9318
    %v10242 = vunpack.c.h.b16 %v9318
    %v10243 = vunpack.c.l.b16 %v9319
    %v10244 = vunpack.c.h.b16 %v9319
    %v10245 = vunpack.c.l.b16 %v9320
    %v10246 = vunpack.c.h.b16 %v9320
    %v10247 = vunpack.c.l.b16 %v9321
    %v10248 = vunpack.c.h.b16 %v9321
    %v10249 = vunpack.c.l.b16 %v9322
    %v10250 = vunpack.c.l.b16 %v9323
    %v10251 = vunpack.c.h.b16 %v9323
    %v10252 = vunpack.c.l.b16 %v9324
    %v10253 = vunpack.c.h.b16 %v9324
    %v10254 = vunpack.c.l.b16 %v9325
    %v10255 = vunpack.c.h.b16 %v9325
    %v10256 = vunpack.c.l.b16 %v9326
    %v10257 = vunpack.c.h.b16 %v9326
    %v10258 = vunpack.c.l.b16 %v9327
    %v10259 = vunpack.c.l.b16 %v9328
    %v10260 = vunpack.c.h.b16 %v9328
    %v10261 = vunpack.c.l.b16 %v9329
    %v10262 = vunpack.c.h.b16 %v9329
    %v10263 = vunpack.c.l.b16 %v9330
    %v10264 = vunpack.c.h.b16 %v9330
    %v10265 = vunpack.c.l.b16 %v9331
    %v10266 = vunpack.c.h.b16 %v9331
    %v10267 = vunpack.c.l.b16 %v9332
    %v10268 = vunpack.c.l.b16 %v9333
    %v10269 = vunpack.c.h.b16 %v9333
    %v10270 = vunpack.c.l.b16 %v9334
    %v10271 = vunpack.c.h.b16 %v9334
    %v10272 = vunpack.c.l.b16 %v9335
    %v10273 = vunpack.c.h.b16 %v9335
    %v10274 = vunpack.c.l.b16 %v9336
    %v10275 = vunpack.c.h.b16 %v9336
    %v10276 = vunpack.c.l.b16 %v9337
    %v10277 = vunpack.c.l.b16 %v9338
    %v10278 = vunpack.c.h.b16 %v9338
    %v10279 = vunpack.c.l.b16 %v9339
    %v10280 = vunpack.c.h.b16 %v9339
    %v10281 = vunpack.c.l.b16 %v9340
    %v10282 = vunpack.c.h.b16 %v9340
    %v10283 = vunpack.c.l.b16 %v9341
    %v10284 = vunpack.c.h.b16 %v9341
    %v10285 = vunpack.c.l.b16 %v9342
    %v10286 = vunpack.c.l.b16 %v9343
    %v10287 = vunpack.c.h.b16 %v9343
    %v10288 = vunpack.c.l.b16 %v9344
    %v10289 = vunpack.c.h.b16 %v9344
    %v10290 = vunpack.c.l.b16 %v9345
    %v10291 = vunpack.c.h.b16 %v9345
    %v10292 = vunpack.c.l.b16 %v9346
    %v10293 = vunpack.c.h.b16 %v9346
    %v10294 = vunpack.c.l.b16 %v9347
    %v10295 = vunpack.c.l.b16 %v9348
    %v10296 = vunpack.c.h.b16 %v9348
    %v10297 = vunpack.c.l.b16 %v9349
    %v10298 = vunpack.c.h.b16 %v9349
    %v10299 = vunpack.c.l.b16 %v9350
    %v10300 = vunpack.c.h.b16 %v9350
    %v10301 = vunpack.c.l.b16 %v9351
    %v10302 = vunpack.c.h.b16 %v9351
    %v10303 = vunpack.c.l.b16 %v9352
    %v10304 = vunpack.c.l.b16 %v9353
    %v10305 = vunpack.c.h.b16 %v9353
    %v10306 = vunpack.c.l.b16 %v9354
    %v10307 = vunpack.c.h.b16 %v9354
    %v10308 = vunpack.c.l.b16 %v9355
    %v10309 = vunpack.c.h.b16 %v9355
    %v10310 = vunpack.c.l.b16 %v9356
    %v10311 = vunpack.c.h.b16 %v9356
    %v10312 = vunpack.c.l.b16 %v9357
    %v10313 = vunpack.c.l.b16 %v9358
    %v10314 = vunpack.c.h.b16 %v9358
    %v10315 = vunpack.c.l.b16 %v9359
    %v10316 = vunpack.c.h.b16 %v9359
    %v10317 = vunpack.c.l.b16 %v9360
    %v10318 = vunpack.c.h.b16 %v9360
    %v10319 = vunpack.c.l.b16 %v9361
    %v10320 = vunpack.c.h.b16 %v9361
    %v10321 = vunpack.c.l.b16 %v9362
    %v10322 = vunpack.c.l.b16 %v9363
    %v10323 = vunpack.c.h.b16 %v9363
    %v10324 = vunpack.c.l.b16 %v9364
    %v10325 = vunpack.c.h.b16 %v9364
    %v10326 = vunpack.c.l.b16 %v9365
    %v10327 = vunpack.c.h.b16 %v9365
    %v10328 = vunpack.c.l.b16 %v9366
    %v10329 = vunpack.c.h.b16 %v9366
    %v10330 = vunpack.c.l.b16 %v9367
    %v10331 = vunpack.c.l.b16 %v9368
    %v10332 = vunpack.c.h.b16 %v9368
    %v10333 = vunpack.c.l.b16 %v9369
    %v10334 = vunpack.c.h.b16 %v9369
    %v10335 = vunpack.c.l.b16 %v9370
    %v10336 = vunpack.c.h.b16 %v9370
    %v10337 = vunpack.c.l.b16 %v9371
    %v10338 = vunpack.c.h.b16 %v9371
    %v10339 = vunpack.c.l.b16 %v9372
    %v10340 = vunpack.c.l.b16 %v9373
    %v10341 = vunpack.c.h.b16 %v9373
    %v10342 = vunpack.c.l.b16 %v9374
    %v10343 = vunpack.c.h.b16 %v9374
    %v10344 = vunpack.c.l.b16 %v9375
    %v10345 = vunpack.c.h.b16 %v9375
    %v10346 = vunpack.c.l.b16 %v9376
    %v10347 = vunpack.c.h.b16 %v9376
    %v10348 = vunpack.c.l.b16 %v9377
    %v10349 = vunpack.c.l.b16 %v9378
    %v10350 = vunpack.c.h.b16 %v9378
    %v10351 = vunpack.c.l.b16 %v9379
    %v10352 = vunpack.c.h.b16 %v9379
    %v10353 = vunpack.c.l.b16 %v9380
    %v10354 = vunpack.c.h.b16 %v9380
    %v10355 = vunpack.c.l.b16 %v9381
    %v10356 = vunpack.c.h.b16 %v9381
    %v10357 = vunpack.c.l.b16 %v9382
    %v10358 = vunpack.c.l.b16 %v9383
    %v10359 = vunpack.c.h.b16 %v9383
    %v10360 = vunpack.c.l.b16 %v9384
    %v10361 = vunpack.c.h.b16 %v9384
    %v10362 = vunpack.c.l.b16 %v9385
    %v10363 = vunpack.c.h.b16 %v9385
    %v10364 = vunpack.c.l.b16 %v9386
    %v10365 = vunpack.c.h.b16 %v9386
    %v10366 = vunpack.c.l.b16 %v9387
    %v10367 = vunpack.c.l.b16 %v9388
    %v10368 = vunpack.c.h.b16 %v9388
    %v10369 = vunpack.c.l.b16 %v9389
    %v10370 = vunpack.c.h.b16 %v9389
    %v10371 = vunpack.c.l.b16 %v9390
    %v10372 = vunpack.c.h.b16 %v9390
    %v10373 = vunpack.c.l.b16 %v9391
    %v10374 = vunpack.c.h.b16 %v9391
    %v10375 = vunpack.c.l.b16 %v9392
    %v10376 = vunpack.c.l.b16 %v9393
    %v10377 = vunpack.c.h.b16 %v9393
    %v10378 = vunpack.c.l.b16 %v9394
    %v10379 = vunpack.c.h.b16 %v9394
    %v10380 = vunpack.c.l.b16 %v9395
    %v10381 = vunpack.c.h.b16 %v9395
    %v10382 = vunpack.c.l.b16 %v9396
    %v10383 = vunpack.c.h.b16 %v9396
    %v10384 = vunpack.c.l.b16 %v9397
    %v10385 = vunpack.c.l.b16 %v9398
    %v10386 = vunpack.c.h.b16 %v9398
    %v10387 = vunpack.c.l.b16 %v9399
    %v10388 = vunpack.c.h.b16 %v9399
    %v10389 = vunpack.c.l.b16 %v9400
    %v10390 = vunpack.c.h.b16 %v9400
    %v10391 = vunpack.c.l.b16 %v9401
    %v10392 = vunpack.c.h.b16 %v9401
    %v10393 = vunpack.c.l.b16 %v9402
    %v10394 = vunpack.c.l.b16 %v9403
    %v10395 = vunpack.c.h.b16 %v9403
    %v10396 = vunpack.c.l.b16 %v9404
    %v10397 = vunpack.c.h.b16 %v9404
    %v10398 = vunpack.c.l.b16 %v9405
    %v10399 = vunpack.c.h.b16 %v9405
    %v10400 = vunpack.c.l.b16 %v9406
    %v10401 = vunpack.c.h.b16 %v9406
    %v10402 = vunpack.c.l.b16 %v9407
    %v10403 = vunpack.c.l.b16 %v9408
    %v10404 = vunpack.c.h.b16 %v9408
    %v10405 = vunpack.c.l.b16 %v9409
    %v10406 = vunpack.c.h.b16 %v9409
    %v10407 = vunpack.c.l.b16 %v9410
    %v10408 = vunpack.c.h.b16 %v9410
    %v10409 = vunpack.c.l.b16 %v9411
    %v10410 = vunpack.c.h.b16 %v9411
    %v10411 = vunpack.c.l.b16 %v9412
    %v10412 = vunpack.c.l.b16 %v9413
    %v10413 = vunpack.c.h.b16 %v9413
    %v10414 = vunpack.c.l.b16 %v9414
    %v10415 = vunpack.c.h.b16 %v9414
    %v10416 = vunpack.c.l.b16 %v9415
    %v10417 = vunpack.c.h.b16 %v9415
    %v10418 = vunpack.c.l.b16 %v9416
    %v10419 = vunpack.c.h.b16 %v9416
    %v10420 = vunpack.c.l.b16 %v9417
    %v10421 = vunpack.c.l.b16 %v9418
    %v10422 = vunpack.c.h.b16 %v9418
    %v10423 = vunpack.c.l.b16 %v9419
    %v10424 = vunpack.c.h.b16 %v9419
    %v10425 = vunpack.c.l.b16 %v9420
    %v10426 = vunpack.c.h.b16 %v9420
    %v10427 = vunpack.c.l.b16 %v9421
    %v10428 = vunpack.c.h.b16 %v9421
    %v10429 = vunpack.c.l.b16 %v9422
    %v10430 = vunpack.c.l.b16 %v9423
    %v10431 = vunpack.c.h.b16 %v9423
    %v10432 = vunpack.c.l.b16 %v9424
    %v10433 = vunpack.c.h.b16 %v9424
    %v10434 = vunpack.c.l.b16 %v9425
    %v10435 = vunpack.c.h.b16 %v9425
    %v10436 = vunpack.c.l.b16 %v9426
    %v10437 = vunpack.c.h.b16 %v9426
    %v10438 = vunpack.c.l.b16 %v9427
    %v10439 = vunpack.c.l.b16 %v9428
    %v10440 = vunpack.c.h.b16 %v9428
    %v10441 = vunpack.c.l.b16 %v9429
    %v10442 = vunpack.c.h.b16 %v9429
    %v10443 = vunpack.c.l.b16 %v9430
    %v10444 = vunpack.c.h.b16 %v9430
    %v10445 = vunpack.c.l.b16 %v9431
    %v10446 = vunpack.c.h.b16 %v9431
    %v10447 = vunpack.c.l.b16 %v9432
    %v10448 = vunpack.c.l.b16 %v9433
    %v10449 = vunpack.c.h.b16 %v9433
    %v10450 = vunpack.c.l.b16 %v9434
    %v10451 = vunpack.c.h.b16 %v9434
    %v10452 = vunpack.c.l.b16 %v9435
    %v10453 = vunpack.c.h.b16 %v9435
    %v10454 = vunpack.c.l.b16 %v9436
    %v10455 = vunpack.c.h.b16 %v9436
    %v10456 = vunpack.c.l.b16 %v9437
    %v10457 = vunpack.c.l.b16 %v9438
    %v10458 = vunpack.c.h.b16 %v9438
    %v10459 = vunpack.c.l.b16 %v9439
    %v10460 = vunpack.c.h.b16 %v9439
    %v10461 = vunpack.c.l.b16 %v9440
    %v10462 = vunpack.c.h.b16 %v9440
    %v10463 = vunpack.c.l.b16 %v9441
    %v10464 = vunpack.c.h.b16 %v9441
    %v10465 = vunpack.c.l.b16 %v9442
    %v10466 = vunpack.c.l.b16 %v9443
    %v10467 = vunpack.c.h.b16 %v9443
    %v10468 = vunpack.c.l.b16 %v9444
    %v10469 = vunpack.c.h.b16 %v9444
    %v10470 = vunpack.c.l.b16 %v9445
    %v10471 = vunpack.c.h.b16 %v9445
    %v10472 = vunpack.c.l.b16 %v9446
    %v10473 = vunpack.c.h.b16 %v9446
    %v10474 = vunpack.c.l.b16 %v9447
    %v10475 = vunpack.c.l.b16 %v9448
    %v10476 = vunpack.c.h.b16 %v9448
    %v10477 = vunpack.c.l.b16 %v9449
    %v10478 = vunpack.c.h.b16 %v9449
    %v10479 = vunpack.c.l.b16 %v9450
    %v10480 = vunpack.c.h.b16 %v9450
    %v10481 = vunpack.c.l.b16 %v9451
    %v10482 = vunpack.c.h.b16 %v9451
    %v10483 = vunpack.c.l.b16 %v9452
    %v10484 = vunpack.c.l.b16 %v9453
    %v10485 = vunpack.c.h.b16 %v9453
    %v10486 = vunpack.c.l.b16 %v9454
    %v10487 = vunpack.c.h.b16 %v9454
    %v10488 = vunpack.c.l.b16 %v9455
    %v10489 = vunpack.c.h.b16 %v9455
    %v10490 = vunpack.c.l.b16 %v9456
    %v10491 = vunpack.c.h.b16 %v9456
    %v10492 = vunpack.c.l.b16 %v9457
    %v10493 = vunpack.c.l.b16 %v9458
    %v10494 = vunpack.c.h.b16 %v9458
    %v10495 = vunpack.c.l.b16 %v9459
    %v10496 = vunpack.c.h.b16 %v9459
    %v10497 = vunpack.c.l.b16 %v9460
    %v10498 = vunpack.c.h.b16 %v9460
    %v10499 = vunpack.c.l.b16 %v9461
    %v10500 = vunpack.c.h.b16 %v9461
    %v10501 = vunpack.c.l.b16 %v9462
    %v10502 = vunpack.c.l.b16 %v9463
    %v10503 = vunpack.c.h.b16 %v9463
    %v10504 = vunpack.c.l.b16 %v9464
    %v10505 = vunpack.c.h.b16 %v9464
    %v10506 = vunpack.c.l.b16 %v9465
    %v10507 = vunpack.c.h.b16 %v9465
    %v10508 = vunpack.c.l.b16 %v9466
    %v10509 = vunpack.c.h.b16 %v9466
    %v10510 = vunpack.c.l.b16 %v9467
    %v10511 = vunpack.c.l.b16 %v9468
    %v10512 = vunpack.c.h.b16 %v9468
    %v10513 = vunpack.c.l.b16 %v9469
    %v10514 = vunpack.c.h.b16 %v9469
    %v10515 = vunpack.c.l.b16 %v9470
    %v10516 = vunpack.c.h.b16 %v9470
    %v10517 = vunpack.c.l.b16 %v9471
    %v10518 = vunpack.c.h.b16 %v9471
    %v10519 = vunpack.c.l.b16 %v9472
    %v10520 = vunpack.c.l.b16 %v9473
    %v10521 = vunpack.c.h.b16 %v9473
    %v10522 = vunpack.c.l.b16 %v9474
    %v10523 = vunpack.c.h.b16 %v9474
    %v10524 = vunpack.c.l.b16 %v9475
    %v10525 = vunpack.c.h.b16 %v9475
    %v10526 = vunpack.c.l.b16 %v9476
    %v10527 = vunpack.c.h.b16 %v9476
    %v10528 = vunpack.c.l.b16 %v9477
    %v10529 = vunpack.c.l.b16 %v9478
    %v10530 = vunpack.c.h.b16 %v9478
    %v10531 = vunpack.c.l.b16 %v9479
    %v10532 = vunpack.c.h.b16 %v9479
    %v10533 = vunpack.c.l.b16 %v9480
    %v10534 = vunpack.c.h.b16 %v9480
    %v10535 = vunpack.c.l.b16 %v9481
    %v10536 = vunpack.c.h.b16 %v9481
    %v10537 = vunpack.c.l.b16 %v9482
    %v10538 = vpack.c.b16 %v9899, %v9890
    %v10539 = vpack.c.b16 %v9900, %v9891
    %v10540 = vpack.c.b16 %v9901, %v9892
    %v10541 = vpack.c.b16 %v9902, %v9893
    %v10542 = vpack.c.b16 %v9903, %v9894
    %v10543 = vpack.c.b16 %v9904, %v9895
    %v10544 = vpack.c.b16 %v9905, %v9896
    %v10545 = vpack.c.b16 %v9906, %v9897
    %v10546 = vpack.c.b16 %v9907, %v9898
    %v10547 = vpack.c.b16 %v9917, %v9908
    %v10548 = vpack.c.b16 %v9918, %v9909
    %v10549 = vpack.c.b16 %v9919, %v9910
    %v10550 = vpack.c.b16 %v9920, %v9911
    %v10551 = vpack.c.b16 %v9921, %v9912
    %v10552 = vpack.c.b16 %v9922, %v9913
    %v10553 = vpack.c.b16 %v9923, %v9914
    %v10554 = vpack.c.b16 %v9924, %v9915
    %v10555 = vpack.c.b16 %v9925, %v9916
    %v10556 = vpack.c.b16 %v9935, %v9926
    %v10557 = vpack.c.b16 %v9936, %v9927
    %v10558 = vpack.c.b16 %v9937, %v9928
    %v10559 = vpack.c.b16 %v9938, %v9929
    %v10560 = vpack.c.b16 %v9939, %v9930
    %v10561 = vpack.c.b16 %v9940, %v9931
    %v10562 = vpack.c.b16 %v9941, %v9932
    %v10563 = vpack.c.b16 %v9942, %v9933
    %v10564 = vpack.c.b16 %v9943, %v9934
    %v10565 = vpack.c.b16 %v9953, %v9944
    %v10566 = vpack.c.b16 %v9954, %v9945
    %v10567 = vpack.c.b16 %v9955, %v9946
    %v10568 = vpack.c.b16 %v9956, %v9947
    %v10569 = vpack.c.b16 %v9957, %v9948
    %v10570 = vpack.c.b16 %v9958, %v9949
    %v10571 = vpack.c.b16 %v9959, %v9950
    %v10572 = vpack.c.b16 %v9960, %v9951
    %v10573 = vpack.c.b16 %v9961, %v9952
    %v10574 = vpack.c.b16 %v9971, %v9962
    %v10575 = vpack.c.b16 %v9972, %v9963
    %v10576 = vpack.c.b16 %v9973, %v9964
    %v10577 = vpack.c.b16 %v9974, %v9965
    %v10578 = vpack.c.b16 %v9975, %v9966
    %v10579 = vpack.c.b16 %v9976, %v9967
    %v10580 = vpack.c.b16 %v9977, %v9968
    %v10581 = vpack.c.b16 %v9978, %v9969
    %v10582 = vpack.c.b16 %v9979, %v9970
    %v10583 = vpack.c.b16 %v9989, %v9980
    %v10584 = vpack.c.b16 %v9990, %v9981
    %v10585 = vpack.c.b16 %v9991, %v9982
    %v10586 = vpack.c.b16 %v9992, %v9983
    %v10587 = vpack.c.b16 %v9993, %v9984
    %v10588 = vpack.c.b16 %v9994, %v9985
    %v10589 = vpack.c.b16 %v9995, %v9986
    %v10590 = vpack.c.b16 %v9996, %v9987
    %v10591 = vpack.c.b16 %v9997, %v9988
    %v10592 = vpack.c.b16 %v10007, %v9998
    %v10593 = vpack.c.b16 %v10008, %v9999
    %v10594 = vpack.c.b16 %v10009, %v10000
    %v10595 = vpack.c.b16 %v10010, %v10001
    %v10596 = vpack.c.b16 %v10011, %v10002
    %v10597 = vpack.c.b16 %v10012, %v10003
    %v10598 = vpack.c.b16 %v10013, %v10004
    %v10599 = vpack.c.b16 %v10014, %v10005
    %v10600 = vpack.c.b16 %v10015, %v10006
    %v10601 = vpack.c.b16 %v10025, %v10016
    %v10602 = vpack.c.b16 %v10026, %v10017
    %v10603 = vpack.c.b16 %v10027, %v10018
    %v10604 = vpack.c.b16 %v10028, %v10019
    %v10605 = vpack.c.b16 %v10029, %v10020
    %v10606 = vpack.c.b16 %v10030, %v10021
    %v10607 = vpack.c.b16 %v10031, %v10022
    %v10608 = vpack.c.b16 %v10032, %v10023
    %v10609 = vpack.c.b16 %v10033, %v10024
    %v10610 = vpack.c.b16 %v10043, %v10034
    %v10611 = vpack.c.b16 %v10044, %v10035
    %v10612 = vpack.c.b16 %v10045, %v10036
    %v10613 = vpack.c.b16 %v10046, %v10037
    %v10614 = vpack.c.b16 %v10047, %v10038
    %v10615 = vpack.c.b16 %v10048, %v10039
    %v10616 = vpack.c.b16 %v10049, %v10040
    %v10617 = vpack.c.b16 %v10050, %v10041
    %v10618 = vpack.c.b16 %v10051, %v10042
    %v10619 = vpack.c.b16 %v10061, %v10052
    %v10620 = vpack.c.b16 %v10062, %v10053
    %v10621 = vpack.c.b16 %v10063, %v10054
    %v10622 = vpack.c.b16 %v10064, %v10055
    %v10623 = vpack.c.b16 %v10065, %v10056
    %v10624 = vpack.c.b16 %v10066, %v10057
    %v10625 = vpack.c.b16 %v10067, %v10058
    %v10626 = vpack.c.b16 %v10068, %v10059
    %v10627 = vpack.c.b16 %v10069, %v10060
    %v10628 = vpack.c.b16 %v10079, %v10070
    %v10629 = vpack.c.b16 %v10080, %v10071
    %v10630 = vpack.c.b16 %v10081, %v10072
    %v10631 = vpack.c.b16 %v10082, %v10073
    %v10632 = vpack.c.b16 %v10083, %v10074
    %v10633 = vpack.c.b16 %v10084, %v10075
    %v10634 = vpack.c.b16 %v10085, %v10076
    %v10635 = vpack.c.b16 %v10086, %v10077
    %v10636 = vpack.c.b16 %v10087, %v10078
    %v10637 = vpack.c.b16 %v10097, %v10088
    %v10638 = vpack.c.b16 %v10098, %v10089
    %v10639 = vpack.c.b16 %v10099, %v10090
    %v10640 = vpack.c.b16 %v10100, %v10091
    %v10641 = vpack.c.b16 %v10101, %v10092
    %v10642 = vpack.c.b16 %v10102, %v10093
    %v10643 = vpack.c.b16 %v10103, %v10094
    %v10644 = vpack.c.b16 %v10104, %v10095
    %v10645 = vpack.c.b16 %v10105, %v10096
    %v10646 = vpack.c.b16 %v10115, %v10106
    %v10647 = vpack.c.b16 %v10116, %v10107
    %v10648 = vpack.c.b16 %v10117, %v10108
    %v10649 = vpack.c.b16 %v10118, %v10109
    %v10650 = vpack.c.b16 %v10119, %v10110
    %v10651 = vpack.c.b16 %v10120, %v10111
    %v10652 = vpack.c.b16 %v10121, %v10112
    %v10653 = vpack.c.b16 %v10122, %v10113
    %v10654 = vpack.c.b16 %v10123, %v10114
    %v10655 = vpack.c.b16 %v10133, %v10124
    %v10656 = vpack.c.b16 %v10134, %v10125
    %v10657 = vpack.c.b16 %v10135, %v10126
    %v10658 = vpack.c.b16 %v10136, %v10127
    %v10659 = vpack.c.b16 %v10137, %v10128
    %v10660 = vpack.c.b16 %v10138, %v10129
    %v10661 = vpack.c.b16 %v10139, %v10130
    %v10662 = vpack.c.b16 %v10140, %v10131
    %v10663 = vpack.c.b16 %v10141, %v10132
    %v10664 = vpack.c.b16 %v10151, %v10142
    %v10665 = vpack.c.b16 %v10152, %v10143
    %v10666 = vpack.c.b16 %v10153, %v10144
    %v10667 = vpack.c.b16 %v10154, %v10145
    %v10668 = vpack.c.b16 %v10155, %v10146
    %v10669 = vpack.c.b16 %v10156, %v10147
    %v10670 = vpack.c.b16 %v10157, %v10148
    %v10671 = vpack.c.b16 %v10158, %v10149
    %v10672 = vpack.c.b16 %v10159, %v10150
    %v10673 = vpack.c.b16 %v10169, %v10160
    %v10674 = vpack.c.b16 %v10170, %v10161
    %v10675 = vpack.c.b16 %v10171, %v10162
    %v10676 = vpack.c.b16 %v10172, %v10163
    %v10677 = vpack.c.b16 %v10173, %v10164
    %v10678 = vpack.c.b16 %v10174, %v10165
    %v10679 = vpack.c.b16 %v10175, %v10166
    %v10680 = vpack.c.b16 %v10176, %v10167
    %v10681 = vpack.c.b16 %v10177, %v10168
    %v10682 = vpack.c.b16 %v10187, %v10178
    %v10683 = vpack.c.b16 %v10188, %v10179
    %v10684 = vpack.c.b16 %v10189, %v10180
    %v10685 = vpack.c.b16 %v10190, %v10181
    %v10686 = vpack.c.b16 %v10191, %v10182
    %v10687 = vpack.c.b16 %v10192, %v10183
    %v10688 = vpack.c.b16 %v10193, %v10184
    %v10689 = vpack.c.b16 %v10194, %v10185
    %v10690 = vpack.c.b16 %v10195, %v10186
    %v10691 = vpack.c.b16 %v10205, %v10196
    %v10692 = vpack.c.b16 %v10206, %v10197
    %v10693 = vpack.c.b16 %v10207, %v10198
    %v10694 = vpack.c.b16 %v10208, %v10199
    %v10695 = vpack.c.b16 %v10209, %v10200
    %v10696 = vpack.c.b16 %v10210, %v10201
    %v10697 = vpack.c.b16 %v10211, %v10202
    %v10698 = vpack.c.b16 %v10212, %v10203
    %v10699 = vpack.c.b16 %v10213, %v10204
    %v10700 = vpack.c.b16 %v10223, %v10214
    %v10701 = vpack.c.b16 %v10224, %v10215
    %v10702 = vpack.c.b16 %v10225, %v10216
    %v10703 = vpack.c.b16 %v10226, %v10217
    %v10704 = vpack.c.b16 %v10227, %v10218
    %v10705 = vpack.c.b16 %v10228, %v10219
    %v10706 = vpack.c.b16 %v10229, %v10220
    %v10707 = vpack.c.b16 %v10230, %v10221
    %v10708 = vpack.c.b16 %v10231, %v10222
    %v10709 = vpack.c.b16 %v10241, %v10232
    %v10710 = vpack.c.b16 %v10242, %v10233
    %v10711 = vpack.c.b16 %v10243, %v10234
    %v10712 = vpack.c.b16 %v10244, %v10235
    %v10713 = vpack.c.b16 %v10245, %v10236
    %v10714 = vpack.c.b16 %v10246, %v10237
    %v10715 = vpack.c.b16 %v10247, %v10238
    %v10716 = vpack.c.b16 %v10248, %v10239
    %v10717 = vpack.c.b16 %v10249, %v10240
    %v10718 = vpack.c.b16 %v10259, %v10250
    %v10719 = vpack.c.b16 %v10260, %v10251
    %v10720 = vpack.c.b16 %v10261, %v10252
    %v10721 = vpack.c.b16 %v10262, %v10253
    %v10722 = vpack.c.b16 %v10263, %v10254
    %v10723 = vpack.c.b16 %v10264, %v10255
    %v10724 = vpack.c.b16 %v10265, %v10256
    %v10725 = vpack.c.b16 %v10266, %v10257
    %v10726 = vpack.c.b16 %v10267, %v10258
    %v10727 = vpack.c.b16 %v10277, %v10268
    %v10728 = vpack.c.b16 %v10278, %v10269
    %v10729 = vpack.c.b16 %v10279, %v10270
    %v10730 = vpack.c.b16 %v10280, %v10271
    %v10731 = vpack.c.b16 %v10281, %v10272
    %v10732 = vpack.c.b16 %v10282, %v10273
    %v10733 = vpack.c.b16 %v10283, %v10274
    %v10734 = vpack.c.b16 %v10284, %v10275
    %v10735 = vpack.c.b16 %v10285, %v10276
    %v10736 = vpack.c.b16 %v10295, %v10286
    %v10737 = vpack.c.b16 %v10296, %v10287
    %v10738 = vpack.c.b16 %v10297, %v10288
    %v10739 = vpack.c.b16 %v10298, %v10289
    %v10740 = vpack.c.b16 %v10299, %v10290
    %v10741 = vpack.c.b16 %v10300, %v10291
    %v10742 = vpack.c.b16 %v10301, %v10292
    %v10743 = vpack.c.b16 %v10302, %v10293
    %v10744 = vpack.c.b16 %v10303, %v10294
    %v10745 = vpack.c.b16 %v10313, %v10304
    %v10746 = vpack.c.b16 %v10314, %v10305
    %v10747 = vpack.c.b16 %v10315, %v10306
    %v10748 = vpack.c.b16 %v10316, %v10307
    %v10749 = vpack.c.b16 %v10317, %v10308
    %v10750 = vpack.c.b16 %v10318, %v10309
    %v10751 = vpack.c.b16 %v10319, %v10310
    %v10752 = vpack.c.b16 %v10320, %v10311
    %v10753 = vpack.c.b16 %v10321, %v10312
    %v10754 = vpack.c.b16 %v10331, %v10322
    %v10755 = vpack.c.b16 %v10332, %v10323
    %v10756 = vpack.c.b16 %v10333, %v10324
    %v10757 = vpack.c.b16 %v10334, %v10325
    %v10758 = vpack.c.b16 %v10335, %v10326
    %v10759 = vpack.c.b16 %v10336, %v10327
    %v10760 = vpack.c.b16 %v10337, %v10328
    %v10761 = vpack.c.b16 %v10338, %v10329
    %v10762 = vpack.c.b16 %v10339, %v10330
    %v10763 = vpack.c.b16 %v10349, %v10340
    %v10764 = vpack.c.b16 %v10350, %v10341
    %v10765 = vpack.c.b16 %v10351, %v10342
    %v10766 = vpack.c.b16 %v10352, %v10343
    %v10767 = vpack.c.b16 %v10353, %v10344
    %v10768 = vpack.c.b16 %v10354, %v10345
    %v10769 = vpack.c.b16 %v10355, %v10346
    %v10770 = vpack.c.b16 %v10356, %v10347
    %v10771 = vpack.c.b16 %v10357, %v10348
    %v10772 = vpack.c.b16 %v10367, %v10358
    %v10773 = vpack.c.b16 %v10368, %v10359
    %v10774 = vpack.c.b16 %v10369, %v10360
    %v10775 = vpack.c.b16 %v10370, %v10361
    %v10776 = vpack.c.b16 %v10371, %v10362
    %v10777 = vpack.c.b16 %v10372, %v10363
    %v10778 = vpack.c.b16 %v10373, %v10364
    %v10779 = vpack.c.b16 %v10374, %v10365
    %v10780 = vpack.c.b16 %v10375, %v10366
    %v10781 = vpack.c.b16 %v10385, %v10376
    %v10782 = vpack.c.b16 %v10386, %v10377
    %v10783 = vpack.c.b16 %v10387, %v10378
    %v10784 = vpack.c.b16 %v10388, %v10379
    %v10785 = vpack.c.b16 %v10389, %v10380
    %v10786 = vpack.c.b16 %v10390, %v10381
    %v10787 = vpack.c.b16 %v10391, %v10382
    %v10788 = vpack.c.b16 %v10392, %v10383
    %v10789 = vpack.c.b16 %v10393, %v10384
    %v10790 = vpack.c.b16 %v10403, %v10394
    %v10791 = vpack.c.b16 %v10404, %v10395
    %v10792 = vpack.c.b16 %v10405, %v10396
    %v10793 = vpack.c.b16 %v10406, %v10397
    %v10794 = vpack.c.b16 %v10407, %v10398
    %v10795 = vpack.c.b16 %v10408, %v10399
    %v10796 = vpack.c.b16 %v10409, %v10400
    %v10797 = vpack.c.b16 %v10410, %v10401
    %v10798 = vpack.c.b16 %v10411, %v10402
    %v10799 = vpack.c.b16 %v10421, %v10412
    %v10800 = vpack.c.b16 %v10422, %v10413
    %v10801 = vpack.c.b16 %v10423, %v10414
    %v10802 = vpack.c.b16 %v10424, %v10415
    %v10803 = vpack.c.b16 %v10425, %v10416
    %v10804 = vpack.c.b16 %v10426, %v10417
    %v10805 = vpack.c.b16 %v10427, %v10418
    %v10806 = vpack.c.b16 %v10428, %v10419
    %v10807 = vpack.c.b16 %v10429, %v10420
    %v10808 = vpack.c.b16 %v10439, %v10430
    %v10809 = vpack.c.b16 %v10440, %v10431
    %v10810 = vpack.c.b16 %v10441, %v10432
    %v10811 = vpack.c.b16 %v10442, %v10433
    %v10812 = vpack.c.b16 %v10443, %v10434
    %v10813 = vpack.c.b16 %v10444, %v10435
    %v10814 = vpack.c.b16 %v10445, %v10436
    %v10815 = vpack.c.b16 %v10446, %v10437
    %v10816 = vpack.c.b16 %v10447, %v10438
    %v10817 = vpack.c.b16 %v10457, %v10448
    %v10818 = vpack.c.b16 %v10458, %v10449
    %v10819 = vpack.c.b16 %v10459, %v10450
    %v10820 = vpack.c.b16 %v10460, %v10451
    %v10821 = vpack.c.b16 %v10461, %v10452
    %v10822 = vpack.c.b16 %v10462, %v10453
    %v10823 = vpack.c.b16 %v10463, %v10454
    %v10824 = vpack.c.b16 %v10464, %v10455
    %v10825 = vpack.c.b16 %v10465, %v10456
    %v10826 = vpack.c.b16 %v10475, %v10466
    %v10827 = vpack.c.b16 %v10476, %v10467
    %v10828 = vpack.c.b16 %v10477, %v10468
    %v10829 = vpack.c.b16 %v10478, %v10469
    %v10830 = vpack.c.b16 %v10479, %v10470
    %v10831 = vpack.c.b16 %v10480, %v10471
    %v10832 = vpack.c.b16 %v10481, %v10472
    %v10833 = vpack.c.b16 %v10482, %v10473
    %v10834 = vpack.c.b16 %v10483, %v10474
    %v10835 = vpack.c.b16 %v10493, %v10484
    %v10836 = vpack.c.b16 %v10494, %v10485
    %v10837 = vpack.c.b16 %v10495, %v10486
    %v10838 = vpack.c.b16 %v10496, %v10487
    %v10839 = vpack.c.b16 %v10497, %v10488
    %v10840 = vpack.c.b16 %v10498, %v10489
    %v10841 = vpack.c.b16 %v10499, %v10490
    %v10842 = vpack.c.b16 %v10500, %v10491
    %v10843 = vpack.c.b16 %v10501, %v10492
    %v10844 = vpack.c.b16 %v10511, %v10502
    %v10845 = vpack.c.b16 %v10512, %v10503
    %v10846 = vpack.c.b16 %v10513, %v10504
    %v10847 = vpack.c.b16 %v10514, %v10505
    %v10848 = vpack.c.b16 %v10515, %v10506
    %v10849 = vpack.c.b16 %v10516, %v10507
    %v10850 = vpack.c.b16 %v10517, %v10508
    %v10851 = vpack.c.b16 %v10518, %v10509
    %v10852 = vpack.c.b16 %v10519, %v10510
    %v10853 = vpack.c.b16 %v10529, %v10520
    %v10854 = vpack.c.b16 %v10530, %v10521
    %v10855 = vpack.c.b16 %v10531, %v10522
    %v10856 = vpack.c.b16 %v10532, %v10523
    %v10857 = vpack.c.b16 %v10533, %v10524
    %v10858 = vpack.c.b16 %v10534, %v10525
    %v10859 = vpack.c.b16 %v10535, %v10526
    %v10860 = vpack.c.b16 %v10536, %v10527
    %v10861 = vpack.c.b16 %v10537, %v10528
    %v11187 = vsel %vm7240, %v9122, 0
    %11189 = vmatprep.subr.bf16.mxu0 %v10539
    %11190 = vmatpush1.bf16.msra.mxu0 %v10538
    %11191 = vmatprep.subr.bf16.mxu0 %v10548
    %11192 = vmatpush1.bf16.msra.mxu0 %v10547
    %11193 = vmatprep.subr.bf16.mxu0 %v10557
    %11194 = vmatpush1.bf16.msra.mxu0 %v10556
    %11195 = vmatprep.subr.bf16.mxu0 %v10566
    %11196 = vmatpush1.bf16.msra.mxu0 %v10565
    %11197 = vmatprep.subr.bf16.mxu0 %v10575
    %11198 = vmatpush1.bf16.msra.mxu0 %v10574
    %11199 = vmatprep.subr.bf16.mxu0 %v10584
    %11200 = vmatpush1.bf16.msra.mxu0 %v10583
    %11201 = vmatprep.subr.bf16.mxu0 %v10593
    %11202 = vmatpush1.bf16.msra.mxu0 %v10592
    %11203 = vmatprep.subr.bf16.mxu0 %v10602
    %11204 = vmatpush1.bf16.msra.mxu0 %v10601
    %11205 = vmatprep.subr.bf16.mxu0 %v10611
    %11206 = vmatpush1.bf16.msra.mxu0 %v10610
    %11207 = vmatprep.subr.bf16.mxu0 %v10620
    %11208 = vmatpush1.bf16.msra.mxu0 %v10619
    %11209 = vmatprep.subr.bf16.mxu0 %v10629
    %11210 = vmatpush1.bf16.msra.mxu0 %v10628
    %11211 = vmatprep.subr.bf16.mxu0 %v10638
    %11212 = vmatpush1.bf16.msra.mxu0 %v10637
    %11213 = vmatprep.subr.bf16.mxu0 %v10647
    %11214 = vmatpush1.bf16.msra.mxu0 %v10646
    %11215 = vmatprep.subr.bf16.mxu0 %v10656
    %11216 = vmatpush1.bf16.msra.mxu0 %v10655
    %11217 = vmatprep.subr.bf16.mxu0 %v10665
    %11218 = vmatpush1.bf16.msra.mxu0 %v10664
    %11219 = vmatprep.subr.bf16.mxu0 %v10674
    %11220 = vmatpush1.bf16.msra.mxu0 %v10673
    %11221 = vmatprep.mubr.bf16.mxu0 %v9119
    %11222 = vmatmul.mubr.bf16.gmra.mrb[0].mxu0 %v9118
    %v11223 = vpop.f32.mrb[0].mxu0
    %v11224 = vadd.f32 %v9488, %v11223
    %v11225 = vpop.f32.mrb[0].mxu0
    %v11226 = vadd.f32 %v9492, %v11225
    %v11227 = vpop.f32.mrb[0].mxu0
    %v11228 = vpop.f32.mrb[0].mxu0
    %11229 = vdwg.mxu0
    %11230 = vmatprep.subr.bf16.mxu0 %v10683
    %11231 = vmatpush1.bf16.msra.mxu0 %v10682
    %11232 = vmatprep.subr.bf16.mxu0 %v10692
    %11233 = vmatpush1.bf16.msra.mxu0 %v10691
    %11234 = vmatprep.subr.bf16.mxu0 %v10701
    %11235 = vmatpush1.bf16.msra.mxu0 %v10700
    %11236 = vmatprep.subr.bf16.mxu0 %v10710
    %11237 = vmatpush1.bf16.msra.mxu0 %v10709
    %11238 = vmatprep.subr.bf16.mxu0 %v10719
    %11239 = vmatpush1.bf16.msra.mxu0 %v10718
    %11240 = vmatprep.subr.bf16.mxu0 %v10728
    %11241 = vmatpush1.bf16.msra.mxu0 %v10727
    %11242 = vmatprep.subr.bf16.mxu0 %v10737
    %11243 = vmatpush1.bf16.msra.mxu0 %v10736
    %11244 = vmatprep.subr.bf16.mxu0 %v10746
    %11245 = vmatpush1.bf16.msra.mxu0 %v10745
    %11246 = vmatprep.subr.bf16.mxu0 %v10755
    %11247 = vmatpush1.bf16.msra.mxu0 %v10754
    %11248 = vmatprep.subr.bf16.mxu0 %v10764
    %11249 = vmatpush1.bf16.msra.mxu0 %v10763
    %11250 = vmatprep.subr.bf16.mxu0 %v10773
    %11251 = vmatpush1.bf16.msra.mxu0 %v10772
    %11252 = vmatprep.subr.bf16.mxu0 %v10782
    %11253 = vmatpush1.bf16.msra.mxu0 %v10781
    %11254 = vmatprep.subr.bf16.mxu0 %v10791
    %11255 = vmatpush1.bf16.msra.mxu0 %v10790
    %11256 = vmatprep.subr.bf16.mxu0 %v10800
    %11257 = vmatpush1.bf16.msra.mxu0 %v10799
    %11258 = vmatprep.subr.bf16.mxu0 %v10809
    %11259 = vmatpush1.bf16.msra.mxu0 %v10808
    %11260 = vmatprep.subr.bf16.mxu0 %v10818
    %11261 = vmatpush1.bf16.msra.mxu0 %v10817
    %11262 = vmatprep.mubr.bf16.mxu0 %v9121
    %11263 = vmatmul.mubr.bf16.gmra.mrb[0].mxu0 %v9120
    %v11264 = vpop.f32.mrb[0].mxu0
    %v11265 = vadd.f32 %v11224, %v11264
    %v11266 = vpop.f32.mrb[0].mxu0
    %v11267 = vadd.f32 %v11226, %v11266
    %v11268 = vpop.f32.mrb[0].mxu0
    %v11269 = vpop.f32.mrb[0].mxu0
    %11270 = vdwg.mxu0
    %11271 = vmatprep.subr.bf16.mxu0 %v10827
    %11272 = vmatpush1.bf16.msra.mxu0 %v10826
    %11273 = vmatprep.subr.bf16.mxu0 %v10836
    %11274 = vmatpush1.bf16.msra.mxu0 %v10835
    %11275 = vmatprep.subr.bf16.mxu0 %v10845
    %11276 = vmatpush1.bf16.msra.mxu0 %v10844
    %11277 = vmatprep.subr.bf16.mxu0 %v10854
    %11278 = vmatpush1.bf16.msra.mxu0 %v10853
    %11279 = vmatprep.subr.bf16.mxu0 0
    %11280 = vmatpush1.bf16.msra.mxu0 0
    %11281 = vmatprep.subr.bf16.mxu0 0
    %11282 = vmatpush1.bf16.msra.mxu0 0
    %11283 = vmatprep.subr.bf16.mxu0 0
    %11284 = vmatpush1.bf16.msra.mxu0 0
    %11285 = vmatprep.subr.bf16.mxu0 0
    %11286 = vmatpush1.bf16.msra.mxu0 0
    %11287 = vmatprep.subr.bf16.mxu0 0
    %11288 = vmatpush1.bf16.msra.mxu0 0
    %11289 = vmatprep.subr.bf16.mxu0 0
    %11290 = vmatpush1.bf16.msra.mxu0 0
    %11291 = vmatprep.subr.bf16.mxu0 0
    %11292 = vmatpush1.bf16.msra.mxu0 0
    %11293 = vmatprep.subr.bf16.mxu0 0
    %11294 = vmatpush1.bf16.msra.mxu0 0
    %11295 = vmatprep.subr.bf16.mxu0 0
    %11296 = vmatpush1.bf16.msra.mxu0 0
    %11297 = vmatprep.subr.bf16.mxu0 0
    %11298 = vmatpush1.bf16.msra.mxu0 0
    %11299 = vmatprep.subr.bf16.mxu0 0
    %11300 = vmatpush1.bf16.msra.mxu0 0
    %11301 = vmatprep.subr.bf16.mxu0 0
    %11302 = vmatpush1.bf16.msra.mxu0 0
    %11303 = vmatprep.mubr.bf16.mxu0 0
    %11304 = vmatmul.mubr.bf16.gmra.mrb[0].mxu0 %v11187
    %v11305 = vpop.f32.mrb[0].mxu0
    %v11306 = vadd.f32 %v11265, %v11305
    %v11307 = vpop.f32.mrb[0].mxu0
    %v11308 = vadd.f32 %v11267, %v11307
    %v11309 = vpop.f32.mrb[0].mxu0
    %v11310 = vpop.f32.mrb[0].mxu0
    %11311 = vdwg.mxu0
    %11312 = vmatprep.subr.bf16.mxu0 %v10541
    %11313 = vmatpush1.bf16.msra.mxu0 %v10540
    %11314 = vmatprep.subr.bf16.mxu0 %v10550
    %11315 = vmatpush1.bf16.msra.mxu0 %v10549
    %11316 = vmatprep.subr.bf16.mxu0 %v10559
    %11317 = vmatpush1.bf16.msra.mxu0 %v10558
    %11318 = vmatprep.subr.bf16.mxu0 %v10568
    %11319 = vmatpush1.bf16.msra.mxu0 %v10567
    %11320 = vmatprep.subr.bf16.mxu0 %v10577
    %11321 = vmatpush1.bf16.msra.mxu0 %v10576
    %11322 = vmatprep.subr.bf16.mxu0 %v10586
    %11323 = vmatpush1.bf16.msra.mxu0 %v10585
    %11324 = vmatprep.subr.bf16.mxu0 %v10595
    %11325 = vmatpush1.bf16.msra.mxu0 %v10594
    %11326 = vmatprep.subr.bf16.mxu0 %v10604
    %11327 = vmatpush1.bf16.msra.mxu0 %v10603
    %11328 = vmatprep.subr.bf16.mxu0 %v10613
    %11329 = vmatpush1.bf16.msra.mxu0 %v10612
    %11330 = vmatprep.subr.bf16.mxu0 %v10622
    %11331 = vmatpush1.bf16.msra.mxu0 %v10621
    %11332 = vmatprep.subr.bf16.mxu0 %v10631
    %11333 = vmatpush1.bf16.msra.mxu0 %v10630
    %11334 = vmatprep.subr.bf16.mxu0 %v10640
    %11335 = vmatpush1.bf16.msra.mxu0 %v10639
    %11336 = vmatprep.subr.bf16.mxu0 %v10649
    %11337 = vmatpush1.bf16.msra.mxu0 %v10648
    %11338 = vmatprep.subr.bf16.mxu0 %v10658
    %11339 = vmatpush1.bf16.msra.mxu0 %v10657
    %11340 = vmatprep.subr.bf16.mxu0 %v10667
    %11341 = vmatpush1.bf16.msra.mxu0 %v10666
    %11342 = vmatprep.subr.bf16.mxu0 %v10676
    %11343 = vmatpush1.bf16.msra.mxu0 %v10675
    %11344 = vmatprep.mubr.bf16.mxu0 %v9119
    %11345 = vmatmul.mubr.bf16.gmra.mrb[0].mxu0 %v9118
    %v11346 = vpop.f32.mrb[0].mxu0
    %v11347 = vadd.f32 %v9496, %v11346
    %v11348 = vpop.f32.mrb[0].mxu0
    %v11349 = vadd.f32 %v9500, %v11348
    %v11350 = vpop.f32.mrb[0].mxu0
    %v11351 = vpop.f32.mrb[0].mxu0
    %11352 = vdwg.mxu0
    %11353 = vmatprep.subr.bf16.mxu0 %v10685
    %11354 = vmatpush1.bf16.msra.mxu0 %v10684
    %11355 = vmatprep.subr.bf16.mxu0 %v10694
    %11356 = vmatpush1.bf16.msra.mxu0 %v10693
    %11357 = vmatprep.subr.bf16.mxu0 %v10703
    %11358 = vmatpush1.bf16.msra.mxu0 %v10702
    %11359 = vmatprep.subr.bf16.mxu0 %v10712
    %11360 = vmatpush1.bf16.msra.mxu0 %v10711
    %11361 = vmatprep.subr.bf16.mxu0 %v10721
    %11362 = vmatpush1.bf16.msra.mxu0 %v10720
    %11363 = vmatprep.subr.bf16.mxu0 %v10730
    %11364 = vmatpush1.bf16.msra.mxu0 %v10729
    %11365 = vmatprep.subr.bf16.mxu0 %v10739
    %11366 = vmatpush1.bf16.msra.mxu0 %v10738
    %11367 = vmatprep.subr.bf16.mxu0 %v10748
    %11368 = vmatpush1.bf16.msra.mxu0 %v10747
    %11369 = vmatprep.subr.bf16.mxu0 %v10757
    %11370 = vmatpush1.bf16.msra.mxu0 %v10756
    %11371 = vmatprep.subr.bf16.mxu0 %v10766
    %11372 = vmatpush1.bf16.msra.mxu0 %v10765
    %11373 = vmatprep.subr.bf16.mxu0 %v10775
    %11374 = vmatpush1.bf16.msra.mxu0 %v10774
    %11375 = vmatprep.subr.bf16.mxu0 %v10784
    %11376 = vmatpush1.bf16.msra.mxu0 %v10783
    %11377 = vmatprep.subr.bf16.mxu0 %v10793
    %11378 = vmatpush1.bf16.msra.mxu0 %v10792
    %11379 = vmatprep.subr.bf16.mxu0 %v10802
    %11380 = vmatpush1.bf16.msra.mxu0 %v10801
    %11381 = vmatprep.subr.bf16.mxu0 %v10811
    %11382 = vmatpush1.bf16.msra.mxu0 %v10810
    %11383 = vmatprep.subr.bf16.mxu0 %v10820
    %11384 = vmatpush1.bf16.msra.mxu0 %v10819
    %11385 = vmatprep.mubr.bf16.mxu0 %v9121
    %11386 = vmatmul.mubr.bf16.gmra.mrb[0].mxu0 %v9120
    %v11387 = vpop.f32.mrb[0].mxu0
    %v11388 = vadd.f32 %v11347, %v11387
    %v11389 = vpop.f32.mrb[0].mxu0
    %v11390 = vadd.f32 %v11349, %v11389
    %v11391 = vpop.f32.mrb[0].mxu0
    %v11392 = vpop.f32.mrb[0].mxu0
    %11393 = vdwg.mxu0
    %11394 = vmatprep.subr.bf16.mxu0 %v10829
    %11395 = vmatpush1.bf16.msra.mxu0 %v10828
    %11396 = vmatprep.subr.bf16.mxu0 %v10838
    %11397 = vmatpush1.bf16.msra.mxu0 %v10837
    %11398 = vmatprep.subr.bf16.mxu0 %v10847
    %11399 = vmatpush1.bf16.msra.mxu0 %v10846
    %11400 = vmatprep.subr.bf16.mxu0 %v10856
    %11401 = vmatpush1.bf16.msra.mxu0 %v10855
    %11402 = vmatprep.subr.bf16.mxu0 0
    %11403 = vmatpush1.bf16.msra.mxu0 0
    %11404 = vmatprep.subr.bf16.mxu0 0
    %11405 = vmatpush1.bf16.msra.mxu0 0
    %11406 = vmatprep.subr.bf16.mxu0 0
    %11407 = vmatpush1.bf16.msra.mxu0 0
    %11408 = vmatprep.subr.bf16.mxu0 0
    %11409 = vmatpush1.bf16.msra.mxu0 0
    %11410 = vmatprep.subr.bf16.mxu0 0
    %11411 = vmatpush1.bf16.msra.mxu0 0
    %11412 = vmatprep.subr.bf16.mxu0 0
    %11413 = vmatpush1.bf16.msra.mxu0 0
    %11414 = vmatprep.subr.bf16.mxu0 0
    %11415 = vmatpush1.bf16.msra.mxu0 0
    %11416 = vmatprep.subr.bf16.mxu0 0
    %11417 = vmatpush1.bf16.msra.mxu0 0
    %11418 = vmatprep.subr.bf16.mxu0 0
    %11419 = vmatpush1.bf16.msra.mxu0 0
    %11420 = vmatprep.subr.bf16.mxu0 0
    %11421 = vmatpush1.bf16.msra.mxu0 0
    %11422 = vmatprep.subr.bf16.mxu0 0
    %11423 = vmatpush1.bf16.msra.mxu0 0
    %11424 = vmatprep.subr.bf16.mxu0 0
    %11425 = vmatpush1.bf16.msra.mxu0 0
    %11426 = vmatprep.mubr.bf16.mxu0 0
    %11427 = vmatmul.mubr.bf16.gmra.mrb[0].mxu0 %v11187
    %v11428 = vpop.f32.mrb[0].mxu0
    %v11429 = vadd.f32 %v11388, %v11428
    %v11430 = vpop.f32.mrb[0].mxu0
    %v11431 = vadd.f32 %v11390, %v11430
    %v11432 = vpop.f32.mrb[0].mxu0
    %v11433 = vpop.f32.mrb[0].mxu0
    %11434 = vdwg.mxu0
    %11435 = vmatprep.subr.bf16.mxu0 %v10543
    %11436 = vmatpush1.bf16.msra.mxu0 %v10542
    %11437 = vmatprep.subr.bf16.mxu0 %v10552
    %11438 = vmatpush1.bf16.msra.mxu0 %v10551
    %11439 = vmatprep.subr.bf16.mxu0 %v10561
    %11440 = vmatpush1.bf16.msra.mxu0 %v10560
    %11441 = vmatprep.subr.bf16.mxu0 %v10570
    %11442 = vmatpush1.bf16.msra.mxu0 %v10569
    %11443 = vmatprep.subr.bf16.mxu0 %v10579
    %11444 = vmatpush1.bf16.msra.mxu0 %v10578
    %11445 = vmatprep.subr.bf16.mxu0 %v10588
    %11446 = vmatpush1.bf16.msra.mxu0 %v10587
    %11447 = vmatprep.subr.bf16.mxu0 %v10597
    %11448 = vmatpush1.bf16.msra.mxu0 %v10596
    %11449 = vmatprep.subr.bf16.mxu0 %v10606
    %11450 = vmatpush1.bf16.msra.mxu0 %v10605
    %11451 = vmatprep.subr.bf16.mxu0 %v10615
    %11452 = vmatpush1.bf16.msra.mxu0 %v10614
    %11453 = vmatprep.subr.bf16.mxu0 %v10624
    %11454 = vmatpush1.bf16.msra.mxu0 %v10623
    %11455 = vmatprep.subr.bf16.mxu0 %v10633
    %11456 = vmatpush1.bf16.msra.mxu0 %v10632
    %11457 = vmatprep.subr.bf16.mxu0 %v10642
    %11458 = vmatpush1.bf16.msra.mxu0 %v10641
    %11459 = vmatprep.subr.bf16.mxu0 %v10651
    %11460 = vmatpush1.bf16.msra.mxu0 %v10650
    %11461 = vmatprep.subr.bf16.mxu0 %v10660
    %11462 = vmatpush1.bf16.msra.mxu0 %v10659
    %11463 = vmatprep.subr.bf16.mxu0 %v10669
    %11464 = vmatpush1.bf16.msra.mxu0 %v10668
    %11465 = vmatprep.subr.bf16.mxu0 %v10678
    %11466 = vmatpush1.bf16.msra.mxu0 %v10677
    %11467 = vmatprep.mubr.bf16.mxu0 %v9119
    %11468 = vmatmul.mubr.bf16.gmra.mrb[0].mxu0 %v9118
    %v11469 = vpop.f32.mrb[0].mxu0
    %v11470 = vadd.f32 %v9504, %v11469
    %v11471 = vpop.f32.mrb[0].mxu0
    %v11472 = vadd.f32 %v9508, %v11471
    %v11473 = vpop.f32.mrb[0].mxu0
    %v11474 = vpop.f32.mrb[0].mxu0
    %11475 = vdwg.mxu0
    %11476 = vmatprep.subr.bf16.mxu0 %v10687
    %11477 = vmatpush1.bf16.msra.mxu0 %v10686
    %11478 = vmatprep.subr.bf16.mxu0 %v10696
    %11479 = vmatpush1.bf16.msra.mxu0 %v10695
    %11480 = vmatprep.subr.bf16.mxu0 %v10705
    %11481 = vmatpush1.bf16.msra.mxu0 %v10704
    %11482 = vmatprep.subr.bf16.mxu0 %v10714
    %11483 = vmatpush1.bf16.msra.mxu0 %v10713
    %11484 = vmatprep.subr.bf16.mxu0 %v10723
    %11485 = vmatpush1.bf16.msra.mxu0 %v10722
    %11486 = vmatprep.subr.bf16.mxu0 %v10732
    %11487 = vmatpush1.bf16.msra.mxu0 %v10731
    %11488 = vmatprep.subr.bf16.mxu0 %v10741
    %11489 = vmatpush1.bf16.msra.mxu0 %v10740
    %11490 = vmatprep.subr.bf16.mxu0 %v10750
    %11491 = vmatpush1.bf16.msra.mxu0 %v10749
    %11492 = vmatprep.subr.bf16.mxu0 %v10759
    %11493 = vmatpush1.bf16.msra.mxu0 %v10758
    %11494 = vmatprep.subr.bf16.mxu0 %v10768
    %11495 = vmatpush1.bf16.msra.mxu0 %v10767
    %11496 = vmatprep.subr.bf16.mxu0 %v10777
    %11497 = vmatpush1.bf16.msra.mxu0 %v10776
    %11498 = vmatprep.subr.bf16.mxu0 %v10786
    %11499 = vmatpush1.bf16.msra.mxu0 %v10785
    %11500 = vmatprep.subr.bf16.mxu0 %v10795
    %11501 = vmatpush1.bf16.msra.mxu0 %v10794
    %11502 = vmatprep.subr.bf16.mxu0 %v10804
    %11503 = vmatpush1.bf16.msra.mxu0 %v10803
    %11504 = vmatprep.subr.bf16.mxu0 %v10813
    %11505 = vmatpush1.bf16.msra.mxu0 %v10812
    %11506 = vmatprep.subr.bf16.mxu0 %v10822
    %11507 = vmatpush1.bf16.msra.mxu0 %v10821
    %11508 = vmatprep.mubr.bf16.mxu0 %v9121
    %11509 = vmatmul.mubr.bf16.gmra.mrb[0].mxu0 %v9120
    %v11510 = vpop.f32.mrb[0].mxu0
    %v11511 = vadd.f32 %v11470, %v11510
    %v11512 = vpop.f32.mrb[0].mxu0
    %v11513 = vadd.f32 %v11472, %v11512
    %v11514 = vpop.f32.mrb[0].mxu0
    %v11515 = vpop.f32.mrb[0].mxu0
    %11516 = vdwg.mxu0
    %11517 = vmatprep.subr.bf16.mxu0 %v10831
    %11518 = vmatpush1.bf16.msra.mxu0 %v10830
    %11519 = vmatprep.subr.bf16.mxu0 %v10840
    %11520 = vmatpush1.bf16.msra.mxu0 %v10839
    %11521 = vmatprep.subr.bf16.mxu0 %v10849
    %11522 = vmatpush1.bf16.msra.mxu0 %v10848
    %11523 = vmatprep.subr.bf16.mxu0 %v10858
    %11524 = vmatpush1.bf16.msra.mxu0 %v10857
    %11525 = vmatprep.subr.bf16.mxu0 0
    %11526 = vmatpush1.bf16.msra.mxu0 0
    %11527 = vmatprep.subr.bf16.mxu0 0
    %11528 = vmatpush1.bf16.msra.mxu0 0
    %11529 = vmatprep.subr.bf16.mxu0 0
    %11530 = vmatpush1.bf16.msra.mxu0 0
    %11531 = vmatprep.subr.bf16.mxu0 0
    %11532 = vmatpush1.bf16.msra.mxu0 0
    %11533 = vmatprep.subr.bf16.mxu0 0
    %11534 = vmatpush1.bf16.msra.mxu0 0
    %11535 = vmatprep.subr.bf16.mxu0 0
    %11536 = vmatpush1.bf16.msra.mxu0 0
    %11537 = vmatprep.subr.bf16.mxu0 0
    %11538 = vmatpush1.bf16.msra.mxu0 0
    %11539 = vmatprep.subr.bf16.mxu0 0
    %11540 = vmatpush1.bf16.msra.mxu0 0
    %11541 = vmatprep.subr.bf16.mxu0 0
    %11542 = vmatpush1.bf16.msra.mxu0 0
    %11543 = vmatprep.subr.bf16.mxu0 0
    %11544 = vmatpush1.bf16.msra.mxu0 0
    %11545 = vmatprep.subr.bf16.mxu0 0
    %11546 = vmatpush1.bf16.msra.mxu0 0
    %11547 = vmatprep.subr.bf16.mxu0 0
    %11548 = vmatpush1.bf16.msra.mxu0 0
    %11549 = vmatprep.mubr.bf16.mxu0 0
    %11550 = vmatmul.mubr.bf16.gmra.mrb[0].mxu0 %v11187
    %v11551 = vpop.f32.mrb[0].mxu0
    %v11552 = vadd.f32 %v11511, %v11551
    %v11553 = vpop.f32.mrb[0].mxu0
    %v11554 = vadd.f32 %v11513, %v11553
    %v11555 = vpop.f32.mrb[0].mxu0
    %v11556 = vpop.f32.mrb[0].mxu0
    %11557 = vdwg.mxu0
    %11558 = vmatprep.subr.bf16.mxu0 %v10545
    %11559 = vmatpush1.bf16.msra.mxu0 %v10544
    %11560 = vmatprep.subr.bf16.mxu0 %v10554
    %11561 = vmatpush1.bf16.msra.mxu0 %v10553
    %11562 = vmatprep.subr.bf16.mxu0 %v10563
    %11563 = vmatpush1.bf16.msra.mxu0 %v10562
    %11564 = vmatprep.subr.bf16.mxu0 %v10572
    %11565 = vmatpush1.bf16.msra.mxu0 %v10571
    %11566 = vmatprep.subr.bf16.mxu0 %v10581
    %11567 = vmatpush1.bf16.msra.mxu0 %v10580
    %11568 = vmatprep.subr.bf16.mxu0 %v10590
    %11569 = vmatpush1.bf16.msra.mxu0 %v10589
    %11570 = vmatprep.subr.bf16.mxu0 %v10599
    %11571 = vmatpush1.bf16.msra.mxu0 %v10598
    %11572 = vmatprep.subr.bf16.mxu0 %v10608
    %11573 = vmatpush1.bf16.msra.mxu0 %v10607
    %11574 = vmatprep.subr.bf16.mxu0 %v10617
    %11575 = vmatpush1.bf16.msra.mxu0 %v10616
    %11576 = vmatprep.subr.bf16.mxu0 %v10626
    %11577 = vmatpush1.bf16.msra.mxu0 %v10625
    %11578 = vmatprep.subr.bf16.mxu0 %v10635
    %11579 = vmatpush1.bf16.msra.mxu0 %v10634
    %11580 = vmatprep.subr.bf16.mxu0 %v10644
    %11581 = vmatpush1.bf16.msra.mxu0 %v10643
    %11582 = vmatprep.subr.bf16.mxu0 %v10653
    %11583 = vmatpush1.bf16.msra.mxu0 %v10652
    %11584 = vmatprep.subr.bf16.mxu0 %v10662
    %11585 = vmatpush1.bf16.msra.mxu0 %v10661
    %11586 = vmatprep.subr.bf16.mxu0 %v10671
    %11587 = vmatpush1.bf16.msra.mxu0 %v10670
    %11588 = vmatprep.subr.bf16.mxu0 %v10680
    %11589 = vmatpush1.bf16.msra.mxu0 %v10679
    %11590 = vmatprep.mubr.bf16.mxu0 %v9119
    %11591 = vmatmul.mubr.bf16.gmra.mrb[0].mxu0 %v9118
    %v11592 = vpop.f32.mrb[0].mxu0
    %v11593 = vadd.f32 %v9512, %v11592
    %v11594 = vpop.f32.mrb[0].mxu0
    %v11595 = vadd.f32 %v9516, %v11594
    %v11596 = vpop.f32.mrb[0].mxu0
    %v11597 = vpop.f32.mrb[0].mxu0
    %11598 = vdwg.mxu0
    %11599 = vmatprep.subr.bf16.mxu0 %v10689
    %11600 = vmatpush1.bf16.msra.mxu0 %v10688
    %11601 = vmatprep.subr.bf16.mxu0 %v10698
    %11602 = vmatpush1.bf16.msra.mxu0 %v10697
    %11603 = vmatprep.subr.bf16.mxu0 %v10707
    %11604 = vmatpush1.bf16.msra.mxu0 %v10706
    %11605 = vmatprep.subr.bf16.mxu0 %v10716
    %11606 = vmatpush1.bf16.msra.mxu0 %v10715
    %11607 = vmatprep.subr.bf16.mxu0 %v10725
    %11608 = vmatpush1.bf16.msra.mxu0 %v10724
    %11609 = vmatprep.subr.bf16.mxu0 %v10734
    %11610 = vmatpush1.bf16.msra.mxu0 %v10733
    %11611 = vmatprep.subr.bf16.mxu0 %v10743
    %11612 = vmatpush1.bf16.msra.mxu0 %v10742
    %11613 = vmatprep.subr.bf16.mxu0 %v10752
    %11614 = vmatpush1.bf16.msra.mxu0 %v10751
    %11615 = vmatprep.subr.bf16.mxu0 %v10761
    %11616 = vmatpush1.bf16.msra.mxu0 %v10760
    %11617 = vmatprep.subr.bf16.mxu0 %v10770
    %11618 = vmatpush1.bf16.msra.mxu0 %v10769
    %11619 = vmatprep.subr.bf16.mxu0 %v10779
    %11620 = vmatpush1.bf16.msra.mxu0 %v10778
    %11621 = vmatprep.subr.bf16.mxu0 %v10788
    %11622 = vmatpush1.bf16.msra.mxu0 %v10787
    %11623 = vmatprep.subr.bf16.mxu0 %v10797
    %11624 = vmatpush1.bf16.msra.mxu0 %v10796
    %11625 = vmatprep.subr.bf16.mxu0 %v10806
    %11626 = vmatpush1.bf16.msra.mxu0 %v10805
    %11627 = vmatprep.subr.bf16.mxu0 %v10815
    %11628 = vmatpush1.bf16.msra.mxu0 %v10814
    %11629 = vmatprep.subr.bf16.mxu0 %v10824
    %11630 = vmatpush1.bf16.msra.mxu0 %v10823
    %11631 = vmatprep.mubr.bf16.mxu0 %v9121
    %11632 = vmatmul.mubr.bf16.gmra.mrb[0].mxu0 %v9120
    %v11633 = vpop.f32.mrb[0].mxu0
    %v11634 = vadd.f32 %v11593, %v11633
    %v11635 = vpop.f32.mrb[0].mxu0
    %v11636 = vadd.f32 %v11595, %v11635
    %v11637 = vpop.f32.mrb[0].mxu0
    %v11638 = vpop.f32.mrb[0].mxu0
    %11639 = vdwg.mxu0
    %11640 = vmatprep.subr.bf16.mxu0 %v10833
    %11641 = vmatpush1.bf16.msra.mxu0 %v10832
    %11642 = vmatprep.subr.bf16.mxu0 %v10842
    %11643 = vmatpush1.bf16.msra.mxu0 %v10841
    %11644 = vmatprep.subr.bf16.mxu0 %v10851
    %11645 = vmatpush1.bf16.msra.mxu0 %v10850
    %11646 = vmatprep.subr.bf16.mxu0 %v10860
    %11647 = vmatpush1.bf16.msra.mxu0 %v10859
    %11648 = vmatprep.subr.bf16.mxu0 0
    %11649 = vmatpush1.bf16.msra.mxu0 0
    %11650 = vmatprep.subr.bf16.mxu0 0
    %11651 = vmatpush1.bf16.msra.mxu0 0
    %11652 = vmatprep.subr.bf16.mxu0 0
    %11653 = vmatpush1.bf16.msra.mxu0 0
    %11654 = vmatprep.subr.bf16.mxu0 0
    %11655 = vmatpush1.bf16.msra.mxu0 0
    %11656 = vmatprep.subr.bf16.mxu0 0
    %11657 = vmatpush1.bf16.msra.mxu0 0
    %11658 = vmatprep.subr.bf16.mxu0 0
    %11659 = vmatpush1.bf16.msra.mxu0 0
    %11660 = vmatprep.subr.bf16.mxu0 0
    %11661 = vmatpush1.bf16.msra.mxu0 0
    %11662 = vmatprep.subr.bf16.mxu0 0
    %11663 = vmatpush1.bf16.msra.mxu0 0
    %11664 = vmatprep.subr.bf16.mxu0 0
    %11665 = vmatpush1.bf16.msra.mxu0 0
    %11666 = vmatprep.subr.bf16.mxu0 0
    %11667 = vmatpush1.bf16.msra.mxu0 0
    %11668 = vmatprep.subr.bf16.mxu0 0
    %11669 = vmatpush1.bf16.msra.mxu0 0
    %11670 = vmatprep.subr.bf16.mxu0 0
    %11671 = vmatpush1.bf16.msra.mxu0 0
    %11672 = vmatprep.mubr.bf16.mxu0 0
    %11673 = vmatmul.mubr.bf16.gmra.mrb[0].mxu0 %v11187
    %v11674 = vpop.f32.mrb[0].mxu0
    %v11675 = vadd.f32 %v11634, %v11674
    %v11676 = vpop.f32.mrb[0].mxu0
    %v11677 = vadd.f32 %v11636, %v11676
    %v11678 = vpop.f32.mrb[0].mxu0
    %v11679 = vpop.f32.mrb[0].mxu0
    %11680 = vdwg.mxu0
    %11681 = vmatprep.subr.bf16.mxu0 0
    %11682 = vmatpush1.bf16.msra.mxu0 %v10546
    %11683 = vmatprep.subr.bf16.mxu0 0
    %11684 = vmatpush1.bf16.msra.mxu0 %v10555
    %11685 = vmatprep.subr.bf16.mxu0 0
    %11686 = vmatpush1.bf16.msra.mxu0 %v10564
    %11687 = vmatprep.subr.bf16.mxu0 0
    %11688 = vmatpush1.bf16.msra.mxu0 %v10573
    %11689 = vmatprep.subr.bf16.mxu0 0
    %11690 = vmatpush1.bf16.msra.mxu0 %v10582
    %11691 = vmatprep.subr.bf16.mxu0 0
    %11692 = vmatpush1.bf16.msra.mxu0 %v10591
    %11693 = vmatprep.subr.bf16.mxu0 0
    %11694 = vmatpush1.bf16.msra.mxu0 %v10600
    %11695 = vmatprep.subr.bf16.mxu0 0
    %11696 = vmatpush1.bf16.msra.mxu0 %v10609
    %11697 = vmatprep.subr.bf16.mxu0 0
    %11698 = vmatpush1.bf16.msra.mxu0 %v10618
    %11699 = vmatprep.subr.bf16.mxu0 0
    %11700 = vmatpush1.bf16.msra.mxu0 %v10627
    %11701 = vmatprep.subr.bf16.mxu0 0
    %11702 = vmatpush1.bf16.msra.mxu0 %v10636
    %11703 = vmatprep.subr.bf16.mxu0 0
    %11704 = vmatpush1.bf16.msra.mxu0 %v10645
    %11705 = vmatprep.subr.bf16.mxu0 0
    %11706 = vmatpush1.bf16.msra.mxu0 %v10654
    %11707 = vmatprep.subr.bf16.mxu0 0
    %11708 = vmatpush1.bf16.msra.mxu0 %v10663
    %11709 = vmatprep.subr.bf16.mxu0 0
    %11710 = vmatpush1.bf16.msra.mxu0 %v10672
    %11711 = vmatprep.subr.bf16.mxu0 0
    %11712 = vmatpush1.bf16.msra.mxu0 %v10681
    %11713 = vmatprep.mubr.bf16.mxu0 %v9119
    %11714 = vmatmul.mubr.bf16.gmra.mrb[0].mxu0 %v9118
    %v11715 = vpop.f32.mrb[0].mxu0
    %v11716 = vadd.f32 %v9520, %v11715
    %v11717 = vpop.f32.mrb[0].mxu0
    %v11718 = vpop.f32.mrb[0].mxu0
    %v11719 = vpop.f32.mrb[0].mxu0
    %11720 = vdwg.mxu0
    %11721 = vmatprep.subr.bf16.mxu0 0
    %11722 = vmatpush1.bf16.msra.mxu0 %v10690
    %11723 = vmatprep.subr.bf16.mxu0 0
    %11724 = vmatpush1.bf16.msra.mxu0 %v10699
    %11725 = vmatprep.subr.bf16.mxu0 0
    %11726 = vmatpush1.bf16.msra.mxu0 %v10708
    %11727 = vmatprep.subr.bf16.mxu0 0
    %11728 = vmatpush1.bf16.msra.mxu0 %v10717
    %11729 = vmatprep.subr.bf16.mxu0 0
    %11730 = vmatpush1.bf16.msra.mxu0 %v10726
    %11731 = vmatprep.subr.bf16.mxu0 0
    %11732 = vmatpush1.bf16.msra.mxu0 %v10735
    %11733 = vmatprep.subr.bf16.mxu0 0
    %11734 = vmatpush1.bf16.msra.mxu0 %v10744
    %11735 = vmatprep.subr.bf16.mxu0 0
    %11736 = vmatpush1.bf16.msra.mxu0 %v10753
    %11737 = vmatprep.subr.bf16.mxu0 0
    %11738 = vmatpush1.bf16.msra.mxu0 %v10762
    %11739 = vmatprep.subr.bf16.mxu0 0
    %11740 = vmatpush1.bf16.msra.mxu0 %v10771
    %11741 = vmatprep.subr.bf16.mxu0 0
    %11742 = vmatpush1.bf16.msra.mxu0 %v10780
    %11743 = vmatprep.subr.bf16.mxu0 0
    %11744 = vmatpush1.bf16.msra.mxu0 %v10789
    %11745 = vmatprep.subr.bf16.mxu0 0
    %11746 = vmatpush1.bf16.msra.mxu0 %v10798
    %11747 = vmatprep.subr.bf16.mxu0 0
    %11748 = vmatpush1.bf16.msra.mxu0 %v10807
    %11749 = vmatprep.subr.bf16.mxu0 0
    %11750 = vmatpush1.bf16.msra.mxu0 %v10816
    %11751 = vmatprep.subr.bf16.mxu0 0
    %11752 = vmatpush1.bf16.msra.mxu0 %v10825
    %11753 = vmatprep.mubr.bf16.mxu0 %v9121
    %11754 = vmatmul.mubr.bf16.gmra.mrb[0].mxu0 %v9120
    %v11755 = vpop.f32.mrb[0].mxu0
    %v11756 = vadd.f32 %v11716, %v11755
    %v11757 = vpop.f32.mrb[0].mxu0
    %v11758 = vpop.f32.mrb[0].mxu0
    %v11759 = vpop.f32.mrb[0].mxu0
    %11760 = vdwg.mxu0
    %11761 = vmatprep.subr.bf16.mxu0 0
    %11762 = vmatpush1.bf16.msra.mxu0 %v10834
    %11763 = vmatprep.subr.bf16.mxu0 0
    %11764 = vmatpush1.bf16.msra.mxu0 %v10843
    %11765 = vmatprep.subr.bf16.mxu0 0
    %11766 = vmatpush1.bf16.msra.mxu0 %v10852
    %11767 = vmatprep.subr.bf16.mxu0 0
    %11768 = vmatpush1.bf16.msra.mxu0 %v10861
    %11769 = vmatprep.subr.bf16.mxu0 0
    %11770 = vmatpush1.bf16.msra.mxu0 0
    %11771 = vmatprep.subr.bf16.mxu0 0
    %11772 = vmatpush1.bf16.msra.mxu0 0
    %11773 = vmatprep.subr.bf16.mxu0 0
    %11774 = vmatpush1.bf16.msra.mxu0 0
    %11775 = vmatprep.subr.bf16.mxu0 0
    %11776 = vmatpush1.bf16.msra.mxu0 0
    %11777 = vmatprep.subr.bf16.mxu0 0
    %11778 = vmatpush1.bf16.msra.mxu0 0
    %11779 = vmatprep.subr.bf16.mxu0 0
    %11780 = vmatpush1.bf16.msra.mxu0 0
    %11781 = vmatprep.subr.bf16.mxu0 0
    %11782 = vmatpush1.bf16.msra.mxu0 0
    %11783 = vmatprep.subr.bf16.mxu0 0
    %11784 = vmatpush1.bf16.msra.mxu0 0
    %11785 = vmatprep.subr.bf16.mxu0 0
    %11786 = vmatpush1.bf16.msra.mxu0 0
    %11787 = vmatprep.subr.bf16.mxu0 0
    %11788 = vmatpush1.bf16.msra.mxu0 0
    %11789 = vmatprep.subr.bf16.mxu0 0
    %11790 = vmatpush1.bf16.msra.mxu0 0
    %11791 = vmatprep.subr.bf16.mxu0 0
    %11792 = vmatpush1.bf16.msra.mxu0 0
    %11793 = vmatprep.mubr.bf16.mxu0 0
    %11794 = vmatmul.mubr.bf16.gmra.mrb[0].mxu0 %v11187
    %v11795 = vpop.f32.mrb[0].mxu0
    %v11796 = vadd.f32 %v11756, %v11795
    %v11797 = vpop.f32.mrb[0].mxu0
    %v11798 = vpop.f32.mrb[0].mxu0
    %v11799 = vpop.f32.mrb[0].mxu0
    %11800 = vdwg.mxu0
    %v11801 = vsel %vm2879, %v11306, 0.0
    %v11802 = vrot.slane %v11801, 4
    %v11803 = vadd.f32 %v11801, %v11802
    %v11804 = vrot.slane %v11803, 2
    %v11805 = vadd.f32 %v11803, %v11804
    %v11806 = vrot.slane %v11805, 1
    %v11807 = vadd.f32 %v11805, %v11806
    %v11808 = vsel %vm2879, %v11308, 0.0
    %v11809 = vrot.slane %v11808, 4
    %v11810 = vadd.f32 %v11808, %v11809
    %v11811 = vrot.slane %v11810, 2
    %v11812 = vadd.f32 %v11810, %v11811
    %v11813 = vrot.slane %v11812, 1
    %v11814 = vadd.f32 %v11812, %v11813
    %v11815 = vsel %vm2879, %v11429, 0.0
    %v11816 = vrot.slane %v11815, 4
    %v11817 = vadd.f32 %v11815, %v11816
    %v11818 = vrot.slane %v11817, 2
    %v11819 = vadd.f32 %v11817, %v11818
    %v11820 = vrot.slane %v11819, 1
    %v11821 = vadd.f32 %v11819, %v11820
    %v11822 = vsel %vm2879, %v11431, 0.0
    %v11823 = vrot.slane %v11822, 4
    %v11824 = vadd.f32 %v11822, %v11823
    %v11825 = vrot.slane %v11824, 2
    %v11826 = vadd.f32 %v11824, %v11825
    %v11827 = vrot.slane %v11826, 1
    %v11828 = vadd.f32 %v11826, %v11827
    %v11829 = vsel %vm2879, %v11552, 0.0
    %v11830 = vrot.slane %v11829, 4
    %v11831 = vadd.f32 %v11829, %v11830
    %v11832 = vrot.slane %v11831, 2
    %v11833 = vadd.f32 %v11831, %v11832
    %v11834 = vrot.slane %v11833, 1
    %v11835 = vadd.f32 %v11833, %v11834
    %v11836 = vsel %vm2879, %v11554, 0.0
    %v11837 = vrot.slane %v11836, 4
    %v11838 = vadd.f32 %v11836, %v11837
    %v11839 = vrot.slane %v11838, 2
    %v11840 = vadd.f32 %v11838, %v11839
    %v11841 = vrot.slane %v11840, 1
    %v11842 = vadd.f32 %v11840, %v11841
    %v11843 = vsel %vm2879, %v11675, 0.0
    %v11844 = vrot.slane %v11843, 4
    %v11845 = vadd.f32 %v11843, %v11844
    %v11846 = vrot.slane %v11845, 2
    %v11847 = vadd.f32 %v11845, %v11846
    %v11848 = vrot.slane %v11847, 1
    %v11849 = vadd.f32 %v11847, %v11848
    %v11850 = vsel %vm2879, %v11677, 0.0
    %v11851 = vrot.slane %v11850, 4
    %v11852 = vadd.f32 %v11850, %v11851
    %v11853 = vrot.slane %v11852, 2
    %v11854 = vadd.f32 %v11852, %v11853
    %v11855 = vrot.slane %v11854, 1
    %v11856 = vadd.f32 %v11854, %v11855
    %v11857 = vsel %vm2879, %v11796, 0.0
    %v11858 = vrot.slane %v11857, 4
    %v11859 = vadd.f32 %v11857, %v11858
    %v11860 = vrot.slane %v11859, 2
    %v11861 = vadd.f32 %v11859, %v11860
    %v11862 = vrot.slane %v11861, 1
    %v11863 = vadd.f32 %v11861, %v11862
    %v11864 = vmul.f32 %v11807, %v2916
    %v11865 = vmul.f32 %v11814, %v2916
    %v11866 = vmul.f32 %v11821, %v2916
    %v11867 = vmul.f32 %v11828, %v2916
    %v11868 = vmul.f32 %v11835, %v2916
    %v11869 = vmul.f32 %v11842, %v2916
    %v11870 = vmul.f32 %v11849, %v2916
    %v11871 = vmul.f32 %v11856, %v2916
    %v11872 = vmul.f32 %v11863, %v2916
    %v11873 = vsub.f32 %v11306, %v11864
    %v11874 = vsub.f32 %v11308, %v11865
    %v11875 = vsub.f32 %v11429, %v11866
    %v11876 = vsub.f32 %v11431, %v11867
    %v11877 = vsub.f32 %v11552, %v11868
    %v11878 = vsub.f32 %v11554, %v11869
    %v11879 = vsub.f32 %v11675, %v11870
    %v11880 = vsub.f32 %v11677, %v11871
    %v11881 = vsub.f32 %v11796, %v11872
    %v11882 = vmul.f32 %v11873, %v11873
    %v11883 = vmul.f32 %v11874, %v11874
    %v11884 = vmul.f32 %v11875, %v11875
    %v11885 = vmul.f32 %v11876, %v11876
    %v11886 = vmul.f32 %v11877, %v11877
    %v11887 = vmul.f32 %v11878, %v11878
    %v11888 = vmul.f32 %v11879, %v11879
    %v11889 = vmul.f32 %v11880, %v11880
    %v11890 = vmul.f32 %v11881, %v11881
    %v11891 = vsel %vm2879, %v11882, 0.0
    %v11892 = vrot.slane %v11891, 4
    %v11893 = vadd.f32 %v11891, %v11892
    %v11894 = vrot.slane %v11893, 2
    %v11895 = vadd.f32 %v11893, %v11894
    %v11896 = vrot.slane %v11895, 1
    %v11897 = vadd.f32 %v11895, %v11896
    %v11898 = vsel %vm2879, %v11883, 0.0
    %v11899 = vrot.slane %v11898, 4
    %v11900 = vadd.f32 %v11898, %v11899
    %v11901 = vrot.slane %v11900, 2
    %v11902 = vadd.f32 %v11900, %v11901
    %v11903 = vrot.slane %v11902, 1
    %v11904 = vadd.f32 %v11902, %v11903
    %v11905 = vsel %vm2879, %v11884, 0.0
    %v11906 = vrot.slane %v11905, 4
    %v11907 = vadd.f32 %v11905, %v11906
    %v11908 = vrot.slane %v11907, 2
    %v11909 = vadd.f32 %v11907, %v11908
    %v11910 = vrot.slane %v11909, 1
    %v11911 = vadd.f32 %v11909, %v11910
    %v11912 = vsel %vm2879, %v11885, 0.0
    %v11913 = vrot.slane %v11912, 4
    %v11914 = vadd.f32 %v11912, %v11913
    %v11915 = vrot.slane %v11914, 2
    %v11916 = vadd.f32 %v11914, %v11915
    %v11917 = vrot.slane %v11916, 1
    %v11918 = vadd.f32 %v11916, %v11917
    %v11919 = vsel %vm2879, %v11886, 0.0
    %v11920 = vrot.slane %v11919, 4
    %v11921 = vadd.f32 %v11919, %v11920
    %v11922 = vrot.slane %v11921, 2
    %v11923 = vadd.f32 %v11921, %v11922
    %v11924 = vrot.slane %v11923, 1
    %v11925 = vadd.f32 %v11923, %v11924
    %v11926 = vsel %vm2879, %v11887, 0.0
    %v11927 = vrot.slane %v11926, 4
    %v11928 = vadd.f32 %v11926, %v11927
    %v11929 = vrot.slane %v11928, 2
    %v11930 = vadd.f32 %v11928, %v11929
    %v11931 = vrot.slane %v11930, 1
    %v11932 = vadd.f32 %v11930, %v11931
    %v11933 = vsel %vm2879, %v11888, 0.0
    %v11934 = vrot.slane %v11933, 4
    %v11935 = vadd.f32 %v11933, %v11934
    %v11936 = vrot.slane %v11935, 2
    %v11937 = vadd.f32 %v11935, %v11936
    %v11938 = vrot.slane %v11937, 1
    %v11939 = vadd.f32 %v11937, %v11938
    %v11940 = vsel %vm2879, %v11889, 0.0
    %v11941 = vrot.slane %v11940, 4
    %v11942 = vadd.f32 %v11940, %v11941
    %v11943 = vrot.slane %v11942, 2
    %v11944 = vadd.f32 %v11942, %v11943
    %v11945 = vrot.slane %v11944, 1
    %v11946 = vadd.f32 %v11944, %v11945
    %v11947 = vsel %vm2879, %v11890, 0.0
    %v11948 = vrot.slane %v11947, 4
    %v11949 = vadd.f32 %v11947, %v11948
    %v11950 = vrot.slane %v11949, 2
    %v11951 = vadd.f32 %v11949, %v11950
    %v11952 = vrot.slane %v11951, 1
    %v11953 = vadd.f32 %v11951, %v11952
    %v11954 = vmul.f32 %v11897, %v2916
    %v11955 = vmul.f32 %v11904, %v2916
    %v11956 = vmul.f32 %v11911, %v2916
    %v11957 = vmul.f32 %v11918, %v2916
    %v11958 = vmul.f32 %v11925, %v2916
    %v11959 = vmul.f32 %v11932, %v2916
    %v11960 = vmul.f32 %v11939, %v2916
    %v11961 = vmul.f32 %v11946, %v2916
    %v11962 = vmul.f32 %v11953, %v2916
    %v11965 = vlaneseq
    %v11966 = vshrl.u32 %v11965, 7
    %v11967 = vsub.s32 0, %v11966
    %v11968 = vrot.slane %v69, %v11967
    %v11969 = vlaneseq
    %v11970 = vshrl.u32 %v11969, 7
    %v11971 = vsub.s32 1, %v11970
    %v11972 = vrot.slane %v69, %v11971
    %v11973 = vlaneseq
    %v11974 = vshrl.u32 %v11973, 7
    %v11975 = vsub.s32 2, %v11974
    %v11976 = vrot.slane %v69, %v11975
    %v11977 = vlaneseq
    %v11978 = vshrl.u32 %v11977, 7
    %v11979 = vsub.s32 3, %v11978
    %v11980 = vrot.slane %v69, %v11979
    %v11981 = vlaneseq
    %v11982 = vshrl.u32 %v11981, 7
    %v11983 = vsub.s32 4, %v11982
    %v11984 = vrot.slane %v69, %v11983
    %v11985 = vlaneseq
    %v11986 = vshrl.u32 %v11985, 7
    %v11987 = vsub.s32 5, %v11986
    %v11988 = vrot.slane %v69, %v11987
    %v11989 = vlaneseq
    %v11990 = vshrl.u32 %v11989, 7
    %v11991 = vsub.s32 6, %v11990
    %v11992 = vrot.slane %v69, %v11991
    %v11993 = vlaneseq
    %v11994 = vshrl.u32 %v11993, 7
    %v11995 = vsub.s32 7, %v11994
    %v11996 = vrot.slane %v69, %v11995
    %v11997 = vlaneseq
    %v11998 = vshrl.u32 %v11997, 7
    %v11999 = vsub.s32 0, %v11998
    %v12000 = vrot.slane %v71, %v11999
    %v12010 = vmul.f32 %v11968, %v11873
    %v12011 = vmul.f32 %v11972, %v11874
    %v12012 = vmul.f32 %v11976, %v11875
    %v12013 = vmul.f32 %v11980, %v11876
    %v12014 = vmul.f32 %v11984, %v11877
    %v12015 = vmul.f32 %v11988, %v11878
    %v12016 = vmul.f32 %v11992, %v11879
    %v12017 = vmul.f32 %v11996, %v11880
    %v12018 = vmul.f32 %v12000, %v11881
    %v12019 = vadd.f32 %v11954, 1e-05
    %v12020 = vadd.f32 %v11955, 1e-05
    %v12021 = vadd.f32 %v11956, 1e-05
    %v12022 = vadd.f32 %v11957, 1e-05
    %v12023 = vadd.f32 %v11958, 1e-05
    %v12024 = vadd.f32 %v11959, 1e-05
    %v12025 = vadd.f32 %v11960, 1e-05
    %v12026 = vadd.f32 %v11961, 1e-05
    %v12027 = vadd.f32 %v11962, 1e-05
    %v12028 = vrsqrt.pop %v12019
    %v12029 = vrsqrt.pop %v12020
    %v12030 = vrsqrt.pop %v12021
    %v12031 = vrsqrt.pop %v12022
    %v12032 = vrsqrt.pop %v12023
    %v12033 = vrsqrt.pop %v12024
    %v12034 = vrsqrt.pop %v12025
    %v12035 = vrsqrt.pop %v12026
    %v12036 = vrsqrt.pop %v12027
    %v12037 = vmul.f32 %v12010, %v12028
    %v12038 = vmul.f32 %v12011, %v12029
    %v12039 = vmul.f32 %v12012, %v12030
    %v12040 = vmul.f32 %v12013, %v12031
    %v12041 = vmul.f32 %v12014, %v12032
    %v12042 = vmul.f32 %v12015, %v12033
    %v12043 = vmul.f32 %v12016, %v12034
    %v12044 = vmul.f32 %v12017, %v12035
    %v12045 = vmul.f32 %v12018, %v12036
    %v12048 = vlaneseq
    %v12049 = vshrl.u32 %v12048, 7
    %v12050 = vsub.s32 0, %v12049
    %v12051 = vrot.slane %v75, %v12050
    %v12052 = vlaneseq
    %v12053 = vshrl.u32 %v12052, 7
    %v12054 = vsub.s32 1, %v12053
    %v12055 = vrot.slane %v75, %v12054
    %v12056 = vlaneseq
    %v12057 = vshrl.u32 %v12056, 7
    %v12058 = vsub.s32 2, %v12057
    %v12059 = vrot.slane %v75, %v12058
    %v12060 = vlaneseq
    %v12061 = vshrl.u32 %v12060, 7
    %v12062 = vsub.s32 3, %v12061
    %v12063 = vrot.slane %v75, %v12062
    %v12064 = vlaneseq
    %v12065 = vshrl.u32 %v12064, 7
    %v12066 = vsub.s32 4, %v12065
    %v12067 = vrot.slane %v75, %v12066
    %v12068 = vlaneseq
    %v12069 = vshrl.u32 %v12068, 7
    %v12070 = vsub.s32 5, %v12069
    %v12071 = vrot.slane %v75, %v12070
    %v12072 = vlaneseq
    %v12073 = vshrl.u32 %v12072, 7
    %v12074 = vsub.s32 6, %v12073
    %v12075 = vrot.slane %v75, %v12074
    %v12076 = vlaneseq
    %v12077 = vshrl.u32 %v12076, 7
    %v12078 = vsub.s32 7, %v12077
    %v12079 = vrot.slane %v75, %v12078
    %v12080 = vlaneseq
    %v12081 = vshrl.u32 %v12080, 7
    %v12082 = vsub.s32 0, %v12081
    %v12083 = vrot.slane %v77, %v12082
    %v12093 = vadd.f32 %v12037, %v12051
    %v12094 = vadd.f32 %v12038, %v12055
    %v12095 = vadd.f32 %v12039, %v12059
    %v12096 = vadd.f32 %v12040, %v12063
    %v12097 = vadd.f32 %v12041, %v12067
    %v12098 = vadd.f32 %v12042, %v12071
    %v12099 = vadd.f32 %v12043, %v12075
    %v12100 = vadd.f32 %v12044, %v12079
    %v12101 = vadd.f32 %v12045, %v12083
    %v12102 = vmax.f32 %v12093, 0.0
    %v12103 = vmax.f32 %v12094, 0.0
    %v12104 = vmax.f32 %v12095, 0.0
    %v12105 = vmax.f32 %v12096, 0.0
    %v12106 = vmax.f32 %v12097, 0.0
    %v12107 = vmax.f32 %v12098, 0.0
    %v12108 = vmax.f32 %v12099, 0.0
    %v12109 = vmax.f32 %v12100, 0.0
    %v12110 = vmax.f32 %v12101, 0.0
    %v12111 = vpack.c.bf16 %v12102, %v12102
    %v12112 = vpack.c.bf16 %v12103, %v12103
    %v12113 = vpack.c.bf16 %v12104, %v12104
    %v12114 = vpack.c.bf16 %v12105, %v12105
    %v12115 = vpack.c.bf16 %v12106, %v12106
    %v12116 = vpack.c.bf16 %v12107, %v12107
    %v12117 = vpack.c.bf16 %v12108, %v12108
    %v12118 = vpack.c.bf16 %v12109, %v12109
    %v12119 = vpack.c.bf16 %v12110, %v12110
    %v12120 = vld [vmem:[%s6] sm:$0xf]
    %v12121 = vld [vmem:[%s6 + $0x4] sm:$0xf]
    %v12122 = vld [vmem:[%s6 + $0x8] sm:$0xf]
    %v12123 = vld [vmem:[%s6 + $0xc] sm:$0xf]
    %v12124 = vld [vmem:[%s6 + $0x10] sm:$0xf]
    %v12125 = vld [vmem:[%s6 + $0x14] sm:$0xf]
    %v12126 = vld [vmem:[%s6 + $0x18] sm:$0xf]
    %v12127 = vld [vmem:[%s6 + $0x1c] sm:$0xf]
    %v12128 = vld [vmem:[%s6 + $0x20] sm:$0xf]
    %v12129 = vld [vmem:[%s6 + $0x24] sm:$0xf]
    %v12130 = vld [vmem:[%s6 + $0x28] sm:$0xf]
    %v12131 = vld [vmem:[%s6 + $0x2c] sm:$0xf]
    %v12132 = vld [vmem:[%s6 + $0x30] sm:$0xf]
    %v12133 = vld [vmem:[%s6 + $0x34] sm:$0xf]
    %v12134 = vld [vmem:[%s6 + $0x38] sm:$0xf]
    %v12135 = vld [vmem:[%s6 + $0x3c] sm:$0xf]
    %v12136 = vld [vmem:[%s6 + $0x40] sm:$0xf]
    %v12137 = vld [vmem:[%s6 + $0x44] sm:$0xf]
    %v12138 = vld [vmem:[%s6 + $0x48] sm:$0xf]
    %v12139 = vld [vmem:[%s6 + $0x4c] sm:$0xf]
    %v12140 = vld [vmem:[%s6 + $0x50] sm:$0xf]
    %v12141 = vld [vmem:[%s6 + $0x54] sm:$0xf]
    %v12142 = vld [vmem:[%s6 + $0x58] sm:$0xf]
    %v12143 = vld [vmem:[%s6 + $0x5c] sm:$0xf]
    %v12144 = vld [vmem:[%s6 + $0x60] sm:$0xf]
    %v12145 = vld [vmem:[%s6 + $0x64] sm:$0xf]
    %v12146 = vld [vmem:[%s6 + $0x68] sm:$0xf]
    %v12147 = vld [vmem:[%s6 + $0x6c] sm:$0xf]
    %v12148 = vld [vmem:[%s6 + $0x70] sm:$0xf]
    %v12149 = vld [vmem:[%s6 + $0x74] sm:$0xf]
    %v12150 = vld [vmem:[%s6 + $0x78] sm:$0xf]
    %v12151 = vld [vmem:[%s6 + $0x7c] sm:$0xf]
    %v12152 = vld [vmem:[%s6 + $0x80] sm:$0xf]
    %v12153 = vld [vmem:[%s6 + $0x84] sm:$0xf]
    %v12154 = vld [vmem:[%s6 + $0x88] sm:$0xf]
    %v12155 = vld [vmem:[%s6 + $0x8c] sm:$0xf]
    %v12156 = vld [vmem:[%s6 + $0x90] sm:$0xf]
    %v12157 = vld [vmem:[%s6 + $0x94] sm:$0xf]
    %v12158 = vld [vmem:[%s6 + $0x98] sm:$0xf]
    %v12159 = vld [vmem:[%s6 + $0x9c] sm:$0xf]
    %v12160 = vld [vmem:[%s6 + $0xa0] sm:$0xf]
    %v12161 = vld [vmem:[%s6 + $0xa4] sm:$0xf]
    %v12162 = vld [vmem:[%s6 + $0xa8] sm:$0xf]
    %v12163 = vld [vmem:[%s6 + $0xac] sm:$0xf]
    %v12164 = vld [vmem:[%s6 + $0xb0] sm:$0xf]
    %v12165 = vld [vmem:[%s6 + $0xb4] sm:$0xf]
    %v12166 = vld [vmem:[%s6 + $0xb8] sm:$0xf]
    %v12167 = vld [vmem:[%s6 + $0xbc] sm:$0xf]
    %v12168 = vld [vmem:[%s6 + $0xc0] sm:$0xf]
    %v12169 = vld [vmem:[%s6 + $0xc4] sm:$0xf]
    %v12170 = vld [vmem:[%s6 + $0xc8] sm:$0xf]
    %v12171 = vld [vmem:[%s6 + $0xcc] sm:$0xf]
    %v12172 = vld [vmem:[%s6 + $0xd0] sm:$0xf]
    %v12173 = vld [vmem:[%s6 + $0xd4] sm:$0xf]
    %v12174 = vld [vmem:[%s6 + $0xd8] sm:$0xf]
    %v12175 = vld [vmem:[%s6 + $0xdc] sm:$0xf]
    %v12176 = vld [vmem:[%s6 + $0xe0] sm:$0xf]
    %v12177 = vld [vmem:[%s6 + $0xe4] sm:$0xf]
    %v12178 = vld [vmem:[%s6 + $0xe8] sm:$0xf]
    %v12179 = vld [vmem:[%s6 + $0xec] sm:$0xf]
    %v12180 = vld [vmem:[%s6 + $0xf0] sm:$0xf]
    %v12181 = vld [vmem:[%s6 + $0xf4] sm:$0xf]
    %v12182 = vld [vmem:[%s6 + $0xf8] sm:$0xf]
    %v12183 = vld [vmem:[%s6 + $0xfc] sm:$0xf]
    %v12184 = vld [vmem:[%s6 + $0x100] sm:$0xf]
    %v12185 = vld [vmem:[%s6 + $0x104] sm:$0xf]
    %v12186 = vld [vmem:[%s6 + $0x108] sm:$0xf]
    %v12187 = vld [vmem:[%s6 + $0x10c] sm:$0xf]
    %v12188 = vld [vmem:[%s6 + $0x110] sm:$0xf]
    %v12189 = vld [vmem:[%s6 + $0x114] sm:$0xf]
    %v12190 = vld [vmem:[%s6 + $0x118] sm:$0xf]
    %v12191 = vld [vmem:[%s6 + $0x11c] sm:$0xf]
    %v12192 = vld [vmem:[%s6 + $0x120] sm:$0xf]
    %v12193 = vld [vmem:[%s6 + $0x124] sm:$0xf]
    %v12194 = vld [vmem:[%s6 + $0x128] sm:$0xf]
    %v12195 = vld [vmem:[%s6 + $0x12c] sm:$0xf]
    %v12196 = vld [vmem:[%s6 + $0x130] sm:$0xf]
    %v12197 = vld [vmem:[%s6 + $0x134] sm:$0xf]
    %v12198 = vld [vmem:[%s6 + $0x138] sm:$0xf]
    %v12199 = vld [vmem:[%s6 + $0x13c] sm:$0xf]
    %v12200 = vld [vmem:[%s6 + $0x140] sm:$0xf]
    %v12201 = vld [vmem:[%s6 + $0x144] sm:$0xf]
    %v12202 = vld [vmem:[%s6 + $0x148] sm:$0xf]
    %v12203 = vld [vmem:[%s6 + $0x14c] sm:$0xf]
    %v12204 = vld [vmem:[%s6 + $0x150] sm:$0xf]
    %v12205 = vld [vmem:[%s6 + $0x154] sm:$0xf]
    %v12206 = vld [vmem:[%s6 + $0x158] sm:$0xf]
    %v12207 = vld [vmem:[%s6 + $0x15c] sm:$0xf]
    %v12208 = vld [vmem:[%s6 + $0x160] sm:$0xf]
    %v12209 = vld [vmem:[%s6 + $0x164] sm:$0xf]
    %v12210 = vld [vmem:[%s6 + $0x168] sm:$0xf]
    %v12211 = vld [vmem:[%s6 + $0x16c] sm:$0xf]
    %v12212 = vld [vmem:[%s6 + $0x170] sm:$0xf]
    %v12213 = vld [vmem:[%s6 + $0x174] sm:$0xf]
    %v12214 = vld [vmem:[%s6 + $0x178] sm:$0xf]
    %v12215 = vld [vmem:[%s6 + $0x17c] sm:$0xf]
    %v12216 = vld [vmem:[%s6 + $0x180] sm:$0xf]
    %v12217 = vld [vmem:[%s6 + $0x184] sm:$0xf]
    %v12218 = vld [vmem:[%s6 + $0x188] sm:$0xf]
    %v12219 = vld [vmem:[%s6 + $0x18c] sm:$0xf]
    %v12220 = vld [vmem:[%s6 + $0x190] sm:$0xf]
    %v12221 = vld [vmem:[%s6 + $0x194] sm:$0xf]
    %v12222 = vld [vmem:[%s6 + $0x198] sm:$0xf]
    %v12223 = vld [vmem:[%s6 + $0x19c] sm:$0xf]
    %v12224 = vld [vmem:[%s6 + $0x1a0] sm:$0xf]
    %v12225 = vld [vmem:[%s6 + $0x1a4] sm:$0xf]
    %v12226 = vld [vmem:[%s6 + $0x1a8] sm:$0xf]
    %v12227 = vld [vmem:[%s6 + $0x1ac] sm:$0xf]
    %v12228 = vld [vmem:[%s6 + $0x1b0] sm:$0xf]
    %v12229 = vld [vmem:[%s6 + $0x1b4] sm:$0xf]
    %v12230 = vld [vmem:[%s6 + $0x1b8] sm:$0xf]
    %v12231 = vld [vmem:[%s6 + $0x1bc] sm:$0xf]
    %v12232 = vld [vmem:[%s6 + $0x1c0] sm:$0xf]
    %v12233 = vld [vmem:[%s6 + $0x1c4] sm:$0xf]
    %v12234 = vld [vmem:[%s6 + $0x1c8] sm:$0xf]
    %v12235 = vld [vmem:[%s6 + $0x1cc] sm:$0xf]
    %v12236 = vld [vmem:[%s6 + $0x1d0] sm:$0xf]
    %v12237 = vld [vmem:[%s6 + $0x1d4] sm:$0xf]
    %v12238 = vld [vmem:[%s6 + $0x1d8] sm:$0xf]
    %v12239 = vld [vmem:[%s6 + $0x1dc] sm:$0xf]
    %v12240 = vld [vmem:[%s6 + $0x1e0] sm:$0xf]
    %v12241 = vld [vmem:[%s6 + $0x1e4] sm:$0xf]
    %v12242 = vld [vmem:[%s6 + $0x1e8] sm:$0xf]
    %v12243 = vld [vmem:[%s6 + $0x1ec] sm:$0xf]
    %v12244 = vld [vmem:[%s6 + $0x1f0] sm:$0xf]
    %v12245 = vld [vmem:[%s6 + $0x1f4] sm:$0xf]
    %v12246 = vld [vmem:[%s6 + $0x1f8] sm:$0xf]
    %v12247 = vld [vmem:[%s6 + $0x1fc] sm:$0xf]
    %v12248 = vld [vmem:[%s6 + $0x200] sm:$0xf]
    %v12249 = vld [vmem:[%s6 + $0x204] sm:$0xf]
    %v12250 = vld [vmem:[%s6 + $0x208] sm:$0xf]
    %v12251 = vld [vmem:[%s6 + $0x20c] sm:$0xf]
    %v12252 = vld [vmem:[%s6 + $0x210] sm:$0xf]
    %v12253 = vld [vmem:[%s6 + $0x214] sm:$0xf]
    %v12254 = vld [vmem:[%s6 + $0x218] sm:$0xf]
    %v12255 = vld [vmem:[%s6 + $0x21c] sm:$0xf]
    %v12256 = vld [vmem:[%s6 + $0x220] sm:$0xf]
    %v12257 = vld [vmem:[%s6 + $0x224] sm:$0xf]
    %v12258 = vld [vmem:[%s6 + $0x228] sm:$0xf]
    %v12259 = vld [vmem:[%s6 + $0x22c] sm:$0xf]
    %v12260 = vld [vmem:[%s6 + $0x230] sm:$0xf]
    %v12261 = vld [vmem:[%s6 + $0x234] sm:$0xf]
    %v12262 = vld [vmem:[%s6 + $0x238] sm:$0xf]
    %v12263 = vld [vmem:[%s6 + $0x23c] sm:$0xf]
    %v12408 = vunpack.c.l.b16 %v12120
    %v12409 = vunpack.c.l.b16 %v12121
    %v12410 = vunpack.c.l.b16 %v12122
    %v12411 = vunpack.c.l.b16 %v12123
    %v12412 = vunpack.c.l.b16 %v12124
    %v12413 = vunpack.c.l.b16 %v12125
    %v12414 = vunpack.c.l.b16 %v12126
    %v12415 = vunpack.c.l.b16 %v12127
    %v12416 = vunpack.c.l.b16 %v12128
    %v12417 = vunpack.c.l.b16 %v12129
    %v12418 = vunpack.c.l.b16 %v12130
    %v12419 = vunpack.c.l.b16 %v12131
    %v12420 = vunpack.c.l.b16 %v12132
    %v12421 = vunpack.c.l.b16 %v12133
    %v12422 = vunpack.c.l.b16 %v12134
    %v12423 = vunpack.c.l.b16 %v12135
    %v12424 = vunpack.c.l.b16 %v12136
    %v12425 = vunpack.c.l.b16 %v12137
    %v12426 = vunpack.c.l.b16 %v12138
    %v12427 = vunpack.c.l.b16 %v12139
    %v12428 = vunpack.c.l.b16 %v12140
    %v12429 = vunpack.c.l.b16 %v12141
    %v12430 = vunpack.c.l.b16 %v12142
    %v12431 = vunpack.c.l.b16 %v12143
    %v12432 = vunpack.c.l.b16 %v12144
    %v12433 = vunpack.c.l.b16 %v12145
    %v12434 = vunpack.c.l.b16 %v12146
    %v12435 = vunpack.c.l.b16 %v12147
    %v12436 = vunpack.c.l.b16 %v12148
    %v12437 = vunpack.c.l.b16 %v12149
    %v12438 = vunpack.c.l.b16 %v12150
    %v12439 = vunpack.c.l.b16 %v12151
    %v12440 = vunpack.c.l.b16 %v12152
    %v12441 = vunpack.c.l.b16 %v12153
    %v12442 = vunpack.c.l.b16 %v12154
    %v12443 = vunpack.c.l.b16 %v12155
    %v12444 = vunpack.c.l.b16 %v12156
    %v12445 = vunpack.c.l.b16 %v12157
    %v12446 = vunpack.c.l.b16 %v12158
    %v12447 = vunpack.c.l.b16 %v12159
    %v12448 = vunpack.c.l.b16 %v12160
    %v12449 = vunpack.c.l.b16 %v12161
    %v12450 = vunpack.c.l.b16 %v12162
    %v12451 = vunpack.c.l.b16 %v12163
    %v12452 = vunpack.c.l.b16 %v12164
    %v12453 = vunpack.c.l.b16 %v12165
    %v12454 = vunpack.c.l.b16 %v12166
    %v12455 = vunpack.c.l.b16 %v12167
    %v12456 = vunpack.c.l.b16 %v12168
    %v12457 = vunpack.c.l.b16 %v12169
    %v12458 = vunpack.c.l.b16 %v12170
    %v12459 = vunpack.c.l.b16 %v12171
    %v12460 = vunpack.c.l.b16 %v12172
    %v12461 = vunpack.c.l.b16 %v12173
    %v12462 = vunpack.c.l.b16 %v12174
    %v12463 = vunpack.c.l.b16 %v12175
    %v12464 = vunpack.c.l.b16 %v12176
    %v12465 = vunpack.c.l.b16 %v12177
    %v12466 = vunpack.c.l.b16 %v12178
    %v12467 = vunpack.c.l.b16 %v12179
    %v12468 = vunpack.c.l.b16 %v12180
    %v12469 = vunpack.c.l.b16 %v12181
    %v12470 = vunpack.c.l.b16 %v12182
    %v12471 = vunpack.c.l.b16 %v12183
    %v12472 = vunpack.c.l.b16 %v12184
    %v12473 = vunpack.c.l.b16 %v12185
    %v12474 = vunpack.c.l.b16 %v12186
    %v12475 = vunpack.c.l.b16 %v12187
    %v12476 = vunpack.c.l.b16 %v12188
    %v12477 = vunpack.c.l.b16 %v12189
    %v12478 = vunpack.c.l.b16 %v12190
    %v12479 = vunpack.c.l.b16 %v12191
    %v12480 = vunpack.c.l.b16 %v12192
    %v12481 = vunpack.c.l.b16 %v12193
    %v12482 = vunpack.c.l.b16 %v12194
    %v12483 = vunpack.c.l.b16 %v12195
    %v12484 = vunpack.c.l.b16 %v12196
    %v12485 = vunpack.c.l.b16 %v12197
    %v12486 = vunpack.c.l.b16 %v12198
    %v12487 = vunpack.c.l.b16 %v12199
    %v12488 = vunpack.c.l.b16 %v12200
    %v12489 = vunpack.c.l.b16 %v12201
    %v12490 = vunpack.c.l.b16 %v12202
    %v12491 = vunpack.c.l.b16 %v12203
    %v12492 = vunpack.c.l.b16 %v12204
    %v12493 = vunpack.c.l.b16 %v12205
    %v12494 = vunpack.c.l.b16 %v12206
    %v12495 = vunpack.c.l.b16 %v12207
    %v12496 = vunpack.c.l.b16 %v12208
    %v12497 = vunpack.c.l.b16 %v12209
    %v12498 = vunpack.c.l.b16 %v12210
    %v12499 = vunpack.c.l.b16 %v12211
    %v12500 = vunpack.c.l.b16 %v12212
    %v12501 = vunpack.c.l.b16 %v12213
    %v12502 = vunpack.c.l.b16 %v12214
    %v12503 = vunpack.c.l.b16 %v12215
    %v12504 = vunpack.c.l.b16 %v12216
    %v12505 = vunpack.c.l.b16 %v12217
    %v12506 = vunpack.c.l.b16 %v12218
    %v12507 = vunpack.c.l.b16 %v12219
    %v12508 = vunpack.c.l.b16 %v12220
    %v12509 = vunpack.c.l.b16 %v12221
    %v12510 = vunpack.c.l.b16 %v12222
    %v12511 = vunpack.c.l.b16 %v12223
    %v12512 = vunpack.c.l.b16 %v12224
    %v12513 = vunpack.c.l.b16 %v12225
    %v12514 = vunpack.c.l.b16 %v12226
    %v12515 = vunpack.c.l.b16 %v12227
    %v12516 = vunpack.c.l.b16 %v12228
    %v12517 = vunpack.c.l.b16 %v12229
    %v12518 = vunpack.c.l.b16 %v12230
    %v12519 = vunpack.c.l.b16 %v12231
    %v12520 = vunpack.c.l.b16 %v12232
    %v12521 = vunpack.c.l.b16 %v12233
    %v12522 = vunpack.c.l.b16 %v12234
    %v12523 = vunpack.c.l.b16 %v12235
    %v12524 = vunpack.c.l.b16 %v12236
    %v12525 = vunpack.c.l.b16 %v12237
    %v12526 = vunpack.c.l.b16 %v12238
    %v12527 = vunpack.c.l.b16 %v12239
    %v12528 = vunpack.c.l.b16 %v12240
    %v12529 = vunpack.c.l.b16 %v12241
    %v12530 = vunpack.c.l.b16 %v12242
    %v12531 = vunpack.c.l.b16 %v12243
    %v12532 = vunpack.c.l.b16 %v12244
    %v12533 = vunpack.c.l.b16 %v12245
    %v12534 = vunpack.c.l.b16 %v12246
    %v12535 = vunpack.c.l.b16 %v12247
    %v12536 = vunpack.c.l.b16 %v12248
    %v12537 = vunpack.c.l.b16 %v12249
    %v12538 = vunpack.c.l.b16 %v12250
    %v12539 = vunpack.c.l.b16 %v12251
    %v12540 = vunpack.c.l.b16 %v12252
    %v12541 = vunpack.c.l.b16 %v12253
    %v12542 = vunpack.c.l.b16 %v12254
    %v12543 = vunpack.c.l.b16 %v12255
    %v12544 = vunpack.c.l.b16 %v12256
    %v12545 = vunpack.c.l.b16 %v12257
    %v12546 = vunpack.c.l.b16 %v12258
    %v12547 = vunpack.c.l.b16 %v12259
    %v12548 = vunpack.c.l.b16 %v12260
    %v12549 = vunpack.c.l.b16 %v12261
    %v12550 = vunpack.c.l.b16 %v12262
    %v12551 = vunpack.c.l.b16 %v12263
    %v12552 = vpack.c.b16 %v12409, %v12408
    %v12553 = vpack.c.b16 %v12411, %v12410
    %v12554 = vpack.c.b16 %v12413, %v12412
    %v12555 = vpack.c.b16 %v12415, %v12414
    %v12556 = vpack.c.b16 %v12417, %v12416
    %v12557 = vpack.c.b16 %v12419, %v12418
    %v12558 = vpack.c.b16 %v12421, %v12420
    %v12559 = vpack.c.b16 %v12423, %v12422
    %v12560 = vpack.c.b16 %v12425, %v12424
    %v12561 = vpack.c.b16 %v12427, %v12426
    %v12562 = vpack.c.b16 %v12429, %v12428
    %v12563 = vpack.c.b16 %v12431, %v12430
    %v12564 = vpack.c.b16 %v12433, %v12432
    %v12565 = vpack.c.b16 %v12435, %v12434
    %v12566 = vpack.c.b16 %v12437, %v12436
    %v12567 = vpack.c.b16 %v12439, %v12438
    %v12568 = vpack.c.b16 %v12441, %v12440
    %v12569 = vpack.c.b16 %v12443, %v12442
    %v12570 = vpack.c.b16 %v12445, %v12444
    %v12571 = vpack.c.b16 %v12447, %v12446
    %v12572 = vpack.c.b16 %v12449, %v12448
    %v12573 = vpack.c.b16 %v12451, %v12450
    %v12574 = vpack.c.b16 %v12453, %v12452
    %v12575 = vpack.c.b16 %v12455, %v12454
    %v12576 = vpack.c.b16 %v12457, %v12456
    %v12577 = vpack.c.b16 %v12459, %v12458
    %v12578 = vpack.c.b16 %v12461, %v12460
    %v12579 = vpack.c.b16 %v12463, %v12462
    %v12580 = vpack.c.b16 %v12465, %v12464
    %v12581 = vpack.c.b16 %v12467, %v12466
    %v12582 = vpack.c.b16 %v12469, %v12468
    %v12583 = vpack.c.b16 %v12471, %v12470
    %v12584 = vpack.c.b16 %v12473, %v12472
    %v12585 = vpack.c.b16 %v12475, %v12474
    %v12586 = vpack.c.b16 %v12477, %v12476
    %v12587 = vpack.c.b16 %v12479, %v12478
    %v12588 = vpack.c.b16 %v12481, %v12480
    %v12589 = vpack.c.b16 %v12483, %v12482
    %v12590 = vpack.c.b16 %v12485, %v12484
    %v12591 = vpack.c.b16 %v12487, %v12486
    %v12592 = vpack.c.b16 %v12489, %v12488
    %v12593 = vpack.c.b16 %v12491, %v12490
    %v12594 = vpack.c.b16 %v12493, %v12492
    %v12595 = vpack.c.b16 %v12495, %v12494
    %v12596 = vpack.c.b16 %v12497, %v12496
    %v12597 = vpack.c.b16 %v12499, %v12498
    %v12598 = vpack.c.b16 %v12501, %v12500
    %v12599 = vpack.c.b16 %v12503, %v12502
    %v12600 = vpack.c.b16 %v12505, %v12504
    %v12601 = vpack.c.b16 %v12507, %v12506
    %v12602 = vpack.c.b16 %v12509, %v12508
    %v12603 = vpack.c.b16 %v12511, %v12510
    %v12604 = vpack.c.b16 %v12513, %v12512
    %v12605 = vpack.c.b16 %v12515, %v12514
    %v12606 = vpack.c.b16 %v12517, %v12516
    %v12607 = vpack.c.b16 %v12519, %v12518
    %v12608 = vpack.c.b16 %v12521, %v12520
    %v12609 = vpack.c.b16 %v12523, %v12522
    %v12610 = vpack.c.b16 %v12525, %v12524
    %v12611 = vpack.c.b16 %v12527, %v12526
    %v12612 = vpack.c.b16 %v12529, %v12528
    %v12613 = vpack.c.b16 %v12531, %v12530
    %v12614 = vpack.c.b16 %v12533, %v12532
    %v12615 = vpack.c.b16 %v12535, %v12534
    %v12616 = vpack.c.b16 %v12537, %v12536
    %v12617 = vpack.c.b16 %v12539, %v12538
    %v12618 = vpack.c.b16 %v12541, %v12540
    %v12619 = vpack.c.b16 %v12543, %v12542
    %v12620 = vpack.c.b16 %v12545, %v12544
    %v12621 = vpack.c.b16 %v12547, %v12546
    %v12622 = vpack.c.b16 %v12549, %v12548
    %v12623 = vpack.c.b16 %v12551, %v12550
    %12696 = vmatprep.subr.bf16.mxu0 0
    %12697 = vmatpush1.bf16.msra.mxu0 %v12552
    %12698 = vmatprep.subr.bf16.mxu0 0
    %12699 = vmatpush1.bf16.msra.mxu0 %v12553
    %12700 = vmatprep.subr.bf16.mxu0 0
    %12701 = vmatpush1.bf16.msra.mxu0 %v12554
    %12702 = vmatprep.subr.bf16.mxu0 0
    %12703 = vmatpush1.bf16.msra.mxu0 %v12555
    %12704 = vmatprep.subr.bf16.mxu0 0
    %12705 = vmatpush1.bf16.msra.mxu0 %v12556
    %12706 = vmatprep.subr.bf16.mxu0 0
    %12707 = vmatpush1.bf16.msra.mxu0 %v12557
    %12708 = vmatprep.subr.bf16.mxu0 0
    %12709 = vmatpush1.bf16.msra.mxu0 %v12558
    %12710 = vmatprep.subr.bf16.mxu0 0
    %12711 = vmatpush1.bf16.msra.mxu0 %v12559
    %12712 = vmatprep.subr.bf16.mxu0 0
    %12713 = vmatpush1.bf16.msra.mxu0 %v12560
    %12714 = vmatprep.subr.bf16.mxu0 0
    %12715 = vmatpush1.bf16.msra.mxu0 %v12561
    %12716 = vmatprep.subr.bf16.mxu0 0
    %12717 = vmatpush1.bf16.msra.mxu0 %v12562
    %12718 = vmatprep.subr.bf16.mxu0 0
    %12719 = vmatpush1.bf16.msra.mxu0 %v12563
    %12720 = vmatprep.subr.bf16.mxu0 0
    %12721 = vmatpush1.bf16.msra.mxu0 %v12564
    %12722 = vmatprep.subr.bf16.mxu0 0
    %12723 = vmatpush1.bf16.msra.mxu0 %v12565
    %12724 = vmatprep.subr.bf16.mxu0 0
    %12725 = vmatpush1.bf16.msra.mxu0 %v12566
    %12726 = vmatprep.subr.bf16.mxu0 0
    %12727 = vmatpush1.bf16.msra.mxu0 %v12567
    %12728 = vmatprep.mubr.bf16.mxu0 %v12112
    %12729 = vmatmul.mubr.bf16.gmra.mrb[0].mxu0 %v12111
    %v12730 = vpop.f32.mrb[0].mxu0
    %v12731 = vadd.f32 %v78, %v12730
    %v12732 = vpop.f32.mrb[0].mxu0
    %v12733 = vpop.f32.mrb[0].mxu0
    %v12734 = vpop.f32.mrb[0].mxu0
    %12735 = vdwg.mxu0
    %12736 = vmatprep.subr.bf16.mxu0 0
    %12737 = vmatpush1.bf16.msra.mxu0 %v12568
    %12738 = vmatprep.subr.bf16.mxu0 0
    %12739 = vmatpush1.bf16.msra.mxu0 %v12569
    %12740 = vmatprep.subr.bf16.mxu0 0
    %12741 = vmatpush1.bf16.msra.mxu0 %v12570
    %12742 = vmatprep.subr.bf16.mxu0 0
    %12743 = vmatpush1.bf16.msra.mxu0 %v12571
    %12744 = vmatprep.subr.bf16.mxu0 0
    %12745 = vmatpush1.bf16.msra.mxu0 %v12572
    %12746 = vmatprep.subr.bf16.mxu0 0
    %12747 = vmatpush1.bf16.msra.mxu0 %v12573
    %12748 = vmatprep.subr.bf16.mxu0 0
    %12749 = vmatpush1.bf16.msra.mxu0 %v12574
    %12750 = vmatprep.subr.bf16.mxu0 0
    %12751 = vmatpush1.bf16.msra.mxu0 %v12575
    %12752 = vmatprep.subr.bf16.mxu0 0
    %12753 = vmatpush1.bf16.msra.mxu0 %v12576
    %12754 = vmatprep.subr.bf16.mxu0 0
    %12755 = vmatpush1.bf16.msra.mxu0 %v12577
    %12756 = vmatprep.subr.bf16.mxu0 0
    %12757 = vmatpush1.bf16.msra.mxu0 %v12578
    %12758 = vmatprep.subr.bf16.mxu0 0
    %12759 = vmatpush1.bf16.msra.mxu0 %v12579
    %12760 = vmatprep.subr.bf16.mxu0 0
    %12761 = vmatpush1.bf16.msra.mxu0 %v12580
    %12762 = vmatprep.subr.bf16.mxu0 0
    %12763 = vmatpush1.bf16.msra.mxu0 %v12581
    %12764 = vmatprep.subr.bf16.mxu0 0
    %12765 = vmatpush1.bf16.msra.mxu0 %v12582
    %12766 = vmatprep.subr.bf16.mxu0 0
    %12767 = vmatpush1.bf16.msra.mxu0 %v12583
    %12768 = vmatprep.mubr.bf16.mxu0 %v12114
    %12769 = vmatmul.mubr.bf16.gmra.mrb[0].mxu0 %v12113
    %v12770 = vpop.f32.mrb[0].mxu0
    %v12771 = vadd.f32 %v12731, %v12770
    %v12772 = vpop.f32.mrb[0].mxu0
    %v12773 = vpop.f32.mrb[0].mxu0
    %v12774 = vpop.f32.mrb[0].mxu0
    %12775 = vdwg.mxu0
    %12776 = vmatprep.subr.bf16.mxu0 0
    %12777 = vmatpush1.bf16.msra.mxu0 %v12584
    %12778 = vmatprep.subr.bf16.mxu0 0
    %12779 = vmatpush1.bf16.msra.mxu0 %v12585
    %12780 = vmatprep.subr.bf16.mxu0 0
    %12781 = vmatpush1.bf16.msra.mxu0 %v12586
    %12782 = vmatprep.subr.bf16.mxu0 0
    %12783 = vmatpush1.bf16.msra.mxu0 %v12587
    %12784 = vmatprep.subr.bf16.mxu0 0
    %12785 = vmatpush1.bf16.msra.mxu0 %v12588
    %12786 = vmatprep.subr.bf16.mxu0 0
    %12787 = vmatpush1.bf16.msra.mxu0 %v12589
    %12788 = vmatprep.subr.bf16.mxu0 0
    %12789 = vmatpush1.bf16.msra.mxu0 %v12590
    %12790 = vmatprep.subr.bf16.mxu0 0
    %12791 = vmatpush1.bf16.msra.mxu0 %v12591
    %12792 = vmatprep.subr.bf16.mxu0 0
    %12793 = vmatpush1.bf16.msra.mxu0 %v12592
    %12794 = vmatprep.subr.bf16.mxu0 0
    %12795 = vmatpush1.bf16.msra.mxu0 %v12593
    %12796 = vmatprep.subr.bf16.mxu0 0
    %12797 = vmatpush1.bf16.msra.mxu0 %v12594
    %12798 = vmatprep.subr.bf16.mxu0 0
    %12799 = vmatpush1.bf16.msra.mxu0 %v12595
    %12800 = vmatprep.subr.bf16.mxu0 0
    %12801 = vmatpush1.bf16.msra.mxu0 %v12596
    %12802 = vmatprep.subr.bf16.mxu0 0
    %12803 = vmatpush1.bf16.msra.mxu0 %v12597
    %12804 = vmatprep.subr.bf16.mxu0 0
    %12805 = vmatpush1.bf16.msra.mxu0 %v12598
    %12806 = vmatprep.subr.bf16.mxu0 0
    %12807 = vmatpush1.bf16.msra.mxu0 %v12599
    %12808 = vmatprep.mubr.bf16.mxu0 %v12116
    %12809 = vmatmul.mubr.bf16.gmra.mrb[0].mxu0 %v12115
    %v12810 = vpop.f32.mrb[0].mxu0
    %v12811 = vadd.f32 %v12771, %v12810
    %v12812 = vpop.f32.mrb[0].mxu0
    %v12813 = vpop.f32.mrb[0].mxu0
    %v12814 = vpop.f32.mrb[0].mxu0
    %12815 = vdwg.mxu0
    %12816 = vmatprep.subr.bf16.mxu0 0
    %12817 = vmatpush1.bf16.msra.mxu0 %v12600
    %12818 = vmatprep.subr.bf16.mxu0 0
    %12819 = vmatpush1.bf16.msra.mxu0 %v12601
    %12820 = vmatprep.subr.bf16.mxu0 0
    %12821 = vmatpush1.bf16.msra.mxu0 %v12602
    %12822 = vmatprep.subr.bf16.mxu0 0
    %12823 = vmatpush1.bf16.msra.mxu0 %v12603
    %12824 = vmatprep.subr.bf16.mxu0 0
    %12825 = vmatpush1.bf16.msra.mxu0 %v12604
    %12826 = vmatprep.subr.bf16.mxu0 0
    %12827 = vmatpush1.bf16.msra.mxu0 %v12605
    %12828 = vmatprep.subr.bf16.mxu0 0
    %12829 = vmatpush1.bf16.msra.mxu0 %v12606
    %12830 = vmatprep.subr.bf16.mxu0 0
    %12831 = vmatpush1.bf16.msra.mxu0 %v12607
    %12832 = vmatprep.subr.bf16.mxu0 0
    %12833 = vmatpush1.bf16.msra.mxu0 %v12608
    %12834 = vmatprep.subr.bf16.mxu0 0
    %12835 = vmatpush1.bf16.msra.mxu0 %v12609
    %12836 = vmatprep.subr.bf16.mxu0 0
    %12837 = vmatpush1.bf16.msra.mxu0 %v12610
    %12838 = vmatprep.subr.bf16.mxu0 0
    %12839 = vmatpush1.bf16.msra.mxu0 %v12611
    %12840 = vmatprep.subr.bf16.mxu0 0
    %12841 = vmatpush1.bf16.msra.mxu0 %v12612
    %12842 = vmatprep.subr.bf16.mxu0 0
    %12843 = vmatpush1.bf16.msra.mxu0 %v12613
    %12844 = vmatprep.subr.bf16.mxu0 0
    %12845 = vmatpush1.bf16.msra.mxu0 %v12614
    %12846 = vmatprep.subr.bf16.mxu0 0
    %12847 = vmatpush1.bf16.msra.mxu0 %v12615
    %12848 = vmatprep.mubr.bf16.mxu0 %v12118
    %12849 = vmatmul.mubr.bf16.gmra.mrb[0].mxu0 %v12117
    %v12850 = vpop.f32.mrb[0].mxu0
    %v12851 = vadd.f32 %v12811, %v12850
    %v12852 = vpop.f32.mrb[0].mxu0
    %v12853 = vpop.f32.mrb[0].mxu0
    %v12854 = vpop.f32.mrb[0].mxu0
    %12855 = vdwg.mxu0
    %12856 = vmatprep.subr.bf16.mxu0 0
    %12857 = vmatpush1.bf16.msra.mxu0 %v12616
    %12858 = vmatprep.subr.bf16.mxu0 0
    %12859 = vmatpush1.bf16.msra.mxu0 %v12617
    %12860 = vmatprep.subr.bf16.mxu0 0
    %12861 = vmatpush1.bf16.msra.mxu0 %v12618
    %12862 = vmatprep.subr.bf16.mxu0 0
    %12863 = vmatpush1.bf16.msra.mxu0 %v12619
    %12864 = vmatprep.subr.bf16.mxu0 0
    %12865 = vmatpush1.bf16.msra.mxu0 %v12620
    %12866 = vmatprep.subr.bf16.mxu0 0
    %12867 = vmatpush1.bf16.msra.mxu0 %v12621
    %12868 = vmatprep.subr.bf16.mxu0 0
    %12869 = vmatpush1.bf16.msra.mxu0 %v12622
    %12870 = vmatprep.subr.bf16.mxu0 0
    %12871 = vmatpush1.bf16.msra.mxu0 %v12623
    %12872 = vmatprep.subr.bf16.mxu0 0
    %12873 = vmatpush1.bf16.msra.mxu0 0
    %12874 = vmatprep.subr.bf16.mxu0 0
    %12875 = vmatpush1.bf16.msra.mxu0 0
    %12876 = vmatprep.subr.bf16.mxu0 0
    %12877 = vmatpush1.bf16.msra.mxu0 0
    %12878 = vmatprep.subr.bf16.mxu0 0
    %12879 = vmatpush1.bf16.msra.mxu0 0
    %12880 = vmatprep.subr.bf16.mxu0 0
    %12881 = vmatpush1.bf16.msra.mxu0 0
    %12882 = vmatprep.subr.bf16.mxu0 0
    %12883 = vmatpush1.bf16.msra.mxu0 0
    %12884 = vmatprep.subr.bf16.mxu0 0
    %12885 = vmatpush1.bf16.msra.mxu0 0
    %12886 = vmatprep.subr.bf16.mxu0 0
    %12887 = vmatpush1.bf16.msra.mxu0 0
    %12888 = vmatprep.mubr.bf16.mxu0 0
    %12889 = vmatmul.mubr.bf16.gmra.mrb[0].mxu0 %v12119
    %v12890 = vpop.f32.mrb[0].mxu0
    %v12891 = vadd.f32 %v12851, %v12890
    %v12892 = vpop.f32.mrb[0].mxu0
    %v12893 = vpop.f32.mrb[0].mxu0
    %v12894 = vpop.f32.mrb[0].mxu0
    %12895 = vdwg.mxu0
    %v12896 = vmax.f32 %v12891, 0.0
    %v12897 = vld [vmem:[%s7] sm:$0xff]
    %v12898 = vld [vmem:[%s7 + $0x8] sm:$0xff]
    %v12899 = vld [vmem:[%s7 + $0x10] sm:$0xff]
    %v12900 = vld [vmem:[%s7 + $0x18] sm:$0xff]
    %v12901 = vld [vmem:[%s7 + $0x20] sm:$0xff]
    %v12902 = vld [vmem:[%s7 + $0x28] sm:$0xff]
    %v12903 = vld [vmem:[%s7 + $0x30] sm:$0xff]
    %v12904 = vld [vmem:[%s7 + $0x38] sm:$0xff]
    %v12905 = vld [vmem:[%s7 + $0x40] sm:$0xff]
    %v12906 = vld [vmem:[%s7 + $0x48] sm:$0xff]
    %v12907 = vld [vmem:[%s7 + $0x50] sm:$0xff]
    %v12908 = vld [vmem:[%s7 + $0x58] sm:$0xff]
    %v12909 = vld [vmem:[%s7 + $0x60] sm:$0xff]
    %v12910 = vld [vmem:[%s7 + $0x68] sm:$0xff]
    %v12911 = vld [vmem:[%s7 + $0x70] sm:$0xff]
    %v12912 = vld [vmem:[%s7 + $0x78] sm:$0xff]
    %12913 = vmatprep.subr.mxu0 0.0
    %12914 = vmatpush1.msra.mxu0 %v12897
    %12915 = vmatprep.subr.mxu0 0.0
    %12916 = vmatpush1.msra.mxu0 %v12898
    %12917 = vmatprep.subr.mxu0 0.0
    %12918 = vmatpush1.msra.mxu0 %v12899
    %12919 = vmatprep.subr.mxu0 0.0
    %12920 = vmatpush1.msra.mxu0 %v12900
    %12921 = vmatprep.subr.mxu0 0.0
    %12922 = vmatpush1.msra.mxu0 %v12901
    %12923 = vmatprep.subr.mxu0 0.0
    %12924 = vmatpush1.msra.mxu0 %v12902
    %12925 = vmatprep.subr.mxu0 0.0
    %12926 = vmatpush1.msra.mxu0 %v12903
    %12927 = vmatprep.subr.mxu0 0.0
    %12928 = vmatpush1.msra.mxu0 %v12904
    %12929 = vmatprep.subr.mxu0 0.0
    %12930 = vmatpush1.msra.mxu0 %v12905
    %12931 = vmatprep.subr.mxu0 0.0
    %12932 = vmatpush1.msra.mxu0 %v12906
    %12933 = vmatprep.subr.mxu0 0.0
    %12934 = vmatpush1.msra.mxu0 %v12907
    %12935 = vmatprep.subr.mxu0 0.0
    %12936 = vmatpush1.msra.mxu0 %v12908
    %12937 = vmatprep.subr.mxu0 0.0
    %12938 = vmatpush1.msra.mxu0 %v12909
    %12939 = vmatprep.subr.mxu0 0.0
    %12940 = vmatpush1.msra.mxu0 %v12910
    %12941 = vmatprep.subr.mxu0 0.0
    %12942 = vmatpush1.msra.mxu0 %v12911
    %12943 = vmatprep.subr.mxu0 0.0
    %12944 = vmatpush1.msra.mxu0 %v12912
    %12945 = vmatprep.subr.mxu0 0.0
    %12946 = vmatpush1.msra.mxu0 0.0
    %12947 = vmatprep.subr.mxu0 0.0
    %12948 = vmatpush1.msra.mxu0 0.0
    %12949 = vmatprep.subr.mxu0 0.0
    %12950 = vmatpush1.msra.mxu0 0.0
    %12951 = vmatprep.subr.mxu0 0.0
    %12952 = vmatpush1.msra.mxu0 0.0
    %12953 = vmatprep.subr.mxu0 0.0
    %12954 = vmatpush1.msra.mxu0 0.0
    %12955 = vmatprep.subr.mxu0 0.0
    %12956 = vmatpush1.msra.mxu0 0.0
    %12957 = vmatprep.subr.mxu0 0.0
    %12958 = vmatpush1.msra.mxu0 0.0
    %12959 = vmatprep.subr.mxu0 0.0
    %12960 = vmatpush1.msra.mxu0 0.0
    %12961 = vmatprep.subr.mxu0 0.0
    %12962 = vmatpush1.msra.mxu0 0.0
    %12963 = vmatprep.subr.mxu0 0.0
    %12964 = vmatpush1.msra.mxu0 0.0
    %12965 = vmatprep.subr.mxu0 0.0
    %12966 = vmatpush1.msra.mxu0 0.0
    %12967 = vmatprep.subr.mxu0 0.0
    %12968 = vmatpush1.msra.mxu0 0.0
    %12969 = vmatprep.subr.mxu0 0.0
    %12970 = vmatpush1.msra.mxu0 0.0
    %12971 = vmatprep.subr.mxu0 0.0
    %12972 = vmatpush1.msra.mxu0 0.0
    %12973 = vmatprep.subr.mxu0 0.0
    %12974 = vmatpush1.msra.mxu0 0.0
    %12975 = vmatprep.subr.mxu0 0.0
    %12976 = vmatpush1.msra.mxu0 0.0
    %12977 = vmatprep.mubr.f32.mxu0 0.0
    %12978 = vmatmul.mubr.f32.gmra.mrb[0].mxu0 %v12896
    %v12979 = vpop.f32.mrb[0].mxu0
    %v12980 = vadd.f32 %v79, %v12979
    %v12981 = vpop.f32.mrb[0].mxu0
    %12982 = vdwg.mxu0
    %v12983 = vmax.f32 %v12980, 0.0
    %v12984 = vld [vmem:[%s2] sm:$0x3]
    %v12985 = vmul.f32 %v12983, %v12984
    %v12986 = vld [vmem:[%s8] sm:$0xff]
    %v12987 = vld [vmem:[%s8 + $0x8] sm:$0xff]
    %v12988 = vld [vmem:[%s8 + $0x10] sm:$0xff]
    %v12989 = vld [vmem:[%s8 + $0x18] sm:$0xff]
    %v12990 = vld [vmem:[%s8 + $0x20] sm:$0xff]
    %v12991 = vld [vmem:[%s8 + $0x28] sm:$0xff]
    %v12992 = vld [vmem:[%s8 + $0x30] sm:$0xff]
    %v12993 = vld [vmem:[%s8 + $0x38] sm:$0xff]
    %v12994 = vld [vmem:[%s8 + $0x40] sm:$0xff]
    %v12995 = vld [vmem:[%s8 + $0x48] sm:$0xff]
    %v12996 = vld [vmem:[%s8 + $0x50] sm:$0xff]
    %v12997 = vld [vmem:[%s8 + $0x58] sm:$0xff]
    %v12998 = vld [vmem:[%s8 + $0x60] sm:$0xff]
    %v12999 = vld [vmem:[%s8 + $0x68] sm:$0xff]
    %v13000 = vld [vmem:[%s8 + $0x70] sm:$0xff]
    %v13001 = vld [vmem:[%s8 + $0x78] sm:$0xff]
    %13002 = vmatprep.subr.mxu0 0.0
    %13003 = vmatpush1.msra.mxu0 %v12986
    %13004 = vmatprep.subr.mxu0 0.0
    %13005 = vmatpush1.msra.mxu0 %v12987
    %13006 = vmatprep.subr.mxu0 0.0
    %13007 = vmatpush1.msra.mxu0 %v12988
    %13008 = vmatprep.subr.mxu0 0.0
    %13009 = vmatpush1.msra.mxu0 %v12989
    %13010 = vmatprep.subr.mxu0 0.0
    %13011 = vmatpush1.msra.mxu0 %v12990
    %13012 = vmatprep.subr.mxu0 0.0
    %13013 = vmatpush1.msra.mxu0 %v12991
    %13014 = vmatprep.subr.mxu0 0.0
    %13015 = vmatpush1.msra.mxu0 %v12992
    %13016 = vmatprep.subr.mxu0 0.0
    %13017 = vmatpush1.msra.mxu0 %v12993
    %13018 = vmatprep.subr.mxu0 0.0
    %13019 = vmatpush1.msra.mxu0 %v12994
    %13020 = vmatprep.subr.mxu0 0.0
    %13021 = vmatpush1.msra.mxu0 %v12995
    %13022 = vmatprep.subr.mxu0 0.0
    %13023 = vmatpush1.msra.mxu0 %v12996
    %13024 = vmatprep.subr.mxu0 0.0
    %13025 = vmatpush1.msra.mxu0 %v12997
    %13026 = vmatprep.subr.mxu0 0.0
    %13027 = vmatpush1.msra.mxu0 %v12998
    %13028 = vmatprep.subr.mxu0 0.0
    %13029 = vmatpush1.msra.mxu0 %v12999
    %13030 = vmatprep.subr.mxu0 0.0
    %13031 = vmatpush1.msra.mxu0 %v13000
    %13032 = vmatprep.subr.mxu0 0.0
    %13033 = vmatpush1.msra.mxu0 %v13001
    %13034 = vmatprep.subr.mxu0 0.0
    %13035 = vmatpush1.msra.mxu0 0.0
    %13036 = vmatprep.subr.mxu0 0.0
    %13037 = vmatpush1.msra.mxu0 0.0
    %13038 = vmatprep.subr.mxu0 0.0
    %13039 = vmatpush1.msra.mxu0 0.0
    %13040 = vmatprep.subr.mxu0 0.0
    %13041 = vmatpush1.msra.mxu0 0.0
    %13042 = vmatprep.subr.mxu0 0.0
    %13043 = vmatpush1.msra.mxu0 0.0
    %13044 = vmatprep.subr.mxu0 0.0
    %13045 = vmatpush1.msra.mxu0 0.0
    %13046 = vmatprep.subr.mxu0 0.0
    %13047 = vmatpush1.msra.mxu0 0.0
    %13048 = vmatprep.subr.mxu0 0.0
    %13049 = vmatpush1.msra.mxu0 0.0
    %13050 = vmatprep.subr.mxu0 0.0
    %13051 = vmatpush1.msra.mxu0 0.0
    %13052 = vmatprep.subr.mxu0 0.0
    %13053 = vmatpush1.msra.mxu0 0.0
    %13054 = vmatprep.subr.mxu0 0.0
    %13055 = vmatpush1.msra.mxu0 0.0
    %13056 = vmatprep.subr.mxu0 0.0
    %13057 = vmatpush1.msra.mxu0 0.0
    %13058 = vmatprep.subr.mxu0 0.0
    %13059 = vmatpush1.msra.mxu0 0.0
    %13060 = vmatprep.subr.mxu0 0.0
    %13061 = vmatpush1.msra.mxu0 0.0
    %13062 = vmatprep.subr.mxu0 0.0
    %13063 = vmatpush1.msra.mxu0 0.0
    %13064 = vmatprep.subr.mxu0 0.0
    %13065 = vmatpush1.msra.mxu0 0.0
    %13066 = vmatprep.mubr.f32.mxu0 0.0
    %13067 = vmatmul.mubr.f32.gmra.mrb[0].mxu0 %v12985
    %v13068 = vpop.f32.mrb[0].mxu0
    %v13069 = vadd.f32 %v80, %v13068
    %v13070 = vpop.f32.mrb[0].mxu0
    %13071 = vdwg.mxu0
    %13072 = vst [vmem:[#allocation2] sm:$0x3] %v13069
    // Predicated region
    $region42: #{tpu_custom_call.1} parent=1 // pred_check
      _
    $region43: #{tpu_custom_call.1} parent=1 // pred_check_branch
      %13074 = sbr.rel (0) target = $region45
    $region44: #{tpu_custom_call.1} parent=1 // pred_region
      %s13076 = ssub.s32 32, 32
      %13077 = vsyncadd [#allocation3], %s13076
      %s13079 = sshll.u32 [#allocation2], 4
      %s13080 = int_to_ptr.vmem [resolvable:$true] %s13079
      %13082 = dma.vmem_to_hbm [thread:$0]  %s13080, 32, %s10, [#allocation3]
    $region45: #{tpu_custom_call.1} parent=1 // pred_fallthru
      _
    // Predicated region
    $region46: #{tpu_custom_call.1} parent=1 // pred_check
      _
    $region47: #{tpu_custom_call.1} parent=1 // pred_check_branch
      %13084 = sbr.rel (0) target = $region49
    $region48: #{tpu_custom_call.1} parent=1 // pred_region
      %13085 = dma.done [#allocation3], 32
    $region49: #{tpu_custom_call.1} parent=1 // pred_fallthru
      _
    %13086 = vsyncpa [#allocation3], 1

</llo_original>
